<compile_context>
chip_gen: v5e
topology: v5e:2x2
jax: 0.10.0
libtpu: 0.0.40
codegen_flags: <defaults>
</compile_context>

<pallas_src>
import jax
import jax.numpy as jnp
import numpy as np
from jax.experimental import pallas as pl
from jax.experimental.pallas import tpu as pltpu

HIDDEN = 8        # nn.LSTM(240, 8)
LSTM_IN = 240     # forces sequence length L == 240
BN_EPS = 0.001
TL = 128          # lane-chunk size for conv accumulators


# ----------------------- one (C_out-chunk, L-chunk) of a conv -----------------------
def _conv_chunk(inp, w_ref, s_ref, b_ref, co, ncol, start, size):
    """inp: [C_in, L_in] (value or VMEM ref); w_ref: [K, C_out, C_in] ref.
    Returns ReLU(BN(conv)) for output rows [co:co+ncol], cols [start:start+size]."""
    k_taps = w_ref.shape[0]
    acc = jnp.zeros((ncol, size), jnp.float32)
    for k in range(k_taps):                               # static unroll over taps
        acc = acc + jnp.dot(w_ref[k, co:co + ncol, :],
                            inp[:, start + k:start + k + size],
                            preferred_element_type=jnp.float32)
    y = acc * s_ref[co:co + ncol, :] + b_ref[co:co + ncol, :]
    return jnp.maximum(y, 0.0)


# ------------------------------- fused forward kernel -------------------------------
def _lstm_fcn_kernel(x_ref, w1, s1, b1, w2, s2, b2, w3, s3, b3,
                     wl, ul, bl, wfc, bfc, o_ref, x1_s, x2_s):
    # x_ref: (1, C, L); w*: (K, C_out, C_in); s*/b*: (C_out, 1)
    # wl: (L, 4H); ul: (H, 4H); bl: (1, 4H); wfc: (H+128, N); bfc: (1, N)
    # o_ref: (1, 1, N); x1_s: (128, L1) VMEM; x2_s: (256, L2) VMEM
    C = x_ref.shape[1]
    L = x_ref.shape[2]
    K1, K2, K3 = w1.shape[0], w2.shape[0], w3.shape[0]
    CO1, CO2, CO3 = w1.shape[1], w2.shape[1], w3.shape[1]
    L1 = L - K1 + 1
    L2 = L1 - K2 + 1
    L3 = L2 - K3 + 1

    x = x_ref[0]                                          # [C, L] -- shared by both branches

    # ---- Conv1 + BN + ReLU -> x1_s (per-tap dots, chunked over L) ----
    for start in range(0, L1, TL):
        size = min(TL, L1 - start)
        x1_s[:, start:start + size] = _conv_chunk(x, w1, s1, b1, 0, CO1, start, size)

    # ---- Conv2 + BN + ReLU -> x2_s (chunked over C_out and L: vreg-sized acc) ----
    for co in range(0, CO2, TL):
        ncol = min(TL, CO2 - co)
        for start in range(0, L2, TL):
            size = min(TL, L2 - start)
            x2_s[co:co + ncol, start:start + size] = _conv_chunk(
                x1_s, w2, s2, b2, co, ncol, start, size)

    # ---- Conv3 + BN + ReLU with the global mean fused into the chunk loop ----
    fsum = jnp.zeros((1, CO3), jnp.float32)
    for start in range(0, L3, TL):
        size = min(TL, L3 - start)
        y3 = _conv_chunk(x2_s, w3, s3, b3, 0, CO3, start, size)     # [CO3, size]
        fsum = fsum + jnp.sum(y3[None, :, :], axis=2)               # [1, CO3]
    mean_f = fsum * (1.0 / L3)                                      # [1, 128]

    # ---- LSTM branch: fused gates, input projection hoisted out of the loop ----
    H = ul.shape[0]
    proj = jnp.dot(x, wl[...], preferred_element_type=jnp.float32) + bl[...]   # [C, 4H]
    u_all = ul[...]
    h = jnp.zeros((1, H), jnp.float32)
    c_t = jnp.zeros((1, H), jnp.float32)
    for t in range(C):                                    # static unroll (T = #channels)
        g_all = proj[t:t + 1, :] + jnp.dot(h, u_all, preferred_element_type=jnp.float32)
        i_t = jax.nn.sigmoid(g_all[:, 0:H])               # torch gate order i, f, g, o
        f_t = jax.nn.sigmoid(g_all[:, H:2 * H])
        g_t = jnp.tanh(g_all[:, 2 * H:3 * H])
        o_t = jax.nn.sigmoid(g_all[:, 3 * H:4 * H])
        c_t = f_t * c_t + i_t * g_t
        h = o_t * jnp.tanh(c_t)
    # TODO(synk): nn.Dropout(p=0.8) is identity at inference; training mask not applied.

    # ---- Head: concat(h, mean_f) @ W_fc + b, with W_fc split into row blocks ----
    out = (jnp.dot(h, wfc[0:H, :], preferred_element_type=jnp.float32)
           + jnp.dot(mean_f, wfc[H:H + CO3, :], preferred_element_type=jnp.float32)
           + bfc[...])
    o_ref[...] = out[None].astype(o_ref.dtype)


def lstm_fcn_forward(x, params):
    B, C, L = x.shape
    c1, c2, c3 = params["convs"]
    lstm, fc = params["lstm"], params["fc"]
    N = fc["b"].shape[1]
    K1, K2 = c1["w"].shape[0], c2["w"].shape[0]
    CO1, CO2 = c1["w"].shape[1], c2["w"].shape[1]
    L1 = L - K1 + 1
    L2 = L1 - K2 + 1

    args = (x,
            c1["w"], c1["scale"], c1["bias"],
            c2["w"], c2["scale"], c2["bias"],
            c3["w"], c3["scale"], c3["bias"],
            lstm["w"], lstm["u"], lstm["b"],
            fc["w"], fc["b"])

    const = lambda shape: pl.BlockSpec(shape, lambda b, s=len(shape): (0,) * s)
    in_specs = ([pl.BlockSpec((1, C, L), lambda b: (b, 0, 0))]
                + [const(a.shape) for a in args[1:]])

    out = pl.pallas_call(
        _lstm_fcn_kernel,
        out_shape=jax.ShapeDtypeStruct((B, 1, N), jnp.float32),
        grid=(B,),
        in_specs=in_specs,
        out_specs=pl.BlockSpec((1, 1, N), lambda b: (b, 0, 0)),
        scratch_shapes=[pltpu.VMEM((CO1, L1), jnp.float32),
                        pltpu.VMEM((CO2, L2), jnp.float32)],
        compiler_params=pltpu.CompilerParams(dimension_semantics=("parallel",)),
    )(*args)
    return out.reshape(B, N)


# ----------------------------------- parameters -------------------------------------
def init_params(key, input_size, num_classes):
    ks = jax.random.split(key, 20)

    def u(k, shape, scale=0.1):
        return jax.random.uniform(k, shape, jnp.float32, -1.0, 1.0) * scale

    idx = 0
    convs = []
    for (co, ci, kk) in [(128, input_size, 8), (256, 128, 5), (128, 256, 3)]:
        w = u(ks[idx], (co, ci, kk)); idx += 1              # torch Conv1d weight [O,I,K]
        b = u(ks[idx], (co,)); idx += 1                     # torch Conv1d bias
        gamma = 1.0 + u(ks[idx], (co,), 0.05); idx += 1
        beta = u(ks[idx], (co,), 0.05); idx += 1
        running_mean = jnp.zeros((co,), jnp.float32)        # fresh-module BN stats (eval)
        running_var = jnp.ones((co,), jnp.float32)
        scale = gamma / jnp.sqrt(running_var + BN_EPS)
        bias = beta + scale * (b - running_mean)            # fold conv bias + BN affine
        convs.append({"w": jnp.transpose(w, (2, 0, 1)),     # [K, C_out, C_in]
                      "scale": scale.reshape(co, 1),
                      "bias": bias.reshape(co, 1)})

    H, F = HIDDEN, LSTM_IN
    w_ih = u(ks[idx], (4 * H, F)); idx += 1                 # torch gate order i,f,g,o
    w_hh = u(ks[idx], (4 * H, H)); idx += 1
    b_ih = u(ks[idx], (4 * H,)); idx += 1
    b_hh = u(ks[idx], (4 * H,)); idx += 1
    lstm = {"w": jnp.transpose(w_ih),                       # [240, 32]
            "u": jnp.transpose(w_hh),                       # [8, 32]
            "b": (b_ih + b_hh).reshape(1, 4 * H)}           # [1, 32]

    w_fc = u(ks[idx], (num_classes, H + 128)); idx += 1     # torch Linear(136, N)
    b_fc = u(ks[idx], (num_classes,)); idx += 1
    fc = {"w": jnp.transpose(w_fc),                         # [136, N]
          "b": b_fc.reshape(1, num_classes)}

    return {"convs": convs, "lstm": lstm, "fc": fc}


# ----------------------------- pure-JAX reference (check) ---------------------------
def reference_forward(x, params):
    hp = jax.lax.Precision.HIGHEST
    dot = lambda a, b: jnp.dot(a, b, precision=hp)
    y = x
    for conv in params["convs"]:
        w_kcc, scale, bias = conv["w"], conv["scale"], conv["bias"]
        K, co, _ = w_kcc.shape
        l_out = y.shape[2] - K + 1
        acc = jnp.zeros((y.shape[0], co, l_out), jnp.float32)
        for k in range(K):
            acc = acc + jnp.einsum("oc,bcl->bol", w_kcc[k], y[:, :, k:k + l_out],
                                   precision=hp)
        y = jnp.maximum(acc * scale[None] + bias[None], 0.0)

    p = params["lstm"]
    B, H = x.shape[0], HIDDEN
    h = jnp.zeros((B, H), jnp.float32)
    c = jnp.zeros((B, H), jnp.float32)
    for t in range(x.shape[1]):                             # seq-first == channel axis
        x_t = x[:, t, :]
        g = dot(x_t, p["w"]) + dot(h, p["u"]) + p["b"]
        i_t = jax.nn.sigmoid(g[:, 0:H])
        f_t = jax.nn.sigmoid(g[:, H:2 * H])
        g_t = jnp.tanh(g[:, 2 * H:3 * H])
        o_t = jax.nn.sigmoid(g[:, 3 * H:4 * H])
        c = f_t * c + i_t * g_t
        h = o_t * jnp.tanh(c)

    mean_f = jnp.mean(y, axis=2)
    fc = params["fc"]
    feat = jnp.concatenate([h, mean_f], axis=1)
    return dot(feat, fc["w"]) + fc["b"]


if __name__ == "__main__":
    key = jax.random.PRNGKey(0)
    kp, kx = jax.random.split(key)
    B, C, L = 2, 4, LSTM_IN            # L must be 240: nn.LSTM(240, 8)
    num_classes = 10
    params = init_params(kp, input_size=C, num_classes=num_classes)
    x = jax.random.normal(kx, (B, C, L), jnp.float32)

    fwd = jax.jit(lstm_fcn_forward)
    out = jax.block_until_ready(fwd(x, params))
    assert out.shape == (B, num_classes)

    ref = reference_forward(x, params)
    np.testing.assert_allclose(np.asarray(out), np.asarray(ref),
                               rtol=2e-3, atol=2e-3)
    print("KERNEL_OK")
</pallas_src>

<mosaic_0001>
module attributes {stable_mosaic.version = 11 : i64} {
  func.func @_lstm_fcn_kernel(%arg0: i32, %arg1: memref<1x4x240xf32, #tpu.memory_space<vmem>>, %arg2: memref<8x128x4xf32, #tpu.memory_space<vmem>>, %arg3: memref<128x1xf32, #tpu.memory_space<vmem>>, %arg4: memref<128x1xf32, #tpu.memory_space<vmem>>, %arg5: memref<5x256x128xf32, #tpu.memory_space<vmem>>, %arg6: memref<256x1xf32, #tpu.memory_space<vmem>>, %arg7: memref<256x1xf32, #tpu.memory_space<vmem>>, %arg8: memref<3x128x256xf32, #tpu.memory_space<vmem>>, %arg9: memref<128x1xf32, #tpu.memory_space<vmem>>, %arg10: memref<128x1xf32, #tpu.memory_space<vmem>>, %arg11: memref<240x32xf32, #tpu.memory_space<vmem>>, %arg12: memref<8x32xf32, #tpu.memory_space<vmem>>, %arg13: memref<1x32xf32, #tpu.memory_space<vmem>>, %arg14: memref<136x10xf32, #tpu.memory_space<vmem>>, %arg15: memref<1x10xf32, #tpu.memory_space<vmem>>, %arg16: memref<1x1x10xf32, #tpu.memory_space<vmem>>, %arg17: memref<128x233xf32, #tpu.memory_space<vmem>>, %arg18: memref<256x229xf32, #tpu.memory_space<vmem>>) attributes {dimension_semantics = [#tpu.dimension_semantics<parallel>], iteration_bounds = array<i64: 2>, scalar_prefetch = 0 : i64, scratch_operands = 2 : i64, tpu.core_type = #tpu.core_type<tc>, window_params = [{transform_indices = @transform_0, window_bounds = array<i64: 1, 4, 240>}, {pipeline_mode = #tpu.pipeline_mode<synchronous>, transform_indices = @transform_1, window_bounds = array<i64: 8, 128, 4>}, {pipeline_mode = #tpu.pipeline_mode<synchronous>, transform_indices = @transform_2, window_bounds = array<i64: 128, 1>}, {pipeline_mode = #tpu.pipeline_mode<synchronous>, transform_indices = @transform_3, window_bounds = array<i64: 128, 1>}, {pipeline_mode = #tpu.pipeline_mode<synchronous>, transform_indices = @transform_4, window_bounds = array<i64: 5, 256, 128>}, {pipeline_mode = #tpu.pipeline_mode<synchronous>, transform_indices = @transform_5, window_bounds = array<i64: 256, 1>}, {pipeline_mode = #tpu.pipeline_mode<synchronous>, transform_indices = @transform_6, window_bounds = array<i64: 256, 1>}, {pipeline_mode = #tpu.pipeline_mode<synchronous>, transform_indices = @transform_7, window_bounds = array<i64: 3, 128, 256>}, {pipeline_mode = #tpu.pipeline_mode<synchronous>, transform_indices = @transform_8, window_bounds = array<i64: 128, 1>}, {pipeline_mode = #tpu.pipeline_mode<synchronous>, transform_indices = @transform_9, window_bounds = array<i64: 128, 1>}, {pipeline_mode = #tpu.pipeline_mode<synchronous>, transform_indices = @transform_10, window_bounds = array<i64: 240, 32>}, {pipeline_mode = #tpu.pipeline_mode<synchronous>, transform_indices = @transform_11, window_bounds = array<i64: 8, 32>}, {pipeline_mode = #tpu.pipeline_mode<synchronous>, transform_indices = @transform_12, window_bounds = array<i64: 1, 32>}, {pipeline_mode = #tpu.pipeline_mode<synchronous>, transform_indices = @transform_13, window_bounds = array<i64: 136, 10>}, {pipeline_mode = #tpu.pipeline_mode<synchronous>, transform_indices = @transform_14, window_bounds = array<i64: 1, 10>}, {transform_indices = @transform_15, window_bounds = array<i64: 1, 1, 10>}]} {
    %c0 = arith.constant 0 : index
    %c0_0 = arith.constant 0 : index
    %c0_1 = arith.constant 0 : index
    %0 = vector.load %arg1[%c0, %c0_0, %c0_1] : memref<1x4x240xf32, #tpu.memory_space<vmem>>, vector<1x4x240xf32>
    %1 = vector.shape_cast %0 : vector<1x4x240xf32> to vector<4x240xf32>
    %cst = arith.constant 0.000000e+00 : f32
    %2 = vector.broadcast %cst : f32 to vector<128x128xf32>
    %c0_2 = arith.constant 0 : index
    %c0_3 = arith.constant 0 : index
    %c0_4 = arith.constant 0 : index
    %3 = vector.load %arg2[%c0_2, %c0_3, %c0_4] : memref<8x128x4xf32, #tpu.memory_space<vmem>>, vector<1x128x4xf32>
    %4 = vector.shape_cast %3 : vector<1x128x4xf32> to vector<128x4xf32>
    %5 = vector.extract_strided_slice %1 {offsets = [0, 0], sizes = [4, 128], strides = [1, 1]} : vector<4x240xf32> to vector<4x128xf32>
    %cst_5 = arith.constant dense<0.000000e+00> : vector<128x128xf32>
    %6 = tpu.matmul %4, %5, %cst_5 {dimension_numbers = #tpu.dot_dimension_numbers<[1], [0], [0], [1], [0, 0, 1, 1], [], []>} : vector<128x4xf32>, vector<4x128xf32>, vector<128x128xf32> -> vector<128x128xf32>
    %7 = arith.addf %2, %6 : vector<128x128xf32>
    %c1 = arith.constant 1 : index
    %c0_6 = arith.constant 0 : index
    %c0_7 = arith.constant 0 : index
    %8 = vector.load %arg2[%c1, %c0_6, %c0_7] : memref<8x128x4xf32, #tpu.memory_space<vmem>>, vector<1x128x4xf32>
    %9 = vector.shape_cast %8 : vector<1x128x4xf32> to vector<128x4xf32>
    %10 = vector.extract_strided_slice %1 {offsets = [0, 1], sizes = [4, 128], strides = [1, 1]} : vector<4x240xf32> to vector<4x128xf32>
    %cst_8 = arith.constant dense<0.000000e+00> : vector<128x128xf32>
    %11 = tpu.matmul %9, %10, %cst_8 {dimension_numbers = #tpu.dot_dimension_numbers<[1], [0], [0], [1], [0, 0, 1, 1], [], []>} : vector<128x4xf32>, vector<4x128xf32>, vector<128x128xf32> -> vector<128x128xf32>
    %12 = arith.addf %7, %11 : vector<128x128xf32>
    %c2 = arith.constant 2 : index
    %c0_9 = arith.constant 0 : index
    %c0_10 = arith.constant 0 : index
    %13 = vector.load %arg2[%c2, %c0_9, %c0_10] : memref<8x128x4xf32, #tpu.memory_space<vmem>>, vector<1x128x4xf32>
    %14 = vector.shape_cast %13 : vector<1x128x4xf32> to vector<128x4xf32>
    %15 = vector.extract_strided_slice %1 {offsets = [0, 2], sizes = [4, 128], strides = [1, 1]} : vector<4x240xf32> to vector<4x128xf32>
    %cst_11 = arith.constant dense<0.000000e+00> : vector<128x128xf32>
    %16 = tpu.matmul %14, %15, %cst_11 {dimension_numbers = #tpu.dot_dimension_numbers<[1], [0], [0], [1], [0, 0, 1, 1], [], []>} : vector<128x4xf32>, vector<4x128xf32>, vector<128x128xf32> -> vector<128x128xf32>
    %17 = arith.addf %12, %16 : vector<128x128xf32>
    %c3 = arith.constant 3 : index
    %c0_12 = arith.constant 0 : index
    %c0_13 = arith.constant 0 : index
    %18 = vector.load %arg2[%c3, %c0_12, %c0_13] : memref<8x128x4xf32, #tpu.memory_space<vmem>>, vector<1x128x4xf32>
    %19 = vector.shape_cast %18 : vector<1x128x4xf32> to vector<128x4xf32>
    %20 = vector.extract_strided_slice %1 {offsets = [0, 3], sizes = [4, 128], strides = [1, 1]} : vector<4x240xf32> to vector<4x128xf32>
    %cst_14 = arith.constant dense<0.000000e+00> : vector<128x128xf32>
    %21 = tpu.matmul %19, %20, %cst_14 {dimension_numbers = #tpu.dot_dimension_numbers<[1], [0], [0], [1], [0, 0, 1, 1], [], []>} : vector<128x4xf32>, vector<4x128xf32>, vector<128x128xf32> -> vector<128x128xf32>
    %22 = arith.addf %17, %21 : vector<128x128xf32>
    %c4 = arith.constant 4 : index
    %c0_15 = arith.constant 0 : index
    %c0_16 = arith.constant 0 : index
    %23 = vector.load %arg2[%c4, %c0_15, %c0_16] : memref<8x128x4xf32, #tpu.memory_space<vmem>>, vector<1x128x4xf32>
    %24 = vector.shape_cast %23 : vector<1x128x4xf32> to vector<128x4xf32>
    %25 = vector.extract_strided_slice %1 {offsets = [0, 4], sizes = [4, 128], strides = [1, 1]} : vector<4x240xf32> to vector<4x128xf32>
    %cst_17 = arith.constant dense<0.000000e+00> : vector<128x128xf32>
    %26 = tpu.matmul %24, %25, %cst_17 {dimension_numbers = #tpu.dot_dimension_numbers<[1], [0], [0], [1], [0, 0, 1, 1], [], []>} : vector<128x4xf32>, vector<4x128xf32>, vector<128x128xf32> -> vector<128x128xf32>
    %27 = arith.addf %22, %26 : vector<128x128xf32>
    %c5 = arith.constant 5 : index
    %c0_18 = arith.constant 0 : index
    %c0_19 = arith.constant 0 : index
    %28 = vector.load %arg2[%c5, %c0_18, %c0_19] : memref<8x128x4xf32, #tpu.memory_space<vmem>>, vector<1x128x4xf32>
    %29 = vector.shape_cast %28 : vector<1x128x4xf32> to vector<128x4xf32>
    %30 = vector.extract_strided_slice %1 {offsets = [0, 5], sizes = [4, 128], strides = [1, 1]} : vector<4x240xf32> to vector<4x128xf32>
    %cst_20 = arith.constant dense<0.000000e+00> : vector<128x128xf32>
    %31 = tpu.matmul %29, %30, %cst_20 {dimension_numbers = #tpu.dot_dimension_numbers<[1], [0], [0], [1], [0, 0, 1, 1], [], []>} : vector<128x4xf32>, vector<4x128xf32>, vector<128x128xf32> -> vector<128x128xf32>
    %32 = arith.addf %27, %31 : vector<128x128xf32>
    %c6 = arith.constant 6 : index
    %c0_21 = arith.constant 0 : index
    %c0_22 = arith.constant 0 : index
    %33 = vector.load %arg2[%c6, %c0_21, %c0_22] : memref<8x128x4xf32, #tpu.memory_space<vmem>>, vector<1x128x4xf32>
    %34 = vector.shape_cast %33 : vector<1x128x4xf32> to vector<128x4xf32>
    %35 = vector.extract_strided_slice %1 {offsets = [0, 6], sizes = [4, 128], strides = [1, 1]} : vector<4x240xf32> to vector<4x128xf32>
    %cst_23 = arith.constant dense<0.000000e+00> : vector<128x128xf32>
    %36 = tpu.matmul %34, %35, %cst_23 {dimension_numbers = #tpu.dot_dimension_numbers<[1], [0], [0], [1], [0, 0, 1, 1], [], []>} : vector<128x4xf32>, vector<4x128xf32>, vector<128x128xf32> -> vector<128x128xf32>
    %37 = arith.addf %32, %36 : vector<128x128xf32>
    %c7 = arith.constant 7 : index
    %c0_24 = arith.constant 0 : index
    %c0_25 = arith.constant 0 : index
    %38 = vector.load %arg2[%c7, %c0_24, %c0_25] : memref<8x128x4xf32, #tpu.memory_space<vmem>>, vector<1x128x4xf32>
    %39 = vector.shape_cast %38 : vector<1x128x4xf32> to vector<128x4xf32>
    %40 = vector.extract_strided_slice %1 {offsets = [0, 7], sizes = [4, 128], strides = [1, 1]} : vector<4x240xf32> to vector<4x128xf32>
    %cst_26 = arith.constant dense<0.000000e+00> : vector<128x128xf32>
    %41 = tpu.matmul %39, %40, %cst_26 {dimension_numbers = #tpu.dot_dimension_numbers<[1], [0], [0], [1], [0, 0, 1, 1], [], []>} : vector<128x4xf32>, vector<4x128xf32>, vector<128x128xf32> -> vector<128x128xf32>
    %42 = arith.addf %37, %41 : vector<128x128xf32>
    %c0_27 = arith.constant 0 : index
    %c0_28 = arith.constant 0 : index
    %43 = vector.load %arg3[%c0_27, %c0_28] : memref<128x1xf32, #tpu.memory_space<vmem>>, vector<128x1xf32>
    %44 = vector.broadcast %43 : vector<128x1xf32> to vector<128x128xf32>
    %45 = arith.mulf %42, %44 : vector<128x128xf32>
    %c0_29 = arith.constant 0 : index
    %c0_30 = arith.constant 0 : index
    %46 = vector.load %arg4[%c0_29, %c0_30] : memref<128x1xf32, #tpu.memory_space<vmem>>, vector<128x1xf32>
    %47 = vector.broadcast %46 : vector<128x1xf32> to vector<128x128xf32>
    %48 = arith.addf %45, %47 : vector<128x128xf32>
    %cst_31 = arith.constant 0.000000e+00 : f32
    %49 = vector.broadcast %cst_31 : f32 to vector<128x128xf32>
    %50 = arith.maximumf %48, %49 : vector<128x128xf32>
    %c0_32 = arith.constant 0 : index
    %c0_33 = arith.constant 0 : index
    %51 = vector.load %arg17[%c0_32, %c0_33] : memref<128x233xf32, #tpu.memory_space<vmem>>, vector<128x128xf32>
    tpu.vector_store %arg17[%c0_32, %c0_33], %50 {strides = array<i32>} : memref<128x233xf32, #tpu.memory_space<vmem>>, vector<128x128xf32>,
    %cst_34 = arith.constant 0.000000e+00 : f32
    %52 = vector.broadcast %cst_34 : f32 to vector<128x105xf32>
    %c0_35 = arith.constant 0 : index
    %c0_36 = arith.constant 0 : index
    %c0_37 = arith.constant 0 : index
    %53 = vector.load %arg2[%c0_35, %c0_36, %c0_37] : memref<8x128x4xf32, #tpu.memory_space<vmem>>, vector<1x128x4xf32>
    %54 = vector.shape_cast %53 : vector<1x128x4xf32> to vector<128x4xf32>
    %55 = vector.extract_strided_slice %1 {offsets = [0, 128], sizes = [4, 105], strides = [1, 1]} : vector<4x240xf32> to vector<4x105xf32>
    %cst_38 = arith.constant dense<0.000000e+00> : vector<128x105xf32>
    %56 = tpu.matmul %54, %55, %cst_38 {dimension_numbers = #tpu.dot_dimension_numbers<[1], [0], [0], [1], [0, 0, 1, 1], [], []>} : vector<128x4xf32>, vector<4x105xf32>, vector<128x105xf32> -> vector<128x105xf32>
    %57 = arith.addf %52, %56 : vector<128x105xf32>
    %c1_39 = arith.constant 1 : index
    %c0_40 = arith.constant 0 : index
    %c0_41 = arith.constant 0 : index
    %58 = vector.load %arg2[%c1_39, %c0_40, %c0_41] : memref<8x128x4xf32, #tpu.memory_space<vmem>>, vector<1x128x4xf32>
    %59 = vector.shape_cast %58 : vector<1x128x4xf32> to vector<128x4xf32>
    %60 = vector.extract_strided_slice %1 {offsets = [0, 129], sizes = [4, 105], strides = [1, 1]} : vector<4x240xf32> to vector<4x105xf32>
    %cst_42 = arith.constant dense<0.000000e+00> : vector<128x105xf32>
    %61 = tpu.matmul %59, %60, %cst_42 {dimension_numbers = #tpu.dot_dimension_numbers<[1], [0], [0], [1], [0, 0, 1, 1], [], []>} : vector<128x4xf32>, vector<4x105xf32>, vector<128x105xf32> -> vector<128x105xf32>
    %62 = arith.addf %57, %61 : vector<128x105xf32>
    %c2_43 = arith.constant 2 : index
    %c0_44 = arith.constant 0 : index
    %c0_45 = arith.constant 0 : index
    %63 = vector.load %arg2[%c2_43, %c0_44, %c0_45] : memref<8x128x4xf32, #tpu.memory_space<vmem>>, vector<1x128x4xf32>
    %64 = vector.shape_cast %63 : vector<1x128x4xf32> to vector<128x4xf32>
    %65 = vector.extract_strided_slice %1 {offsets = [0, 130], sizes = [4, 105], strides = [1, 1]} : vector<4x240xf32> to vector<4x105xf32>
    %cst_46 = arith.constant dense<0.000000e+00> : vector<128x105xf32>
    %66 = tpu.matmul %64, %65, %cst_46 {dimension_numbers = #tpu.dot_dimension_numbers<[1], [0], [0], [1], [0, 0, 1, 1], [], []>} : vector<128x4xf32>, vector<4x105xf32>, vector<128x105xf32> -> vector<128x105xf32>
    %67 = arith.addf %62, %66 : vector<128x105xf32>
    %c3_47 = arith.constant 3 : index
    %c0_48 = arith.constant 0 : index
    %c0_49 = arith.constant 0 : index
    %68 = vector.load %arg2[%c3_47, %c0_48, %c0_49] : memref<8x128x4xf32, #tpu.memory_space<vmem>>, vector<1x128x4xf32>
    %69 = vector.shape_cast %68 : vector<1x128x4xf32> to vector<128x4xf32>
    %70 = vector.extract_strided_slice %1 {offsets = [0, 131], sizes = [4, 105], strides = [1, 1]} : vector<4x240xf32> to vector<4x105xf32>
    %cst_50 = arith.constant dense<0.000000e+00> : vector<128x105xf32>
    %71 = tpu.matmul %69, %70, %cst_50 {dimension_numbers = #tpu.dot_dimension_numbers<[1], [0], [0], [1], [0, 0, 1, 1], [], []>} : vector<128x4xf32>, vector<4x105xf32>, vector<128x105xf32> -> vector<128x105xf32>
    %72 = arith.addf %67, %71 : vector<128x105xf32>
    %c4_51 = arith.constant 4 : index
    %c0_52 = arith.constant 0 : index
    %c0_53 = arith.constant 0 : index
    %73 = vector.load %arg2[%c4_51, %c0_52, %c0_53] : memref<8x128x4xf32, #tpu.memory_space<vmem>>, vector<1x128x4xf32>
    %74 = vector.shape_cast %73 : vector<1x128x4xf32> to vector<128x4xf32>
    %75 = vector.extract_strided_slice %1 {offsets = [0, 132], sizes = [4, 105], strides = [1, 1]} : vector<4x240xf32> to vector<4x105xf32>
    %cst_54 = arith.constant dense<0.000000e+00> : vector<128x105xf32>
    %76 = tpu.matmul %74, %75, %cst_54 {dimension_numbers = #tpu.dot_dimension_numbers<[1], [0], [0], [1], [0, 0, 1, 1], [], []>} : vector<128x4xf32>, vector<4x105xf32>, vector<128x105xf32> -> vector<128x105xf32>
    %77 = arith.addf %72, %76 : vector<128x105xf32>
    %c5_55 = arith.constant 5 : index
    %c0_56 = arith.constant 0 : index
    %c0_57 = arith.constant 0 : index
    %78 = vector.load %arg2[%c5_55, %c0_56, %c0_57] : memref<8x128x4xf32, #tpu.memory_space<vmem>>, vector<1x128x4xf32>
    %79 = vector.shape_cast %78 : vector<1x128x4xf32> to vector<128x4xf32>
    %80 = vector.extract_strided_slice %1 {offsets = [0, 133], sizes = [4, 105], strides = [1, 1]} : vector<4x240xf32> to vector<4x105xf32>
    %cst_58 = arith.constant dense<0.000000e+00> : vector<128x105xf32>
    %81 = tpu.matmul %79, %80, %cst_58 {dimension_numbers = #tpu.dot_dimension_numbers<[1], [0], [0], [1], [0, 0, 1, 1], [], []>} : vector<128x4xf32>, vector<4x105xf32>, vector<128x105xf32> -> vector<128x105xf32>
    %82 = arith.addf %77, %81 : vector<128x105xf32>
    %c6_59 = arith.constant 6 : index
    %c0_60 = arith.constant 0 : index
    %c0_61 = arith.constant 0 : index
    %83 = vector.load %arg2[%c6_59, %c0_60, %c0_61] : memref<8x128x4xf32, #tpu.memory_space<vmem>>, vector<1x128x4xf32>
    %84 = vector.shape_cast %83 : vector<1x128x4xf32> to vector<128x4xf32>
    %85 = vector.extract_strided_slice %1 {offsets = [0, 134], sizes = [4, 105], strides = [1, 1]} : vector<4x240xf32> to vector<4x105xf32>
    %cst_62 = arith.constant dense<0.000000e+00> : vector<128x105xf32>
    %86 = tpu.matmul %84, %85, %cst_62 {dimension_numbers = #tpu.dot_dimension_numbers<[1], [0], [0], [1], [0, 0, 1, 1], [], []>} : vector<128x4xf32>, vector<4x105xf32>, vector<128x105xf32> -> vector<128x105xf32>
    %87 = arith.addf %82, %86 : vector<128x105xf32>
    %c7_63 = arith.constant 7 : index
    %c0_64 = arith.constant 0 : index
    %c0_65 = arith.constant 0 : index
    %88 = vector.load %arg2[%c7_63, %c0_64, %c0_65] : memref<8x128x4xf32, #tpu.memory_space<vmem>>, vector<1x128x4xf32>
    %89 = vector.shape_cast %88 : vector<1x128x4xf32> to vector<128x4xf32>
    %90 = vector.extract_strided_slice %1 {offsets = [0, 135], sizes = [4, 105], strides = [1, 1]} : vector<4x240xf32> to vector<4x105xf32>
    %cst_66 = arith.constant dense<0.000000e+00> : vector<128x105xf32>
    %91 = tpu.matmul %89, %90, %cst_66 {dimension_numbers = #tpu.dot_dimension_numbers<[1], [0], [0], [1], [0, 0, 1, 1], [], []>} : vector<128x4xf32>, vector<4x105xf32>, vector<128x105xf32> -> vector<128x105xf32>
    %92 = arith.addf %87, %91 : vector<128x105xf32>
    %c0_67 = arith.constant 0 : index
    %c0_68 = arith.constant 0 : index
    %93 = vector.load %arg3[%c0_67, %c0_68] : memref<128x1xf32, #tpu.memory_space<vmem>>, vector<128x1xf32>
    %94 = vector.broadcast %93 : vector<128x1xf32> to vector<128x105xf32>
    %95 = arith.mulf %92, %94 : vector<128x105xf32>
    %c0_69 = arith.constant 0 : index
    %c0_70 = arith.constant 0 : index
    %96 = vector.load %arg4[%c0_69, %c0_70] : memref<128x1xf32, #tpu.memory_space<vmem>>, vector<128x1xf32>
    %97 = vector.broadcast %96 : vector<128x1xf32> to vector<128x105xf32>
    %98 = arith.addf %95, %97 : vector<128x105xf32>
    %cst_71 = arith.constant 0.000000e+00 : f32
    %99 = vector.broadcast %cst_71 : f32 to vector<128x105xf32>
    %100 = arith.maximumf %98, %99 : vector<128x105xf32>
    %c0_72 = arith.constant 0 : index
    %c128 = arith.constant 128 : index
    %101 = vector.load %arg17[%c0_72, %c128] : memref<128x233xf32, #tpu.memory_space<vmem>>, vector<128x105xf32>
    tpu.vector_store %arg17[%c0_72, %c128], %100 {strides = array<i32>} : memref<128x233xf32, #tpu.memory_space<vmem>>, vector<128x105xf32>,
    %cst_73 = arith.constant 0.000000e+00 : f32
    %102 = vector.broadcast %cst_73 : f32 to vector<128x128xf32>
    %c0_74 = arith.constant 0 : index
    %c0_75 = arith.constant 0 : index
    %c0_76 = arith.constant 0 : index
    %103 = vector.load %arg5[%c0_74, %c0_75, %c0_76] : memref<5x256x128xf32, #tpu.memory_space<vmem>>, vector<1x128x128xf32>
    %104 = vector.shape_cast %103 : vector<1x128x128xf32> to vector<128x128xf32>
    %c0_77 = arith.constant 0 : index
    %c0_78 = arith.constant 0 : index
    %105 = vector.load %arg17[%c0_77, %c0_78] : memref<128x233xf32, #tpu.memory_space<vmem>>, vector<128x128xf32>
    %cst_79 = arith.constant dense<0.000000e+00> : vector<128x128xf32>
    %106 = tpu.matmul %104, %105, %cst_79 {dimension_numbers = #tpu.dot_dimension_numbers<[1], [0], [0], [1], [0, 0, 1, 1], [], []>} : vector<128x128xf32>, vector<128x128xf32>, vector<128x128xf32> -> vector<128x128xf32>
    %107 = arith.addf %102, %106 : vector<128x128xf32>
    %c1_80 = arith.constant 1 : index
    %c0_81 = arith.constant 0 : index
    %c0_82 = arith.constant 0 : index
    %108 = vector.load %arg5[%c1_80, %c0_81, %c0_82] : memref<5x256x128xf32, #tpu.memory_space<vmem>>, vector<1x128x128xf32>
    %109 = vector.shape_cast %108 : vector<1x128x128xf32> to vector<128x128xf32>
    %c0_83 = arith.constant 0 : index
    %c1_84 = arith.constant 1 : index
    %110 = vector.load %arg17[%c0_83, %c1_84] : memref<128x233xf32, #tpu.memory_space<vmem>>, vector<128x128xf32>
    %cst_85 = arith.constant dense<0.000000e+00> : vector<128x128xf32>
    %111 = tpu.matmul %109, %110, %cst_85 {dimension_numbers = #tpu.dot_dimension_numbers<[1], [0], [0], [1], [0, 0, 1, 1], [], []>} : vector<128x128xf32>, vector<128x128xf32>, vector<128x128xf32> -> vector<128x128xf32>
    %112 = arith.addf %107, %111 : vector<128x128xf32>
    %c2_86 = arith.constant 2 : index
    %c0_87 = arith.constant 0 : index
    %c0_88 = arith.constant 0 : index
    %113 = vector.load %arg5[%c2_86, %c0_87, %c0_88] : memref<5x256x128xf32, #tpu.memory_space<vmem>>, vector<1x128x128xf32>
    %114 = vector.shape_cast %113 : vector<1x128x128xf32> to vector<128x128xf32>
    %c0_89 = arith.constant 0 : index
    %c2_90 = arith.constant 2 : index
    %115 = vector.load %arg17[%c0_89, %c2_90] : memref<128x233xf32, #tpu.memory_space<vmem>>, vector<128x128xf32>
    %cst_91 = arith.constant dense<0.000000e+00> : vector<128x128xf32>
    %116 = tpu.matmul %114, %115, %cst_91 {dimension_numbers = #tpu.dot_dimension_numbers<[1], [0], [0], [1], [0, 0, 1, 1], [], []>} : vector<128x128xf32>, vector<128x128xf32>, vector<128x128xf32> -> vector<128x128xf32>
    %117 = arith.addf %112, %116 : vector<128x128xf32>
    %c3_92 = arith.constant 3 : index
    %c0_93 = arith.constant 0 : index
    %c0_94 = arith.constant 0 : index
    %118 = vector.load %arg5[%c3_92, %c0_93, %c0_94] : memref<5x256x128xf32, #tpu.memory_space<vmem>>, vector<1x128x128xf32>
    %119 = vector.shape_cast %118 : vector<1x128x128xf32> to vector<128x128xf32>
    %c0_95 = arith.constant 0 : index
    %c3_96 = arith.constant 3 : index
    %120 = vector.load %arg17[%c0_95, %c3_96] : memref<128x233xf32, #tpu.memory_space<vmem>>, vector<128x128xf32>
    %cst_97 = arith.constant dense<0.000000e+00> : vector<128x128xf32>
    %121 = tpu.matmul %119, %120, %cst_97 {dimension_numbers = #tpu.dot_dimension_numbers<[1], [0], [0], [1], [0, 0, 1, 1], [], []>} : vector<128x128xf32>, vector<128x128xf32>, vector<128x128xf32> -> vector<128x128xf32>
    %122 = arith.addf %117, %121 : vector<128x128xf32>
    %c4_98 = arith.constant 4 : index
    %c0_99 = arith.constant 0 : index
    %c0_100 = arith.constant 0 : index
    %123 = vector.load %arg5[%c4_98, %c0_99, %c0_100] : memref<5x256x128xf32, #tpu.memory_space<vmem>>, vector<1x128x128xf32>
    %124 = vector.shape_cast %123 : vector<1x128x128xf32> to vector<128x128xf32>
    %c0_101 = arith.constant 0 : index
    %c4_102 = arith.constant 4 : index
    %125 = vector.load %arg17[%c0_101, %c4_102] : memref<128x233xf32, #tpu.memory_space<vmem>>, vector<128x128xf32>
    %cst_103 = arith.constant dense<0.000000e+00> : vector<128x128xf32>
    %126 = tpu.matmul %124, %125, %cst_103 {dimension_numbers = #tpu.dot_dimension_numbers<[1], [0], [0], [1], [0, 0, 1, 1], [], []>} : vector<128x128xf32>, vector<128x128xf32>, vector<128x128xf32> -> vector<128x128xf32>
    %127 = arith.addf %122, %126 : vector<128x128xf32>
    %c0_104 = arith.constant 0 : index
    %c0_105 = arith.constant 0 : index
    %128 = vector.load %arg6[%c0_104, %c0_105] : memref<256x1xf32, #tpu.memory_space<vmem>>, vector<128x1xf32>
    %129 = vector.broadcast %128 : vector<128x1xf32> to vector<128x128xf32>
    %130 = arith.mulf %127, %129 : vector<128x128xf32>
    %c0_106 = arith.constant 0 : index
    %c0_107 = arith.constant 0 : index
    %131 = vector.load %arg7[%c0_106, %c0_107] : memref<256x1xf32, #tpu.memory_space<vmem>>, vector<128x1xf32>
    %132 = vector.broadcast %131 : vector<128x1xf32> to vector<128x128xf32>
    %133 = arith.addf %130, %132 : vector<128x128xf32>
    %cst_108 = arith.constant 0.000000e+00 : f32
    %134 = vector.broadcast %cst_108 : f32 to vector<128x128xf32>
    %135 = arith.maximumf %133, %134 : vector<128x128xf32>
    %c0_109 = arith.constant 0 : index
    %c0_110 = arith.constant 0 : index
    %136 = vector.load %arg18[%c0_109, %c0_110] : memref<256x229xf32, #tpu.memory_space<vmem>>, vector<128x128xf32>
    tpu.vector_store %arg18[%c0_109, %c0_110], %135 {strides = array<i32>} : memref<256x229xf32, #tpu.memory_space<vmem>>, vector<128x128xf32>,
    %cst_111 = arith.constant 0.000000e+00 : f32
    %137 = vector.broadcast %cst_111 : f32 to vector<128x101xf32>
    %c0_112 = arith.constant 0 : index
    %c0_113 = arith.constant 0 : index
    %c0_114 = arith.constant 0 : index
    %138 = vector.load %arg5[%c0_112, %c0_113, %c0_114] : memref<5x256x128xf32, #tpu.memory_space<vmem>>, vector<1x128x128xf32>
    %139 = vector.shape_cast %138 : vector<1x128x128xf32> to vector<128x128xf32>
    %c0_115 = arith.constant 0 : index
    %c128_116 = arith.constant 128 : index
    %140 = vector.load %arg17[%c0_115, %c128_116] : memref<128x233xf32, #tpu.memory_space<vmem>>, vector<128x101xf32>
    %cst_117 = arith.constant dense<0.000000e+00> : vector<128x101xf32>
    %141 = tpu.matmul %139, %140, %cst_117 {dimension_numbers = #tpu.dot_dimension_numbers<[1], [0], [0], [1], [0, 0, 1, 1], [], []>} : vector<128x128xf32>, vector<128x101xf32>, vector<128x101xf32> -> vector<128x101xf32>
    %142 = arith.addf %137, %141 : vector<128x101xf32>
    %c1_118 = arith.constant 1 : index
    %c0_119 = arith.constant 0 : index
    %c0_120 = arith.constant 0 : index
    %143 = vector.load %arg5[%c1_118, %c0_119, %c0_120] : memref<5x256x128xf32, #tpu.memory_space<vmem>>, vector<1x128x128xf32>
    %144 = vector.shape_cast %143 : vector<1x128x128xf32> to vector<128x128xf32>
    %c0_121 = arith.constant 0 : index
    %c129 = arith.constant 129 : index
    %145 = vector.load %arg17[%c0_121, %c129] : memref<128x233xf32, #tpu.memory_space<vmem>>, vector<128x101xf32>
    %cst_122 = arith.constant dense<0.000000e+00> : vector<128x101xf32>
    %146 = tpu.matmul %144, %145, %cst_122 {dimension_numbers = #tpu.dot_dimension_numbers<[1], [0], [0], [1], [0, 0, 1, 1], [], []>} : vector<128x128xf32>, vector<128x101xf32>, vector<128x101xf32> -> vector<128x101xf32>
    %147 = arith.addf %142, %146 : vector<128x101xf32>
    %c2_123 = arith.constant 2 : index
    %c0_124 = arith.constant 0 : index
    %c0_125 = arith.constant 0 : index
    %148 = vector.load %arg5[%c2_123, %c0_124, %c0_125] : memref<5x256x128xf32, #tpu.memory_space<vmem>>, vector<1x128x128xf32>
    %149 = vector.shape_cast %148 : vector<1x128x128xf32> to vector<128x128xf32>
    %c0_126 = arith.constant 0 : index
    %c130 = arith.constant 130 : index
    %150 = vector.load %arg17[%c0_126, %c130] : memref<128x233xf32, #tpu.memory_space<vmem>>, vector<128x101xf32>
    %cst_127 = arith.constant dense<0.000000e+00> : vector<128x101xf32>
    %151 = tpu.matmul %149, %150, %cst_127 {dimension_numbers = #tpu.dot_dimension_numbers<[1], [0], [0], [1], [0, 0, 1, 1], [], []>} : vector<128x128xf32>, vector<128x101xf32>, vector<128x101xf32> -> vector<128x101xf32>
    %152 = arith.addf %147, %151 : vector<128x101xf32>
    %c3_128 = arith.constant 3 : index
    %c0_129 = arith.constant 0 : index
    %c0_130 = arith.constant 0 : index
    %153 = vector.load %arg5[%c3_128, %c0_129, %c0_130] : memref<5x256x128xf32, #tpu.memory_space<vmem>>, vector<1x128x128xf32>
    %154 = vector.shape_cast %153 : vector<1x128x128xf32> to vector<128x128xf32>
    %c0_131 = arith.constant 0 : index
    %c131 = arith.constant 131 : index
    %155 = vector.load %arg17[%c0_131, %c131] : memref<128x233xf32, #tpu.memory_space<vmem>>, vector<128x101xf32>
    %cst_132 = arith.constant dense<0.000000e+00> : vector<128x101xf32>
    %156 = tpu.matmul %154, %155, %cst_132 {dimension_numbers = #tpu.dot_dimension_numbers<[1], [0], [0], [1], [0, 0, 1, 1], [], []>} : vector<128x128xf32>, vector<128x101xf32>, vector<128x101xf32> -> vector<128x101xf32>
    %157 = arith.addf %152, %156 : vector<128x101xf32>
    %c4_133 = arith.constant 4 : index
    %c0_134 = arith.constant 0 : index
    %c0_135 = arith.constant 0 : index
    %158 = vector.load %arg5[%c4_133, %c0_134, %c0_135] : memref<5x256x128xf32, #tpu.memory_space<vmem>>, vector<1x128x128xf32>
    %159 = vector.shape_cast %158 : vector<1x128x128xf32> to vector<128x128xf32>
    %c0_136 = arith.constant 0 : index
    %c132 = arith.constant 132 : index
    %160 = vector.load %arg17[%c0_136, %c132] : memref<128x233xf32, #tpu.memory_space<vmem>>, vector<128x101xf32>
    %cst_137 = arith.constant dense<0.000000e+00> : vector<128x101xf32>
    %161 = tpu.matmul %159, %160, %cst_137 {dimension_numbers = #tpu.dot_dimension_numbers<[1], [0], [0], [1], [0, 0, 1, 1], [], []>} : vector<128x128xf32>, vector<128x101xf32>, vector<128x101xf32> -> vector<128x101xf32>
    %162 = arith.addf %157, %161 : vector<128x101xf32>
    %c0_138 = arith.constant 0 : index
    %c0_139 = arith.constant 0 : index
    %163 = vector.load %arg6[%c0_138, %c0_139] : memref<256x1xf32, #tpu.memory_space<vmem>>, vector<128x1xf32>
    %164 = vector.broadcast %163 : vector<128x1xf32> to vector<128x101xf32>
    %165 = arith.mulf %162, %164 : vector<128x101xf32>
    %c0_140 = arith.constant 0 : index
    %c0_141 = arith.constant 0 : index
    %166 = vector.load %arg7[%c0_140, %c0_141] : memref<256x1xf32, #tpu.memory_space<vmem>>, vector<128x1xf32>
    %167 = vector.broadcast %166 : vector<128x1xf32> to vector<128x101xf32>
    %168 = arith.addf %165, %167 : vector<128x101xf32>
    %cst_142 = arith.constant 0.000000e+00 : f32
    %169 = vector.broadcast %cst_142 : f32 to vector<128x101xf32>
    %170 = arith.maximumf %168, %169 : vector<128x101xf32>
    %c0_143 = arith.constant 0 : index
    %c128_144 = arith.constant 128 : index
    %171 = vector.load %arg18[%c0_143, %c128_144] : memref<256x229xf32, #tpu.memory_space<vmem>>, vector<128x101xf32>
    tpu.vector_store %arg18[%c0_143, %c128_144], %170 {strides = array<i32>} : memref<256x229xf32, #tpu.memory_space<vmem>>, vector<128x101xf32>,
    %cst_145 = arith.constant 0.000000e+00 : f32
    %172 = vector.broadcast %cst_145 : f32 to vector<128x128xf32>
    %c0_146 = arith.constant 0 : index
    %c128_147 = arith.constant 128 : index
    %c0_148 = arith.constant 0 : index
    %173 = vector.load %arg5[%c0_146, %c128_147, %c0_148] : memref<5x256x128xf32, #tpu.memory_space<vmem>>, vector<1x128x128xf32>
    %174 = vector.shape_cast %173 : vector<1x128x128xf32> to vector<128x128xf32>
    %c0_149 = arith.constant 0 : index
    %c0_150 = arith.constant 0 : index
    %175 = vector.load %arg17[%c0_149, %c0_150] : memref<128x233xf32, #tpu.memory_space<vmem>>, vector<128x128xf32>
    %cst_151 = arith.constant dense<0.000000e+00> : vector<128x128xf32>
    %176 = tpu.matmul %174, %175, %cst_151 {dimension_numbers = #tpu.dot_dimension_numbers<[1], [0], [0], [1], [0, 0, 1, 1], [], []>} : vector<128x128xf32>, vector<128x128xf32>, vector<128x128xf32> -> vector<128x128xf32>
    %177 = arith.addf %172, %176 : vector<128x128xf32>
    %c1_152 = arith.constant 1 : index
    %c128_153 = arith.constant 128 : index
    %c0_154 = arith.constant 0 : index
    %178 = vector.load %arg5[%c1_152, %c128_153, %c0_154] : memref<5x256x128xf32, #tpu.memory_space<vmem>>, vector<1x128x128xf32>
    %179 = vector.shape_cast %178 : vector<1x128x128xf32> to vector<128x128xf32>
    %c0_155 = arith.constant 0 : index
    %c1_156 = arith.constant 1 : index
    %180 = vector.load %arg17[%c0_155, %c1_156] : memref<128x233xf32, #tpu.memory_space<vmem>>, vector<128x128xf32>
    %cst_157 = arith.constant dense<0.000000e+00> : vector<128x128xf32>
    %181 = tpu.matmul %179, %180, %cst_157 {dimension_numbers = #tpu.dot_dimension_numbers<[1], [0], [0], [1], [0, 0, 1, 1], [], []>} : vector<128x128xf32>, vector<128x128xf32>, vector<128x128xf32> -> vector<128x128xf32>
    %182 = arith.addf %177, %181 : vector<128x128xf32>
    %c2_158 = arith.constant 2 : index
    %c128_159 = arith.constant 128 : index
    %c0_160 = arith.constant 0 : index
    %183 = vector.load %arg5[%c2_158, %c128_159, %c0_160] : memref<5x256x128xf32, #tpu.memory_space<vmem>>, vector<1x128x128xf32>
    %184 = vector.shape_cast %183 : vector<1x128x128xf32> to vector<128x128xf32>
    %c0_161 = arith.constant 0 : index
    %c2_162 = arith.constant 2 : index
    %185 = vector.load %arg17[%c0_161, %c2_162] : memref<128x233xf32, #tpu.memory_space<vmem>>, vector<128x128xf32>
    %cst_163 = arith.constant dense<0.000000e+00> : vector<128x128xf32>
    %186 = tpu.matmul %184, %185, %cst_163 {dimension_numbers = #tpu.dot_dimension_numbers<[1], [0], [0], [1], [0, 0, 1, 1], [], []>} : vector<128x128xf32>, vector<128x128xf32>, vector<128x128xf32> -> vector<128x128xf32>
    %187 = arith.addf %182, %186 : vector<128x128xf32>
    %c3_164 = arith.constant 3 : index
    %c128_165 = arith.constant 128 : index
    %c0_166 = arith.constant 0 : index
    %188 = vector.load %arg5[%c3_164, %c128_165, %c0_166] : memref<5x256x128xf32, #tpu.memory_space<vmem>>, vector<1x128x128xf32>
    %189 = vector.shape_cast %188 : vector<1x128x128xf32> to vector<128x128xf32>
    %c0_167 = arith.constant 0 : index
    %c3_168 = arith.constant 3 : index
    %190 = vector.load %arg17[%c0_167, %c3_168] : memref<128x233xf32, #tpu.memory_space<vmem>>, vector<128x128xf32>
    %cst_169 = arith.constant dense<0.000000e+00> : vector<128x128xf32>
    %191 = tpu.matmul %189, %190, %cst_169 {dimension_numbers = #tpu.dot_dimension_numbers<[1], [0], [0], [1], [0, 0, 1, 1], [], []>} : vector<128x128xf32>, vector<128x128xf32>, vector<128x128xf32> -> vector<128x128xf32>
    %192 = arith.addf %187, %191 : vector<128x128xf32>
    %c4_170 = arith.constant 4 : index
    %c128_171 = arith.constant 128 : index
    %c0_172 = arith.constant 0 : index
    %193 = vector.load %arg5[%c4_170, %c128_171, %c0_172] : memref<5x256x128xf32, #tpu.memory_space<vmem>>, vector<1x128x128xf32>
    %194 = vector.shape_cast %193 : vector<1x128x128xf32> to vector<128x128xf32>
    %c0_173 = arith.constant 0 : index
    %c4_174 = arith.constant 4 : index
    %195 = vector.load %arg17[%c0_173, %c4_174] : memref<128x233xf32, #tpu.memory_space<vmem>>, vector<128x128xf32>
    %cst_175 = arith.constant dense<0.000000e+00> : vector<128x128xf32>
    %196 = tpu.matmul %194, %195, %cst_175 {dimension_numbers = #tpu.dot_dimension_numbers<[1], [0], [0], [1], [0, 0, 1, 1], [], []>} : vector<128x128xf32>, vector<128x128xf32>, vector<128x128xf32> -> vector<128x128xf32>
    %197 = arith.addf %192, %196 : vector<128x128xf32>
    %c128_176 = arith.constant 128 : index
    %c0_177 = arith.constant 0 : index
    %198 = vector.load %arg6[%c128_176, %c0_177] : memref<256x1xf32, #tpu.memory_space<vmem>>, vector<128x1xf32>
    %199 = vector.broadcast %198 : vector<128x1xf32> to vector<128x128xf32>
    %200 = arith.mulf %197, %199 : vector<128x128xf32>
    %c128_178 = arith.constant 128 : index
    %c0_179 = arith.constant 0 : index
    %201 = vector.load %arg7[%c128_178, %c0_179] : memref<256x1xf32, #tpu.memory_space<vmem>>, vector<128x1xf32>
    %202 = vector.broadcast %201 : vector<128x1xf32> to vector<128x128xf32>
    %203 = arith.addf %200, %202 : vector<128x128xf32>
    %cst_180 = arith.constant 0.000000e+00 : f32
    %204 = vector.broadcast %cst_180 : f32 to vector<128x128xf32>
    %205 = arith.maximumf %203, %204 : vector<128x128xf32>
    %c128_181 = arith.constant 128 : index
    %c0_182 = arith.constant 0 : index
    %206 = vector.load %arg18[%c128_181, %c0_182] : memref<256x229xf32, #tpu.memory_space<vmem>>, vector<128x128xf32>
    tpu.vector_store %arg18[%c128_181, %c0_182], %205 {strides = array<i32>} : memref<256x229xf32, #tpu.memory_space<vmem>>, vector<128x128xf32>,
    %cst_183 = arith.constant 0.000000e+00 : f32
    %207 = vector.broadcast %cst_183 : f32 to vector<128x101xf32>
    %c0_184 = arith.constant 0 : index
    %c128_185 = arith.constant 128 : index
    %c0_186 = arith.constant 0 : index
    %208 = vector.load %arg5[%c0_184, %c128_185, %c0_186] : memref<5x256x128xf32, #tpu.memory_space<vmem>>, vector<1x128x128xf32>
    %209 = vector.shape_cast %208 : vector<1x128x128xf32> to vector<128x128xf32>
    %c0_187 = arith.constant 0 : index
    %c128_188 = arith.constant 128 : index
    %210 = vector.load %arg17[%c0_187, %c128_188] : memref<128x233xf32, #tpu.memory_space<vmem>>, vector<128x101xf32>
    %cst_189 = arith.constant dense<0.000000e+00> : vector<128x101xf32>
    %211 = tpu.matmul %209, %210, %cst_189 {dimension_numbers = #tpu.dot_dimension_numbers<[1], [0], [0], [1], [0, 0, 1, 1], [], []>} : vector<128x128xf32>, vector<128x101xf32>, vector<128x101xf32> -> vector<128x101xf32>
    %212 = arith.addf %207, %211 : vector<128x101xf32>
    %c1_190 = arith.constant 1 : index
    %c128_191 = arith.constant 128 : index
    %c0_192 = arith.constant 0 : index
    %213 = vector.load %arg5[%c1_190, %c128_191, %c0_192] : memref<5x256x128xf32, #tpu.memory_space<vmem>>, vector<1x128x128xf32>
    %214 = vector.shape_cast %213 : vector<1x128x128xf32> to vector<128x128xf32>
    %c0_193 = arith.constant 0 : index
    %c129_194 = arith.constant 129 : index
    %215 = vector.load %arg17[%c0_193, %c129_194] : memref<128x233xf32, #tpu.memory_space<vmem>>, vector<128x101xf32>
    %cst_195 = arith.constant dense<0.000000e+00> : vector<128x101xf32>
    %216 = tpu.matmul %214, %215, %cst_195 {dimension_numbers = #tpu.dot_dimension_numbers<[1], [0], [0], [1], [0, 0, 1, 1], [], []>} : vector<128x128xf32>, vector<128x101xf32>, vector<128x101xf32> -> vector<128x101xf32>
    %217 = arith.addf %212, %216 : vector<128x101xf32>
    %c2_196 = arith.constant 2 : index
    %c128_197 = arith.constant 128 : index
    %c0_198 = arith.constant 0 : index
    %218 = vector.load %arg5[%c2_196, %c128_197, %c0_198] : memref<5x256x128xf32, #tpu.memory_space<vmem>>, vector<1x128x128xf32>
    %219 = vector.shape_cast %218 : vector<1x128x128xf32> to vector<128x128xf32>
    %c0_199 = arith.constant 0 : index
    %c130_200 = arith.constant 130 : index
    %220 = vector.load %arg17[%c0_199, %c130_200] : memref<128x233xf32, #tpu.memory_space<vmem>>, vector<128x101xf32>
    %cst_201 = arith.constant dense<0.000000e+00> : vector<128x101xf32>
    %221 = tpu.matmul %219, %220, %cst_201 {dimension_numbers = #tpu.dot_dimension_numbers<[1], [0], [0], [1], [0, 0, 1, 1], [], []>} : vector<128x128xf32>, vector<128x101xf32>, vector<128x101xf32> -> vector<128x101xf32>
    %222 = arith.addf %217, %221 : vector<128x101xf32>
    %c3_202 = arith.constant 3 : index
    %c128_203 = arith.constant 128 : index
    %c0_204 = arith.constant 0 : index
    %223 = vector.load %arg5[%c3_202, %c128_203, %c0_204] : memref<5x256x128xf32, #tpu.memory_space<vmem>>, vector<1x128x128xf32>
    %224 = vector.shape_cast %223 : vector<1x128x128xf32> to vector<128x128xf32>
    %c0_205 = arith.constant 0 : index
    %c131_206 = arith.constant 131 : index
    %225 = vector.load %arg17[%c0_205, %c131_206] : memref<128x233xf32, #tpu.memory_space<vmem>>, vector<128x101xf32>
    %cst_207 = arith.constant dense<0.000000e+00> : vector<128x101xf32>
    %226 = tpu.matmul %224, %225, %cst_207 {dimension_numbers = #tpu.dot_dimension_numbers<[1], [0], [0], [1], [0, 0, 1, 1], [], []>} : vector<128x128xf32>, vector<128x101xf32>, vector<128x101xf32> -> vector<128x101xf32>
    %227 = arith.addf %222, %226 : vector<128x101xf32>
    %c4_208 = arith.constant 4 : index
    %c128_209 = arith.constant 128 : index
    %c0_210 = arith.constant 0 : index
    %228 = vector.load %arg5[%c4_208, %c128_209, %c0_210] : memref<5x256x128xf32, #tpu.memory_space<vmem>>, vector<1x128x128xf32>
    %229 = vector.shape_cast %228 : vector<1x128x128xf32> to vector<128x128xf32>
    %c0_211 = arith.constant 0 : index
    %c132_212 = arith.constant 132 : index
    %230 = vector.load %arg17[%c0_211, %c132_212] : memref<128x233xf32, #tpu.memory_space<vmem>>, vector<128x101xf32>
    %cst_213 = arith.constant dense<0.000000e+00> : vector<128x101xf32>
    %231 = tpu.matmul %229, %230, %cst_213 {dimension_numbers = #tpu.dot_dimension_numbers<[1], [0], [0], [1], [0, 0, 1, 1], [], []>} : vector<128x128xf32>, vector<128x101xf32>, vector<128x101xf32> -> vector<128x101xf32>
    %232 = arith.addf %227, %231 : vector<128x101xf32>
    %c128_214 = arith.constant 128 : index
    %c0_215 = arith.constant 0 : index
    %233 = vector.load %arg6[%c128_214, %c0_215] : memref<256x1xf32, #tpu.memory_space<vmem>>, vector<128x1xf32>
    %234 = vector.broadcast %233 : vector<128x1xf32> to vector<128x101xf32>
    %235 = arith.mulf %232, %234 : vector<128x101xf32>
    %c128_216 = arith.constant 128 : index
    %c0_217 = arith.constant 0 : index
    %236 = vector.load %arg7[%c128_216, %c0_217] : memref<256x1xf32, #tpu.memory_space<vmem>>, vector<128x1xf32>
    %237 = vector.broadcast %236 : vector<128x1xf32> to vector<128x101xf32>
    %238 = arith.addf %235, %237 : vector<128x101xf32>
    %cst_218 = arith.constant 0.000000e+00 : f32
    %239 = vector.broadcast %cst_218 : f32 to vector<128x101xf32>
    %240 = arith.maximumf %238, %239 : vector<128x101xf32>
    %c128_219 = arith.constant 128 : index
    %c128_220 = arith.constant 128 : index
    %241 = vector.load %arg18[%c128_219, %c128_220] : memref<256x229xf32, #tpu.memory_space<vmem>>, vector<128x101xf32>
    tpu.vector_store %arg18[%c128_219, %c128_220], %240 {strides = array<i32>} : memref<256x229xf32, #tpu.memory_space<vmem>>, vector<128x101xf32>,
    %cst_221 = arith.constant 0.000000e+00 : f32
    %242 = vector.broadcast %cst_221 : f32 to vector<1x128xf32>
    %cst_222 = arith.constant 0.000000e+00 : f32
    %243 = vector.broadcast %cst_222 : f32 to vector<128x128xf32>
    %c0_223 = arith.constant 0 : index
    %c0_224 = arith.constant 0 : index
    %c0_225 = arith.constant 0 : index
    %244 = vector.load %arg8[%c0_223, %c0_224, %c0_225] : memref<3x128x256xf32, #tpu.memory_space<vmem>>, vector<1x128x256xf32>
    %245 = vector.shape_cast %244 : vector<1x128x256xf32> to vector<128x256xf32>
    %c0_226 = arith.constant 0 : index
    %c0_227 = arith.constant 0 : index
    %246 = vector.load %arg18[%c0_226, %c0_227] : memref<256x229xf32, #tpu.memory_space<vmem>>, vector<256x128xf32>
    %cst_228 = arith.constant dense<0.000000e+00> : vector<128x128xf32>
    %247 = tpu.matmul %245, %246, %cst_228 {dimension_numbers = #tpu.dot_dimension_numbers<[1], [0], [0], [1], [0, 0, 1, 1], [], []>} : vector<128x256xf32>, vector<256x128xf32>, vector<128x128xf32> -> vector<128x128xf32>
    %248 = arith.addf %243, %247 : vector<128x128xf32>
    %c1_229 = arith.constant 1 : index
    %c0_230 = arith.constant 0 : index
    %c0_231 = arith.constant 0 : index
    %249 = vector.load %arg8[%c1_229, %c0_230, %c0_231] : memref<3x128x256xf32, #tpu.memory_space<vmem>>, vector<1x128x256xf32>
    %250 = vector.shape_cast %249 : vector<1x128x256xf32> to vector<128x256xf32>
    %c0_232 = arith.constant 0 : index
    %c1_233 = arith.constant 1 : index
    %251 = vector.load %arg18[%c0_232, %c1_233] : memref<256x229xf32, #tpu.memory_space<vmem>>, vector<256x128xf32>
    %cst_234 = arith.constant dense<0.000000e+00> : vector<128x128xf32>
    %252 = tpu.matmul %250, %251, %cst_234 {dimension_numbers = #tpu.dot_dimension_numbers<[1], [0], [0], [1], [0, 0, 1, 1], [], []>} : vector<128x256xf32>, vector<256x128xf32>, vector<128x128xf32> -> vector<128x128xf32>
    %253 = arith.addf %248, %252 : vector<128x128xf32>
    %c2_235 = arith.constant 2 : index
    %c0_236 = arith.constant 0 : index
    %c0_237 = arith.constant 0 : index
    %254 = vector.load %arg8[%c2_235, %c0_236, %c0_237] : memref<3x128x256xf32, #tpu.memory_space<vmem>>, vector<1x128x256xf32>
    %255 = vector.shape_cast %254 : vector<1x128x256xf32> to vector<128x256xf32>
    %c0_238 = arith.constant 0 : index
    %c2_239 = arith.constant 2 : index
    %256 = vector.load %arg18[%c0_238, %c2_239] : memref<256x229xf32, #tpu.memory_space<vmem>>, vector<256x128xf32>
    %cst_240 = arith.constant dense<0.000000e+00> : vector<128x128xf32>
    %257 = tpu.matmul %255, %256, %cst_240 {dimension_numbers = #tpu.dot_dimension_numbers<[1], [0], [0], [1], [0, 0, 1, 1], [], []>} : vector<128x256xf32>, vector<256x128xf32>, vector<128x128xf32> -> vector<128x128xf32>
    %258 = arith.addf %253, %257 : vector<128x128xf32>
    %c0_241 = arith.constant 0 : index
    %c0_242 = arith.constant 0 : index
    %259 = vector.load %arg9[%c0_241, %c0_242] : memref<128x1xf32, #tpu.memory_space<vmem>>, vector<128x1xf32>
    %260 = vector.broadcast %259 : vector<128x1xf32> to vector<128x128xf32>
    %261 = arith.mulf %258, %260 : vector<128x128xf32>
    %c0_243 = arith.constant 0 : index
    %c0_244 = arith.constant 0 : index
    %262 = vector.load %arg10[%c0_243, %c0_244] : memref<128x1xf32, #tpu.memory_space<vmem>>, vector<128x1xf32>
    %263 = vector.broadcast %262 : vector<128x1xf32> to vector<128x128xf32>
    %264 = arith.addf %261, %263 : vector<128x128xf32>
    %cst_245 = arith.constant 0.000000e+00 : f32
    %265 = vector.broadcast %cst_245 : f32 to vector<128x128xf32>
    %266 = arith.maximumf %264, %265 : vector<128x128xf32>
    %267 = vector.shape_cast %266 : vector<128x128xf32> to vector<1x128x128xf32>
    %cst_246 = arith.constant dense<0.000000e+00> : vector<1x128xf32>
    %268 = vector.multi_reduction <add>, %267, %cst_246 [2] : vector<1x128x128xf32> to vector<1x128xf32>
    %269 = arith.addf %242, %268 : vector<1x128xf32>
    %cst_247 = arith.constant 0.000000e+00 : f32
    %270 = vector.broadcast %cst_247 : f32 to vector<128x99xf32>
    %c0_248 = arith.constant 0 : index
    %c0_249 = arith.constant 0 : index
    %c0_250 = arith.constant 0 : index
    %271 = vector.load %arg8[%c0_248, %c0_249, %c0_250] : memref<3x128x256xf32, #tpu.memory_space<vmem>>, vector<1x128x256xf32>
    %272 = vector.shape_cast %271 : vector<1x128x256xf32> to vector<128x256xf32>
    %c0_251 = arith.constant 0 : index
    %c128_252 = arith.constant 128 : index
    %273 = vector.load %arg18[%c0_251, %c128_252] : memref<256x229xf32, #tpu.memory_space<vmem>>, vector<256x99xf32>
    %cst_253 = arith.constant dense<0.000000e+00> : vector<128x99xf32>
    %274 = tpu.matmul %272, %273, %cst_253 {dimension_numbers = #tpu.dot_dimension_numbers<[1], [0], [0], [1], [0, 0, 1, 1], [], []>} : vector<128x256xf32>, vector<256x99xf32>, vector<128x99xf32> -> vector<128x99xf32>
    %275 = arith.addf %270, %274 : vector<128x99xf32>
    %c1_254 = arith.constant 1 : index
    %c0_255 = arith.constant 0 : index
    %c0_256 = arith.constant 0 : index
    %276 = vector.load %arg8[%c1_254, %c0_255, %c0_256] : memref<3x128x256xf32, #tpu.memory_space<vmem>>, vector<1x128x256xf32>
    %277 = vector.shape_cast %276 : vector<1x128x256xf32> to vector<128x256xf32>
    %c0_257 = arith.constant 0 : index
    %c129_258 = arith.constant 129 : index
    %278 = vector.load %arg18[%c0_257, %c129_258] : memref<256x229xf32, #tpu.memory_space<vmem>>, vector<256x99xf32>
    %cst_259 = arith.constant dense<0.000000e+00> : vector<128x99xf32>
    %279 = tpu.matmul %277, %278, %cst_259 {dimension_numbers = #tpu.dot_dimension_numbers<[1], [0], [0], [1], [0, 0, 1, 1], [], []>} : vector<128x256xf32>, vector<256x99xf32>, vector<128x99xf32> -> vector<128x99xf32>
    %280 = arith.addf %275, %279 : vector<128x99xf32>
    %c2_260 = arith.constant 2 : index
    %c0_261 = arith.constant 0 : index
    %c0_262 = arith.constant 0 : index
    %281 = vector.load %arg8[%c2_260, %c0_261, %c0_262] : memref<3x128x256xf32, #tpu.memory_space<vmem>>, vector<1x128x256xf32>
    %282 = vector.shape_cast %281 : vector<1x128x256xf32> to vector<128x256xf32>
    %c0_263 = arith.constant 0 : index
    %c130_264 = arith.constant 130 : index
    %283 = vector.load %arg18[%c0_263, %c130_264] : memref<256x229xf32, #tpu.memory_space<vmem>>, vector<256x99xf32>
    %cst_265 = arith.constant dense<0.000000e+00> : vector<128x99xf32>
    %284 = tpu.matmul %282, %283, %cst_265 {dimension_numbers = #tpu.dot_dimension_numbers<[1], [0], [0], [1], [0, 0, 1, 1], [], []>} : vector<128x256xf32>, vector<256x99xf32>, vector<128x99xf32> -> vector<128x99xf32>
    %285 = arith.addf %280, %284 : vector<128x99xf32>
    %c0_266 = arith.constant 0 : index
    %c0_267 = arith.constant 0 : index
    %286 = vector.load %arg9[%c0_266, %c0_267] : memref<128x1xf32, #tpu.memory_space<vmem>>, vector<128x1xf32>
    %287 = vector.broadcast %286 : vector<128x1xf32> to vector<128x99xf32>
    %288 = arith.mulf %285, %287 : vector<128x99xf32>
    %c0_268 = arith.constant 0 : index
    %c0_269 = arith.constant 0 : index
    %289 = vector.load %arg10[%c0_268, %c0_269] : memref<128x1xf32, #tpu.memory_space<vmem>>, vector<128x1xf32>
    %290 = vector.broadcast %289 : vector<128x1xf32> to vector<128x99xf32>
    %291 = arith.addf %288, %290 : vector<128x99xf32>
    %cst_270 = arith.constant 0.000000e+00 : f32
    %292 = vector.broadcast %cst_270 : f32 to vector<128x99xf32>
    %293 = arith.maximumf %291, %292 : vector<128x99xf32>
    %294 = vector.shape_cast %293 : vector<128x99xf32> to vector<1x128x99xf32>
    %cst_271 = arith.constant dense<0.000000e+00> : vector<1x128xf32>
    %295 = vector.multi_reduction <add>, %294, %cst_271 [2] : vector<1x128x99xf32> to vector<1x128xf32>
    %296 = arith.addf %269, %295 : vector<1x128xf32>
    %cst_272 = arith.constant 0.00440528616 : f32
    %297 = vector.broadcast %cst_272 : f32 to vector<1x128xf32>
    %298 = arith.mulf %296, %297 : vector<1x128xf32>
    %c0_273 = arith.constant 0 : index
    %c0_274 = arith.constant 0 : index
    %299 = vector.load %arg11[%c0_273, %c0_274] : memref<240x32xf32, #tpu.memory_space<vmem>>, vector<240x32xf32>
    %cst_275 = arith.constant dense<0.000000e+00> : vector<4x32xf32>
    %300 = tpu.matmul %1, %299, %cst_275 {dimension_numbers = #tpu.dot_dimension_numbers<[1], [0], [0], [1], [0, 0, 1, 1], [], []>} : vector<4x240xf32>, vector<240x32xf32>, vector<4x32xf32> -> vector<4x32xf32>
    %c0_276 = arith.constant 0 : index
    %c0_277 = arith.constant 0 : index
    %301 = vector.load %arg13[%c0_276, %c0_277] : memref<1x32xf32, #tpu.memory_space<vmem>>, vector<1x32xf32>
    %302 = vector.broadcast %301 : vector<1x32xf32> to vector<4x32xf32>
    %303 = arith.addf %300, %302 : vector<4x32xf32>
    %c0_278 = arith.constant 0 : index
    %c0_279 = arith.constant 0 : index
    %304 = vector.load %arg12[%c0_278, %c0_279] : memref<8x32xf32, #tpu.memory_space<vmem>>, vector<8x32xf32>
    %cst_280 = arith.constant 0.000000e+00 : f32
    %305 = vector.broadcast %cst_280 : f32 to vector<1x8xf32>
    %cst_281 = arith.constant 0.000000e+00 : f32
    %306 = vector.broadcast %cst_281 : f32 to vector<1x8xf32>
    %307 = vector.extract_strided_slice %303 {offsets = [0, 0], sizes = [1, 32], strides = [1, 1]} : vector<4x32xf32> to vector<1x32xf32>
    %cst_282 = arith.constant dense<0.000000e+00> : vector<1x32xf32>
    %308 = tpu.matmul %305, %304, %cst_282 {dimension_numbers = #tpu.dot_dimension_numbers<[1], [0], [0], [1], [0, 0, 1, 1], [], []>} : vector<1x8xf32>, vector<8x32xf32>, vector<1x32xf32> -> vector<1x32xf32>
    %309 = arith.addf %307, %308 : vector<1x32xf32>
    %310 = vector.extract_strided_slice %309 {offsets = [0, 0], sizes = [1, 8], strides = [1, 1]} : vector<1x32xf32> to vector<1x8xf32>
    %311 = arith.negf %310 : vector<1x8xf32>
    %312 = math.exp %311 : vector<1x8xf32>
    %cst_283 = arith.constant 1.000000e+00 : f32
    %313 = vector.broadcast %cst_283 : f32 to vector<1x8xf32>
    %314 = arith.addf %313, %312 : vector<1x8xf32>
    %315 = arith.divf %313, %314 : vector<1x8xf32>
    %316 = vector.extract_strided_slice %309 {offsets = [0, 8], sizes = [1, 8], strides = [1, 1]} : vector<1x32xf32> to vector<1x8xf32>
    %317 = arith.negf %316 : vector<1x8xf32>
    %318 = math.exp %317 : vector<1x8xf32>
    %cst_284 = arith.constant 1.000000e+00 : f32
    %319 = vector.broadcast %cst_284 : f32 to vector<1x8xf32>
    %320 = arith.addf %319, %318 : vector<1x8xf32>
    %321 = arith.divf %319, %320 : vector<1x8xf32>
    %322 = vector.extract_strided_slice %309 {offsets = [0, 16], sizes = [1, 8], strides = [1, 1]} : vector<1x32xf32> to vector<1x8xf32>
    %323 = math.tanh %322 : vector<1x8xf32>
    %324 = vector.extract_strided_slice %309 {offsets = [0, 24], sizes = [1, 8], strides = [1, 1]} : vector<1x32xf32> to vector<1x8xf32>
    %325 = arith.negf %324 : vector<1x8xf32>
    %326 = math.exp %325 : vector<1x8xf32>
    %cst_285 = arith.constant 1.000000e+00 : f32
    %327 = vector.broadcast %cst_285 : f32 to vector<1x8xf32>
    %328 = arith.addf %327, %326 : vector<1x8xf32>
    %329 = arith.divf %327, %328 : vector<1x8xf32>
    %330 = arith.mulf %321, %306 : vector<1x8xf32>
    %331 = arith.mulf %315, %323 : vector<1x8xf32>
    %332 = arith.addf %330, %331 : vector<1x8xf32>
    %333 = math.tanh %332 : vector<1x8xf32>
    %334 = arith.mulf %329, %333 : vector<1x8xf32>
    %335 = vector.extract_strided_slice %303 {offsets = [1, 0], sizes = [1, 32], strides = [1, 1]} : vector<4x32xf32> to vector<1x32xf32>
    %cst_286 = arith.constant dense<0.000000e+00> : vector<1x32xf32>
    %336 = tpu.matmul %334, %304, %cst_286 {dimension_numbers = #tpu.dot_dimension_numbers<[1], [0], [0], [1], [0, 0, 1, 1], [], []>} : vector<1x8xf32>, vector<8x32xf32>, vector<1x32xf32> -> vector<1x32xf32>
    %337 = arith.addf %335, %336 : vector<1x32xf32>
    %338 = vector.extract_strided_slice %337 {offsets = [0, 0], sizes = [1, 8], strides = [1, 1]} : vector<1x32xf32> to vector<1x8xf32>
    %339 = arith.negf %338 : vector<1x8xf32>
    %340 = math.exp %339 : vector<1x8xf32>
    %cst_287 = arith.constant 1.000000e+00 : f32
    %341 = vector.broadcast %cst_287 : f32 to vector<1x8xf32>
    %342 = arith.addf %341, %340 : vector<1x8xf32>
    %343 = arith.divf %341, %342 : vector<1x8xf32>
    %344 = vector.extract_strided_slice %337 {offsets = [0, 8], sizes = [1, 8], strides = [1, 1]} : vector<1x32xf32> to vector<1x8xf32>
    %345 = arith.negf %344 : vector<1x8xf32>
    %346 = math.exp %345 : vector<1x8xf32>
    %cst_288 = arith.constant 1.000000e+00 : f32
    %347 = vector.broadcast %cst_288 : f32 to vector<1x8xf32>
    %348 = arith.addf %347, %346 : vector<1x8xf32>
    %349 = arith.divf %347, %348 : vector<1x8xf32>
    %350 = vector.extract_strided_slice %337 {offsets = [0, 16], sizes = [1, 8], strides = [1, 1]} : vector<1x32xf32> to vector<1x8xf32>
    %351 = math.tanh %350 : vector<1x8xf32>
    %352 = vector.extract_strided_slice %337 {offsets = [0, 24], sizes = [1, 8], strides = [1, 1]} : vector<1x32xf32> to vector<1x8xf32>
    %353 = arith.negf %352 : vector<1x8xf32>
    %354 = math.exp %353 : vector<1x8xf32>
    %cst_289 = arith.constant 1.000000e+00 : f32
    %355 = vector.broadcast %cst_289 : f32 to vector<1x8xf32>
    %356 = arith.addf %355, %354 : vector<1x8xf32>
    %357 = arith.divf %355, %356 : vector<1x8xf32>
    %358 = arith.mulf %349, %332 : vector<1x8xf32>
    %359 = arith.mulf %343, %351 : vector<1x8xf32>
    %360 = arith.addf %358, %359 : vector<1x8xf32>
    %361 = math.tanh %360 : vector<1x8xf32>
    %362 = arith.mulf %357, %361 : vector<1x8xf32>
    %363 = vector.extract_strided_slice %303 {offsets = [2, 0], sizes = [1, 32], strides = [1, 1]} : vector<4x32xf32> to vector<1x32xf32>
    %cst_290 = arith.constant dense<0.000000e+00> : vector<1x32xf32>
    %364 = tpu.matmul %362, %304, %cst_290 {dimension_numbers = #tpu.dot_dimension_numbers<[1], [0], [0], [1], [0, 0, 1, 1], [], []>} : vector<1x8xf32>, vector<8x32xf32>, vector<1x32xf32> -> vector<1x32xf32>
    %365 = arith.addf %363, %364 : vector<1x32xf32>
    %366 = vector.extract_strided_slice %365 {offsets = [0, 0], sizes = [1, 8], strides = [1, 1]} : vector<1x32xf32> to vector<1x8xf32>
    %367 = arith.negf %366 : vector<1x8xf32>
    %368 = math.exp %367 : vector<1x8xf32>
    %cst_291 = arith.constant 1.000000e+00 : f32
    %369 = vector.broadcast %cst_291 : f32 to vector<1x8xf32>
    %370 = arith.addf %369, %368 : vector<1x8xf32>
    %371 = arith.divf %369, %370 : vector<1x8xf32>
    %372 = vector.extract_strided_slice %365 {offsets = [0, 8], sizes = [1, 8], strides = [1, 1]} : vector<1x32xf32> to vector<1x8xf32>
    %373 = arith.negf %372 : vector<1x8xf32>
    %374 = math.exp %373 : vector<1x8xf32>
    %cst_292 = arith.constant 1.000000e+00 : f32
    %375 = vector.broadcast %cst_292 : f32 to vector<1x8xf32>
    %376 = arith.addf %375, %374 : vector<1x8xf32>
    %377 = arith.divf %375, %376 : vector<1x8xf32>
    %378 = vector.extract_strided_slice %365 {offsets = [0, 16], sizes = [1, 8], strides = [1, 1]} : vector<1x32xf32> to vector<1x8xf32>
    %379 = math.tanh %378 : vector<1x8xf32>
    %380 = vector.extract_strided_slice %365 {offsets = [0, 24], sizes = [1, 8], strides = [1, 1]} : vector<1x32xf32> to vector<1x8xf32>
    %381 = arith.negf %380 : vector<1x8xf32>
    %382 = math.exp %381 : vector<1x8xf32>
    %cst_293 = arith.constant 1.000000e+00 : f32
    %383 = vector.broadcast %cst_293 : f32 to vector<1x8xf32>
    %384 = arith.addf %383, %382 : vector<1x8xf32>
    %385 = arith.divf %383, %384 : vector<1x8xf32>
    %386 = arith.mulf %377, %360 : vector<1x8xf32>
    %387 = arith.mulf %371, %379 : vector<1x8xf32>
    %388 = arith.addf %386, %387 : vector<1x8xf32>
    %389 = math.tanh %388 : vector<1x8xf32>
    %390 = arith.mulf %385, %389 : vector<1x8xf32>
    %391 = vector.extract_strided_slice %303 {offsets = [3, 0], sizes = [1, 32], strides = [1, 1]} : vector<4x32xf32> to vector<1x32xf32>
    %cst_294 = arith.constant dense<0.000000e+00> : vector<1x32xf32>
    %392 = tpu.matmul %390, %304, %cst_294 {dimension_numbers = #tpu.dot_dimension_numbers<[1], [0], [0], [1], [0, 0, 1, 1], [], []>} : vector<1x8xf32>, vector<8x32xf32>, vector<1x32xf32> -> vector<1x32xf32>
    %393 = arith.addf %391, %392 : vector<1x32xf32>
    %394 = vector.extract_strided_slice %393 {offsets = [0, 0], sizes = [1, 8], strides = [1, 1]} : vector<1x32xf32> to vector<1x8xf32>
    %395 = arith.negf %394 : vector<1x8xf32>
    %396 = math.exp %395 : vector<1x8xf32>
    %cst_295 = arith.constant 1.000000e+00 : f32
    %397 = vector.broadcast %cst_295 : f32 to vector<1x8xf32>
    %398 = arith.addf %397, %396 : vector<1x8xf32>
    %399 = arith.divf %397, %398 : vector<1x8xf32>
    %400 = vector.extract_strided_slice %393 {offsets = [0, 8], sizes = [1, 8], strides = [1, 1]} : vector<1x32xf32> to vector<1x8xf32>
    %401 = arith.negf %400 : vector<1x8xf32>
    %402 = math.exp %401 : vector<1x8xf32>
    %cst_296 = arith.constant 1.000000e+00 : f32
    %403 = vector.broadcast %cst_296 : f32 to vector<1x8xf32>
    %404 = arith.addf %403, %402 : vector<1x8xf32>
    %405 = arith.divf %403, %404 : vector<1x8xf32>
    %406 = vector.extract_strided_slice %393 {offsets = [0, 16], sizes = [1, 8], strides = [1, 1]} : vector<1x32xf32> to vector<1x8xf32>
    %407 = math.tanh %406 : vector<1x8xf32>
    %408 = vector.extract_strided_slice %393 {offsets = [0, 24], sizes = [1, 8], strides = [1, 1]} : vector<1x32xf32> to vector<1x8xf32>
    %409 = arith.negf %408 : vector<1x8xf32>
    %410 = math.exp %409 : vector<1x8xf32>
    %cst_297 = arith.constant 1.000000e+00 : f32
    %411 = vector.broadcast %cst_297 : f32 to vector<1x8xf32>
    %412 = arith.addf %411, %410 : vector<1x8xf32>
    %413 = arith.divf %411, %412 : vector<1x8xf32>
    %414 = arith.mulf %405, %388 : vector<1x8xf32>
    %415 = arith.mulf %399, %407 : vector<1x8xf32>
    %416 = arith.addf %414, %415 : vector<1x8xf32>
    %417 = math.tanh %416 : vector<1x8xf32>
    %418 = arith.mulf %413, %417 : vector<1x8xf32>
    %c0_298 = arith.constant 0 : index
    %c0_299 = arith.constant 0 : index
    %419 = vector.load %arg14[%c0_298, %c0_299] : memref<136x10xf32, #tpu.memory_space<vmem>>, vector<8x10xf32>
    %cst_300 = arith.constant dense<0.000000e+00> : vector<1x10xf32>
    %420 = tpu.matmul %418, %419, %cst_300 {dimension_numbers = #tpu.dot_dimension_numbers<[1], [0], [0], [1], [0, 0, 1, 1], [], []>} : vector<1x8xf32>, vector<8x10xf32>, vector<1x10xf32> -> vector<1x10xf32>
    %c8 = arith.constant 8 : index
    %c0_301 = arith.constant 0 : index
    %421 = vector.load %arg14[%c8, %c0_301] : memref<136x10xf32, #tpu.memory_space<vmem>>, vector<128x10xf32>
    %cst_302 = arith.constant dense<0.000000e+00> : vector<1x10xf32>
    %422 = tpu.matmul %298, %421, %cst_302 {dimension_numbers = #tpu.dot_dimension_numbers<[1], [0], [0], [1], [0, 0, 1, 1], [], []>} : vector<1x128xf32>, vector<128x10xf32>, vector<1x10xf32> -> vector<1x10xf32>
    %423 = arith.addf %420, %422 : vector<1x10xf32>
    %c0_303 = arith.constant 0 : index
    %c0_304 = arith.constant 0 : index
    %424 = vector.load %arg15[%c0_303, %c0_304] : memref<1x10xf32, #tpu.memory_space<vmem>>, vector<1x10xf32>
    %425 = arith.addf %423, %424 : vector<1x10xf32>
    %426 = vector.shape_cast %425 : vector<1x10xf32> to vector<1x1x10xf32>
    %c0_305 = arith.constant 0 : index
    %c0_306 = arith.constant 0 : index
    %c0_307 = arith.constant 0 : index
    %427 = vector.load %arg16[%c0_305, %c0_306, %c0_307] : memref<1x1x10xf32, #tpu.memory_space<vmem>>, vector<1x1x10xf32>
    tpu.vector_store %arg16[%c0_305, %c0_306, %c0_307], %426 {strides = array<i32>} : memref<1x1x10xf32, #tpu.memory_space<vmem>>, vector<1x1x10xf32>,
    return
  }
  func.func @transform_0(%arg0: i32) -> (i32, i32, i32) {
    %c0_i32 = arith.constant 0 : i32
    %c0_i32_0 = arith.constant 0 : i32
    %c0_i32_1 = arith.constant 0 : i32
    return %arg0, %c0_i32, %c0_i32_0 : i32, i32, i32
  }
  func.func @transform_1(%arg0: i32) -> (i32, i32, i32) {
    %c0_i32 = arith.constant 0 : i32
    %c0_i32_0 = arith.constant 0 : i32
    %c0_i32_1 = arith.constant 0 : i32
    %c0_i32_2 = arith.constant 0 : i32
    return %c0_i32, %c0_i32_0, %c0_i32_1 : i32, i32, i32
  }
  func.func @transform_2(%arg0: i32) -> (i32, i32) {
    %c0_i32 = arith.constant 0 : i32
    %c0_i32_0 = arith.constant 0 : i32
    %c0_i32_1 = arith.constant 0 : i32
    return %c0_i32, %c0_i32_0 : i32, i32
  }
  func.func @transform_3(%arg0: i32) -> (i32, i32) {
    %c0_i32 = arith.constant 0 : i32
    %c0_i32_0 = arith.constant 0 : i32
    %c0_i32_1 = arith.constant 0 : i32
    return %c0_i32, %c0_i32_0 : i32, i32
  }
  func.func @transform_4(%arg0: i32) -> (i32, i32, i32) {
    %c0_i32 = arith.constant 0 : i32
    %c0_i32_0 = arith.constant 0 : i32
    %c0_i32_1 = arith.constant 0 : i32
    %c0_i32_2 = arith.constant 0 : i32
    return %c0_i32, %c0_i32_0, %c0_i32_1 : i32, i32, i32
  }
  func.func @transform_5(%arg0: i32) -> (i32, i32) {
    %c0_i32 = arith.constant 0 : i32
    %c0_i32_0 = arith.constant 0 : i32
    %c0_i32_1 = arith.constant 0 : i32
    return %c0_i32, %c0_i32_0 : i32, i32
  }
  func.func @transform_6(%arg0: i32) -> (i32, i32) {
    %c0_i32 = arith.constant 0 : i32
    %c0_i32_0 = arith.constant 0 : i32
    %c0_i32_1 = arith.constant 0 : i32
    return %c0_i32, %c0_i32_0 : i32, i32
  }
  func.func @transform_7(%arg0: i32) -> (i32, i32, i32) {
    %c0_i32 = arith.constant 0 : i32
    %c0_i32_0 = arith.constant 0 : i32
    %c0_i32_1 = arith.constant 0 : i32
    %c0_i32_2 = arith.constant 0 : i32
    return %c0_i32, %c0_i32_0, %c0_i32_1 : i32, i32, i32
  }
  func.func @transform_8(%arg0: i32) -> (i32, i32) {
    %c0_i32 = arith.constant 0 : i32
    %c0_i32_0 = arith.constant 0 : i32
    %c0_i32_1 = arith.constant 0 : i32
    return %c0_i32, %c0_i32_0 : i32, i32
  }
  func.func @transform_9(%arg0: i32) -> (i32, i32) {
    %c0_i32 = arith.constant 0 : i32
    %c0_i32_0 = arith.constant 0 : i32
    %c0_i32_1 = arith.constant 0 : i32
    return %c0_i32, %c0_i32_0 : i32, i32
  }
  func.func @transform_10(%arg0: i32) -> (i32, i32) {
    %c0_i32 = arith.constant 0 : i32
    %c0_i32_0 = arith.constant 0 : i32
    %c0_i32_1 = arith.constant 0 : i32
    return %c0_i32, %c0_i32_0 : i32, i32
  }
  func.func @transform_11(%arg0: i32) -> (i32, i32) {
    %c0_i32 = arith.constant 0 : i32
    %c0_i32_0 = arith.constant 0 : i32
    %c0_i32_1 = arith.constant 0 : i32
    return %c0_i32, %c0_i32_0 : i32, i32
  }
  func.func @transform_12(%arg0: i32) -> (i32, i32) {
    %c0_i32 = arith.constant 0 : i32
    %c0_i32_0 = arith.constant 0 : i32
    %c0_i32_1 = arith.constant 0 : i32
    return %c0_i32, %c0_i32_0 : i32, i32
  }
  func.func @transform_13(%arg0: i32) -> (i32, i32) {
    %c0_i32 = arith.constant 0 : i32
    %c0_i32_0 = arith.constant 0 : i32
    %c0_i32_1 = arith.constant 0 : i32
    return %c0_i32, %c0_i32_0 : i32, i32
  }
  func.func @transform_14(%arg0: i32) -> (i32, i32) {
    %c0_i32 = arith.constant 0 : i32
    %c0_i32_0 = arith.constant 0 : i32
    %c0_i32_1 = arith.constant 0 : i32
    return %c0_i32, %c0_i32_0 : i32, i32
  }
  func.func @transform_15(%arg0: i32) -> (i32, i32, i32) {
    %c0_i32 = arith.constant 0 : i32
    %c0_i32_0 = arith.constant 0 : i32
    %c0_i32_1 = arith.constant 0 : i32
    return %arg0, %c0_i32, %c0_i32_0 : i32, i32, i32
  }
}

</mosaic_0001>

<llo_original>
// kernel: lstm_fcn_forward.1
$region0: #{lstm_fcn_forward.1}
  #allocation0 [shape = 'u32[]', space=smem, size = 0x4, offset = 0x4, fixed_abs, tag = 'smem constant byte address 0x4 - core index']
  #allocation1 [shape = 'u32[72,128]{1,0:T(1,128)}', space=vmem, size = 0x9000, scoped, tag = 'internal scratch']
  #allocation2 [shape = 'f32[128,233]{1,0:T(8,128)}', space=vmem, size = 0x20000, scoped, tag = 'scratch operand']
  #allocation3 [shape = 'f32[256,229]{1,0:T(8,128)}', space=vmem, size = 0x40000, scoped, tag = 'scratch operand']
  %s0 = inlined_call_operand.vmem [shape: f32[2,4,240], index: 0, kind: input, shape index: {}]
  %s1 = inlined_call_operand.vmem [shape: f32[8,128,4], index: 1, kind: input, shape index: {}]
  %s2 = inlined_call_operand.vmem [shape: f32[128,1], index: 2, kind: input, shape index: {}]
  %s3 = inlined_call_operand.vmem [shape: f32[128,1], index: 3, kind: input, shape index: {}]
  %s4 = inlined_call_operand.vmem [shape: f32[5,256,128], index: 4, kind: input, shape index: {}]
  %s5 = inlined_call_operand.vmem [shape: f32[256,1], index: 5, kind: input, shape index: {}]
  %s6 = inlined_call_operand.vmem [shape: f32[256,1], index: 6, kind: input, shape index: {}]
  %s7 = inlined_call_operand.hbm [shape: f32[3,128,256], index: 7, kind: input, shape index: {}]
  %s8 = inlined_call_operand.vmem [shape: f32[128,1], index: 8, kind: input, shape index: {}]
  %s9 = inlined_call_operand.vmem [shape: f32[128,1], index: 9, kind: input, shape index: {}]
  %s10 = inlined_call_operand.vmem [shape: f32[240,32], index: 10, kind: input, shape index: {}]
  %s11 = inlined_call_operand.vmem [shape: f32[8,32], index: 11, kind: input, shape index: {}]
  %s12 = inlined_call_operand.vmem [shape: f32[1,32], index: 12, kind: input, shape index: {}]
  %s13 = inlined_call_operand.vmem [shape: f32[136,10], index: 13, kind: input, shape index: {}]
  %s14 = inlined_call_operand.vmem [shape: f32[1,10], index: 14, kind: input, shape index: {}]
  %s15 = inlined_call_operand.hbm [shape: f32[2,1,10], index: 15, kind: output, shape index: {}]
  %s16 = sld [smem:[#allocation0]]
  $region97: #{lstm_fcn_forward.1} parent=0
    _
  %s18 = ssub.s32 1, %s16
  %s19 = scalar_select 0, %s18, %s16
  $region1: #{lstm_fcn_forward.1} parent=0
    #allocation4 [shape = 'u8[393216]{0}', space=vmem, size = 0x60000, scoped, tag = 'input window, operand 7, single buffered']
    #allocation5 [shape = 's32[2]{0}', space=sflag, size = 0x8, scoped, tag = 'scoped memory for lstm_fcn_forward.1']
    #allocation6 [shape = 's32[2]{0}', space=sflag, size = 0x8, scoped, tag = 'scoped memory for lstm_fcn_forward.1']
    #allocation7 [shape = 'u8[1024]{0}', space=vmem, size = 0x400, scoped, tag = 'output window, operand 0']
    %20 = vsyncpa [#allocation5], 0
    %21 = vsyncpa [#allocation6], 0
    %s22 = scalar_lea.sflag [#allocation6], 1
    %23 = vsyncpa %s22, 0
    loop: start=0, step=1, limit=4
    $region2: #{lstm_fcn_forward.1} parent=1 // loop_pre_header
      _
    $region3: #{lstm_fcn_forward.1} parent=1 // loop_header
      %s25 = sphi 0, %s29
      %p26 = scmp.ge.s32.totalorder %s25, 4
      %s35 = sphi 0, %s37
      %s38 = sphi 0, %s35
      %s39 = sphi 0, %s38
      %s55 = sphi 0, %s39
      %s59 = sphi 0, %s59
      %s61 = sphi 0, %s59
      %s62 = sphi 0, %s61
      %s76 = sphi 0, %s62
      %s80 = sphi 0, %s80
      %s82 = sphi 0, %s80
      %s83 = sphi 0, %s82
      %s97 = sphi 0, %s83
      %s101 = sphi 0, %s101
      %s103 = sphi 0, %s101
      %s104 = sphi 0, %s103
      %s118 = sphi 0, %s104
      %s122 = sphi 0, %s122
      %s124 = sphi 0, %s122
      %s125 = sphi 0, %s124
      %s139 = sphi 0, %s125
      %s143 = sphi 0, %s143
      %s145 = sphi 0, %s143
      %s146 = sphi 0, %s145
      %s160 = sphi 0, %s146
      %s164 = sphi 0, %s164
      %s166 = sphi 0, %s164
      %s167 = sphi 0, %s166
      %s181 = sphi 0, %s167
      %s185 = sphi 0, %s185
      %s187 = sphi 0, %s185
      %s188 = sphi 0, %s187
      %s202 = sphi 0, %s188
      %s206 = sphi 0, %s206
      %s208 = sphi 0, %s206
      %s209 = sphi 0, %s208
      %s223 = sphi 0, %s209
      %s227 = sphi 0, %s227
      %s229 = sphi 0, %s227
      %s230 = sphi 0, %s229
      %s244 = sphi 0, %s230
      %s248 = sphi 0, %s248
      %s250 = sphi 0, %s248
      %s251 = sphi 0, %s250
      %s265 = sphi 0, %s251
      %s269 = sphi 0, %s269
      %s271 = sphi 0, %s269
      %s272 = sphi 0, %s271
      %s286 = sphi 0, %s272
      %s290 = sphi 0, %s290
      %s292 = sphi 0, %s290
      %s293 = sphi 0, %s292
      %s307 = sphi 0, %s293
      %s311 = sphi 0, %s311
      %s313 = sphi 0, %s311
      %s314 = sphi 0, %s313
      %s328 = sphi 0, %s314
      %s332 = sphi 0, %s332
      %s334 = sphi 0, %s332
      %s335 = sphi 0, %s334
      %s349 = sphi 0, %s335
      %s355 = sphi 0, %s357
      %s358 = sphi 0, %s355
      %s359 = sphi 0, %s358
      %s375 = sphi 0, %s359
    $region4: #{lstm_fcn_forward.1} parent=1 // loop_header_branch
      %28 = sbr.rel (%p26) target = $region8
    $region5: #{lstm_fcn_forward.1} parent=1 // loop_body
      %s30 = ssub.s32 %s25, 1
      %s31 = ssub.s32 %s25, 2
      %s32 = sadd.s32 %s25, 1
      %s33 = ssub.s32 %s25, %s32
      %p34 = scmp.eq.s32.totalorder %s33, 0
      %s36 = sadd.s32 %s35, 1
      %s37 = scalar_select %p34, %s35, %s36
      %p40 = pneg %p34
      %p41 = scmp.eq.s32.totalorder %s25, 1
      %p42 = por %p40, %p41
      %p43 = scmp.ne.s32.totalorder %s35, %s38
      %p44 = scmp.eq.s32.totalorder %s25, 0
      %p45 = por %p43, %p44
      %p46 = scmp.ne.s32.totalorder %s35, %s38
      %p47 = scmp.eq.s32.totalorder %s30, 1
      %p48 = por %p46, %p47
      %p49 = scmp.ne.s32.totalorder %s38, %s39
      %p50 = scmp.eq.s32.totalorder %s30, 0
      %p51 = por %p49, %p50
      %p52 = scmp.ne.s32.totalorder %s38, %s39
      %p53 = scmp.eq.s32.totalorder %s31, 1
      %p54 = por %p52, %p53
      %p56 = scmp.ne.s32.totalorder %s39, %s55
      %p57 = scmp.eq.s32.totalorder %s31, 0
      %p58 = por %p56, %p57
      %s60 = sadd.s32 %s59, 1
      %p63 = scmp.eq.s32.totalorder %s25, 1
      %p64 = scmp.ne.s32.totalorder %s59, %s61
      %p65 = scmp.eq.s32.totalorder %s25, 0
      %p66 = por %p64, %p65
      %p67 = scmp.ne.s32.totalorder %s59, %s61
      %p68 = scmp.eq.s32.totalorder %s30, 1
      %p69 = por %p67, %p68
      %p70 = scmp.ne.s32.totalorder %s61, %s62
      %p71 = scmp.eq.s32.totalorder %s30, 0
      %p72 = por %p70, %p71
      %p73 = scmp.ne.s32.totalorder %s61, %s62
      %p74 = scmp.eq.s32.totalorder %s31, 1
      %p75 = por %p73, %p74
      %p77 = scmp.ne.s32.totalorder %s62, %s76
      %p78 = scmp.eq.s32.totalorder %s31, 0
      %p79 = por %p77, %p78
      %s81 = sadd.s32 %s80, 1
      %p84 = scmp.eq.s32.totalorder %s25, 1
      %p85 = scmp.ne.s32.totalorder %s80, %s82
      %p86 = scmp.eq.s32.totalorder %s25, 0
      %p87 = por %p85, %p86
      %p88 = scmp.ne.s32.totalorder %s80, %s82
      %p89 = scmp.eq.s32.totalorder %s30, 1
      %p90 = por %p88, %p89
      %p91 = scmp.ne.s32.totalorder %s82, %s83
      %p92 = scmp.eq.s32.totalorder %s30, 0
      %p93 = por %p91, %p92
      %p94 = scmp.ne.s32.totalorder %s82, %s83
      %p95 = scmp.eq.s32.totalorder %s31, 1
      %p96 = por %p94, %p95
      %p98 = scmp.ne.s32.totalorder %s83, %s97
      %p99 = scmp.eq.s32.totalorder %s31, 0
      %p100 = por %p98, %p99
      %s102 = sadd.s32 %s101, 1
      %p105 = scmp.eq.s32.totalorder %s25, 1
      %p106 = scmp.ne.s32.totalorder %s101, %s103
      %p107 = scmp.eq.s32.totalorder %s25, 0
      %p108 = por %p106, %p107
      %p109 = scmp.ne.s32.totalorder %s101, %s103
      %p110 = scmp.eq.s32.totalorder %s30, 1
      %p111 = por %p109, %p110
      %p112 = scmp.ne.s32.totalorder %s103, %s104
      %p113 = scmp.eq.s32.totalorder %s30, 0
      %p114 = por %p112, %p113
      %p115 = scmp.ne.s32.totalorder %s103, %s104
      %p116 = scmp.eq.s32.totalorder %s31, 1
      %p117 = por %p115, %p116
      %p119 = scmp.ne.s32.totalorder %s104, %s118
      %p120 = scmp.eq.s32.totalorder %s31, 0
      %p121 = por %p119, %p120
      %s123 = sadd.s32 %s122, 1
      %p126 = scmp.eq.s32.totalorder %s25, 1
      %p127 = scmp.ne.s32.totalorder %s122, %s124
      %p128 = scmp.eq.s32.totalorder %s25, 0
      %p129 = por %p127, %p128
      %p130 = scmp.ne.s32.totalorder %s122, %s124
      %p131 = scmp.eq.s32.totalorder %s30, 1
      %p132 = por %p130, %p131
      %p133 = scmp.ne.s32.totalorder %s124, %s125
      %p134 = scmp.eq.s32.totalorder %s30, 0
      %p135 = por %p133, %p134
      %p136 = scmp.ne.s32.totalorder %s124, %s125
      %p137 = scmp.eq.s32.totalorder %s31, 1
      %p138 = por %p136, %p137
      %p140 = scmp.ne.s32.totalorder %s125, %s139
      %p141 = scmp.eq.s32.totalorder %s31, 0
      %p142 = por %p140, %p141
      %s144 = sadd.s32 %s143, 1
      %p147 = scmp.eq.s32.totalorder %s25, 1
      %p148 = scmp.ne.s32.totalorder %s143, %s145
      %p149 = scmp.eq.s32.totalorder %s25, 0
      %p150 = por %p148, %p149
      %p151 = scmp.ne.s32.totalorder %s143, %s145
      %p152 = scmp.eq.s32.totalorder %s30, 1
      %p153 = por %p151, %p152
      %p154 = scmp.ne.s32.totalorder %s145, %s146
      %p155 = scmp.eq.s32.totalorder %s30, 0
      %p156 = por %p154, %p155
      %p157 = scmp.ne.s32.totalorder %s145, %s146
      %p158 = scmp.eq.s32.totalorder %s31, 1
      %p159 = por %p157, %p158
      %p161 = scmp.ne.s32.totalorder %s146, %s160
      %p162 = scmp.eq.s32.totalorder %s31, 0
      %p163 = por %p161, %p162
      %s165 = sadd.s32 %s164, 1
      %p168 = scmp.eq.s32.totalorder %s25, 1
      %p169 = scmp.ne.s32.totalorder %s164, %s166
      %p170 = scmp.eq.s32.totalorder %s25, 0
      %p171 = por %p169, %p170
      %p172 = scmp.ne.s32.totalorder %s164, %s166
      %p173 = scmp.eq.s32.totalorder %s30, 1
      %p174 = por %p172, %p173
      %p175 = scmp.ne.s32.totalorder %s166, %s167
      %p176 = scmp.eq.s32.totalorder %s30, 0
      %p177 = por %p175, %p176
      %p178 = scmp.ne.s32.totalorder %s166, %s167
      %p179 = scmp.eq.s32.totalorder %s31, 1
      %p180 = por %p178, %p179
      %p182 = scmp.ne.s32.totalorder %s167, %s181
      %p183 = scmp.eq.s32.totalorder %s31, 0
      %p184 = por %p182, %p183
      %s186 = sadd.s32 %s185, 1
      %p189 = scmp.eq.s32.totalorder %s25, 1
      %p190 = scmp.ne.s32.totalorder %s185, %s187
      %p191 = scmp.eq.s32.totalorder %s25, 0
      %p192 = por %p190, %p191
      %p193 = scmp.ne.s32.totalorder %s185, %s187
      %p194 = scmp.eq.s32.totalorder %s30, 1
      %p195 = por %p193, %p194
      %p196 = scmp.ne.s32.totalorder %s187, %s188
      %p197 = scmp.eq.s32.totalorder %s30, 0
      %p198 = por %p196, %p197
      %p199 = scmp.ne.s32.totalorder %s187, %s188
      %p200 = scmp.eq.s32.totalorder %s31, 1
      %p201 = por %p199, %p200
      %p203 = scmp.ne.s32.totalorder %s188, %s202
      %p204 = scmp.eq.s32.totalorder %s31, 0
      %p205 = por %p203, %p204
      %s207 = sadd.s32 %s206, 1
      %p210 = scmp.eq.s32.totalorder %s25, 1
      %p211 = scmp.ne.s32.totalorder %s206, %s208
      %p212 = scmp.eq.s32.totalorder %s25, 0
      %p213 = por %p211, %p212
      %p214 = scmp.ne.s32.totalorder %s206, %s208
      %p215 = scmp.eq.s32.totalorder %s30, 1
      %p216 = por %p214, %p215
      %p217 = scmp.ne.s32.totalorder %s208, %s209
      %p218 = scmp.eq.s32.totalorder %s30, 0
      %p219 = por %p217, %p218
      %p220 = scmp.ne.s32.totalorder %s208, %s209
      %p221 = scmp.eq.s32.totalorder %s31, 1
      %p222 = por %p220, %p221
      %p224 = scmp.ne.s32.totalorder %s209, %s223
      %p225 = scmp.eq.s32.totalorder %s31, 0
      %p226 = por %p224, %p225
      %s228 = sadd.s32 %s227, 1
      %p231 = scmp.eq.s32.totalorder %s25, 1
      %p232 = scmp.ne.s32.totalorder %s227, %s229
      %p233 = scmp.eq.s32.totalorder %s25, 0
      %p234 = por %p232, %p233
      %p235 = scmp.ne.s32.totalorder %s227, %s229
      %p236 = scmp.eq.s32.totalorder %s30, 1
      %p237 = por %p235, %p236
      %p238 = scmp.ne.s32.totalorder %s229, %s230
      %p239 = scmp.eq.s32.totalorder %s30, 0
      %p240 = por %p238, %p239
      %p241 = scmp.ne.s32.totalorder %s229, %s230
      %p242 = scmp.eq.s32.totalorder %s31, 1
      %p243 = por %p241, %p242
      %p245 = scmp.ne.s32.totalorder %s230, %s244
      %p246 = scmp.eq.s32.totalorder %s31, 0
      %p247 = por %p245, %p246
      %s249 = sadd.s32 %s248, 1
      %p252 = scmp.eq.s32.totalorder %s25, 1
      %p253 = scmp.ne.s32.totalorder %s248, %s250
      %p254 = scmp.eq.s32.totalorder %s25, 0
      %p255 = por %p253, %p254
      %p256 = scmp.ne.s32.totalorder %s248, %s250
      %p257 = scmp.eq.s32.totalorder %s30, 1
      %p258 = por %p256, %p257
      %p259 = scmp.ne.s32.totalorder %s250, %s251
      %p260 = scmp.eq.s32.totalorder %s30, 0
      %p261 = por %p259, %p260
      %p262 = scmp.ne.s32.totalorder %s250, %s251
      %p263 = scmp.eq.s32.totalorder %s31, 1
      %p264 = por %p262, %p263
      %p266 = scmp.ne.s32.totalorder %s251, %s265
      %p267 = scmp.eq.s32.totalorder %s31, 0
      %p268 = por %p266, %p267
      %s270 = sadd.s32 %s269, 1
      %p273 = scmp.eq.s32.totalorder %s25, 1
      %p274 = scmp.ne.s32.totalorder %s269, %s271
      %p275 = scmp.eq.s32.totalorder %s25, 0
      %p276 = por %p274, %p275
      %p277 = scmp.ne.s32.totalorder %s269, %s271
      %p278 = scmp.eq.s32.totalorder %s30, 1
      %p279 = por %p277, %p278
      %p280 = scmp.ne.s32.totalorder %s271, %s272
      %p281 = scmp.eq.s32.totalorder %s30, 0
      %p282 = por %p280, %p281
      %p283 = scmp.ne.s32.totalorder %s271, %s272
      %p284 = scmp.eq.s32.totalorder %s31, 1
      %p285 = por %p283, %p284
      %p287 = scmp.ne.s32.totalorder %s272, %s286
      %p288 = scmp.eq.s32.totalorder %s31, 0
      %p289 = por %p287, %p288
      %s291 = sadd.s32 %s290, 1
      %p294 = scmp.eq.s32.totalorder %s25, 1
      %p295 = scmp.ne.s32.totalorder %s290, %s292
      %p296 = scmp.eq.s32.totalorder %s25, 0
      %p297 = por %p295, %p296
      %p298 = scmp.ne.s32.totalorder %s290, %s292
      %p299 = scmp.eq.s32.totalorder %s30, 1
      %p300 = por %p298, %p299
      %p301 = scmp.ne.s32.totalorder %s292, %s293
      %p302 = scmp.eq.s32.totalorder %s30, 0
      %p303 = por %p301, %p302
      %p304 = scmp.ne.s32.totalorder %s292, %s293
      %p305 = scmp.eq.s32.totalorder %s31, 1
      %p306 = por %p304, %p305
      %p308 = scmp.ne.s32.totalorder %s293, %s307
      %p309 = scmp.eq.s32.totalorder %s31, 0
      %p310 = por %p308, %p309
      %s312 = sadd.s32 %s311, 1
      %p315 = scmp.eq.s32.totalorder %s25, 1
      %p316 = scmp.ne.s32.totalorder %s311, %s313
      %p317 = scmp.eq.s32.totalorder %s25, 0
      %p318 = por %p316, %p317
      %p319 = scmp.ne.s32.totalorder %s311, %s313
      %p320 = scmp.eq.s32.totalorder %s30, 1
      %p321 = por %p319, %p320
      %p322 = scmp.ne.s32.totalorder %s313, %s314
      %p323 = scmp.eq.s32.totalorder %s30, 0
      %p324 = por %p322, %p323
      %p325 = scmp.ne.s32.totalorder %s313, %s314
      %p326 = scmp.eq.s32.totalorder %s31, 1
      %p327 = por %p325, %p326
      %p329 = scmp.ne.s32.totalorder %s314, %s328
      %p330 = scmp.eq.s32.totalorder %s31, 0
      %p331 = por %p329, %p330
      %s333 = sadd.s32 %s332, 1
      %p336 = scmp.eq.s32.totalorder %s25, 1
      %p337 = scmp.ne.s32.totalorder %s332, %s334
      %p338 = scmp.eq.s32.totalorder %s25, 0
      %p339 = por %p337, %p338
      %p340 = scmp.ne.s32.totalorder %s332, %s334
      %p341 = scmp.eq.s32.totalorder %s30, 1
      %p342 = por %p340, %p341
      %p343 = scmp.ne.s32.totalorder %s334, %s335
      %p344 = scmp.eq.s32.totalorder %s30, 0
      %p345 = por %p343, %p344
      %p346 = scmp.ne.s32.totalorder %s334, %s335
      %p347 = scmp.eq.s32.totalorder %s31, 1
      %p348 = por %p346, %p347
      %p350 = scmp.ne.s32.totalorder %s335, %s349
      %p351 = scmp.eq.s32.totalorder %s31, 0
      %p352 = por %p350, %p351
      %s353 = ssub.s32 %s25, %s32
      %p354 = scmp.eq.s32.totalorder %s353, 0
      %s356 = sadd.s32 %s355, 1
      %s357 = scalar_select %p354, %s355, %s356
      %p360 = pneg %p354
      %p361 = scmp.eq.s32.totalorder %s25, 1
      %p362 = por %p360, %p361
      %p363 = scmp.ne.s32.totalorder %s355, %s358
      %p364 = scmp.eq.s32.totalorder %s25, 0
      %p365 = por %p363, %p364
      %p366 = scmp.ne.s32.totalorder %s355, %s358
      %p367 = scmp.eq.s32.totalorder %s30, 1
      %p368 = por %p366, %p367
      %p369 = scmp.ne.s32.totalorder %s358, %s359
      %p370 = scmp.eq.s32.totalorder %s30, 0
      %p371 = por %p369, %p370
      %p372 = scmp.ne.s32.totalorder %s358, %s359
      %p373 = scmp.eq.s32.totalorder %s31, 1
      %p374 = por %p372, %p373
      %p376 = scmp.ne.s32.totalorder %s359, %s375
      %p377 = scmp.eq.s32.totalorder %s31, 0
      %p378 = por %p376, %p377
      %p379 = scmp.le.s32.totalorder 1, %s25
      %p380 = scmp.lt.s32.totalorder %s25, 3
      %p381 = pnand %p379, %p380
      %p382 = pneg %p381
      // Predicated region
      $region9: #{lstm_fcn_forward.1} parent=5 // pred_check
        _
      $region10: #{lstm_fcn_forward.1} parent=5 // pred_check_branch
        %384 = sbr.rel (%p381) target = $region12
      $region11: #{lstm_fcn_forward.1} parent=5 // pred_region
        %s385 = ssub.s32 %s25, 1
        // Predicated region
        $region13: #{lstm_fcn_forward.1} parent=11 // pred_check
          %p386 = pneg %p72
        $region14: #{lstm_fcn_forward.1} parent=11 // pred_check_branch
          %388 = sbr.rel (%p386) target = $region16
        $region15: #{lstm_fcn_forward.1} parent=11 // pred_region
          _
        $region16: #{lstm_fcn_forward.1} parent=11 // pred_fallthru
          _
        // Predicated region
        $region17: #{lstm_fcn_forward.1} parent=11 // pred_check
          %p389 = pneg %p93
        $region18: #{lstm_fcn_forward.1} parent=11 // pred_check_branch
          %391 = sbr.rel (%p389) target = $region20
        $region19: #{lstm_fcn_forward.1} parent=11 // pred_region
          _
        $region20: #{lstm_fcn_forward.1} parent=11 // pred_fallthru
          _
        // Predicated region
        $region21: #{lstm_fcn_forward.1} parent=11 // pred_check
          %p392 = pneg %p114
        $region22: #{lstm_fcn_forward.1} parent=11 // pred_check_branch
          %394 = sbr.rel (%p392) target = $region24
        $region23: #{lstm_fcn_forward.1} parent=11 // pred_region
          _
        $region24: #{lstm_fcn_forward.1} parent=11 // pred_fallthru
          _
        // Predicated region
        $region25: #{lstm_fcn_forward.1} parent=11 // pred_check
          %p395 = pneg %p135
        $region26: #{lstm_fcn_forward.1} parent=11 // pred_check_branch
          %397 = sbr.rel (%p395) target = $region28
        $region27: #{lstm_fcn_forward.1} parent=11 // pred_region
          _
        $region28: #{lstm_fcn_forward.1} parent=11 // pred_fallthru
          _
        // Predicated region
        $region29: #{lstm_fcn_forward.1} parent=11 // pred_check
          %p398 = pneg %p156
        $region30: #{lstm_fcn_forward.1} parent=11 // pred_check_branch
          %400 = sbr.rel (%p398) target = $region32
        $region31: #{lstm_fcn_forward.1} parent=11 // pred_region
          _
        $region32: #{lstm_fcn_forward.1} parent=11 // pred_fallthru
          _
        // Predicated region
        $region33: #{lstm_fcn_forward.1} parent=11 // pred_check
          %p401 = pneg %p177
        $region34: #{lstm_fcn_forward.1} parent=11 // pred_check_branch
          %403 = sbr.rel (%p401) target = $region36
        $region35: #{lstm_fcn_forward.1} parent=11 // pred_region
          _
        $region36: #{lstm_fcn_forward.1} parent=11 // pred_fallthru
          _
        // Predicated region
        $region37: #{lstm_fcn_forward.1} parent=11 // pred_check
          %p404 = pneg %p198
        $region38: #{lstm_fcn_forward.1} parent=11 // pred_check_branch
          %406 = sbr.rel (%p404) target = $region40
        $region39: #{lstm_fcn_forward.1} parent=11 // pred_region
          %408 = vsyncadd [#allocation5], 0
          %s409 = sshll.u32 %s7, 4
          %s410 = int_to_ptr.hbm [resolvable:$true] %s409
          %s411 = sshll.u32 [#allocation4], 4
          %s412 = int_to_ptr.vmem [resolvable:$true] %s411
          %417 = dma.hbm_to_vmem [thread:$0]  %s410, 12288, %s412, [#allocation5], 256, 256, 16
        $region40: #{lstm_fcn_forward.1} parent=11 // pred_fallthru
          _
        // Predicated region
        $region41: #{lstm_fcn_forward.1} parent=11 // pred_check
          %p418 = pneg %p219
        $region42: #{lstm_fcn_forward.1} parent=11 // pred_check_branch
          %420 = sbr.rel (%p418) target = $region44
        $region43: #{lstm_fcn_forward.1} parent=11 // pred_region
          _
        $region44: #{lstm_fcn_forward.1} parent=11 // pred_fallthru
          _
        // Predicated region
        $region45: #{lstm_fcn_forward.1} parent=11 // pred_check
          %p421 = pneg %p240
        $region46: #{lstm_fcn_forward.1} parent=11 // pred_check_branch
          %423 = sbr.rel (%p421) target = $region48
        $region47: #{lstm_fcn_forward.1} parent=11 // pred_region
          _
        $region48: #{lstm_fcn_forward.1} parent=11 // pred_fallthru
          _
        // Predicated region
        $region49: #{lstm_fcn_forward.1} parent=11 // pred_check
          %p424 = pneg %p261
        $region50: #{lstm_fcn_forward.1} parent=11 // pred_check_branch
          %426 = sbr.rel (%p424) target = $region52
        $region51: #{lstm_fcn_forward.1} parent=11 // pred_region
          _
        $region52: #{lstm_fcn_forward.1} parent=11 // pred_fallthru
          _
        // Predicated region
        $region53: #{lstm_fcn_forward.1} parent=11 // pred_check
          %p427 = pneg %p282
        $region54: #{lstm_fcn_forward.1} parent=11 // pred_check_branch
          %429 = sbr.rel (%p427) target = $region56
        $region55: #{lstm_fcn_forward.1} parent=11 // pred_region
          _
        $region56: #{lstm_fcn_forward.1} parent=11 // pred_fallthru
          _
        // Predicated region
        $region57: #{lstm_fcn_forward.1} parent=11 // pred_check
          %p430 = pneg %p303
        $region58: #{lstm_fcn_forward.1} parent=11 // pred_check_branch
          %432 = sbr.rel (%p430) target = $region60
        $region59: #{lstm_fcn_forward.1} parent=11 // pred_region
          _
        $region60: #{lstm_fcn_forward.1} parent=11 // pred_fallthru
          _
        // Predicated region
        $region61: #{lstm_fcn_forward.1} parent=11 // pred_check
          %p433 = pneg %p324
        $region62: #{lstm_fcn_forward.1} parent=11 // pred_check_branch
          %435 = sbr.rel (%p433) target = $region64
        $region63: #{lstm_fcn_forward.1} parent=11 // pred_region
          _
        $region64: #{lstm_fcn_forward.1} parent=11 // pred_fallthru
          _
        // Predicated region
        $region65: #{lstm_fcn_forward.1} parent=11 // pred_check
          %p436 = pneg %p345
        $region66: #{lstm_fcn_forward.1} parent=11 // pred_check_branch
          %438 = sbr.rel (%p436) target = $region68
        $region67: #{lstm_fcn_forward.1} parent=11 // pred_region
          _
        $region68: #{lstm_fcn_forward.1} parent=11 // pred_fallthru
          _
      $region12: #{lstm_fcn_forward.1} parent=5 // pred_fallthru
        _
      %p439 = scmp.lt.s32.totalorder %s25, 2
      // Predicated region
      $region69: #{lstm_fcn_forward.1} parent=5 // pred_check
        %p440 = pneg %p439
      $region70: #{lstm_fcn_forward.1} parent=5 // pred_check_branch
        %442 = sbr.rel (%p440) target = $region72
      $region71: #{lstm_fcn_forward.1} parent=5 // pred_region
        // Predicated region
        $region73: #{lstm_fcn_forward.1} parent=71 // pred_check
          %p443 = pneg %p45
        $region74: #{lstm_fcn_forward.1} parent=71 // pred_check_branch
          %445 = sbr.rel (%p443) target = $region76
        $region75: #{lstm_fcn_forward.1} parent=71 // pred_region
          %p446 = scmp.lt.s32.totalorder %s25, 1
          %s447 = scalar_select %p446, %s25, 1
          %s448 = smul.addr %s447, 2
          %s449 = smul.addr %s448, 4
          %s450 = scalar_lea.vmem %s0, %s449
        $region76: #{lstm_fcn_forward.1} parent=71 // pred_fallthru
          _
      $region72: #{lstm_fcn_forward.1} parent=5 // pred_fallthru
        _
      %p451 = scmp.le.s32.totalorder 1, %s25
      %p452 = scmp.lt.s32.totalorder %s25, 3
      %p453 = pnand %p451, %p452
      %p454 = pneg %p453
      // Predicated region
      $region77: #{lstm_fcn_forward.1} parent=5 // pred_check
        _
      $region78: #{lstm_fcn_forward.1} parent=5 // pred_check_branch
        %456 = sbr.rel (%p453) target = $region80
      $region79: #{lstm_fcn_forward.1} parent=5 // pred_region
        %s457 = ssub.s32 %s25, 1
        // Predicated region
        $region81: #{lstm_fcn_forward.1} parent=79 // pred_check
          %p458 = pneg %p198
        $region82: #{lstm_fcn_forward.1} parent=79 // pred_check_branch
          %460 = sbr.rel (%p458) target = $region84
        $region83: #{lstm_fcn_forward.1} parent=79 // pred_region
          %462 = dma.done [#allocation5], 12288
        $region84: #{lstm_fcn_forward.1} parent=79 // pred_fallthru
          _
        %p463 = scmp.lt.s32.totalorder %s30, 1
        %s464 = scalar_select %p463, %s30, 1
        %s465 = smul.addr %s464, 2
        %s466 = smul.addr %s465, 4
        %s467 = scalar_lea.vmem %s0, %s466
        %p468 = pneg %p51
        %p469 = pneg %p48
        %p470 = pneg %p72
        %p471 = pneg %p69
        %p472 = pneg %p93
        %p473 = pneg %p90
        %p474 = pneg %p114
        %p475 = pneg %p111
        %p476 = pneg %p135
        %p477 = pneg %p132
        %p478 = pneg %p156
        %p479 = pneg %p153
        %p480 = pneg %p177
        %p481 = pneg %p174
        %p482 = pneg %p198
        %p483 = pneg %p195
        %p484 = pneg %p219
        %p485 = pneg %p216
        %p486 = pneg %p240
        %p487 = pneg %p237
        %p488 = pneg %p261
        %p489 = pneg %p258
        %p490 = pneg %p282
        %p491 = pneg %p279
        %p492 = pneg %p303
        %p493 = pneg %p300
        %p494 = pneg %p324
        %p495 = pneg %p321
        %p496 = pneg %p345
        %p497 = pneg %p342
        %p498 = pneg %p371
        %p499 = pneg %p368
        %s500 = sand.u32 %s358, 1
        %s501 = scalar_lea.sflag [#allocation6], %s500
        %s502 = sand.u32 %s358, 1
        %s503 = scalar_lea.vmem [#allocation7], %s502
        %p504 = scmp.lt.s32.totalorder %s30, 1
        %s505 = scalar_select %p504, %s30, 1
        %s506 = smul.addr %s505, 2
        %s507 = smul.addr %s506, 4
        %s508 = scalar_lea.vmem %s0, %s507
        %v509 = vld [vmem:[%s508] sm:$0xff]
        %v510 = vld [vmem:[%s1] sm:$0xff]
        %v511 = vld [vmem:[%s1 + $0x8] sm:$0xff]
        %v512 = vld [vmem:[%s1 + $0x10] sm:$0xff]
        %v513 = vld [vmem:[%s1 + $0x18] sm:$0xff]
        %v514 = vld [vmem:[%s1 + $0x20] sm:$0xff]
        %v515 = vld [vmem:[%s1 + $0x28] sm:$0xff]
        %v516 = vld [vmem:[%s1 + $0x30] sm:$0xff]
        %v517 = vld [vmem:[%s1 + $0x38] sm:$0xff]
        %v518 = vld [vmem:[%s1 + $0x40] sm:$0xff]
        %v519 = vld [vmem:[%s1 + $0x48] sm:$0xff]
        %v520 = vld [vmem:[%s1 + $0x50] sm:$0xff]
        %v521 = vld [vmem:[%s1 + $0x58] sm:$0xff]
        %v522 = vld [vmem:[%s1 + $0x60] sm:$0xff]
        %v523 = vld [vmem:[%s1 + $0x68] sm:$0xff]
        %v524 = vld [vmem:[%s1 + $0x70] sm:$0xff]
        %v525 = vld [vmem:[%s1 + $0x78] sm:$0xff]
        %s526 = scalar_lea.vmem %s1, 128
        %v527 = vld [vmem:[%s526] sm:$0xff]
        %v528 = vld [vmem:[%s526 + $0x8] sm:$0xff]
        %v529 = vld [vmem:[%s526 + $0x10] sm:$0xff]
        %v530 = vld [vmem:[%s526 + $0x18] sm:$0xff]
        %v531 = vld [vmem:[%s526 + $0x20] sm:$0xff]
        %v532 = vld [vmem:[%s526 + $0x28] sm:$0xff]
        %v533 = vld [vmem:[%s526 + $0x30] sm:$0xff]
        %v534 = vld [vmem:[%s526 + $0x38] sm:$0xff]
        %v535 = vld [vmem:[%s526 + $0x40] sm:$0xff]
        %v536 = vld [vmem:[%s526 + $0x48] sm:$0xff]
        %v537 = vld [vmem:[%s526 + $0x50] sm:$0xff]
        %v538 = vld [vmem:[%s526 + $0x58] sm:$0xff]
        %v539 = vld [vmem:[%s526 + $0x60] sm:$0xff]
        %v540 = vld [vmem:[%s526 + $0x68] sm:$0xff]
        %v541 = vld [vmem:[%s526 + $0x70] sm:$0xff]
        %v542 = vld [vmem:[%s526 + $0x78] sm:$0xff]
        %544 = vst [vmem:[#allocation1] ss:$2 sm:$0xff] %v509
        %v545 = vld.sshfl [vmem:[#allocation1] sm:$0xff pattern:$0x75316420]
        %v546 = vld.sshfl [vmem:[#allocation1 + $0x8] sm:$0xff pattern:$0x75316420]
        %547 = vrot.lane.b32.xlu0 %v545, 127
        %v548 = vpop.permute.xlu0 %547
        %549 = vrot.lane.b32.xlu0 %v546, 127
        %v550 = vpop.permute.xlu0 %549
        %vm551 = vcmask 1039360
        %v552 = vsel %vm551, %v548, %v550
        %vm553 = vcmask 31744
        %v555 = vsel %vm553, %v527, 0
        %v558 = vsel %vm553, %v528, 0
        %v561 = vsel %vm553, %v529, 0
        %v564 = vsel %vm553, %v530, 0
        %v567 = vsel %vm553, %v531, 0
        %v570 = vsel %vm553, %v532, 0
        %v573 = vsel %vm553, %v533, 0
        %v576 = vsel %vm553, %v534, 0
        %v579 = vsel %vm553, %v535, 0
        %v582 = vsel %vm553, %v536, 0
        %v585 = vsel %vm553, %v537, 0
        %v588 = vsel %vm553, %v538, 0
        %v591 = vsel %vm553, %v539, 0
        %v594 = vsel %vm553, %v540, 0
        %v597 = vsel %vm553, %v541, 0
        %v600 = vsel %vm553, %v542, 0
        %vm602 = vcmask 1043456
        %v603 = vsel %vm602, %v552, 0
        %605 = vmatpush.msra.mxu0 0.0
        %606 = vmatpush.msra.mxu0 0.0
        %607 = vmatpush.msra.mxu0 0.0
        %608 = vmatpush.msra.mxu0 0.0
        %609 = vmatpush.msra.mxu0 0.0
        %610 = vmatpush.msra.mxu0 0.0
        %611 = vmatpush.msra.mxu0 0.0
        %612 = vmatpush.msra.mxu0 0.0
        %613 = vmatpush.msra.mxu0 0.0
        %614 = vmatpush.msra.mxu0 0.0
        %615 = vmatpush.msra.mxu0 0.0
        %616 = vmatpush.msra.mxu0 0.0
        %617 = vmatpush.msra.mxu0 0.0
        %618 = vmatpush.msra.mxu0 0.0
        %619 = vmatpush.msra.mxu0 0.0
        %620 = vmatpush.msra.mxu0 %v603
        %621 = vmatmul.f32.gmra.mxu0 %v555
        %v622 = vpop.f32.mrf.mxu0
        %v623 = vadd.f32 0.0, %v622
        %624 = vmatmul.f32.gmra.mxu0 %v558
        %v625 = vpop.f32.mrf.mxu0
        %v626 = vadd.f32 0.0, %v625
        %627 = vmatmul.f32.gmra.mxu0 %v561
        %v628 = vpop.f32.mrf.mxu0
        %v629 = vadd.f32 0.0, %v628
        %630 = vmatmul.f32.gmra.mxu0 %v564
        %v631 = vpop.f32.mrf.mxu0
        %v632 = vadd.f32 0.0, %v631
        %633 = vmatmul.f32.gmra.mxu0 %v567
        %v634 = vpop.f32.mrf.mxu0
        %v635 = vadd.f32 0.0, %v634
        %636 = vmatmul.f32.gmra.mxu0 %v570
        %v637 = vpop.f32.mrf.mxu0
        %v638 = vadd.f32 0.0, %v637
        %639 = vmatmul.f32.gmra.mxu0 %v573
        %v640 = vpop.f32.mrf.mxu0
        %v641 = vadd.f32 0.0, %v640
        %642 = vmatmul.f32.gmra.mxu0 %v576
        %v643 = vpop.f32.mrf.mxu0
        %v644 = vadd.f32 0.0, %v643
        %645 = vmatmul.f32.gmra.mxu0 %v579
        %v646 = vpop.f32.mrf.mxu0
        %v647 = vadd.f32 0.0, %v646
        %648 = vmatmul.f32.gmra.mxu0 %v582
        %v649 = vpop.f32.mrf.mxu0
        %v650 = vadd.f32 0.0, %v649
        %651 = vmatmul.f32.gmra.mxu0 %v585
        %v652 = vpop.f32.mrf.mxu0
        %v653 = vadd.f32 0.0, %v652
        %654 = vmatmul.f32.gmra.mxu0 %v588
        %v655 = vpop.f32.mrf.mxu0
        %v656 = vadd.f32 0.0, %v655
        %657 = vmatmul.f32.gmra.mxu0 %v591
        %v658 = vpop.f32.mrf.mxu0
        %v659 = vadd.f32 0.0, %v658
        %660 = vmatmul.f32.gmra.mxu0 %v594
        %v661 = vpop.f32.mrf.mxu0
        %v662 = vadd.f32 0.0, %v661
        %663 = vmatmul.f32.gmra.mxu0 %v597
        %v664 = vpop.f32.mrf.mxu0
        %v665 = vadd.f32 0.0, %v664
        %666 = vmatmul.f32.gmra.mxu0 %v600
        %v667 = vpop.f32.mrf.mxu0
        %v668 = vadd.f32 0.0, %v667
        %669 = vdwg.mxu0
        %v671 = vsel %vm553, %v510, 0
        %v674 = vsel %vm553, %v511, 0
        %v677 = vsel %vm553, %v512, 0
        %v680 = vsel %vm553, %v513, 0
        %v683 = vsel %vm553, %v514, 0
        %v686 = vsel %vm553, %v515, 0
        %v689 = vsel %vm553, %v516, 0
        %v692 = vsel %vm553, %v517, 0
        %v695 = vsel %vm553, %v518, 0
        %v698 = vsel %vm553, %v519, 0
        %v701 = vsel %vm553, %v520, 0
        %v704 = vsel %vm553, %v521, 0
        %v707 = vsel %vm553, %v522, 0
        %v710 = vsel %vm553, %v523, 0
        %v713 = vsel %vm553, %v524, 0
        %v716 = vsel %vm553, %v525, 0
        %v718 = vsel %vm602, %v509, 0
        %720 = vmatpush.msra.mxu0 0.0
        %721 = vmatpush.msra.mxu0 0.0
        %722 = vmatpush.msra.mxu0 0.0
        %723 = vmatpush.msra.mxu0 0.0
        %724 = vmatpush.msra.mxu0 0.0
        %725 = vmatpush.msra.mxu0 0.0
        %726 = vmatpush.msra.mxu0 0.0
        %727 = vmatpush.msra.mxu0 0.0
        %728 = vmatpush.msra.mxu0 0.0
        %729 = vmatpush.msra.mxu0 0.0
        %730 = vmatpush.msra.mxu0 0.0
        %731 = vmatpush.msra.mxu0 0.0
        %732 = vmatpush.msra.mxu0 0.0
        %733 = vmatpush.msra.mxu0 0.0
        %734 = vmatpush.msra.mxu0 0.0
        %735 = vmatpush.msra.mxu0 %v718
        %736 = vmatmul.f32.gmra.mxu0 %v671
        %v737 = vpop.f32.mrf.mxu0
        %v738 = vadd.f32 %v623, %v737
        %739 = vmatmul.f32.gmra.mxu0 %v674
        %v740 = vpop.f32.mrf.mxu0
        %v741 = vadd.f32 %v626, %v740
        %742 = vmatmul.f32.gmra.mxu0 %v677
        %v743 = vpop.f32.mrf.mxu0
        %v744 = vadd.f32 %v629, %v743
        %745 = vmatmul.f32.gmra.mxu0 %v680
        %v746 = vpop.f32.mrf.mxu0
        %v747 = vadd.f32 %v632, %v746
        %748 = vmatmul.f32.gmra.mxu0 %v683
        %v749 = vpop.f32.mrf.mxu0
        %v750 = vadd.f32 %v635, %v749
        %751 = vmatmul.f32.gmra.mxu0 %v686
        %v752 = vpop.f32.mrf.mxu0
        %v753 = vadd.f32 %v638, %v752
        %754 = vmatmul.f32.gmra.mxu0 %v689
        %v755 = vpop.f32.mrf.mxu0
        %v756 = vadd.f32 %v641, %v755
        %757 = vmatmul.f32.gmra.mxu0 %v692
        %v758 = vpop.f32.mrf.mxu0
        %v759 = vadd.f32 %v644, %v758
        %760 = vmatmul.f32.gmra.mxu0 %v695
        %v761 = vpop.f32.mrf.mxu0
        %v762 = vadd.f32 %v647, %v761
        %763 = vmatmul.f32.gmra.mxu0 %v698
        %v764 = vpop.f32.mrf.mxu0
        %v765 = vadd.f32 %v650, %v764
        %766 = vmatmul.f32.gmra.mxu0 %v701
        %v767 = vpop.f32.mrf.mxu0
        %v768 = vadd.f32 %v653, %v767
        %769 = vmatmul.f32.gmra.mxu0 %v704
        %v770 = vpop.f32.mrf.mxu0
        %v771 = vadd.f32 %v656, %v770
        %772 = vmatmul.f32.gmra.mxu0 %v707
        %v773 = vpop.f32.mrf.mxu0
        %v774 = vadd.f32 %v659, %v773
        %775 = vmatmul.f32.gmra.mxu0 %v710
        %v776 = vpop.f32.mrf.mxu0
        %v777 = vadd.f32 %v662, %v776
        %778 = vmatmul.f32.gmra.mxu0 %v713
        %v779 = vpop.f32.mrf.mxu0
        %v780 = vadd.f32 %v665, %v779
        %781 = vmatmul.f32.gmra.mxu0 %v716
        %v782 = vpop.f32.mrf.mxu0
        %v783 = vadd.f32 %v668, %v782
        %784 = vdwg.mxu0
        %s785 = scalar_lea.vmem %s1, 256
        %v786 = vld [vmem:[%s785] sm:$0xff]
        %v787 = vld [vmem:[%s785 + $0x8] sm:$0xff]
        %v788 = vld [vmem:[%s785 + $0x10] sm:$0xff]
        %v789 = vld [vmem:[%s785 + $0x18] sm:$0xff]
        %v790 = vld [vmem:[%s785 + $0x20] sm:$0xff]
        %v791 = vld [vmem:[%s785 + $0x28] sm:$0xff]
        %v792 = vld [vmem:[%s785 + $0x30] sm:$0xff]
        %v793 = vld [vmem:[%s785 + $0x38] sm:$0xff]
        %v794 = vld [vmem:[%s785 + $0x40] sm:$0xff]
        %v795 = vld [vmem:[%s785 + $0x48] sm:$0xff]
        %v796 = vld [vmem:[%s785 + $0x50] sm:$0xff]
        %v797 = vld [vmem:[%s785 + $0x58] sm:$0xff]
        %v798 = vld [vmem:[%s785 + $0x60] sm:$0xff]
        %v799 = vld [vmem:[%s785 + $0x68] sm:$0xff]
        %v800 = vld [vmem:[%s785 + $0x70] sm:$0xff]
        %v801 = vld [vmem:[%s785 + $0x78] sm:$0xff]
        %802 = vst [vmem:[#allocation1] ss:$2 sm:$0xff] %v509
        %v803 = vld.sshfl [vmem:[#allocation1] sm:$0xff pattern:$0x75316420]
        %v804 = vld.sshfl [vmem:[#allocation1 + $0x8] sm:$0xff pattern:$0x75316420]
        %805 = vrot.lane.b32.xlu0 %v803, 126
        %v806 = vpop.permute.xlu0 %805
        %807 = vrot.lane.b32.xlu0 %v804, 126
        %v808 = vpop.permute.xlu0 %807
        %vm809 = vcmask 1031168
        %v810 = vsel %vm809, %v806, %v808
        %v812 = vsel %vm553, %v786, 0
        %v815 = vsel %vm553, %v787, 0
        %v818 = vsel %vm553, %v788, 0
        %v821 = vsel %vm553, %v789, 0
        %v824 = vsel %vm553, %v790, 0
        %v827 = vsel %vm553, %v791, 0
        %v830 = vsel %vm553, %v792, 0
        %v833 = vsel %vm553, %v793, 0
        %v836 = vsel %vm553, %v794, 0
        %v839 = vsel %vm553, %v795, 0
        %v842 = vsel %vm553, %v796, 0
        %v845 = vsel %vm553, %v797, 0
        %v848 = vsel %vm553, %v798, 0
        %v851 = vsel %vm553, %v799, 0
        %v854 = vsel %vm553, %v800, 0
        %v857 = vsel %vm553, %v801, 0
        %v859 = vsel %vm602, %v810, 0
        %861 = vmatpush.msra.mxu0 0.0
        %862 = vmatpush.msra.mxu0 0.0
        %863 = vmatpush.msra.mxu0 0.0
        %864 = vmatpush.msra.mxu0 0.0
        %865 = vmatpush.msra.mxu0 0.0
        %866 = vmatpush.msra.mxu0 0.0
        %867 = vmatpush.msra.mxu0 0.0
        %868 = vmatpush.msra.mxu0 0.0
        %869 = vmatpush.msra.mxu0 0.0
        %870 = vmatpush.msra.mxu0 0.0
        %871 = vmatpush.msra.mxu0 0.0
        %872 = vmatpush.msra.mxu0 0.0
        %873 = vmatpush.msra.mxu0 0.0
        %874 = vmatpush.msra.mxu0 0.0
        %875 = vmatpush.msra.mxu0 0.0
        %876 = vmatpush.msra.mxu0 %v859
        %877 = vmatmul.f32.gmra.mxu0 %v812
        %v878 = vpop.f32.mrf.mxu0
        %v879 = vadd.f32 0.0, %v878
        %880 = vmatmul.f32.gmra.mxu0 %v815
        %v881 = vpop.f32.mrf.mxu0
        %v882 = vadd.f32 0.0, %v881
        %883 = vmatmul.f32.gmra.mxu0 %v818
        %v884 = vpop.f32.mrf.mxu0
        %v885 = vadd.f32 0.0, %v884
        %886 = vmatmul.f32.gmra.mxu0 %v821
        %v887 = vpop.f32.mrf.mxu0
        %v888 = vadd.f32 0.0, %v887
        %889 = vmatmul.f32.gmra.mxu0 %v824
        %v890 = vpop.f32.mrf.mxu0
        %v891 = vadd.f32 0.0, %v890
        %892 = vmatmul.f32.gmra.mxu0 %v827
        %v893 = vpop.f32.mrf.mxu0
        %v894 = vadd.f32 0.0, %v893
        %895 = vmatmul.f32.gmra.mxu0 %v830
        %v896 = vpop.f32.mrf.mxu0
        %v897 = vadd.f32 0.0, %v896
        %898 = vmatmul.f32.gmra.mxu0 %v833
        %v899 = vpop.f32.mrf.mxu0
        %v900 = vadd.f32 0.0, %v899
        %901 = vmatmul.f32.gmra.mxu0 %v836
        %v902 = vpop.f32.mrf.mxu0
        %v903 = vadd.f32 0.0, %v902
        %904 = vmatmul.f32.gmra.mxu0 %v839
        %v905 = vpop.f32.mrf.mxu0
        %v906 = vadd.f32 0.0, %v905
        %907 = vmatmul.f32.gmra.mxu0 %v842
        %v908 = vpop.f32.mrf.mxu0
        %v909 = vadd.f32 0.0, %v908
        %910 = vmatmul.f32.gmra.mxu0 %v845
        %v911 = vpop.f32.mrf.mxu0
        %v912 = vadd.f32 0.0, %v911
        %913 = vmatmul.f32.gmra.mxu0 %v848
        %v914 = vpop.f32.mrf.mxu0
        %v915 = vadd.f32 0.0, %v914
        %916 = vmatmul.f32.gmra.mxu0 %v851
        %v917 = vpop.f32.mrf.mxu0
        %v918 = vadd.f32 0.0, %v917
        %919 = vmatmul.f32.gmra.mxu0 %v854
        %v920 = vpop.f32.mrf.mxu0
        %v921 = vadd.f32 0.0, %v920
        %922 = vmatmul.f32.gmra.mxu0 %v857
        %v923 = vpop.f32.mrf.mxu0
        %v924 = vadd.f32 0.0, %v923
        %925 = vdwg.mxu0
        %v926 = vadd.f32 %v738, %v879
        %v927 = vadd.f32 %v741, %v882
        %v928 = vadd.f32 %v744, %v885
        %v929 = vadd.f32 %v747, %v888
        %v930 = vadd.f32 %v750, %v891
        %v931 = vadd.f32 %v753, %v894
        %v932 = vadd.f32 %v756, %v897
        %v933 = vadd.f32 %v759, %v900
        %v934 = vadd.f32 %v762, %v903
        %v935 = vadd.f32 %v765, %v906
        %v936 = vadd.f32 %v768, %v909
        %v937 = vadd.f32 %v771, %v912
        %v938 = vadd.f32 %v774, %v915
        %v939 = vadd.f32 %v777, %v918
        %v940 = vadd.f32 %v780, %v921
        %v941 = vadd.f32 %v783, %v924
        %s942 = scalar_lea.vmem %s1, 384
        %v943 = vld [vmem:[%s942] sm:$0xff]
        %v944 = vld [vmem:[%s942 + $0x8] sm:$0xff]
        %v945 = vld [vmem:[%s942 + $0x10] sm:$0xff]
        %v946 = vld [vmem:[%s942 + $0x18] sm:$0xff]
        %v947 = vld [vmem:[%s942 + $0x20] sm:$0xff]
        %v948 = vld [vmem:[%s942 + $0x28] sm:$0xff]
        %v949 = vld [vmem:[%s942 + $0x30] sm:$0xff]
        %v950 = vld [vmem:[%s942 + $0x38] sm:$0xff]
        %v951 = vld [vmem:[%s942 + $0x40] sm:$0xff]
        %v952 = vld [vmem:[%s942 + $0x48] sm:$0xff]
        %v953 = vld [vmem:[%s942 + $0x50] sm:$0xff]
        %v954 = vld [vmem:[%s942 + $0x58] sm:$0xff]
        %v955 = vld [vmem:[%s942 + $0x60] sm:$0xff]
        %v956 = vld [vmem:[%s942 + $0x68] sm:$0xff]
        %v957 = vld [vmem:[%s942 + $0x70] sm:$0xff]
        %v958 = vld [vmem:[%s942 + $0x78] sm:$0xff]
        %959 = vst [vmem:[#allocation1] ss:$2 sm:$0xff] %v509
        %v960 = vld.sshfl [vmem:[#allocation1] sm:$0xff pattern:$0x75316420]
        %v961 = vld.sshfl [vmem:[#allocation1 + $0x8] sm:$0xff pattern:$0x75316420]
        %962 = vrot.lane.b32.xlu0 %v960, 125
        %v963 = vpop.permute.xlu0 %962
        %964 = vrot.lane.b32.xlu0 %v961, 125
        %v965 = vpop.permute.xlu0 %964
        %vm966 = vcmask 1022976
        %v967 = vsel %vm966, %v963, %v965
        %v969 = vsel %vm553, %v943, 0
        %v972 = vsel %vm553, %v944, 0
        %v975 = vsel %vm553, %v945, 0
        %v978 = vsel %vm553, %v946, 0
        %v981 = vsel %vm553, %v947, 0
        %v984 = vsel %vm553, %v948, 0
        %v987 = vsel %vm553, %v949, 0
        %v990 = vsel %vm553, %v950, 0
        %v993 = vsel %vm553, %v951, 0
        %v996 = vsel %vm553, %v952, 0
        %v999 = vsel %vm553, %v953, 0
        %v1002 = vsel %vm553, %v954, 0
        %v1005 = vsel %vm553, %v955, 0
        %v1008 = vsel %vm553, %v956, 0
        %v1011 = vsel %vm553, %v957, 0
        %v1014 = vsel %vm553, %v958, 0
        %v1016 = vsel %vm602, %v967, 0
        %1018 = vmatpush.msra.mxu0 0.0
        %1019 = vmatpush.msra.mxu0 0.0
        %1020 = vmatpush.msra.mxu0 0.0
        %1021 = vmatpush.msra.mxu0 0.0
        %1022 = vmatpush.msra.mxu0 0.0
        %1023 = vmatpush.msra.mxu0 0.0
        %1024 = vmatpush.msra.mxu0 0.0
        %1025 = vmatpush.msra.mxu0 0.0
        %1026 = vmatpush.msra.mxu0 0.0
        %1027 = vmatpush.msra.mxu0 0.0
        %1028 = vmatpush.msra.mxu0 0.0
        %1029 = vmatpush.msra.mxu0 0.0
        %1030 = vmatpush.msra.mxu0 0.0
        %1031 = vmatpush.msra.mxu0 0.0
        %1032 = vmatpush.msra.mxu0 0.0
        %1033 = vmatpush.msra.mxu0 %v1016
        %1034 = vmatmul.f32.gmra.mxu0 %v969
        %v1035 = vpop.f32.mrf.mxu0
        %v1036 = vadd.f32 0.0, %v1035
        %1037 = vmatmul.f32.gmra.mxu0 %v972
        %v1038 = vpop.f32.mrf.mxu0
        %v1039 = vadd.f32 0.0, %v1038
        %1040 = vmatmul.f32.gmra.mxu0 %v975
        %v1041 = vpop.f32.mrf.mxu0
        %v1042 = vadd.f32 0.0, %v1041
        %1043 = vmatmul.f32.gmra.mxu0 %v978
        %v1044 = vpop.f32.mrf.mxu0
        %v1045 = vadd.f32 0.0, %v1044
        %1046 = vmatmul.f32.gmra.mxu0 %v981
        %v1047 = vpop.f32.mrf.mxu0
        %v1048 = vadd.f32 0.0, %v1047
        %1049 = vmatmul.f32.gmra.mxu0 %v984
        %v1050 = vpop.f32.mrf.mxu0
        %v1051 = vadd.f32 0.0, %v1050
        %1052 = vmatmul.f32.gmra.mxu0 %v987
        %v1053 = vpop.f32.mrf.mxu0
        %v1054 = vadd.f32 0.0, %v1053
        %1055 = vmatmul.f32.gmra.mxu0 %v990
        %v1056 = vpop.f32.mrf.mxu0
        %v1057 = vadd.f32 0.0, %v1056
        %1058 = vmatmul.f32.gmra.mxu0 %v993
        %v1059 = vpop.f32.mrf.mxu0
        %v1060 = vadd.f32 0.0, %v1059
        %1061 = vmatmul.f32.gmra.mxu0 %v996
        %v1062 = vpop.f32.mrf.mxu0
        %v1063 = vadd.f32 0.0, %v1062
        %1064 = vmatmul.f32.gmra.mxu0 %v999
        %v1065 = vpop.f32.mrf.mxu0
        %v1066 = vadd.f32 0.0, %v1065
        %1067 = vmatmul.f32.gmra.mxu0 %v1002
        %v1068 = vpop.f32.mrf.mxu0
        %v1069 = vadd.f32 0.0, %v1068
        %1070 = vmatmul.f32.gmra.mxu0 %v1005
        %v1071 = vpop.f32.mrf.mxu0
        %v1072 = vadd.f32 0.0, %v1071
        %1073 = vmatmul.f32.gmra.mxu0 %v1008
        %v1074 = vpop.f32.mrf.mxu0
        %v1075 = vadd.f32 0.0, %v1074
        %1076 = vmatmul.f32.gmra.mxu0 %v1011
        %v1077 = vpop.f32.mrf.mxu0
        %v1078 = vadd.f32 0.0, %v1077
        %1079 = vmatmul.f32.gmra.mxu0 %v1014
        %v1080 = vpop.f32.mrf.mxu0
        %v1081 = vadd.f32 0.0, %v1080
        %1082 = vdwg.mxu0
        %v1083 = vadd.f32 %v926, %v1036
        %v1084 = vadd.f32 %v927, %v1039
        %v1085 = vadd.f32 %v928, %v1042
        %v1086 = vadd.f32 %v929, %v1045
        %v1087 = vadd.f32 %v930, %v1048
        %v1088 = vadd.f32 %v931, %v1051
        %v1089 = vadd.f32 %v932, %v1054
        %v1090 = vadd.f32 %v933, %v1057
        %v1091 = vadd.f32 %v934, %v1060
        %v1092 = vadd.f32 %v935, %v1063
        %v1093 = vadd.f32 %v936, %v1066
        %v1094 = vadd.f32 %v937, %v1069
        %v1095 = vadd.f32 %v938, %v1072
        %v1096 = vadd.f32 %v939, %v1075
        %v1097 = vadd.f32 %v940, %v1078
        %v1098 = vadd.f32 %v941, %v1081
        %s1099 = scalar_lea.vmem %s1, 512
        %v1100 = vld [vmem:[%s1099] sm:$0xff]
        %v1101 = vld [vmem:[%s1099 + $0x8] sm:$0xff]
        %v1102 = vld [vmem:[%s1099 + $0x10] sm:$0xff]
        %v1103 = vld [vmem:[%s1099 + $0x18] sm:$0xff]
        %v1104 = vld [vmem:[%s1099 + $0x20] sm:$0xff]
        %v1105 = vld [vmem:[%s1099 + $0x28] sm:$0xff]
        %v1106 = vld [vmem:[%s1099 + $0x30] sm:$0xff]
        %v1107 = vld [vmem:[%s1099 + $0x38] sm:$0xff]
        %v1108 = vld [vmem:[%s1099 + $0x40] sm:$0xff]
        %v1109 = vld [vmem:[%s1099 + $0x48] sm:$0xff]
        %v1110 = vld [vmem:[%s1099 + $0x50] sm:$0xff]
        %v1111 = vld [vmem:[%s1099 + $0x58] sm:$0xff]
        %v1112 = vld [vmem:[%s1099 + $0x60] sm:$0xff]
        %v1113 = vld [vmem:[%s1099 + $0x68] sm:$0xff]
        %v1114 = vld [vmem:[%s1099 + $0x70] sm:$0xff]
        %v1115 = vld [vmem:[%s1099 + $0x78] sm:$0xff]
        %1116 = vst [vmem:[#allocation1] ss:$2 sm:$0xff] %v509
        %v1117 = vld.sshfl [vmem:[#allocation1] sm:$0xff pattern:$0x75316420]
        %v1118 = vld.sshfl [vmem:[#allocation1 + $0x8] sm:$0xff pattern:$0x75316420]
        %1119 = vrot.lane.b32.xlu0 %v1117, 124
        %v1120 = vpop.permute.xlu0 %1119
        %1121 = vrot.lane.b32.xlu0 %v1118, 124
        %v1122 = vpop.permute.xlu0 %1121
        %vm1123 = vcmask 1014784
        %v1124 = vsel %vm1123, %v1120, %v1122
        %v1126 = vsel %vm553, %v1100, 0
        %v1129 = vsel %vm553, %v1101, 0
        %v1132 = vsel %vm553, %v1102, 0
        %v1135 = vsel %vm553, %v1103, 0
        %v1138 = vsel %vm553, %v1104, 0
        %v1141 = vsel %vm553, %v1105, 0
        %v1144 = vsel %vm553, %v1106, 0
        %v1147 = vsel %vm553, %v1107, 0
        %v1150 = vsel %vm553, %v1108, 0
        %v1153 = vsel %vm553, %v1109, 0
        %v1156 = vsel %vm553, %v1110, 0
        %v1159 = vsel %vm553, %v1111, 0
        %v1162 = vsel %vm553, %v1112, 0
        %v1165 = vsel %vm553, %v1113, 0
        %v1168 = vsel %vm553, %v1114, 0
        %v1171 = vsel %vm553, %v1115, 0
        %v1173 = vsel %vm602, %v1124, 0
        %1175 = vmatpush.msra.mxu0 0.0
        %1176 = vmatpush.msra.mxu0 0.0
        %1177 = vmatpush.msra.mxu0 0.0
        %1178 = vmatpush.msra.mxu0 0.0
        %1179 = vmatpush.msra.mxu0 0.0
        %1180 = vmatpush.msra.mxu0 0.0
        %1181 = vmatpush.msra.mxu0 0.0
        %1182 = vmatpush.msra.mxu0 0.0
        %1183 = vmatpush.msra.mxu0 0.0
        %1184 = vmatpush.msra.mxu0 0.0
        %1185 = vmatpush.msra.mxu0 0.0
        %1186 = vmatpush.msra.mxu0 0.0
        %1187 = vmatpush.msra.mxu0 0.0
        %1188 = vmatpush.msra.mxu0 0.0
        %1189 = vmatpush.msra.mxu0 0.0
        %1190 = vmatpush.msra.mxu0 %v1173
        %1191 = vmatmul.f32.gmra.mxu0 %v1126
        %v1192 = vpop.f32.mrf.mxu0
        %v1193 = vadd.f32 0.0, %v1192
        %1194 = vmatmul.f32.gmra.mxu0 %v1129
        %v1195 = vpop.f32.mrf.mxu0
        %v1196 = vadd.f32 0.0, %v1195
        %1197 = vmatmul.f32.gmra.mxu0 %v1132
        %v1198 = vpop.f32.mrf.mxu0
        %v1199 = vadd.f32 0.0, %v1198
        %1200 = vmatmul.f32.gmra.mxu0 %v1135
        %v1201 = vpop.f32.mrf.mxu0
        %v1202 = vadd.f32 0.0, %v1201
        %1203 = vmatmul.f32.gmra.mxu0 %v1138
        %v1204 = vpop.f32.mrf.mxu0
        %v1205 = vadd.f32 0.0, %v1204
        %1206 = vmatmul.f32.gmra.mxu0 %v1141
        %v1207 = vpop.f32.mrf.mxu0
        %v1208 = vadd.f32 0.0, %v1207
        %1209 = vmatmul.f32.gmra.mxu0 %v1144
        %v1210 = vpop.f32.mrf.mxu0
        %v1211 = vadd.f32 0.0, %v1210
        %1212 = vmatmul.f32.gmra.mxu0 %v1147
        %v1213 = vpop.f32.mrf.mxu0
        %v1214 = vadd.f32 0.0, %v1213
        %1215 = vmatmul.f32.gmra.mxu0 %v1150
        %v1216 = vpop.f32.mrf.mxu0
        %v1217 = vadd.f32 0.0, %v1216
        %1218 = vmatmul.f32.gmra.mxu0 %v1153
        %v1219 = vpop.f32.mrf.mxu0
        %v1220 = vadd.f32 0.0, %v1219
        %1221 = vmatmul.f32.gmra.mxu0 %v1156
        %v1222 = vpop.f32.mrf.mxu0
        %v1223 = vadd.f32 0.0, %v1222
        %1224 = vmatmul.f32.gmra.mxu0 %v1159
        %v1225 = vpop.f32.mrf.mxu0
        %v1226 = vadd.f32 0.0, %v1225
        %1227 = vmatmul.f32.gmra.mxu0 %v1162
        %v1228 = vpop.f32.mrf.mxu0
        %v1229 = vadd.f32 0.0, %v1228
        %1230 = vmatmul.f32.gmra.mxu0 %v1165
        %v1231 = vpop.f32.mrf.mxu0
        %v1232 = vadd.f32 0.0, %v1231
        %1233 = vmatmul.f32.gmra.mxu0 %v1168
        %v1234 = vpop.f32.mrf.mxu0
        %v1235 = vadd.f32 0.0, %v1234
        %1236 = vmatmul.f32.gmra.mxu0 %v1171
        %v1237 = vpop.f32.mrf.mxu0
        %v1238 = vadd.f32 0.0, %v1237
        %1239 = vdwg.mxu0
        %v1240 = vadd.f32 %v1083, %v1193
        %v1241 = vadd.f32 %v1084, %v1196
        %v1242 = vadd.f32 %v1085, %v1199
        %v1243 = vadd.f32 %v1086, %v1202
        %v1244 = vadd.f32 %v1087, %v1205
        %v1245 = vadd.f32 %v1088, %v1208
        %v1246 = vadd.f32 %v1089, %v1211
        %v1247 = vadd.f32 %v1090, %v1214
        %v1248 = vadd.f32 %v1091, %v1217
        %v1249 = vadd.f32 %v1092, %v1220
        %v1250 = vadd.f32 %v1093, %v1223
        %v1251 = vadd.f32 %v1094, %v1226
        %v1252 = vadd.f32 %v1095, %v1229
        %v1253 = vadd.f32 %v1096, %v1232
        %v1254 = vadd.f32 %v1097, %v1235
        %v1255 = vadd.f32 %v1098, %v1238
        %s1256 = scalar_lea.vmem %s1, 640
        %v1257 = vld [vmem:[%s1256] sm:$0xff]
        %v1258 = vld [vmem:[%s1256 + $0x8] sm:$0xff]
        %v1259 = vld [vmem:[%s1256 + $0x10] sm:$0xff]
        %v1260 = vld [vmem:[%s1256 + $0x18] sm:$0xff]
        %v1261 = vld [vmem:[%s1256 + $0x20] sm:$0xff]
        %v1262 = vld [vmem:[%s1256 + $0x28] sm:$0xff]
        %v1263 = vld [vmem:[%s1256 + $0x30] sm:$0xff]
        %v1264 = vld [vmem:[%s1256 + $0x38] sm:$0xff]
        %v1265 = vld [vmem:[%s1256 + $0x40] sm:$0xff]
        %v1266 = vld [vmem:[%s1256 + $0x48] sm:$0xff]
        %v1267 = vld [vmem:[%s1256 + $0x50] sm:$0xff]
        %v1268 = vld [vmem:[%s1256 + $0x58] sm:$0xff]
        %v1269 = vld [vmem:[%s1256 + $0x60] sm:$0xff]
        %v1270 = vld [vmem:[%s1256 + $0x68] sm:$0xff]
        %v1271 = vld [vmem:[%s1256 + $0x70] sm:$0xff]
        %v1272 = vld [vmem:[%s1256 + $0x78] sm:$0xff]
        %1273 = vst [vmem:[#allocation1] ss:$2 sm:$0xff] %v509
        %v1274 = vld.sshfl [vmem:[#allocation1] sm:$0xff pattern:$0x75316420]
        %v1275 = vld.sshfl [vmem:[#allocation1 + $0x8] sm:$0xff pattern:$0x75316420]
        %1276 = vrot.lane.b32.xlu0 %v1274, 123
        %v1277 = vpop.permute.xlu0 %1276
        %1278 = vrot.lane.b32.xlu0 %v1275, 123
        %v1279 = vpop.permute.xlu0 %1278
        %vm1280 = vcmask 1006592
        %v1281 = vsel %vm1280, %v1277, %v1279
        %v1283 = vsel %vm553, %v1257, 0
        %v1286 = vsel %vm553, %v1258, 0
        %v1289 = vsel %vm553, %v1259, 0
        %v1292 = vsel %vm553, %v1260, 0
        %v1295 = vsel %vm553, %v1261, 0
        %v1298 = vsel %vm553, %v1262, 0
        %v1301 = vsel %vm553, %v1263, 0
        %v1304 = vsel %vm553, %v1264, 0
        %v1307 = vsel %vm553, %v1265, 0
        %v1310 = vsel %vm553, %v1266, 0
        %v1313 = vsel %vm553, %v1267, 0
        %v1316 = vsel %vm553, %v1268, 0
        %v1319 = vsel %vm553, %v1269, 0
        %v1322 = vsel %vm553, %v1270, 0
        %v1325 = vsel %vm553, %v1271, 0
        %v1328 = vsel %vm553, %v1272, 0
        %v1330 = vsel %vm602, %v1281, 0
        %1332 = vmatpush.msra.mxu0 0.0
        %1333 = vmatpush.msra.mxu0 0.0
        %1334 = vmatpush.msra.mxu0 0.0
        %1335 = vmatpush.msra.mxu0 0.0
        %1336 = vmatpush.msra.mxu0 0.0
        %1337 = vmatpush.msra.mxu0 0.0
        %1338 = vmatpush.msra.mxu0 0.0
        %1339 = vmatpush.msra.mxu0 0.0
        %1340 = vmatpush.msra.mxu0 0.0
        %1341 = vmatpush.msra.mxu0 0.0
        %1342 = vmatpush.msra.mxu0 0.0
        %1343 = vmatpush.msra.mxu0 0.0
        %1344 = vmatpush.msra.mxu0 0.0
        %1345 = vmatpush.msra.mxu0 0.0
        %1346 = vmatpush.msra.mxu0 0.0
        %1347 = vmatpush.msra.mxu0 %v1330
        %1348 = vmatmul.f32.gmra.mxu0 %v1283
        %v1349 = vpop.f32.mrf.mxu0
        %v1350 = vadd.f32 0.0, %v1349
        %1351 = vmatmul.f32.gmra.mxu0 %v1286
        %v1352 = vpop.f32.mrf.mxu0
        %v1353 = vadd.f32 0.0, %v1352
        %1354 = vmatmul.f32.gmra.mxu0 %v1289
        %v1355 = vpop.f32.mrf.mxu0
        %v1356 = vadd.f32 0.0, %v1355
        %1357 = vmatmul.f32.gmra.mxu0 %v1292
        %v1358 = vpop.f32.mrf.mxu0
        %v1359 = vadd.f32 0.0, %v1358
        %1360 = vmatmul.f32.gmra.mxu0 %v1295
        %v1361 = vpop.f32.mrf.mxu0
        %v1362 = vadd.f32 0.0, %v1361
        %1363 = vmatmul.f32.gmra.mxu0 %v1298
        %v1364 = vpop.f32.mrf.mxu0
        %v1365 = vadd.f32 0.0, %v1364
        %1366 = vmatmul.f32.gmra.mxu0 %v1301
        %v1367 = vpop.f32.mrf.mxu0
        %v1368 = vadd.f32 0.0, %v1367
        %1369 = vmatmul.f32.gmra.mxu0 %v1304
        %v1370 = vpop.f32.mrf.mxu0
        %v1371 = vadd.f32 0.0, %v1370
        %1372 = vmatmul.f32.gmra.mxu0 %v1307
        %v1373 = vpop.f32.mrf.mxu0
        %v1374 = vadd.f32 0.0, %v1373
        %1375 = vmatmul.f32.gmra.mxu0 %v1310
        %v1376 = vpop.f32.mrf.mxu0
        %v1377 = vadd.f32 0.0, %v1376
        %1378 = vmatmul.f32.gmra.mxu0 %v1313
        %v1379 = vpop.f32.mrf.mxu0
        %v1380 = vadd.f32 0.0, %v1379
        %1381 = vmatmul.f32.gmra.mxu0 %v1316
        %v1382 = vpop.f32.mrf.mxu0
        %v1383 = vadd.f32 0.0, %v1382
        %1384 = vmatmul.f32.gmra.mxu0 %v1319
        %v1385 = vpop.f32.mrf.mxu0
        %v1386 = vadd.f32 0.0, %v1385
        %1387 = vmatmul.f32.gmra.mxu0 %v1322
        %v1388 = vpop.f32.mrf.mxu0
        %v1389 = vadd.f32 0.0, %v1388
        %1390 = vmatmul.f32.gmra.mxu0 %v1325
        %v1391 = vpop.f32.mrf.mxu0
        %v1392 = vadd.f32 0.0, %v1391
        %1393 = vmatmul.f32.gmra.mxu0 %v1328
        %v1394 = vpop.f32.mrf.mxu0
        %v1395 = vadd.f32 0.0, %v1394
        %1396 = vdwg.mxu0
        %v1397 = vadd.f32 %v1240, %v1350
        %v1398 = vadd.f32 %v1241, %v1353
        %v1399 = vadd.f32 %v1242, %v1356
        %v1400 = vadd.f32 %v1243, %v1359
        %v1401 = vadd.f32 %v1244, %v1362
        %v1402 = vadd.f32 %v1245, %v1365
        %v1403 = vadd.f32 %v1246, %v1368
        %v1404 = vadd.f32 %v1247, %v1371
        %v1405 = vadd.f32 %v1248, %v1374
        %v1406 = vadd.f32 %v1249, %v1377
        %v1407 = vadd.f32 %v1250, %v1380
        %v1408 = vadd.f32 %v1251, %v1383
        %v1409 = vadd.f32 %v1252, %v1386
        %v1410 = vadd.f32 %v1253, %v1389
        %v1411 = vadd.f32 %v1254, %v1392
        %v1412 = vadd.f32 %v1255, %v1395
        %s1413 = scalar_lea.vmem %s1, 768
        %v1414 = vld [vmem:[%s1413] sm:$0xff]
        %v1415 = vld [vmem:[%s1413 + $0x8] sm:$0xff]
        %v1416 = vld [vmem:[%s1413 + $0x10] sm:$0xff]
        %v1417 = vld [vmem:[%s1413 + $0x18] sm:$0xff]
        %v1418 = vld [vmem:[%s1413 + $0x20] sm:$0xff]
        %v1419 = vld [vmem:[%s1413 + $0x28] sm:$0xff]
        %v1420 = vld [vmem:[%s1413 + $0x30] sm:$0xff]
        %v1421 = vld [vmem:[%s1413 + $0x38] sm:$0xff]
        %v1422 = vld [vmem:[%s1413 + $0x40] sm:$0xff]
        %v1423 = vld [vmem:[%s1413 + $0x48] sm:$0xff]
        %v1424 = vld [vmem:[%s1413 + $0x50] sm:$0xff]
        %v1425 = vld [vmem:[%s1413 + $0x58] sm:$0xff]
        %v1426 = vld [vmem:[%s1413 + $0x60] sm:$0xff]
        %v1427 = vld [vmem:[%s1413 + $0x68] sm:$0xff]
        %v1428 = vld [vmem:[%s1413 + $0x70] sm:$0xff]
        %v1429 = vld [vmem:[%s1413 + $0x78] sm:$0xff]
        %1430 = vst [vmem:[#allocation1] ss:$2 sm:$0xff] %v509
        %v1431 = vld.sshfl [vmem:[#allocation1] sm:$0xff pattern:$0x75316420]
        %v1432 = vld.sshfl [vmem:[#allocation1 + $0x8] sm:$0xff pattern:$0x75316420]
        %1433 = vrot.lane.b32.xlu0 %v1431, 122
        %v1434 = vpop.permute.xlu0 %1433
        %1435 = vrot.lane.b32.xlu0 %v1432, 122
        %v1436 = vpop.permute.xlu0 %1435
        %vm1437 = vcmask 998400
        %v1438 = vsel %vm1437, %v1434, %v1436
        %v1440 = vsel %vm553, %v1414, 0
        %v1443 = vsel %vm553, %v1415, 0
        %v1446 = vsel %vm553, %v1416, 0
        %v1449 = vsel %vm553, %v1417, 0
        %v1452 = vsel %vm553, %v1418, 0
        %v1455 = vsel %vm553, %v1419, 0
        %v1458 = vsel %vm553, %v1420, 0
        %v1461 = vsel %vm553, %v1421, 0
        %v1464 = vsel %vm553, %v1422, 0
        %v1467 = vsel %vm553, %v1423, 0
        %v1470 = vsel %vm553, %v1424, 0
        %v1473 = vsel %vm553, %v1425, 0
        %v1476 = vsel %vm553, %v1426, 0
        %v1479 = vsel %vm553, %v1427, 0
        %v1482 = vsel %vm553, %v1428, 0
        %v1485 = vsel %vm553, %v1429, 0
        %v1487 = vsel %vm602, %v1438, 0
        %1489 = vmatpush.msra.mxu0 0.0
        %1490 = vmatpush.msra.mxu0 0.0
        %1491 = vmatpush.msra.mxu0 0.0
        %1492 = vmatpush.msra.mxu0 0.0
        %1493 = vmatpush.msra.mxu0 0.0
        %1494 = vmatpush.msra.mxu0 0.0
        %1495 = vmatpush.msra.mxu0 0.0
        %1496 = vmatpush.msra.mxu0 0.0
        %1497 = vmatpush.msra.mxu0 0.0
        %1498 = vmatpush.msra.mxu0 0.0
        %1499 = vmatpush.msra.mxu0 0.0
        %1500 = vmatpush.msra.mxu0 0.0
        %1501 = vmatpush.msra.mxu0 0.0
        %1502 = vmatpush.msra.mxu0 0.0
        %1503 = vmatpush.msra.mxu0 0.0
        %1504 = vmatpush.msra.mxu0 %v1487
        %1505 = vmatmul.f32.gmra.mxu0 %v1440
        %v1506 = vpop.f32.mrf.mxu0
        %v1507 = vadd.f32 0.0, %v1506
        %1508 = vmatmul.f32.gmra.mxu0 %v1443
        %v1509 = vpop.f32.mrf.mxu0
        %v1510 = vadd.f32 0.0, %v1509
        %1511 = vmatmul.f32.gmra.mxu0 %v1446
        %v1512 = vpop.f32.mrf.mxu0
        %v1513 = vadd.f32 0.0, %v1512
        %1514 = vmatmul.f32.gmra.mxu0 %v1449
        %v1515 = vpop.f32.mrf.mxu0
        %v1516 = vadd.f32 0.0, %v1515
        %1517 = vmatmul.f32.gmra.mxu0 %v1452
        %v1518 = vpop.f32.mrf.mxu0
        %v1519 = vadd.f32 0.0, %v1518
        %1520 = vmatmul.f32.gmra.mxu0 %v1455
        %v1521 = vpop.f32.mrf.mxu0
        %v1522 = vadd.f32 0.0, %v1521
        %1523 = vmatmul.f32.gmra.mxu0 %v1458
        %v1524 = vpop.f32.mrf.mxu0
        %v1525 = vadd.f32 0.0, %v1524
        %1526 = vmatmul.f32.gmra.mxu0 %v1461
        %v1527 = vpop.f32.mrf.mxu0
        %v1528 = vadd.f32 0.0, %v1527
        %1529 = vmatmul.f32.gmra.mxu0 %v1464
        %v1530 = vpop.f32.mrf.mxu0
        %v1531 = vadd.f32 0.0, %v1530
        %1532 = vmatmul.f32.gmra.mxu0 %v1467
        %v1533 = vpop.f32.mrf.mxu0
        %v1534 = vadd.f32 0.0, %v1533
        %1535 = vmatmul.f32.gmra.mxu0 %v1470
        %v1536 = vpop.f32.mrf.mxu0
        %v1537 = vadd.f32 0.0, %v1536
        %1538 = vmatmul.f32.gmra.mxu0 %v1473
        %v1539 = vpop.f32.mrf.mxu0
        %v1540 = vadd.f32 0.0, %v1539
        %1541 = vmatmul.f32.gmra.mxu0 %v1476
        %v1542 = vpop.f32.mrf.mxu0
        %v1543 = vadd.f32 0.0, %v1542
        %1544 = vmatmul.f32.gmra.mxu0 %v1479
        %v1545 = vpop.f32.mrf.mxu0
        %v1546 = vadd.f32 0.0, %v1545
        %1547 = vmatmul.f32.gmra.mxu0 %v1482
        %v1548 = vpop.f32.mrf.mxu0
        %v1549 = vadd.f32 0.0, %v1548
        %1550 = vmatmul.f32.gmra.mxu0 %v1485
        %v1551 = vpop.f32.mrf.mxu0
        %v1552 = vadd.f32 0.0, %v1551
        %1553 = vdwg.mxu0
        %v1554 = vadd.f32 %v1397, %v1507
        %v1555 = vadd.f32 %v1398, %v1510
        %v1556 = vadd.f32 %v1399, %v1513
        %v1557 = vadd.f32 %v1400, %v1516
        %v1558 = vadd.f32 %v1401, %v1519
        %v1559 = vadd.f32 %v1402, %v1522
        %v1560 = vadd.f32 %v1403, %v1525
        %v1561 = vadd.f32 %v1404, %v1528
        %v1562 = vadd.f32 %v1405, %v1531
        %v1563 = vadd.f32 %v1406, %v1534
        %v1564 = vadd.f32 %v1407, %v1537
        %v1565 = vadd.f32 %v1408, %v1540
        %v1566 = vadd.f32 %v1409, %v1543
        %v1567 = vadd.f32 %v1410, %v1546
        %v1568 = vadd.f32 %v1411, %v1549
        %v1569 = vadd.f32 %v1412, %v1552
        %s1570 = scalar_lea.vmem %s1, 896
        %v1571 = vld [vmem:[%s1570] sm:$0xff]
        %v1572 = vld [vmem:[%s1570 + $0x8] sm:$0xff]
        %v1573 = vld [vmem:[%s1570 + $0x10] sm:$0xff]
        %v1574 = vld [vmem:[%s1570 + $0x18] sm:$0xff]
        %v1575 = vld [vmem:[%s1570 + $0x20] sm:$0xff]
        %v1576 = vld [vmem:[%s1570 + $0x28] sm:$0xff]
        %v1577 = vld [vmem:[%s1570 + $0x30] sm:$0xff]
        %v1578 = vld [vmem:[%s1570 + $0x38] sm:$0xff]
        %v1579 = vld [vmem:[%s1570 + $0x40] sm:$0xff]
        %v1580 = vld [vmem:[%s1570 + $0x48] sm:$0xff]
        %v1581 = vld [vmem:[%s1570 + $0x50] sm:$0xff]
        %v1582 = vld [vmem:[%s1570 + $0x58] sm:$0xff]
        %v1583 = vld [vmem:[%s1570 + $0x60] sm:$0xff]
        %v1584 = vld [vmem:[%s1570 + $0x68] sm:$0xff]
        %v1585 = vld [vmem:[%s1570 + $0x70] sm:$0xff]
        %v1586 = vld [vmem:[%s1570 + $0x78] sm:$0xff]
        %1587 = vst [vmem:[#allocation1] ss:$2 sm:$0xff] %v509
        %v1588 = vld.sshfl [vmem:[#allocation1] sm:$0xff pattern:$0x75316420]
        %v1589 = vld.sshfl [vmem:[#allocation1 + $0x8] sm:$0xff pattern:$0x75316420]
        %1590 = vrot.lane.b32.xlu0 %v1588, 121
        %v1591 = vpop.permute.xlu0 %1590
        %1592 = vrot.lane.b32.xlu0 %v1589, 121
        %v1593 = vpop.permute.xlu0 %1592
        %vm1594 = vcmask 990208
        %v1595 = vsel %vm1594, %v1591, %v1593
        %v1597 = vsel %vm553, %v1571, 0
        %v1600 = vsel %vm553, %v1572, 0
        %v1603 = vsel %vm553, %v1573, 0
        %v1606 = vsel %vm553, %v1574, 0
        %v1609 = vsel %vm553, %v1575, 0
        %v1612 = vsel %vm553, %v1576, 0
        %v1615 = vsel %vm553, %v1577, 0
        %v1618 = vsel %vm553, %v1578, 0
        %v1621 = vsel %vm553, %v1579, 0
        %v1624 = vsel %vm553, %v1580, 0
        %v1627 = vsel %vm553, %v1581, 0
        %v1630 = vsel %vm553, %v1582, 0
        %v1633 = vsel %vm553, %v1583, 0
        %v1636 = vsel %vm553, %v1584, 0
        %v1639 = vsel %vm553, %v1585, 0
        %v1642 = vsel %vm553, %v1586, 0
        %v1644 = vsel %vm602, %v1595, 0
        %1646 = vmatpush.msra.mxu0 0.0
        %1647 = vmatpush.msra.mxu0 0.0
        %1648 = vmatpush.msra.mxu0 0.0
        %1649 = vmatpush.msra.mxu0 0.0
        %1650 = vmatpush.msra.mxu0 0.0
        %1651 = vmatpush.msra.mxu0 0.0
        %1652 = vmatpush.msra.mxu0 0.0
        %1653 = vmatpush.msra.mxu0 0.0
        %1654 = vmatpush.msra.mxu0 0.0
        %1655 = vmatpush.msra.mxu0 0.0
        %1656 = vmatpush.msra.mxu0 0.0
        %1657 = vmatpush.msra.mxu0 0.0
        %1658 = vmatpush.msra.mxu0 0.0
        %1659 = vmatpush.msra.mxu0 0.0
        %1660 = vmatpush.msra.mxu0 0.0
        %1661 = vmatpush.msra.mxu0 %v1644
        %1662 = vmatmul.f32.gmra.mxu0 %v1597
        %v1663 = vpop.f32.mrf.mxu0
        %v1664 = vadd.f32 0.0, %v1663
        %1665 = vmatmul.f32.gmra.mxu0 %v1600
        %v1666 = vpop.f32.mrf.mxu0
        %v1667 = vadd.f32 0.0, %v1666
        %1668 = vmatmul.f32.gmra.mxu0 %v1603
        %v1669 = vpop.f32.mrf.mxu0
        %v1670 = vadd.f32 0.0, %v1669
        %1671 = vmatmul.f32.gmra.mxu0 %v1606
        %v1672 = vpop.f32.mrf.mxu0
        %v1673 = vadd.f32 0.0, %v1672
        %1674 = vmatmul.f32.gmra.mxu0 %v1609
        %v1675 = vpop.f32.mrf.mxu0
        %v1676 = vadd.f32 0.0, %v1675
        %1677 = vmatmul.f32.gmra.mxu0 %v1612
        %v1678 = vpop.f32.mrf.mxu0
        %v1679 = vadd.f32 0.0, %v1678
        %1680 = vmatmul.f32.gmra.mxu0 %v1615
        %v1681 = vpop.f32.mrf.mxu0
        %v1682 = vadd.f32 0.0, %v1681
        %1683 = vmatmul.f32.gmra.mxu0 %v1618
        %v1684 = vpop.f32.mrf.mxu0
        %v1685 = vadd.f32 0.0, %v1684
        %1686 = vmatmul.f32.gmra.mxu0 %v1621
        %v1687 = vpop.f32.mrf.mxu0
        %v1688 = vadd.f32 0.0, %v1687
        %1689 = vmatmul.f32.gmra.mxu0 %v1624
        %v1690 = vpop.f32.mrf.mxu0
        %v1691 = vadd.f32 0.0, %v1690
        %1692 = vmatmul.f32.gmra.mxu0 %v1627
        %v1693 = vpop.f32.mrf.mxu0
        %v1694 = vadd.f32 0.0, %v1693
        %1695 = vmatmul.f32.gmra.mxu0 %v1630
        %v1696 = vpop.f32.mrf.mxu0
        %v1697 = vadd.f32 0.0, %v1696
        %1698 = vmatmul.f32.gmra.mxu0 %v1633
        %v1699 = vpop.f32.mrf.mxu0
        %v1700 = vadd.f32 0.0, %v1699
        %1701 = vmatmul.f32.gmra.mxu0 %v1636
        %v1702 = vpop.f32.mrf.mxu0
        %v1703 = vadd.f32 0.0, %v1702
        %1704 = vmatmul.f32.gmra.mxu0 %v1639
        %v1705 = vpop.f32.mrf.mxu0
        %v1706 = vadd.f32 0.0, %v1705
        %1707 = vmatmul.f32.gmra.mxu0 %v1642
        %v1708 = vpop.f32.mrf.mxu0
        %v1709 = vadd.f32 0.0, %v1708
        %1710 = vdwg.mxu0
        %v1711 = vadd.f32 %v1554, %v1664
        %v1712 = vadd.f32 %v1555, %v1667
        %v1713 = vadd.f32 %v1556, %v1670
        %v1714 = vadd.f32 %v1557, %v1673
        %v1715 = vadd.f32 %v1558, %v1676
        %v1716 = vadd.f32 %v1559, %v1679
        %v1717 = vadd.f32 %v1560, %v1682
        %v1718 = vadd.f32 %v1561, %v1685
        %v1719 = vadd.f32 %v1562, %v1688
        %v1720 = vadd.f32 %v1563, %v1691
        %v1721 = vadd.f32 %v1564, %v1694
        %v1722 = vadd.f32 %v1565, %v1697
        %v1723 = vadd.f32 %v1566, %v1700
        %v1724 = vadd.f32 %v1567, %v1703
        %v1725 = vadd.f32 %v1568, %v1706
        %v1726 = vadd.f32 %v1569, %v1709
        %v1727 = vld [vmem:[%s2] sm:$0xff]
        %v1728 = vld [vmem:[%s2 + $0x8] sm:$0xff]
        %v1729 = vld [vmem:[%s2 + $0x10] sm:$0xff]
        %v1730 = vld [vmem:[%s2 + $0x18] sm:$0xff]
        %v1731 = vld [vmem:[%s2 + $0x20] sm:$0xff]
        %v1732 = vld [vmem:[%s2 + $0x28] sm:$0xff]
        %v1733 = vld [vmem:[%s2 + $0x30] sm:$0xff]
        %v1734 = vld [vmem:[%s2 + $0x38] sm:$0xff]
        %v1735 = vld [vmem:[%s2 + $0x40] sm:$0xff]
        %v1736 = vld [vmem:[%s2 + $0x48] sm:$0xff]
        %v1737 = vld [vmem:[%s2 + $0x50] sm:$0xff]
        %v1738 = vld [vmem:[%s2 + $0x58] sm:$0xff]
        %v1739 = vld [vmem:[%s2 + $0x60] sm:$0xff]
        %v1740 = vld [vmem:[%s2 + $0x68] sm:$0xff]
        %v1741 = vld [vmem:[%s2 + $0x70] sm:$0xff]
        %v1742 = vld [vmem:[%s2 + $0x78] sm:$0xff]
        %1744 = vset.pattern.permute.xlu0 0
        %1745 = vperm.xlu0 %1744, %v1727
        %v1746 = vpop.permute.xlu0 %1745
        %1749 = vset.pattern.permute.xlu0 0
        %1750 = vperm.xlu0 %1749, %v1728
        %v1751 = vpop.permute.xlu0 %1750
        %1754 = vset.pattern.permute.xlu0 0
        %1755 = vperm.xlu0 %1754, %v1729
        %v1756 = vpop.permute.xlu0 %1755
        %1759 = vset.pattern.permute.xlu0 0
        %1760 = vperm.xlu0 %1759, %v1730
        %v1761 = vpop.permute.xlu0 %1760
        %1764 = vset.pattern.permute.xlu0 0
        %1765 = vperm.xlu0 %1764, %v1731
        %v1766 = vpop.permute.xlu0 %1765
        %1769 = vset.pattern.permute.xlu0 0
        %1770 = vperm.xlu0 %1769, %v1732
        %v1771 = vpop.permute.xlu0 %1770
        %1774 = vset.pattern.permute.xlu0 0
        %1775 = vperm.xlu0 %1774, %v1733
        %v1776 = vpop.permute.xlu0 %1775
        %1779 = vset.pattern.permute.xlu0 0
        %1780 = vperm.xlu0 %1779, %v1734
        %v1781 = vpop.permute.xlu0 %1780
        %1784 = vset.pattern.permute.xlu0 0
        %1785 = vperm.xlu0 %1784, %v1735
        %v1786 = vpop.permute.xlu0 %1785
        %1789 = vset.pattern.permute.xlu0 0
        %1790 = vperm.xlu0 %1789, %v1736
        %v1791 = vpop.permute.xlu0 %1790
        %1794 = vset.pattern.permute.xlu0 0
        %1795 = vperm.xlu0 %1794, %v1737
        %v1796 = vpop.permute.xlu0 %1795
        %1799 = vset.pattern.permute.xlu0 0
        %1800 = vperm.xlu0 %1799, %v1738
        %v1801 = vpop.permute.xlu0 %1800
        %1804 = vset.pattern.permute.xlu0 0
        %1805 = vperm.xlu0 %1804, %v1739
        %v1806 = vpop.permute.xlu0 %1805
        %1809 = vset.pattern.permute.xlu0 0
        %1810 = vperm.xlu0 %1809, %v1740
        %v1811 = vpop.permute.xlu0 %1810
        %1814 = vset.pattern.permute.xlu0 0
        %1815 = vperm.xlu0 %1814, %v1741
        %v1816 = vpop.permute.xlu0 %1815
        %1819 = vset.pattern.permute.xlu0 0
        %1820 = vperm.xlu0 %1819, %v1742
        %v1821 = vpop.permute.xlu0 %1820
        %v1823 = vmul.f32 %v1711, %v1746
        %v1824 = vmul.f32 %v1712, %v1751
        %v1825 = vmul.f32 %v1713, %v1756
        %v1826 = vmul.f32 %v1714, %v1761
        %v1827 = vmul.f32 %v1715, %v1766
        %v1828 = vmul.f32 %v1716, %v1771
        %v1829 = vmul.f32 %v1717, %v1776
        %v1830 = vmul.f32 %v1718, %v1781
        %v1831 = vmul.f32 %v1719, %v1786
        %v1832 = vmul.f32 %v1720, %v1791
        %v1833 = vmul.f32 %v1721, %v1796
        %v1834 = vmul.f32 %v1722, %v1801
        %v1835 = vmul.f32 %v1723, %v1806
        %v1836 = vmul.f32 %v1724, %v1811
        %v1837 = vmul.f32 %v1725, %v1816
        %v1838 = vmul.f32 %v1726, %v1821
        %v1839 = vld [vmem:[%s3] sm:$0xff]
        %v1840 = vld [vmem:[%s3 + $0x8] sm:$0xff]
        %v1841 = vld [vmem:[%s3 + $0x10] sm:$0xff]
        %v1842 = vld [vmem:[%s3 + $0x18] sm:$0xff]
        %v1843 = vld [vmem:[%s3 + $0x20] sm:$0xff]
        %v1844 = vld [vmem:[%s3 + $0x28] sm:$0xff]
        %v1845 = vld [vmem:[%s3 + $0x30] sm:$0xff]
        %v1846 = vld [vmem:[%s3 + $0x38] sm:$0xff]
        %v1847 = vld [vmem:[%s3 + $0x40] sm:$0xff]
        %v1848 = vld [vmem:[%s3 + $0x48] sm:$0xff]
        %v1849 = vld [vmem:[%s3 + $0x50] sm:$0xff]
        %v1850 = vld [vmem:[%s3 + $0x58] sm:$0xff]
        %v1851 = vld [vmem:[%s3 + $0x60] sm:$0xff]
        %v1852 = vld [vmem:[%s3 + $0x68] sm:$0xff]
        %v1853 = vld [vmem:[%s3 + $0x70] sm:$0xff]
        %v1854 = vld [vmem:[%s3 + $0x78] sm:$0xff]
        %1856 = vset.pattern.permute.xlu0 0
        %1857 = vperm.xlu0 %1856, %v1839
        %v1858 = vpop.permute.xlu0 %1857
        %1861 = vset.pattern.permute.xlu0 0
        %1862 = vperm.xlu0 %1861, %v1840
        %v1863 = vpop.permute.xlu0 %1862
        %1866 = vset.pattern.permute.xlu0 0
        %1867 = vperm.xlu0 %1866, %v1841
        %v1868 = vpop.permute.xlu0 %1867
        %1871 = vset.pattern.permute.xlu0 0
        %1872 = vperm.xlu0 %1871, %v1842
        %v1873 = vpop.permute.xlu0 %1872
        %1876 = vset.pattern.permute.xlu0 0
        %1877 = vperm.xlu0 %1876, %v1843
        %v1878 = vpop.permute.xlu0 %1877
        %1881 = vset.pattern.permute.xlu0 0
        %1882 = vperm.xlu0 %1881, %v1844
        %v1883 = vpop.permute.xlu0 %1882
        %1886 = vset.pattern.permute.xlu0 0
        %1887 = vperm.xlu0 %1886, %v1845
        %v1888 = vpop.permute.xlu0 %1887
        %1891 = vset.pattern.permute.xlu0 0
        %1892 = vperm.xlu0 %1891, %v1846
        %v1893 = vpop.permute.xlu0 %1892
        %1896 = vset.pattern.permute.xlu0 0
        %1897 = vperm.xlu0 %1896, %v1847
        %v1898 = vpop.permute.xlu0 %1897
        %1901 = vset.pattern.permute.xlu0 0
        %1902 = vperm.xlu0 %1901, %v1848
        %v1903 = vpop.permute.xlu0 %1902
        %1906 = vset.pattern.permute.xlu0 0
        %1907 = vperm.xlu0 %1906, %v1849
        %v1908 = vpop.permute.xlu0 %1907
        %1911 = vset.pattern.permute.xlu0 0
        %1912 = vperm.xlu0 %1911, %v1850
        %v1913 = vpop.permute.xlu0 %1912
        %1916 = vset.pattern.permute.xlu0 0
        %1917 = vperm.xlu0 %1916, %v1851
        %v1918 = vpop.permute.xlu0 %1917
        %1921 = vset.pattern.permute.xlu0 0
        %1922 = vperm.xlu0 %1921, %v1852
        %v1923 = vpop.permute.xlu0 %1922
        %1926 = vset.pattern.permute.xlu0 0
        %1927 = vperm.xlu0 %1926, %v1853
        %v1928 = vpop.permute.xlu0 %1927
        %1931 = vset.pattern.permute.xlu0 0
        %1932 = vperm.xlu0 %1931, %v1854
        %v1933 = vpop.permute.xlu0 %1932
        %v1935 = vadd.f32 %v1823, %v1858
        %v1936 = vadd.f32 %v1824, %v1863
        %v1937 = vadd.f32 %v1825, %v1868
        %v1938 = vadd.f32 %v1826, %v1873
        %v1939 = vadd.f32 %v1827, %v1878
        %v1940 = vadd.f32 %v1828, %v1883
        %v1941 = vadd.f32 %v1829, %v1888
        %v1942 = vadd.f32 %v1830, %v1893
        %v1943 = vadd.f32 %v1831, %v1898
        %v1944 = vadd.f32 %v1832, %v1903
        %v1945 = vadd.f32 %v1833, %v1908
        %v1946 = vadd.f32 %v1834, %v1913
        %v1947 = vadd.f32 %v1835, %v1918
        %v1948 = vadd.f32 %v1836, %v1923
        %v1949 = vadd.f32 %v1837, %v1928
        %v1950 = vadd.f32 %v1838, %v1933
        %v1951 = vmax.f32 %v1935, 0.0
        %v1952 = vmax.f32 %v1936, 0.0
        %v1953 = vmax.f32 %v1937, 0.0
        %v1954 = vmax.f32 %v1938, 0.0
        %v1955 = vmax.f32 %v1939, 0.0
        %v1956 = vmax.f32 %v1940, 0.0
        %v1957 = vmax.f32 %v1941, 0.0
        %v1958 = vmax.f32 %v1942, 0.0
        %v1959 = vmax.f32 %v1943, 0.0
        %v1960 = vmax.f32 %v1944, 0.0
        %v1961 = vmax.f32 %v1945, 0.0
        %v1962 = vmax.f32 %v1946, 0.0
        %v1963 = vmax.f32 %v1947, 0.0
        %v1964 = vmax.f32 %v1948, 0.0
        %v1965 = vmax.f32 %v1949, 0.0
        %v1966 = vmax.f32 %v1950, 0.0
        %1967 = vst [vmem:[#allocation2] sm:$0xff] %v1951
        %1968 = vst [vmem:[#allocation2 + $0x10] sm:$0xff] %v1952
        %1969 = vst [vmem:[#allocation2 + $0x20] sm:$0xff] %v1953
        %1970 = vst [vmem:[#allocation2 + $0x30] sm:$0xff] %v1954
        %1971 = vst [vmem:[#allocation2 + $0x40] sm:$0xff] %v1955
        %1972 = vst [vmem:[#allocation2 + $0x50] sm:$0xff] %v1956
        %1973 = vst [vmem:[#allocation2 + $0x60] sm:$0xff] %v1957
        %1974 = vst [vmem:[#allocation2 + $0x70] sm:$0xff] %v1958
        %1975 = vst [vmem:[#allocation2 + $0x80] sm:$0xff] %v1959
        %1976 = vst [vmem:[#allocation2 + $0x90] sm:$0xff] %v1960
        %1977 = vst [vmem:[#allocation2 + $0xa0] sm:$0xff] %v1961
        %1978 = vst [vmem:[#allocation2 + $0xb0] sm:$0xff] %v1962
        %1979 = vst [vmem:[#allocation2 + $0xc0] sm:$0xff] %v1963
        %1980 = vst [vmem:[#allocation2 + $0xd0] sm:$0xff] %v1964
        %1981 = vst [vmem:[#allocation2 + $0xe0] sm:$0xff] %v1965
        %1982 = vst [vmem:[#allocation2 + $0xf0] sm:$0xff] %v1966
        %v1983 = vld [vmem:[%s1] sm:$0xff]
        %v1984 = vld [vmem:[%s1 + $0x8] sm:$0xff]
        %v1985 = vld [vmem:[%s1 + $0x10] sm:$0xff]
        %v1986 = vld [vmem:[%s1 + $0x18] sm:$0xff]
        %v1987 = vld [vmem:[%s1 + $0x20] sm:$0xff]
        %v1988 = vld [vmem:[%s1 + $0x28] sm:$0xff]
        %v1989 = vld [vmem:[%s1 + $0x30] sm:$0xff]
        %v1990 = vld [vmem:[%s1 + $0x38] sm:$0xff]
        %v1991 = vld [vmem:[%s1 + $0x40] sm:$0xff]
        %v1992 = vld [vmem:[%s1 + $0x48] sm:$0xff]
        %v1993 = vld [vmem:[%s1 + $0x50] sm:$0xff]
        %v1994 = vld [vmem:[%s1 + $0x58] sm:$0xff]
        %v1995 = vld [vmem:[%s1 + $0x60] sm:$0xff]
        %v1996 = vld [vmem:[%s1 + $0x68] sm:$0xff]
        %v1997 = vld [vmem:[%s1 + $0x70] sm:$0xff]
        %v1998 = vld [vmem:[%s1 + $0x78] sm:$0xff]
        %v1999 = vld [vmem:[%s526] sm:$0xff]
        %v2000 = vld [vmem:[%s526 + $0x8] sm:$0xff]
        %v2001 = vld [vmem:[%s526 + $0x10] sm:$0xff]
        %v2002 = vld [vmem:[%s526 + $0x18] sm:$0xff]
        %v2003 = vld [vmem:[%s526 + $0x20] sm:$0xff]
        %v2004 = vld [vmem:[%s526 + $0x28] sm:$0xff]
        %v2005 = vld [vmem:[%s526 + $0x30] sm:$0xff]
        %v2006 = vld [vmem:[%s526 + $0x38] sm:$0xff]
        %v2007 = vld [vmem:[%s526 + $0x40] sm:$0xff]
        %v2008 = vld [vmem:[%s526 + $0x48] sm:$0xff]
        %v2009 = vld [vmem:[%s526 + $0x50] sm:$0xff]
        %v2010 = vld [vmem:[%s526 + $0x58] sm:$0xff]
        %v2011 = vld [vmem:[%s526 + $0x60] sm:$0xff]
        %v2012 = vld [vmem:[%s526 + $0x68] sm:$0xff]
        %v2013 = vld [vmem:[%s526 + $0x70] sm:$0xff]
        %v2014 = vld [vmem:[%s526 + $0x78] sm:$0xff]
        %2015 = vst [vmem:[#allocation1] ss:$2 sm:$0xff] %v509
        %v2016 = vld.sshfl [vmem:[#allocation1 + $0x8] sm:$0xff pattern:$0x75316420]
        %2017 = vrot.lane.b32.xlu0 %v2016, 127
        %v2018 = vpop.permute.xlu0 %2017
        %v2020 = vsel %vm553, %v1999, 0
        %v2023 = vsel %vm553, %v2000, 0
        %v2026 = vsel %vm553, %v2001, 0
        %v2029 = vsel %vm553, %v2002, 0
        %v2032 = vsel %vm553, %v2003, 0
        %v2035 = vsel %vm553, %v2004, 0
        %v2038 = vsel %vm553, %v2005, 0
        %v2041 = vsel %vm553, %v2006, 0
        %v2044 = vsel %vm553, %v2007, 0
        %v2047 = vsel %vm553, %v2008, 0
        %v2050 = vsel %vm553, %v2009, 0
        %v2053 = vsel %vm553, %v2010, 0
        %v2056 = vsel %vm553, %v2011, 0
        %v2059 = vsel %vm553, %v2012, 0
        %v2062 = vsel %vm553, %v2013, 0
        %v2065 = vsel %vm553, %v2014, 0
        %v2067 = vsel %vm602, %v2018, 0
        %2069 = vmatpush.msra.mxu0 0.0
        %2070 = vmatpush.msra.mxu0 0.0
        %2071 = vmatpush.msra.mxu0 0.0
        %2072 = vmatpush.msra.mxu0 0.0
        %2073 = vmatpush.msra.mxu0 0.0
        %2074 = vmatpush.msra.mxu0 0.0
        %2075 = vmatpush.msra.mxu0 0.0
        %2076 = vmatpush.msra.mxu0 0.0
        %2077 = vmatpush.msra.mxu0 0.0
        %2078 = vmatpush.msra.mxu0 0.0
        %2079 = vmatpush.msra.mxu0 0.0
        %2080 = vmatpush.msra.mxu0 0.0
        %2081 = vmatpush.msra.mxu0 0.0
        %2082 = vmatpush.msra.mxu0 0.0
        %2083 = vmatpush.msra.mxu0 0.0
        %2084 = vmatpush.msra.mxu0 %v2067
        %2085 = vmatmul.f32.gmra.mxu0 %v2020
        %v2086 = vpop.f32.mrf.mxu0
        %v2087 = vadd.f32 0.0, %v2086
        %2088 = vmatmul.f32.gmra.mxu0 %v2023
        %v2089 = vpop.f32.mrf.mxu0
        %v2090 = vadd.f32 0.0, %v2089
        %2091 = vmatmul.f32.gmra.mxu0 %v2026
        %v2092 = vpop.f32.mrf.mxu0
        %v2093 = vadd.f32 0.0, %v2092
        %2094 = vmatmul.f32.gmra.mxu0 %v2029
        %v2095 = vpop.f32.mrf.mxu0
        %v2096 = vadd.f32 0.0, %v2095
        %2097 = vmatmul.f32.gmra.mxu0 %v2032
        %v2098 = vpop.f32.mrf.mxu0
        %v2099 = vadd.f32 0.0, %v2098
        %2100 = vmatmul.f32.gmra.mxu0 %v2035
        %v2101 = vpop.f32.mrf.mxu0
        %v2102 = vadd.f32 0.0, %v2101
        %2103 = vmatmul.f32.gmra.mxu0 %v2038
        %v2104 = vpop.f32.mrf.mxu0
        %v2105 = vadd.f32 0.0, %v2104
        %2106 = vmatmul.f32.gmra.mxu0 %v2041
        %v2107 = vpop.f32.mrf.mxu0
        %v2108 = vadd.f32 0.0, %v2107
        %2109 = vmatmul.f32.gmra.mxu0 %v2044
        %v2110 = vpop.f32.mrf.mxu0
        %v2111 = vadd.f32 0.0, %v2110
        %2112 = vmatmul.f32.gmra.mxu0 %v2047
        %v2113 = vpop.f32.mrf.mxu0
        %v2114 = vadd.f32 0.0, %v2113
        %2115 = vmatmul.f32.gmra.mxu0 %v2050
        %v2116 = vpop.f32.mrf.mxu0
        %v2117 = vadd.f32 0.0, %v2116
        %2118 = vmatmul.f32.gmra.mxu0 %v2053
        %v2119 = vpop.f32.mrf.mxu0
        %v2120 = vadd.f32 0.0, %v2119
        %2121 = vmatmul.f32.gmra.mxu0 %v2056
        %v2122 = vpop.f32.mrf.mxu0
        %v2123 = vadd.f32 0.0, %v2122
        %2124 = vmatmul.f32.gmra.mxu0 %v2059
        %v2125 = vpop.f32.mrf.mxu0
        %v2126 = vadd.f32 0.0, %v2125
        %2127 = vmatmul.f32.gmra.mxu0 %v2062
        %v2128 = vpop.f32.mrf.mxu0
        %v2129 = vadd.f32 0.0, %v2128
        %2130 = vmatmul.f32.gmra.mxu0 %v2065
        %v2131 = vpop.f32.mrf.mxu0
        %v2132 = vadd.f32 0.0, %v2131
        %2133 = vdwg.mxu0
        %2134 = vst [vmem:[#allocation1] ss:$2 sm:$0xff] %v509
        %v2135 = vld.sshfl [vmem:[#allocation1 + $0x8] sm:$0xff pattern:$0x75316420]
        %v2137 = vsel %vm553, %v1983, 0
        %v2140 = vsel %vm553, %v1984, 0
        %v2143 = vsel %vm553, %v1985, 0
        %v2146 = vsel %vm553, %v1986, 0
        %v2149 = vsel %vm553, %v1987, 0
        %v2152 = vsel %vm553, %v1988, 0
        %v2155 = vsel %vm553, %v1989, 0
        %v2158 = vsel %vm553, %v1990, 0
        %v2161 = vsel %vm553, %v1991, 0
        %v2164 = vsel %vm553, %v1992, 0
        %v2167 = vsel %vm553, %v1993, 0
        %v2170 = vsel %vm553, %v1994, 0
        %v2173 = vsel %vm553, %v1995, 0
        %v2176 = vsel %vm553, %v1996, 0
        %v2179 = vsel %vm553, %v1997, 0
        %v2182 = vsel %vm553, %v1998, 0
        %v2184 = vsel %vm602, %v2135, 0
        %2186 = vmatpush.msra.mxu0 0.0
        %2187 = vmatpush.msra.mxu0 0.0
        %2188 = vmatpush.msra.mxu0 0.0
        %2189 = vmatpush.msra.mxu0 0.0
        %2190 = vmatpush.msra.mxu0 0.0
        %2191 = vmatpush.msra.mxu0 0.0
        %2192 = vmatpush.msra.mxu0 0.0
        %2193 = vmatpush.msra.mxu0 0.0
        %2194 = vmatpush.msra.mxu0 0.0
        %2195 = vmatpush.msra.mxu0 0.0
        %2196 = vmatpush.msra.mxu0 0.0
        %2197 = vmatpush.msra.mxu0 0.0
        %2198 = vmatpush.msra.mxu0 0.0
        %2199 = vmatpush.msra.mxu0 0.0
        %2200 = vmatpush.msra.mxu0 0.0
        %2201 = vmatpush.msra.mxu0 %v2184
        %2202 = vmatmul.f32.gmra.mxu0 %v2137
        %v2203 = vpop.f32.mrf.mxu0
        %v2204 = vadd.f32 %v2087, %v2203
        %2205 = vmatmul.f32.gmra.mxu0 %v2140
        %v2206 = vpop.f32.mrf.mxu0
        %v2207 = vadd.f32 %v2090, %v2206
        %2208 = vmatmul.f32.gmra.mxu0 %v2143
        %v2209 = vpop.f32.mrf.mxu0
        %v2210 = vadd.f32 %v2093, %v2209
        %2211 = vmatmul.f32.gmra.mxu0 %v2146
        %v2212 = vpop.f32.mrf.mxu0
        %v2213 = vadd.f32 %v2096, %v2212
        %2214 = vmatmul.f32.gmra.mxu0 %v2149
        %v2215 = vpop.f32.mrf.mxu0
        %v2216 = vadd.f32 %v2099, %v2215
        %2217 = vmatmul.f32.gmra.mxu0 %v2152
        %v2218 = vpop.f32.mrf.mxu0
        %v2219 = vadd.f32 %v2102, %v2218
        %2220 = vmatmul.f32.gmra.mxu0 %v2155
        %v2221 = vpop.f32.mrf.mxu0
        %v2222 = vadd.f32 %v2105, %v2221
        %2223 = vmatmul.f32.gmra.mxu0 %v2158
        %v2224 = vpop.f32.mrf.mxu0
        %v2225 = vadd.f32 %v2108, %v2224
        %2226 = vmatmul.f32.gmra.mxu0 %v2161
        %v2227 = vpop.f32.mrf.mxu0
        %v2228 = vadd.f32 %v2111, %v2227
        %2229 = vmatmul.f32.gmra.mxu0 %v2164
        %v2230 = vpop.f32.mrf.mxu0
        %v2231 = vadd.f32 %v2114, %v2230
        %2232 = vmatmul.f32.gmra.mxu0 %v2167
        %v2233 = vpop.f32.mrf.mxu0
        %v2234 = vadd.f32 %v2117, %v2233
        %2235 = vmatmul.f32.gmra.mxu0 %v2170
        %v2236 = vpop.f32.mrf.mxu0
        %v2237 = vadd.f32 %v2120, %v2236
        %2238 = vmatmul.f32.gmra.mxu0 %v2173
        %v2239 = vpop.f32.mrf.mxu0
        %v2240 = vadd.f32 %v2123, %v2239
        %2241 = vmatmul.f32.gmra.mxu0 %v2176
        %v2242 = vpop.f32.mrf.mxu0
        %v2243 = vadd.f32 %v2126, %v2242
        %2244 = vmatmul.f32.gmra.mxu0 %v2179
        %v2245 = vpop.f32.mrf.mxu0
        %v2246 = vadd.f32 %v2129, %v2245
        %2247 = vmatmul.f32.gmra.mxu0 %v2182
        %v2248 = vpop.f32.mrf.mxu0
        %v2249 = vadd.f32 %v2132, %v2248
        %2250 = vdwg.mxu0
        %v2251 = vld [vmem:[%s785] sm:$0xff]
        %v2252 = vld [vmem:[%s785 + $0x8] sm:$0xff]
        %v2253 = vld [vmem:[%s785 + $0x10] sm:$0xff]
        %v2254 = vld [vmem:[%s785 + $0x18] sm:$0xff]
        %v2255 = vld [vmem:[%s785 + $0x20] sm:$0xff]
        %v2256 = vld [vmem:[%s785 + $0x28] sm:$0xff]
        %v2257 = vld [vmem:[%s785 + $0x30] sm:$0xff]
        %v2258 = vld [vmem:[%s785 + $0x38] sm:$0xff]
        %v2259 = vld [vmem:[%s785 + $0x40] sm:$0xff]
        %v2260 = vld [vmem:[%s785 + $0x48] sm:$0xff]
        %v2261 = vld [vmem:[%s785 + $0x50] sm:$0xff]
        %v2262 = vld [vmem:[%s785 + $0x58] sm:$0xff]
        %v2263 = vld [vmem:[%s785 + $0x60] sm:$0xff]
        %v2264 = vld [vmem:[%s785 + $0x68] sm:$0xff]
        %v2265 = vld [vmem:[%s785 + $0x70] sm:$0xff]
        %v2266 = vld [vmem:[%s785 + $0x78] sm:$0xff]
        %2267 = vst [vmem:[#allocation1] ss:$2 sm:$0xff] %v509
        %v2268 = vld.sshfl [vmem:[#allocation1 + $0x8] sm:$0xff pattern:$0x75316420]
        %2269 = vrot.lane.b32.xlu0 %v2268, 126
        %v2270 = vpop.permute.xlu0 %2269
        %v2272 = vsel %vm553, %v2251, 0
        %v2275 = vsel %vm553, %v2252, 0
        %v2278 = vsel %vm553, %v2253, 0
        %v2281 = vsel %vm553, %v2254, 0
        %v2284 = vsel %vm553, %v2255, 0
        %v2287 = vsel %vm553, %v2256, 0
        %v2290 = vsel %vm553, %v2257, 0
        %v2293 = vsel %vm553, %v2258, 0
        %v2296 = vsel %vm553, %v2259, 0
        %v2299 = vsel %vm553, %v2260, 0
        %v2302 = vsel %vm553, %v2261, 0
        %v2305 = vsel %vm553, %v2262, 0
        %v2308 = vsel %vm553, %v2263, 0
        %v2311 = vsel %vm553, %v2264, 0
        %v2314 = vsel %vm553, %v2265, 0
        %v2317 = vsel %vm553, %v2266, 0
        %v2319 = vsel %vm602, %v2270, 0
        %2321 = vmatpush.msra.mxu0 0.0
        %2322 = vmatpush.msra.mxu0 0.0
        %2323 = vmatpush.msra.mxu0 0.0
        %2324 = vmatpush.msra.mxu0 0.0
        %2325 = vmatpush.msra.mxu0 0.0
        %2326 = vmatpush.msra.mxu0 0.0
        %2327 = vmatpush.msra.mxu0 0.0
        %2328 = vmatpush.msra.mxu0 0.0
        %2329 = vmatpush.msra.mxu0 0.0
        %2330 = vmatpush.msra.mxu0 0.0
        %2331 = vmatpush.msra.mxu0 0.0
        %2332 = vmatpush.msra.mxu0 0.0
        %2333 = vmatpush.msra.mxu0 0.0
        %2334 = vmatpush.msra.mxu0 0.0
        %2335 = vmatpush.msra.mxu0 0.0
        %2336 = vmatpush.msra.mxu0 %v2319
        %2337 = vmatmul.f32.gmra.mxu0 %v2272
        %v2338 = vpop.f32.mrf.mxu0
        %v2339 = vadd.f32 0.0, %v2338
        %2340 = vmatmul.f32.gmra.mxu0 %v2275
        %v2341 = vpop.f32.mrf.mxu0
        %v2342 = vadd.f32 0.0, %v2341
        %2343 = vmatmul.f32.gmra.mxu0 %v2278
        %v2344 = vpop.f32.mrf.mxu0
        %v2345 = vadd.f32 0.0, %v2344
        %2346 = vmatmul.f32.gmra.mxu0 %v2281
        %v2347 = vpop.f32.mrf.mxu0
        %v2348 = vadd.f32 0.0, %v2347
        %2349 = vmatmul.f32.gmra.mxu0 %v2284
        %v2350 = vpop.f32.mrf.mxu0
        %v2351 = vadd.f32 0.0, %v2350
        %2352 = vmatmul.f32.gmra.mxu0 %v2287
        %v2353 = vpop.f32.mrf.mxu0
        %v2354 = vadd.f32 0.0, %v2353
        %2355 = vmatmul.f32.gmra.mxu0 %v2290
        %v2356 = vpop.f32.mrf.mxu0
        %v2357 = vadd.f32 0.0, %v2356
        %2358 = vmatmul.f32.gmra.mxu0 %v2293
        %v2359 = vpop.f32.mrf.mxu0
        %v2360 = vadd.f32 0.0, %v2359
        %2361 = vmatmul.f32.gmra.mxu0 %v2296
        %v2362 = vpop.f32.mrf.mxu0
        %v2363 = vadd.f32 0.0, %v2362
        %2364 = vmatmul.f32.gmra.mxu0 %v2299
        %v2365 = vpop.f32.mrf.mxu0
        %v2366 = vadd.f32 0.0, %v2365
        %2367 = vmatmul.f32.gmra.mxu0 %v2302
        %v2368 = vpop.f32.mrf.mxu0
        %v2369 = vadd.f32 0.0, %v2368
        %2370 = vmatmul.f32.gmra.mxu0 %v2305
        %v2371 = vpop.f32.mrf.mxu0
        %v2372 = vadd.f32 0.0, %v2371
        %2373 = vmatmul.f32.gmra.mxu0 %v2308
        %v2374 = vpop.f32.mrf.mxu0
        %v2375 = vadd.f32 0.0, %v2374
        %2376 = vmatmul.f32.gmra.mxu0 %v2311
        %v2377 = vpop.f32.mrf.mxu0
        %v2378 = vadd.f32 0.0, %v2377
        %2379 = vmatmul.f32.gmra.mxu0 %v2314
        %v2380 = vpop.f32.mrf.mxu0
        %v2381 = vadd.f32 0.0, %v2380
        %2382 = vmatmul.f32.gmra.mxu0 %v2317
        %v2383 = vpop.f32.mrf.mxu0
        %v2384 = vadd.f32 0.0, %v2383
        %2385 = vdwg.mxu0
        %v2386 = vadd.f32 %v2204, %v2339
        %v2387 = vadd.f32 %v2207, %v2342
        %v2388 = vadd.f32 %v2210, %v2345
        %v2389 = vadd.f32 %v2213, %v2348
        %v2390 = vadd.f32 %v2216, %v2351
        %v2391 = vadd.f32 %v2219, %v2354
        %v2392 = vadd.f32 %v2222, %v2357
        %v2393 = vadd.f32 %v2225, %v2360
        %v2394 = vadd.f32 %v2228, %v2363
        %v2395 = vadd.f32 %v2231, %v2366
        %v2396 = vadd.f32 %v2234, %v2369
        %v2397 = vadd.f32 %v2237, %v2372
        %v2398 = vadd.f32 %v2240, %v2375
        %v2399 = vadd.f32 %v2243, %v2378
        %v2400 = vadd.f32 %v2246, %v2381
        %v2401 = vadd.f32 %v2249, %v2384
        %v2402 = vld [vmem:[%s942] sm:$0xff]
        %v2403 = vld [vmem:[%s942 + $0x8] sm:$0xff]
        %v2404 = vld [vmem:[%s942 + $0x10] sm:$0xff]
        %v2405 = vld [vmem:[%s942 + $0x18] sm:$0xff]
        %v2406 = vld [vmem:[%s942 + $0x20] sm:$0xff]
        %v2407 = vld [vmem:[%s942 + $0x28] sm:$0xff]
        %v2408 = vld [vmem:[%s942 + $0x30] sm:$0xff]
        %v2409 = vld [vmem:[%s942 + $0x38] sm:$0xff]
        %v2410 = vld [vmem:[%s942 + $0x40] sm:$0xff]
        %v2411 = vld [vmem:[%s942 + $0x48] sm:$0xff]
        %v2412 = vld [vmem:[%s942 + $0x50] sm:$0xff]
        %v2413 = vld [vmem:[%s942 + $0x58] sm:$0xff]
        %v2414 = vld [vmem:[%s942 + $0x60] sm:$0xff]
        %v2415 = vld [vmem:[%s942 + $0x68] sm:$0xff]
        %v2416 = vld [vmem:[%s942 + $0x70] sm:$0xff]
        %v2417 = vld [vmem:[%s942 + $0x78] sm:$0xff]
        %2418 = vst [vmem:[#allocation1] ss:$2 sm:$0xff] %v509
        %v2419 = vld.sshfl [vmem:[#allocation1 + $0x8] sm:$0xff pattern:$0x75316420]
        %2420 = vrot.lane.b32.xlu0 %v2419, 125
        %v2421 = vpop.permute.xlu0 %2420
        %v2423 = vsel %vm553, %v2402, 0
        %v2426 = vsel %vm553, %v2403, 0
        %v2429 = vsel %vm553, %v2404, 0
        %v2432 = vsel %vm553, %v2405, 0
        %v2435 = vsel %vm553, %v2406, 0
        %v2438 = vsel %vm553, %v2407, 0
        %v2441 = vsel %vm553, %v2408, 0
        %v2444 = vsel %vm553, %v2409, 0
        %v2447 = vsel %vm553, %v2410, 0
        %v2450 = vsel %vm553, %v2411, 0
        %v2453 = vsel %vm553, %v2412, 0
        %v2456 = vsel %vm553, %v2413, 0
        %v2459 = vsel %vm553, %v2414, 0
        %v2462 = vsel %vm553, %v2415, 0
        %v2465 = vsel %vm553, %v2416, 0
        %v2468 = vsel %vm553, %v2417, 0
        %v2470 = vsel %vm602, %v2421, 0
        %2472 = vmatpush.msra.mxu0 0.0
        %2473 = vmatpush.msra.mxu0 0.0
        %2474 = vmatpush.msra.mxu0 0.0
        %2475 = vmatpush.msra.mxu0 0.0
        %2476 = vmatpush.msra.mxu0 0.0
        %2477 = vmatpush.msra.mxu0 0.0
        %2478 = vmatpush.msra.mxu0 0.0
        %2479 = vmatpush.msra.mxu0 0.0
        %2480 = vmatpush.msra.mxu0 0.0
        %2481 = vmatpush.msra.mxu0 0.0
        %2482 = vmatpush.msra.mxu0 0.0
        %2483 = vmatpush.msra.mxu0 0.0
        %2484 = vmatpush.msra.mxu0 0.0
        %2485 = vmatpush.msra.mxu0 0.0
        %2486 = vmatpush.msra.mxu0 0.0
        %2487 = vmatpush.msra.mxu0 %v2470
        %2488 = vmatmul.f32.gmra.mxu0 %v2423
        %v2489 = vpop.f32.mrf.mxu0
        %v2490 = vadd.f32 0.0, %v2489
        %2491 = vmatmul.f32.gmra.mxu0 %v2426
        %v2492 = vpop.f32.mrf.mxu0
        %v2493 = vadd.f32 0.0, %v2492
        %2494 = vmatmul.f32.gmra.mxu0 %v2429
        %v2495 = vpop.f32.mrf.mxu0
        %v2496 = vadd.f32 0.0, %v2495
        %2497 = vmatmul.f32.gmra.mxu0 %v2432
        %v2498 = vpop.f32.mrf.mxu0
        %v2499 = vadd.f32 0.0, %v2498
        %2500 = vmatmul.f32.gmra.mxu0 %v2435
        %v2501 = vpop.f32.mrf.mxu0
        %v2502 = vadd.f32 0.0, %v2501
        %2503 = vmatmul.f32.gmra.mxu0 %v2438
        %v2504 = vpop.f32.mrf.mxu0
        %v2505 = vadd.f32 0.0, %v2504
        %2506 = vmatmul.f32.gmra.mxu0 %v2441
        %v2507 = vpop.f32.mrf.mxu0
        %v2508 = vadd.f32 0.0, %v2507
        %2509 = vmatmul.f32.gmra.mxu0 %v2444
        %v2510 = vpop.f32.mrf.mxu0
        %v2511 = vadd.f32 0.0, %v2510
        %2512 = vmatmul.f32.gmra.mxu0 %v2447
        %v2513 = vpop.f32.mrf.mxu0
        %v2514 = vadd.f32 0.0, %v2513
        %2515 = vmatmul.f32.gmra.mxu0 %v2450
        %v2516 = vpop.f32.mrf.mxu0
        %v2517 = vadd.f32 0.0, %v2516
        %2518 = vmatmul.f32.gmra.mxu0 %v2453
        %v2519 = vpop.f32.mrf.mxu0
        %v2520 = vadd.f32 0.0, %v2519
        %2521 = vmatmul.f32.gmra.mxu0 %v2456
        %v2522 = vpop.f32.mrf.mxu0
        %v2523 = vadd.f32 0.0, %v2522
        %2524 = vmatmul.f32.gmra.mxu0 %v2459
        %v2525 = vpop.f32.mrf.mxu0
        %v2526 = vadd.f32 0.0, %v2525
        %2527 = vmatmul.f32.gmra.mxu0 %v2462
        %v2528 = vpop.f32.mrf.mxu0
        %v2529 = vadd.f32 0.0, %v2528
        %2530 = vmatmul.f32.gmra.mxu0 %v2465
        %v2531 = vpop.f32.mrf.mxu0
        %v2532 = vadd.f32 0.0, %v2531
        %2533 = vmatmul.f32.gmra.mxu0 %v2468
        %v2534 = vpop.f32.mrf.mxu0
        %v2535 = vadd.f32 0.0, %v2534
        %2536 = vdwg.mxu0
        %v2537 = vadd.f32 %v2386, %v2490
        %v2538 = vadd.f32 %v2387, %v2493
        %v2539 = vadd.f32 %v2388, %v2496
        %v2540 = vadd.f32 %v2389, %v2499
        %v2541 = vadd.f32 %v2390, %v2502
        %v2542 = vadd.f32 %v2391, %v2505
        %v2543 = vadd.f32 %v2392, %v2508
        %v2544 = vadd.f32 %v2393, %v2511
        %v2545 = vadd.f32 %v2394, %v2514
        %v2546 = vadd.f32 %v2395, %v2517
        %v2547 = vadd.f32 %v2396, %v2520
        %v2548 = vadd.f32 %v2397, %v2523
        %v2549 = vadd.f32 %v2398, %v2526
        %v2550 = vadd.f32 %v2399, %v2529
        %v2551 = vadd.f32 %v2400, %v2532
        %v2552 = vadd.f32 %v2401, %v2535
        %v2553 = vld [vmem:[%s1099] sm:$0xff]
        %v2554 = vld [vmem:[%s1099 + $0x8] sm:$0xff]
        %v2555 = vld [vmem:[%s1099 + $0x10] sm:$0xff]
        %v2556 = vld [vmem:[%s1099 + $0x18] sm:$0xff]
        %v2557 = vld [vmem:[%s1099 + $0x20] sm:$0xff]
        %v2558 = vld [vmem:[%s1099 + $0x28] sm:$0xff]
        %v2559 = vld [vmem:[%s1099 + $0x30] sm:$0xff]
        %v2560 = vld [vmem:[%s1099 + $0x38] sm:$0xff]
        %v2561 = vld [vmem:[%s1099 + $0x40] sm:$0xff]
        %v2562 = vld [vmem:[%s1099 + $0x48] sm:$0xff]
        %v2563 = vld [vmem:[%s1099 + $0x50] sm:$0xff]
        %v2564 = vld [vmem:[%s1099 + $0x58] sm:$0xff]
        %v2565 = vld [vmem:[%s1099 + $0x60] sm:$0xff]
        %v2566 = vld [vmem:[%s1099 + $0x68] sm:$0xff]
        %v2567 = vld [vmem:[%s1099 + $0x70] sm:$0xff]
        %v2568 = vld [vmem:[%s1099 + $0x78] sm:$0xff]
        %2569 = vst [vmem:[#allocation1] ss:$2 sm:$0xff] %v509
        %v2570 = vld.sshfl [vmem:[#allocation1 + $0x8] sm:$0xff pattern:$0x75316420]
        %2571 = vrot.lane.b32.xlu0 %v2570, 124
        %v2572 = vpop.permute.xlu0 %2571
        %v2574 = vsel %vm553, %v2553, 0
        %v2577 = vsel %vm553, %v2554, 0
        %v2580 = vsel %vm553, %v2555, 0
        %v2583 = vsel %vm553, %v2556, 0
        %v2586 = vsel %vm553, %v2557, 0
        %v2589 = vsel %vm553, %v2558, 0
        %v2592 = vsel %vm553, %v2559, 0
        %v2595 = vsel %vm553, %v2560, 0
        %v2598 = vsel %vm553, %v2561, 0
        %v2601 = vsel %vm553, %v2562, 0
        %v2604 = vsel %vm553, %v2563, 0
        %v2607 = vsel %vm553, %v2564, 0
        %v2610 = vsel %vm553, %v2565, 0
        %v2613 = vsel %vm553, %v2566, 0
        %v2616 = vsel %vm553, %v2567, 0
        %v2619 = vsel %vm553, %v2568, 0
        %v2621 = vsel %vm602, %v2572, 0
        %2623 = vmatpush.msra.mxu0 0.0
        %2624 = vmatpush.msra.mxu0 0.0
        %2625 = vmatpush.msra.mxu0 0.0
        %2626 = vmatpush.msra.mxu0 0.0
        %2627 = vmatpush.msra.mxu0 0.0
        %2628 = vmatpush.msra.mxu0 0.0
        %2629 = vmatpush.msra.mxu0 0.0
        %2630 = vmatpush.msra.mxu0 0.0
        %2631 = vmatpush.msra.mxu0 0.0
        %2632 = vmatpush.msra.mxu0 0.0
        %2633 = vmatpush.msra.mxu0 0.0
        %2634 = vmatpush.msra.mxu0 0.0
        %2635 = vmatpush.msra.mxu0 0.0
        %2636 = vmatpush.msra.mxu0 0.0
        %2637 = vmatpush.msra.mxu0 0.0
        %2638 = vmatpush.msra.mxu0 %v2621
        %2639 = vmatmul.f32.gmra.mxu0 %v2574
        %v2640 = vpop.f32.mrf.mxu0
        %v2641 = vadd.f32 0.0, %v2640
        %2642 = vmatmul.f32.gmra.mxu0 %v2577
        %v2643 = vpop.f32.mrf.mxu0
        %v2644 = vadd.f32 0.0, %v2643
        %2645 = vmatmul.f32.gmra.mxu0 %v2580
        %v2646 = vpop.f32.mrf.mxu0
        %v2647 = vadd.f32 0.0, %v2646
        %2648 = vmatmul.f32.gmra.mxu0 %v2583
        %v2649 = vpop.f32.mrf.mxu0
        %v2650 = vadd.f32 0.0, %v2649
        %2651 = vmatmul.f32.gmra.mxu0 %v2586
        %v2652 = vpop.f32.mrf.mxu0
        %v2653 = vadd.f32 0.0, %v2652
        %2654 = vmatmul.f32.gmra.mxu0 %v2589
        %v2655 = vpop.f32.mrf.mxu0
        %v2656 = vadd.f32 0.0, %v2655
        %2657 = vmatmul.f32.gmra.mxu0 %v2592
        %v2658 = vpop.f32.mrf.mxu0
        %v2659 = vadd.f32 0.0, %v2658
        %2660 = vmatmul.f32.gmra.mxu0 %v2595
        %v2661 = vpop.f32.mrf.mxu0
        %v2662 = vadd.f32 0.0, %v2661
        %2663 = vmatmul.f32.gmra.mxu0 %v2598
        %v2664 = vpop.f32.mrf.mxu0
        %v2665 = vadd.f32 0.0, %v2664
        %2666 = vmatmul.f32.gmra.mxu0 %v2601
        %v2667 = vpop.f32.mrf.mxu0
        %v2668 = vadd.f32 0.0, %v2667
        %2669 = vmatmul.f32.gmra.mxu0 %v2604
        %v2670 = vpop.f32.mrf.mxu0
        %v2671 = vadd.f32 0.0, %v2670
        %2672 = vmatmul.f32.gmra.mxu0 %v2607
        %v2673 = vpop.f32.mrf.mxu0
        %v2674 = vadd.f32 0.0, %v2673
        %2675 = vmatmul.f32.gmra.mxu0 %v2610
        %v2676 = vpop.f32.mrf.mxu0
        %v2677 = vadd.f32 0.0, %v2676
        %2678 = vmatmul.f32.gmra.mxu0 %v2613
        %v2679 = vpop.f32.mrf.mxu0
        %v2680 = vadd.f32 0.0, %v2679
        %2681 = vmatmul.f32.gmra.mxu0 %v2616
        %v2682 = vpop.f32.mrf.mxu0
        %v2683 = vadd.f32 0.0, %v2682
        %2684 = vmatmul.f32.gmra.mxu0 %v2619
        %v2685 = vpop.f32.mrf.mxu0
        %v2686 = vadd.f32 0.0, %v2685
        %2687 = vdwg.mxu0
        %v2688 = vadd.f32 %v2537, %v2641
        %v2689 = vadd.f32 %v2538, %v2644
        %v2690 = vadd.f32 %v2539, %v2647
        %v2691 = vadd.f32 %v2540, %v2650
        %v2692 = vadd.f32 %v2541, %v2653
        %v2693 = vadd.f32 %v2542, %v2656
        %v2694 = vadd.f32 %v2543, %v2659
        %v2695 = vadd.f32 %v2544, %v2662
        %v2696 = vadd.f32 %v2545, %v2665
        %v2697 = vadd.f32 %v2546, %v2668
        %v2698 = vadd.f32 %v2547, %v2671
        %v2699 = vadd.f32 %v2548, %v2674
        %v2700 = vadd.f32 %v2549, %v2677
        %v2701 = vadd.f32 %v2550, %v2680
        %v2702 = vadd.f32 %v2551, %v2683
        %v2703 = vadd.f32 %v2552, %v2686
        %v2704 = vld [vmem:[%s1256] sm:$0xff]
        %v2705 = vld [vmem:[%s1256 + $0x8] sm:$0xff]
        %v2706 = vld [vmem:[%s1256 + $0x10] sm:$0xff]
        %v2707 = vld [vmem:[%s1256 + $0x18] sm:$0xff]
        %v2708 = vld [vmem:[%s1256 + $0x20] sm:$0xff]
        %v2709 = vld [vmem:[%s1256 + $0x28] sm:$0xff]
        %v2710 = vld [vmem:[%s1256 + $0x30] sm:$0xff]
        %v2711 = vld [vmem:[%s1256 + $0x38] sm:$0xff]
        %v2712 = vld [vmem:[%s1256 + $0x40] sm:$0xff]
        %v2713 = vld [vmem:[%s1256 + $0x48] sm:$0xff]
        %v2714 = vld [vmem:[%s1256 + $0x50] sm:$0xff]
        %v2715 = vld [vmem:[%s1256 + $0x58] sm:$0xff]
        %v2716 = vld [vmem:[%s1256 + $0x60] sm:$0xff]
        %v2717 = vld [vmem:[%s1256 + $0x68] sm:$0xff]
        %v2718 = vld [vmem:[%s1256 + $0x70] sm:$0xff]
        %v2719 = vld [vmem:[%s1256 + $0x78] sm:$0xff]
        %2720 = vst [vmem:[#allocation1] ss:$2 sm:$0xff] %v509
        %v2721 = vld.sshfl [vmem:[#allocation1 + $0x8] sm:$0xff pattern:$0x75316420]
        %2722 = vrot.lane.b32.xlu0 %v2721, 123
        %v2723 = vpop.permute.xlu0 %2722
        %v2725 = vsel %vm553, %v2704, 0
        %v2728 = vsel %vm553, %v2705, 0
        %v2731 = vsel %vm553, %v2706, 0
        %v2734 = vsel %vm553, %v2707, 0
        %v2737 = vsel %vm553, %v2708, 0
        %v2740 = vsel %vm553, %v2709, 0
        %v2743 = vsel %vm553, %v2710, 0
        %v2746 = vsel %vm553, %v2711, 0
        %v2749 = vsel %vm553, %v2712, 0
        %v2752 = vsel %vm553, %v2713, 0
        %v2755 = vsel %vm553, %v2714, 0
        %v2758 = vsel %vm553, %v2715, 0
        %v2761 = vsel %vm553, %v2716, 0
        %v2764 = vsel %vm553, %v2717, 0
        %v2767 = vsel %vm553, %v2718, 0
        %v2770 = vsel %vm553, %v2719, 0
        %v2772 = vsel %vm602, %v2723, 0
        %2774 = vmatpush.msra.mxu0 0.0
        %2775 = vmatpush.msra.mxu0 0.0
        %2776 = vmatpush.msra.mxu0 0.0
        %2777 = vmatpush.msra.mxu0 0.0
        %2778 = vmatpush.msra.mxu0 0.0
        %2779 = vmatpush.msra.mxu0 0.0
        %2780 = vmatpush.msra.mxu0 0.0
        %2781 = vmatpush.msra.mxu0 0.0
        %2782 = vmatpush.msra.mxu0 0.0
        %2783 = vmatpush.msra.mxu0 0.0
        %2784 = vmatpush.msra.mxu0 0.0
        %2785 = vmatpush.msra.mxu0 0.0
        %2786 = vmatpush.msra.mxu0 0.0
        %2787 = vmatpush.msra.mxu0 0.0
        %2788 = vmatpush.msra.mxu0 0.0
        %2789 = vmatpush.msra.mxu0 %v2772
        %2790 = vmatmul.f32.gmra.mxu0 %v2725
        %v2791 = vpop.f32.mrf.mxu0
        %v2792 = vadd.f32 0.0, %v2791
        %2793 = vmatmul.f32.gmra.mxu0 %v2728
        %v2794 = vpop.f32.mrf.mxu0
        %v2795 = vadd.f32 0.0, %v2794
        %2796 = vmatmul.f32.gmra.mxu0 %v2731
        %v2797 = vpop.f32.mrf.mxu0
        %v2798 = vadd.f32 0.0, %v2797
        %2799 = vmatmul.f32.gmra.mxu0 %v2734
        %v2800 = vpop.f32.mrf.mxu0
        %v2801 = vadd.f32 0.0, %v2800
        %2802 = vmatmul.f32.gmra.mxu0 %v2737
        %v2803 = vpop.f32.mrf.mxu0
        %v2804 = vadd.f32 0.0, %v2803
        %2805 = vmatmul.f32.gmra.mxu0 %v2740
        %v2806 = vpop.f32.mrf.mxu0
        %v2807 = vadd.f32 0.0, %v2806
        %2808 = vmatmul.f32.gmra.mxu0 %v2743
        %v2809 = vpop.f32.mrf.mxu0
        %v2810 = vadd.f32 0.0, %v2809
        %2811 = vmatmul.f32.gmra.mxu0 %v2746
        %v2812 = vpop.f32.mrf.mxu0
        %v2813 = vadd.f32 0.0, %v2812
        %2814 = vmatmul.f32.gmra.mxu0 %v2749
        %v2815 = vpop.f32.mrf.mxu0
        %v2816 = vadd.f32 0.0, %v2815
        %2817 = vmatmul.f32.gmra.mxu0 %v2752
        %v2818 = vpop.f32.mrf.mxu0
        %v2819 = vadd.f32 0.0, %v2818
        %2820 = vmatmul.f32.gmra.mxu0 %v2755
        %v2821 = vpop.f32.mrf.mxu0
        %v2822 = vadd.f32 0.0, %v2821
        %2823 = vmatmul.f32.gmra.mxu0 %v2758
        %v2824 = vpop.f32.mrf.mxu0
        %v2825 = vadd.f32 0.0, %v2824
        %2826 = vmatmul.f32.gmra.mxu0 %v2761
        %v2827 = vpop.f32.mrf.mxu0
        %v2828 = vadd.f32 0.0, %v2827
        %2829 = vmatmul.f32.gmra.mxu0 %v2764
        %v2830 = vpop.f32.mrf.mxu0
        %v2831 = vadd.f32 0.0, %v2830
        %2832 = vmatmul.f32.gmra.mxu0 %v2767
        %v2833 = vpop.f32.mrf.mxu0
        %v2834 = vadd.f32 0.0, %v2833
        %2835 = vmatmul.f32.gmra.mxu0 %v2770
        %v2836 = vpop.f32.mrf.mxu0
        %v2837 = vadd.f32 0.0, %v2836
        %2838 = vdwg.mxu0
        %v2839 = vadd.f32 %v2688, %v2792
        %v2840 = vadd.f32 %v2689, %v2795
        %v2841 = vadd.f32 %v2690, %v2798
        %v2842 = vadd.f32 %v2691, %v2801
        %v2843 = vadd.f32 %v2692, %v2804
        %v2844 = vadd.f32 %v2693, %v2807
        %v2845 = vadd.f32 %v2694, %v2810
        %v2846 = vadd.f32 %v2695, %v2813
        %v2847 = vadd.f32 %v2696, %v2816
        %v2848 = vadd.f32 %v2697, %v2819
        %v2849 = vadd.f32 %v2698, %v2822
        %v2850 = vadd.f32 %v2699, %v2825
        %v2851 = vadd.f32 %v2700, %v2828
        %v2852 = vadd.f32 %v2701, %v2831
        %v2853 = vadd.f32 %v2702, %v2834
        %v2854 = vadd.f32 %v2703, %v2837
        %v2855 = vld [vmem:[%s1413] sm:$0xff]
        %v2856 = vld [vmem:[%s1413 + $0x8] sm:$0xff]
        %v2857 = vld [vmem:[%s1413 + $0x10] sm:$0xff]
        %v2858 = vld [vmem:[%s1413 + $0x18] sm:$0xff]
        %v2859 = vld [vmem:[%s1413 + $0x20] sm:$0xff]
        %v2860 = vld [vmem:[%s1413 + $0x28] sm:$0xff]
        %v2861 = vld [vmem:[%s1413 + $0x30] sm:$0xff]
        %v2862 = vld [vmem:[%s1413 + $0x38] sm:$0xff]
        %v2863 = vld [vmem:[%s1413 + $0x40] sm:$0xff]
        %v2864 = vld [vmem:[%s1413 + $0x48] sm:$0xff]
        %v2865 = vld [vmem:[%s1413 + $0x50] sm:$0xff]
        %v2866 = vld [vmem:[%s1413 + $0x58] sm:$0xff]
        %v2867 = vld [vmem:[%s1413 + $0x60] sm:$0xff]
        %v2868 = vld [vmem:[%s1413 + $0x68] sm:$0xff]
        %v2869 = vld [vmem:[%s1413 + $0x70] sm:$0xff]
        %v2870 = vld [vmem:[%s1413 + $0x78] sm:$0xff]
        %2871 = vst [vmem:[#allocation1] ss:$2 sm:$0xff] %v509
        %v2872 = vld.sshfl [vmem:[#allocation1 + $0x8] sm:$0xff pattern:$0x75316420]
        %2873 = vrot.lane.b32.xlu0 %v2872, 122
        %v2874 = vpop.permute.xlu0 %2873
        %v2876 = vsel %vm553, %v2855, 0
        %v2879 = vsel %vm553, %v2856, 0
        %v2882 = vsel %vm553, %v2857, 0
        %v2885 = vsel %vm553, %v2858, 0
        %v2888 = vsel %vm553, %v2859, 0
        %v2891 = vsel %vm553, %v2860, 0
        %v2894 = vsel %vm553, %v2861, 0
        %v2897 = vsel %vm553, %v2862, 0
        %v2900 = vsel %vm553, %v2863, 0
        %v2903 = vsel %vm553, %v2864, 0
        %v2906 = vsel %vm553, %v2865, 0
        %v2909 = vsel %vm553, %v2866, 0
        %v2912 = vsel %vm553, %v2867, 0
        %v2915 = vsel %vm553, %v2868, 0
        %v2918 = vsel %vm553, %v2869, 0
        %v2921 = vsel %vm553, %v2870, 0
        %v2923 = vsel %vm602, %v2874, 0
        %2925 = vmatpush.msra.mxu0 0.0
        %2926 = vmatpush.msra.mxu0 0.0
        %2927 = vmatpush.msra.mxu0 0.0
        %2928 = vmatpush.msra.mxu0 0.0
        %2929 = vmatpush.msra.mxu0 0.0
        %2930 = vmatpush.msra.mxu0 0.0
        %2931 = vmatpush.msra.mxu0 0.0
        %2932 = vmatpush.msra.mxu0 0.0
        %2933 = vmatpush.msra.mxu0 0.0
        %2934 = vmatpush.msra.mxu0 0.0
        %2935 = vmatpush.msra.mxu0 0.0
        %2936 = vmatpush.msra.mxu0 0.0
        %2937 = vmatpush.msra.mxu0 0.0
        %2938 = vmatpush.msra.mxu0 0.0
        %2939 = vmatpush.msra.mxu0 0.0
        %2940 = vmatpush.msra.mxu0 %v2923
        %2941 = vmatmul.f32.gmra.mxu0 %v2876
        %v2942 = vpop.f32.mrf.mxu0
        %v2943 = vadd.f32 0.0, %v2942
        %2944 = vmatmul.f32.gmra.mxu0 %v2879
        %v2945 = vpop.f32.mrf.mxu0
        %v2946 = vadd.f32 0.0, %v2945
        %2947 = vmatmul.f32.gmra.mxu0 %v2882
        %v2948 = vpop.f32.mrf.mxu0
        %v2949 = vadd.f32 0.0, %v2948
        %2950 = vmatmul.f32.gmra.mxu0 %v2885
        %v2951 = vpop.f32.mrf.mxu0
        %v2952 = vadd.f32 0.0, %v2951
        %2953 = vmatmul.f32.gmra.mxu0 %v2888
        %v2954 = vpop.f32.mrf.mxu0
        %v2955 = vadd.f32 0.0, %v2954
        %2956 = vmatmul.f32.gmra.mxu0 %v2891
        %v2957 = vpop.f32.mrf.mxu0
        %v2958 = vadd.f32 0.0, %v2957
        %2959 = vmatmul.f32.gmra.mxu0 %v2894
        %v2960 = vpop.f32.mrf.mxu0
        %v2961 = vadd.f32 0.0, %v2960
        %2962 = vmatmul.f32.gmra.mxu0 %v2897
        %v2963 = vpop.f32.mrf.mxu0
        %v2964 = vadd.f32 0.0, %v2963
        %2965 = vmatmul.f32.gmra.mxu0 %v2900
        %v2966 = vpop.f32.mrf.mxu0
        %v2967 = vadd.f32 0.0, %v2966
        %2968 = vmatmul.f32.gmra.mxu0 %v2903
        %v2969 = vpop.f32.mrf.mxu0
        %v2970 = vadd.f32 0.0, %v2969
        %2971 = vmatmul.f32.gmra.mxu0 %v2906
        %v2972 = vpop.f32.mrf.mxu0
        %v2973 = vadd.f32 0.0, %v2972
        %2974 = vmatmul.f32.gmra.mxu0 %v2909
        %v2975 = vpop.f32.mrf.mxu0
        %v2976 = vadd.f32 0.0, %v2975
        %2977 = vmatmul.f32.gmra.mxu0 %v2912
        %v2978 = vpop.f32.mrf.mxu0
        %v2979 = vadd.f32 0.0, %v2978
        %2980 = vmatmul.f32.gmra.mxu0 %v2915
        %v2981 = vpop.f32.mrf.mxu0
        %v2982 = vadd.f32 0.0, %v2981
        %2983 = vmatmul.f32.gmra.mxu0 %v2918
        %v2984 = vpop.f32.mrf.mxu0
        %v2985 = vadd.f32 0.0, %v2984
        %2986 = vmatmul.f32.gmra.mxu0 %v2921
        %v2987 = vpop.f32.mrf.mxu0
        %v2988 = vadd.f32 0.0, %v2987
        %2989 = vdwg.mxu0
        %v2990 = vadd.f32 %v2839, %v2943
        %v2991 = vadd.f32 %v2840, %v2946
        %v2992 = vadd.f32 %v2841, %v2949
        %v2993 = vadd.f32 %v2842, %v2952
        %v2994 = vadd.f32 %v2843, %v2955
        %v2995 = vadd.f32 %v2844, %v2958
        %v2996 = vadd.f32 %v2845, %v2961
        %v2997 = vadd.f32 %v2846, %v2964
        %v2998 = vadd.f32 %v2847, %v2967
        %v2999 = vadd.f32 %v2848, %v2970
        %v3000 = vadd.f32 %v2849, %v2973
        %v3001 = vadd.f32 %v2850, %v2976
        %v3002 = vadd.f32 %v2851, %v2979
        %v3003 = vadd.f32 %v2852, %v2982
        %v3004 = vadd.f32 %v2853, %v2985
        %v3005 = vadd.f32 %v2854, %v2988
        %v3006 = vld [vmem:[%s1570] sm:$0xff]
        %v3007 = vld [vmem:[%s1570 + $0x8] sm:$0xff]
        %v3008 = vld [vmem:[%s1570 + $0x10] sm:$0xff]
        %v3009 = vld [vmem:[%s1570 + $0x18] sm:$0xff]
        %v3010 = vld [vmem:[%s1570 + $0x20] sm:$0xff]
        %v3011 = vld [vmem:[%s1570 + $0x28] sm:$0xff]
        %v3012 = vld [vmem:[%s1570 + $0x30] sm:$0xff]
        %v3013 = vld [vmem:[%s1570 + $0x38] sm:$0xff]
        %v3014 = vld [vmem:[%s1570 + $0x40] sm:$0xff]
        %v3015 = vld [vmem:[%s1570 + $0x48] sm:$0xff]
        %v3016 = vld [vmem:[%s1570 + $0x50] sm:$0xff]
        %v3017 = vld [vmem:[%s1570 + $0x58] sm:$0xff]
        %v3018 = vld [vmem:[%s1570 + $0x60] sm:$0xff]
        %v3019 = vld [vmem:[%s1570 + $0x68] sm:$0xff]
        %v3020 = vld [vmem:[%s1570 + $0x70] sm:$0xff]
        %v3021 = vld [vmem:[%s1570 + $0x78] sm:$0xff]
        %3022 = vst [vmem:[#allocation1] ss:$2 sm:$0xff] %v509
        %v3023 = vld.sshfl [vmem:[#allocation1 + $0x8] sm:$0xff pattern:$0x75316420]
        %3024 = vrot.lane.b32.xlu0 %v3023, 121
        %v3025 = vpop.permute.xlu0 %3024
        %v3027 = vsel %vm553, %v3006, 0
        %v3030 = vsel %vm553, %v3007, 0
        %v3033 = vsel %vm553, %v3008, 0
        %v3036 = vsel %vm553, %v3009, 0
        %v3039 = vsel %vm553, %v3010, 0
        %v3042 = vsel %vm553, %v3011, 0
        %v3045 = vsel %vm553, %v3012, 0
        %v3048 = vsel %vm553, %v3013, 0
        %v3051 = vsel %vm553, %v3014, 0
        %v3054 = vsel %vm553, %v3015, 0
        %v3057 = vsel %vm553, %v3016, 0
        %v3060 = vsel %vm553, %v3017, 0
        %v3063 = vsel %vm553, %v3018, 0
        %v3066 = vsel %vm553, %v3019, 0
        %v3069 = vsel %vm553, %v3020, 0
        %v3072 = vsel %vm553, %v3021, 0
        %v3074 = vsel %vm602, %v3025, 0
        %3076 = vmatpush.msra.mxu0 0.0
        %3077 = vmatpush.msra.mxu0 0.0
        %3078 = vmatpush.msra.mxu0 0.0
        %3079 = vmatpush.msra.mxu0 0.0
        %3080 = vmatpush.msra.mxu0 0.0
        %3081 = vmatpush.msra.mxu0 0.0
        %3082 = vmatpush.msra.mxu0 0.0
        %3083 = vmatpush.msra.mxu0 0.0
        %3084 = vmatpush.msra.mxu0 0.0
        %3085 = vmatpush.msra.mxu0 0.0
        %3086 = vmatpush.msra.mxu0 0.0
        %3087 = vmatpush.msra.mxu0 0.0
        %3088 = vmatpush.msra.mxu0 0.0
        %3089 = vmatpush.msra.mxu0 0.0
        %3090 = vmatpush.msra.mxu0 0.0
        %3091 = vmatpush.msra.mxu0 %v3074
        %3092 = vmatmul.f32.gmra.mxu0 %v3027
        %v3093 = vpop.f32.mrf.mxu0
        %v3094 = vadd.f32 0.0, %v3093
        %3095 = vmatmul.f32.gmra.mxu0 %v3030
        %v3096 = vpop.f32.mrf.mxu0
        %v3097 = vadd.f32 0.0, %v3096
        %3098 = vmatmul.f32.gmra.mxu0 %v3033
        %v3099 = vpop.f32.mrf.mxu0
        %v3100 = vadd.f32 0.0, %v3099
        %3101 = vmatmul.f32.gmra.mxu0 %v3036
        %v3102 = vpop.f32.mrf.mxu0
        %v3103 = vadd.f32 0.0, %v3102
        %3104 = vmatmul.f32.gmra.mxu0 %v3039
        %v3105 = vpop.f32.mrf.mxu0
        %v3106 = vadd.f32 0.0, %v3105
        %3107 = vmatmul.f32.gmra.mxu0 %v3042
        %v3108 = vpop.f32.mrf.mxu0
        %v3109 = vadd.f32 0.0, %v3108
        %3110 = vmatmul.f32.gmra.mxu0 %v3045
        %v3111 = vpop.f32.mrf.mxu0
        %v3112 = vadd.f32 0.0, %v3111
        %3113 = vmatmul.f32.gmra.mxu0 %v3048
        %v3114 = vpop.f32.mrf.mxu0
        %v3115 = vadd.f32 0.0, %v3114
        %3116 = vmatmul.f32.gmra.mxu0 %v3051
        %v3117 = vpop.f32.mrf.mxu0
        %v3118 = vadd.f32 0.0, %v3117
        %3119 = vmatmul.f32.gmra.mxu0 %v3054
        %v3120 = vpop.f32.mrf.mxu0
        %v3121 = vadd.f32 0.0, %v3120
        %3122 = vmatmul.f32.gmra.mxu0 %v3057
        %v3123 = vpop.f32.mrf.mxu0
        %v3124 = vadd.f32 0.0, %v3123
        %3125 = vmatmul.f32.gmra.mxu0 %v3060
        %v3126 = vpop.f32.mrf.mxu0
        %v3127 = vadd.f32 0.0, %v3126
        %3128 = vmatmul.f32.gmra.mxu0 %v3063
        %v3129 = vpop.f32.mrf.mxu0
        %v3130 = vadd.f32 0.0, %v3129
        %3131 = vmatmul.f32.gmra.mxu0 %v3066
        %v3132 = vpop.f32.mrf.mxu0
        %v3133 = vadd.f32 0.0, %v3132
        %3134 = vmatmul.f32.gmra.mxu0 %v3069
        %v3135 = vpop.f32.mrf.mxu0
        %v3136 = vadd.f32 0.0, %v3135
        %3137 = vmatmul.f32.gmra.mxu0 %v3072
        %v3138 = vpop.f32.mrf.mxu0
        %v3139 = vadd.f32 0.0, %v3138
        %3140 = vdwg.mxu0
        %v3141 = vadd.f32 %v2990, %v3094
        %v3142 = vadd.f32 %v2991, %v3097
        %v3143 = vadd.f32 %v2992, %v3100
        %v3144 = vadd.f32 %v2993, %v3103
        %v3145 = vadd.f32 %v2994, %v3106
        %v3146 = vadd.f32 %v2995, %v3109
        %v3147 = vadd.f32 %v2996, %v3112
        %v3148 = vadd.f32 %v2997, %v3115
        %v3149 = vadd.f32 %v2998, %v3118
        %v3150 = vadd.f32 %v2999, %v3121
        %v3151 = vadd.f32 %v3000, %v3124
        %v3152 = vadd.f32 %v3001, %v3127
        %v3153 = vadd.f32 %v3002, %v3130
        %v3154 = vadd.f32 %v3003, %v3133
        %v3155 = vadd.f32 %v3004, %v3136
        %v3156 = vadd.f32 %v3005, %v3139
        %v3157 = vld [vmem:[%s2] sm:$0xff]
        %v3158 = vld [vmem:[%s2 + $0x8] sm:$0xff]
        %v3159 = vld [vmem:[%s2 + $0x10] sm:$0xff]
        %v3160 = vld [vmem:[%s2 + $0x18] sm:$0xff]
        %v3161 = vld [vmem:[%s2 + $0x20] sm:$0xff]
        %v3162 = vld [vmem:[%s2 + $0x28] sm:$0xff]
        %v3163 = vld [vmem:[%s2 + $0x30] sm:$0xff]
        %v3164 = vld [vmem:[%s2 + $0x38] sm:$0xff]
        %v3165 = vld [vmem:[%s2 + $0x40] sm:$0xff]
        %v3166 = vld [vmem:[%s2 + $0x48] sm:$0xff]
        %v3167 = vld [vmem:[%s2 + $0x50] sm:$0xff]
        %v3168 = vld [vmem:[%s2 + $0x58] sm:$0xff]
        %v3169 = vld [vmem:[%s2 + $0x60] sm:$0xff]
        %v3170 = vld [vmem:[%s2 + $0x68] sm:$0xff]
        %v3171 = vld [vmem:[%s2 + $0x70] sm:$0xff]
        %v3172 = vld [vmem:[%s2 + $0x78] sm:$0xff]
        %3174 = vset.pattern.permute.xlu0 0
        %3175 = vperm.xlu0 %3174, %v3157
        %v3176 = vpop.permute.xlu0 %3175
        %3179 = vset.pattern.permute.xlu0 0
        %3180 = vperm.xlu0 %3179, %v3158
        %v3181 = vpop.permute.xlu0 %3180
        %3184 = vset.pattern.permute.xlu0 0
        %3185 = vperm.xlu0 %3184, %v3159
        %v3186 = vpop.permute.xlu0 %3185
        %3189 = vset.pattern.permute.xlu0 0
        %3190 = vperm.xlu0 %3189, %v3160
        %v3191 = vpop.permute.xlu0 %3190
        %3194 = vset.pattern.permute.xlu0 0
        %3195 = vperm.xlu0 %3194, %v3161
        %v3196 = vpop.permute.xlu0 %3195
        %3199 = vset.pattern.permute.xlu0 0
        %3200 = vperm.xlu0 %3199, %v3162
        %v3201 = vpop.permute.xlu0 %3200
        %3204 = vset.pattern.permute.xlu0 0
        %3205 = vperm.xlu0 %3204, %v3163
        %v3206 = vpop.permute.xlu0 %3205
        %3209 = vset.pattern.permute.xlu0 0
        %3210 = vperm.xlu0 %3209, %v3164
        %v3211 = vpop.permute.xlu0 %3210
        %3214 = vset.pattern.permute.xlu0 0
        %3215 = vperm.xlu0 %3214, %v3165
        %v3216 = vpop.permute.xlu0 %3215
        %3219 = vset.pattern.permute.xlu0 0
        %3220 = vperm.xlu0 %3219, %v3166
        %v3221 = vpop.permute.xlu0 %3220
        %3224 = vset.pattern.permute.xlu0 0
        %3225 = vperm.xlu0 %3224, %v3167
        %v3226 = vpop.permute.xlu0 %3225
        %3229 = vset.pattern.permute.xlu0 0
        %3230 = vperm.xlu0 %3229, %v3168
        %v3231 = vpop.permute.xlu0 %3230
        %3234 = vset.pattern.permute.xlu0 0
        %3235 = vperm.xlu0 %3234, %v3169
        %v3236 = vpop.permute.xlu0 %3235
        %3239 = vset.pattern.permute.xlu0 0
        %3240 = vperm.xlu0 %3239, %v3170
        %v3241 = vpop.permute.xlu0 %3240
        %3244 = vset.pattern.permute.xlu0 0
        %3245 = vperm.xlu0 %3244, %v3171
        %v3246 = vpop.permute.xlu0 %3245
        %3249 = vset.pattern.permute.xlu0 0
        %3250 = vperm.xlu0 %3249, %v3172
        %v3251 = vpop.permute.xlu0 %3250
        %v3253 = vmul.f32 %v3141, %v3176
        %v3254 = vmul.f32 %v3142, %v3181
        %v3255 = vmul.f32 %v3143, %v3186
        %v3256 = vmul.f32 %v3144, %v3191
        %v3257 = vmul.f32 %v3145, %v3196
        %v3258 = vmul.f32 %v3146, %v3201
        %v3259 = vmul.f32 %v3147, %v3206
        %v3260 = vmul.f32 %v3148, %v3211
        %v3261 = vmul.f32 %v3149, %v3216
        %v3262 = vmul.f32 %v3150, %v3221
        %v3263 = vmul.f32 %v3151, %v3226
        %v3264 = vmul.f32 %v3152, %v3231
        %v3265 = vmul.f32 %v3153, %v3236
        %v3266 = vmul.f32 %v3154, %v3241
        %v3267 = vmul.f32 %v3155, %v3246
        %v3268 = vmul.f32 %v3156, %v3251
        %v3269 = vld [vmem:[%s3] sm:$0xff]
        %v3270 = vld [vmem:[%s3 + $0x8] sm:$0xff]
        %v3271 = vld [vmem:[%s3 + $0x10] sm:$0xff]
        %v3272 = vld [vmem:[%s3 + $0x18] sm:$0xff]
        %v3273 = vld [vmem:[%s3 + $0x20] sm:$0xff]
        %v3274 = vld [vmem:[%s3 + $0x28] sm:$0xff]
        %v3275 = vld [vmem:[%s3 + $0x30] sm:$0xff]
        %v3276 = vld [vmem:[%s3 + $0x38] sm:$0xff]
        %v3277 = vld [vmem:[%s3 + $0x40] sm:$0xff]
        %v3278 = vld [vmem:[%s3 + $0x48] sm:$0xff]
        %v3279 = vld [vmem:[%s3 + $0x50] sm:$0xff]
        %v3280 = vld [vmem:[%s3 + $0x58] sm:$0xff]
        %v3281 = vld [vmem:[%s3 + $0x60] sm:$0xff]
        %v3282 = vld [vmem:[%s3 + $0x68] sm:$0xff]
        %v3283 = vld [vmem:[%s3 + $0x70] sm:$0xff]
        %v3284 = vld [vmem:[%s3 + $0x78] sm:$0xff]
        %3286 = vset.pattern.permute.xlu0 0
        %3287 = vperm.xlu0 %3286, %v3269
        %v3288 = vpop.permute.xlu0 %3287
        %3291 = vset.pattern.permute.xlu0 0
        %3292 = vperm.xlu0 %3291, %v3270
        %v3293 = vpop.permute.xlu0 %3292
        %3296 = vset.pattern.permute.xlu0 0
        %3297 = vperm.xlu0 %3296, %v3271
        %v3298 = vpop.permute.xlu0 %3297
        %3301 = vset.pattern.permute.xlu0 0
        %3302 = vperm.xlu0 %3301, %v3272
        %v3303 = vpop.permute.xlu0 %3302
        %3306 = vset.pattern.permute.xlu0 0
        %3307 = vperm.xlu0 %3306, %v3273
        %v3308 = vpop.permute.xlu0 %3307
        %3311 = vset.pattern.permute.xlu0 0
        %3312 = vperm.xlu0 %3311, %v3274
        %v3313 = vpop.permute.xlu0 %3312
        %3316 = vset.pattern.permute.xlu0 0
        %3317 = vperm.xlu0 %3316, %v3275
        %v3318 = vpop.permute.xlu0 %3317
        %3321 = vset.pattern.permute.xlu0 0
        %3322 = vperm.xlu0 %3321, %v3276
        %v3323 = vpop.permute.xlu0 %3322
        %3326 = vset.pattern.permute.xlu0 0
        %3327 = vperm.xlu0 %3326, %v3277
        %v3328 = vpop.permute.xlu0 %3327
        %3331 = vset.pattern.permute.xlu0 0
        %3332 = vperm.xlu0 %3331, %v3278
        %v3333 = vpop.permute.xlu0 %3332
        %3336 = vset.pattern.permute.xlu0 0
        %3337 = vperm.xlu0 %3336, %v3279
        %v3338 = vpop.permute.xlu0 %3337
        %3341 = vset.pattern.permute.xlu0 0
        %3342 = vperm.xlu0 %3341, %v3280
        %v3343 = vpop.permute.xlu0 %3342
        %3346 = vset.pattern.permute.xlu0 0
        %3347 = vperm.xlu0 %3346, %v3281
        %v3348 = vpop.permute.xlu0 %3347
        %3351 = vset.pattern.permute.xlu0 0
        %3352 = vperm.xlu0 %3351, %v3282
        %v3353 = vpop.permute.xlu0 %3352
        %3356 = vset.pattern.permute.xlu0 0
        %3357 = vperm.xlu0 %3356, %v3283
        %v3358 = vpop.permute.xlu0 %3357
        %3361 = vset.pattern.permute.xlu0 0
        %3362 = vperm.xlu0 %3361, %v3284
        %v3363 = vpop.permute.xlu0 %3362
        %v3365 = vadd.f32 %v3253, %v3288
        %v3366 = vadd.f32 %v3254, %v3293
        %v3367 = vadd.f32 %v3255, %v3298
        %v3368 = vadd.f32 %v3256, %v3303
        %v3369 = vadd.f32 %v3257, %v3308
        %v3370 = vadd.f32 %v3258, %v3313
        %v3371 = vadd.f32 %v3259, %v3318
        %v3372 = vadd.f32 %v3260, %v3323
        %v3373 = vadd.f32 %v3261, %v3328
        %v3374 = vadd.f32 %v3262, %v3333
        %v3375 = vadd.f32 %v3263, %v3338
        %v3376 = vadd.f32 %v3264, %v3343
        %v3377 = vadd.f32 %v3265, %v3348
        %v3378 = vadd.f32 %v3266, %v3353
        %v3379 = vadd.f32 %v3267, %v3358
        %v3380 = vadd.f32 %v3268, %v3363
        %v3381 = vmax.f32 %v3365, 0.0
        %v3382 = vmax.f32 %v3366, 0.0
        %v3383 = vmax.f32 %v3367, 0.0
        %v3384 = vmax.f32 %v3368, 0.0
        %v3385 = vmax.f32 %v3369, 0.0
        %v3386 = vmax.f32 %v3370, 0.0
        %v3387 = vmax.f32 %v3371, 0.0
        %v3388 = vmax.f32 %v3372, 0.0
        %v3389 = vmax.f32 %v3373, 0.0
        %v3390 = vmax.f32 %v3374, 0.0
        %v3391 = vmax.f32 %v3375, 0.0
        %v3392 = vmax.f32 %v3376, 0.0
        %v3393 = vmax.f32 %v3377, 0.0
        %v3394 = vmax.f32 %v3378, 0.0
        %v3395 = vmax.f32 %v3379, 0.0
        %v3396 = vmax.f32 %v3380, 0.0
        %vm3397 = vcmask 859136
        %3398 = vst.msk [vmem:[#allocation2 + $0x8] sm:$0xff] %vm3397, %v3381
        %3399 = vst.msk [vmem:[#allocation2 + $0x18] sm:$0xff] %vm3397, %v3382
        %3400 = vst.msk [vmem:[#allocation2 + $0x28] sm:$0xff] %vm3397, %v3383
        %3401 = vst.msk [vmem:[#allocation2 + $0x38] sm:$0xff] %vm3397, %v3384
        %3402 = vst.msk [vmem:[#allocation2 + $0x48] sm:$0xff] %vm3397, %v3385
        %3403 = vst.msk [vmem:[#allocation2 + $0x58] sm:$0xff] %vm3397, %v3386
        %3404 = vst.msk [vmem:[#allocation2 + $0x68] sm:$0xff] %vm3397, %v3387
        %3405 = vst.msk [vmem:[#allocation2 + $0x78] sm:$0xff] %vm3397, %v3388
        %3406 = vst.msk [vmem:[#allocation2 + $0x88] sm:$0xff] %vm3397, %v3389
        %3407 = vst.msk [vmem:[#allocation2 + $0x98] sm:$0xff] %vm3397, %v3390
        %3408 = vst.msk [vmem:[#allocation2 + $0xa8] sm:$0xff] %vm3397, %v3391
        %3409 = vst.msk [vmem:[#allocation2 + $0xb8] sm:$0xff] %vm3397, %v3392
        %3410 = vst.msk [vmem:[#allocation2 + $0xc8] sm:$0xff] %vm3397, %v3393
        %3411 = vst.msk [vmem:[#allocation2 + $0xd8] sm:$0xff] %vm3397, %v3394
        %3412 = vst.msk [vmem:[#allocation2 + $0xe8] sm:$0xff] %vm3397, %v3395
        %3413 = vst.msk [vmem:[#allocation2 + $0xf8] sm:$0xff] %vm3397, %v3396
        %v3414 = vld [vmem:[%s4] sm:$0xff]
        %v3415 = vld [vmem:[%s4 + $0x8] sm:$0xff]
        %v3416 = vld [vmem:[%s4 + $0x10] sm:$0xff]
        %v3417 = vld [vmem:[%s4 + $0x18] sm:$0xff]
        %v3418 = vld [vmem:[%s4 + $0x20] sm:$0xff]
        %v3419 = vld [vmem:[%s4 + $0x28] sm:$0xff]
        %v3420 = vld [vmem:[%s4 + $0x30] sm:$0xff]
        %v3421 = vld [vmem:[%s4 + $0x38] sm:$0xff]
        %v3422 = vld [vmem:[%s4 + $0x40] sm:$0xff]
        %v3423 = vld [vmem:[%s4 + $0x48] sm:$0xff]
        %v3424 = vld [vmem:[%s4 + $0x50] sm:$0xff]
        %v3425 = vld [vmem:[%s4 + $0x58] sm:$0xff]
        %v3426 = vld [vmem:[%s4 + $0x60] sm:$0xff]
        %v3427 = vld [vmem:[%s4 + $0x68] sm:$0xff]
        %v3428 = vld [vmem:[%s4 + $0x70] sm:$0xff]
        %v3429 = vld [vmem:[%s4 + $0x78] sm:$0xff]
        %v3430 = vld [vmem:[#allocation2] sm:$0xff]
        %v3431 = vld [vmem:[#allocation2 + $0x10] sm:$0xff]
        %v3432 = vld [vmem:[#allocation2 + $0x20] sm:$0xff]
        %v3433 = vld [vmem:[#allocation2 + $0x30] sm:$0xff]
        %v3434 = vld [vmem:[#allocation2 + $0x40] sm:$0xff]
        %v3435 = vld [vmem:[#allocation2 + $0x50] sm:$0xff]
        %v3436 = vld [vmem:[#allocation2 + $0x60] sm:$0xff]
        %v3437 = vld [vmem:[#allocation2 + $0x70] sm:$0xff]
        %v3438 = vld [vmem:[#allocation2 + $0x80] sm:$0xff]
        %v3439 = vld [vmem:[#allocation2 + $0x90] sm:$0xff]
        %v3440 = vld [vmem:[#allocation2 + $0xa0] sm:$0xff]
        %v3441 = vld [vmem:[#allocation2 + $0xb0] sm:$0xff]
        %v3442 = vld [vmem:[#allocation2 + $0xc0] sm:$0xff]
        %v3443 = vld [vmem:[#allocation2 + $0xd0] sm:$0xff]
        %v3444 = vld [vmem:[#allocation2 + $0xe0] sm:$0xff]
        %v3445 = vld [vmem:[#allocation2 + $0xf0] sm:$0xff]
        %s3446 = scalar_lea.vmem %s4, 256
        %v3447 = vld [vmem:[%s3446] sm:$0xff]
        %v3448 = vld [vmem:[%s3446 + $0x8] sm:$0xff]
        %v3449 = vld [vmem:[%s3446 + $0x10] sm:$0xff]
        %v3450 = vld [vmem:[%s3446 + $0x18] sm:$0xff]
        %v3451 = vld [vmem:[%s3446 + $0x20] sm:$0xff]
        %v3452 = vld [vmem:[%s3446 + $0x28] sm:$0xff]
        %v3453 = vld [vmem:[%s3446 + $0x30] sm:$0xff]
        %v3454 = vld [vmem:[%s3446 + $0x38] sm:$0xff]
        %v3455 = vld [vmem:[%s3446 + $0x40] sm:$0xff]
        %v3456 = vld [vmem:[%s3446 + $0x48] sm:$0xff]
        %v3457 = vld [vmem:[%s3446 + $0x50] sm:$0xff]
        %v3458 = vld [vmem:[%s3446 + $0x58] sm:$0xff]
        %v3459 = vld [vmem:[%s3446 + $0x60] sm:$0xff]
        %v3460 = vld [vmem:[%s3446 + $0x68] sm:$0xff]
        %v3461 = vld [vmem:[%s3446 + $0x70] sm:$0xff]
        %v3462 = vld [vmem:[%s3446 + $0x78] sm:$0xff]
        %v3463 = vld [vmem:[#allocation2 + $0x8] sm:$0xff]
        %v3464 = vld [vmem:[#allocation2 + $0x18] sm:$0xff]
        %v3465 = vld [vmem:[#allocation2 + $0x28] sm:$0xff]
        %v3466 = vld [vmem:[#allocation2 + $0x38] sm:$0xff]
        %v3467 = vld [vmem:[#allocation2 + $0x48] sm:$0xff]
        %v3468 = vld [vmem:[#allocation2 + $0x58] sm:$0xff]
        %v3469 = vld [vmem:[#allocation2 + $0x68] sm:$0xff]
        %v3470 = vld [vmem:[#allocation2 + $0x78] sm:$0xff]
        %v3471 = vld [vmem:[#allocation2 + $0x88] sm:$0xff]
        %v3472 = vld [vmem:[#allocation2 + $0x98] sm:$0xff]
        %v3473 = vld [vmem:[#allocation2 + $0xa8] sm:$0xff]
        %v3474 = vld [vmem:[#allocation2 + $0xb8] sm:$0xff]
        %v3475 = vld [vmem:[#allocation2 + $0xc8] sm:$0xff]
        %v3476 = vld [vmem:[#allocation2 + $0xd8] sm:$0xff]
        %v3477 = vld [vmem:[#allocation2 + $0xe8] sm:$0xff]
        %v3478 = vld [vmem:[#allocation2 + $0xf8] sm:$0xff]
        %3511 = vrot.lane.b32.xlu0 %v3430, 127
        %v3512 = vpop.permute.xlu0 %3511
        %3513 = vrot.lane.b32.xlu0 %v3463, 127
        %v3514 = vpop.permute.xlu0 %3513
        %3515 = vrot.lane.b32.xlu0 %v3431, 127
        %v3516 = vpop.permute.xlu0 %3515
        %3517 = vrot.lane.b32.xlu0 %v3464, 127
        %v3518 = vpop.permute.xlu0 %3517
        %3519 = vrot.lane.b32.xlu0 %v3432, 127
        %v3520 = vpop.permute.xlu0 %3519
        %3521 = vrot.lane.b32.xlu0 %v3465, 127
        %v3522 = vpop.permute.xlu0 %3521
        %3523 = vrot.lane.b32.xlu0 %v3433, 127
        %v3524 = vpop.permute.xlu0 %3523
        %3525 = vrot.lane.b32.xlu0 %v3466, 127
        %v3526 = vpop.permute.xlu0 %3525
        %3527 = vrot.lane.b32.xlu0 %v3434, 127
        %v3528 = vpop.permute.xlu0 %3527
        %3529 = vrot.lane.b32.xlu0 %v3467, 127
        %v3530 = vpop.permute.xlu0 %3529
        %3531 = vrot.lane.b32.xlu0 %v3435, 127
        %v3532 = vpop.permute.xlu0 %3531
        %3533 = vrot.lane.b32.xlu0 %v3468, 127
        %v3534 = vpop.permute.xlu0 %3533
        %3535 = vrot.lane.b32.xlu0 %v3436, 127
        %v3536 = vpop.permute.xlu0 %3535
        %3537 = vrot.lane.b32.xlu0 %v3469, 127
        %v3538 = vpop.permute.xlu0 %3537
        %3539 = vrot.lane.b32.xlu0 %v3437, 127
        %v3540 = vpop.permute.xlu0 %3539
        %3541 = vrot.lane.b32.xlu0 %v3470, 127
        %v3542 = vpop.permute.xlu0 %3541
        %3543 = vrot.lane.b32.xlu0 %v3438, 127
        %v3544 = vpop.permute.xlu0 %3543
        %3545 = vrot.lane.b32.xlu0 %v3471, 127
        %v3546 = vpop.permute.xlu0 %3545
        %3547 = vrot.lane.b32.xlu0 %v3439, 127
        %v3548 = vpop.permute.xlu0 %3547
        %3549 = vrot.lane.b32.xlu0 %v3472, 127
        %v3550 = vpop.permute.xlu0 %3549
        %3551 = vrot.lane.b32.xlu0 %v3440, 127
        %v3552 = vpop.permute.xlu0 %3551
        %3553 = vrot.lane.b32.xlu0 %v3473, 127
        %v3554 = vpop.permute.xlu0 %3553
        %3555 = vrot.lane.b32.xlu0 %v3441, 127
        %v3556 = vpop.permute.xlu0 %3555
        %3557 = vrot.lane.b32.xlu0 %v3474, 127
        %v3558 = vpop.permute.xlu0 %3557
        %3559 = vrot.lane.b32.xlu0 %v3442, 127
        %v3560 = vpop.permute.xlu0 %3559
        %3561 = vrot.lane.b32.xlu0 %v3475, 127
        %v3562 = vpop.permute.xlu0 %3561
        %3563 = vrot.lane.b32.xlu0 %v3443, 127
        %v3564 = vpop.permute.xlu0 %3563
        %3565 = vrot.lane.b32.xlu0 %v3476, 127
        %v3566 = vpop.permute.xlu0 %3565
        %3567 = vrot.lane.b32.xlu0 %v3444, 127
        %v3568 = vpop.permute.xlu0 %3567
        %3569 = vrot.lane.b32.xlu0 %v3477, 127
        %v3570 = vpop.permute.xlu0 %3569
        %3571 = vrot.lane.b32.xlu0 %v3445, 127
        %v3572 = vpop.permute.xlu0 %3571
        %3573 = vrot.lane.b32.xlu0 %v3478, 127
        %v3574 = vpop.permute.xlu0 %3573
        %v3575 = vsel %vm551, %v3512, %v3514
        %v3576 = vsel %vm551, %v3516, %v3518
        %v3577 = vsel %vm551, %v3520, %v3522
        %v3578 = vsel %vm551, %v3524, %v3526
        %v3579 = vsel %vm551, %v3528, %v3530
        %v3580 = vsel %vm551, %v3532, %v3534
        %v3581 = vsel %vm551, %v3536, %v3538
        %v3582 = vsel %vm551, %v3540, %v3542
        %v3583 = vsel %vm551, %v3544, %v3546
        %v3584 = vsel %vm551, %v3548, %v3550
        %v3585 = vsel %vm551, %v3552, %v3554
        %v3586 = vsel %vm551, %v3556, %v3558
        %v3587 = vsel %vm551, %v3560, %v3562
        %v3588 = vsel %vm551, %v3564, %v3566
        %v3589 = vsel %vm551, %v3568, %v3570
        %v3590 = vsel %vm551, %v3572, %v3574
        %3607 = vmatpush.msra.mxu0 %v3590
        %3608 = vmatpush.msra.mxu0 %v3589
        %3609 = vmatpush.msra.mxu0 %v3588
        %3610 = vmatpush.msra.mxu0 %v3587
        %3611 = vmatpush.msra.mxu0 %v3586
        %3612 = vmatpush.msra.mxu0 %v3585
        %3613 = vmatpush.msra.mxu0 %v3584
        %3614 = vmatpush.msra.mxu0 %v3583
        %3615 = vmatpush.msra.mxu0 %v3582
        %3616 = vmatpush.msra.mxu0 %v3581
        %3617 = vmatpush.msra.mxu0 %v3580
        %3618 = vmatpush.msra.mxu0 %v3579
        %3619 = vmatpush.msra.mxu0 %v3578
        %3620 = vmatpush.msra.mxu0 %v3577
        %3621 = vmatpush.msra.mxu0 %v3576
        %3622 = vmatpush.msra.mxu0 %v3575
        %3623 = vmatmul.f32.gmra.mxu0 %v3447
        %v3624 = vpop.f32.mrf.mxu0
        %v3625 = vadd.f32 0.0, %v3624
        %3626 = vmatmul.f32.gmra.mxu0 %v3448
        %v3627 = vpop.f32.mrf.mxu0
        %v3628 = vadd.f32 0.0, %v3627
        %3629 = vmatmul.f32.gmra.mxu0 %v3449
        %v3630 = vpop.f32.mrf.mxu0
        %v3631 = vadd.f32 0.0, %v3630
        %3632 = vmatmul.f32.gmra.mxu0 %v3450
        %v3633 = vpop.f32.mrf.mxu0
        %v3634 = vadd.f32 0.0, %v3633
        %3635 = vmatmul.f32.gmra.mxu0 %v3451
        %v3636 = vpop.f32.mrf.mxu0
        %v3637 = vadd.f32 0.0, %v3636
        %3638 = vmatmul.f32.gmra.mxu0 %v3452
        %v3639 = vpop.f32.mrf.mxu0
        %v3640 = vadd.f32 0.0, %v3639
        %3641 = vmatmul.f32.gmra.mxu0 %v3453
        %v3642 = vpop.f32.mrf.mxu0
        %v3643 = vadd.f32 0.0, %v3642
        %3644 = vmatmul.f32.gmra.mxu0 %v3454
        %v3645 = vpop.f32.mrf.mxu0
        %v3646 = vadd.f32 0.0, %v3645
        %3647 = vmatmul.f32.gmra.mxu0 %v3455
        %v3648 = vpop.f32.mrf.mxu0
        %v3649 = vadd.f32 0.0, %v3648
        %3650 = vmatmul.f32.gmra.mxu0 %v3456
        %v3651 = vpop.f32.mrf.mxu0
        %v3652 = vadd.f32 0.0, %v3651
        %3653 = vmatmul.f32.gmra.mxu0 %v3457
        %v3654 = vpop.f32.mrf.mxu0
        %v3655 = vadd.f32 0.0, %v3654
        %3656 = vmatmul.f32.gmra.mxu0 %v3458
        %v3657 = vpop.f32.mrf.mxu0
        %v3658 = vadd.f32 0.0, %v3657
        %3659 = vmatmul.f32.gmra.mxu0 %v3459
        %v3660 = vpop.f32.mrf.mxu0
        %v3661 = vadd.f32 0.0, %v3660
        %3662 = vmatmul.f32.gmra.mxu0 %v3460
        %v3663 = vpop.f32.mrf.mxu0
        %v3664 = vadd.f32 0.0, %v3663
        %3665 = vmatmul.f32.gmra.mxu0 %v3461
        %v3666 = vpop.f32.mrf.mxu0
        %v3667 = vadd.f32 0.0, %v3666
        %3668 = vmatmul.f32.gmra.mxu0 %v3462
        %v3669 = vpop.f32.mrf.mxu0
        %v3670 = vadd.f32 0.0, %v3669
        %3671 = vdwg.mxu0
        %3672 = vmatpush.msra.mxu0 %v3445
        %3673 = vmatpush.msra.mxu0 %v3444
        %3674 = vmatpush.msra.mxu0 %v3443
        %3675 = vmatpush.msra.mxu0 %v3442
        %3676 = vmatpush.msra.mxu0 %v3441
        %3677 = vmatpush.msra.mxu0 %v3440
        %3678 = vmatpush.msra.mxu0 %v3439
        %3679 = vmatpush.msra.mxu0 %v3438
        %3680 = vmatpush.msra.mxu0 %v3437
        %3681 = vmatpush.msra.mxu0 %v3436
        %3682 = vmatpush.msra.mxu0 %v3435
        %3683 = vmatpush.msra.mxu0 %v3434
        %3684 = vmatpush.msra.mxu0 %v3433
        %3685 = vmatpush.msra.mxu0 %v3432
        %3686 = vmatpush.msra.mxu0 %v3431
        %3687 = vmatpush.msra.mxu0 %v3430
        %3688 = vmatmul.f32.gmra.mxu0 %v3414
        %v3689 = vpop.f32.mrf.mxu0
        %v3690 = vadd.f32 %v3625, %v3689
        %3691 = vmatmul.f32.gmra.mxu0 %v3415
        %v3692 = vpop.f32.mrf.mxu0
        %v3693 = vadd.f32 %v3628, %v3692
        %3694 = vmatmul.f32.gmra.mxu0 %v3416
        %v3695 = vpop.f32.mrf.mxu0
        %v3696 = vadd.f32 %v3631, %v3695
        %3697 = vmatmul.f32.gmra.mxu0 %v3417
        %v3698 = vpop.f32.mrf.mxu0
        %v3699 = vadd.f32 %v3634, %v3698
        %3700 = vmatmul.f32.gmra.mxu0 %v3418
        %v3701 = vpop.f32.mrf.mxu0
        %v3702 = vadd.f32 %v3637, %v3701
        %3703 = vmatmul.f32.gmra.mxu0 %v3419
        %v3704 = vpop.f32.mrf.mxu0
        %v3705 = vadd.f32 %v3640, %v3704
        %3706 = vmatmul.f32.gmra.mxu0 %v3420
        %v3707 = vpop.f32.mrf.mxu0
        %v3708 = vadd.f32 %v3643, %v3707
        %3709 = vmatmul.f32.gmra.mxu0 %v3421
        %v3710 = vpop.f32.mrf.mxu0
        %v3711 = vadd.f32 %v3646, %v3710
        %3712 = vmatmul.f32.gmra.mxu0 %v3422
        %v3713 = vpop.f32.mrf.mxu0
        %v3714 = vadd.f32 %v3649, %v3713
        %3715 = vmatmul.f32.gmra.mxu0 %v3423
        %v3716 = vpop.f32.mrf.mxu0
        %v3717 = vadd.f32 %v3652, %v3716
        %3718 = vmatmul.f32.gmra.mxu0 %v3424
        %v3719 = vpop.f32.mrf.mxu0
        %v3720 = vadd.f32 %v3655, %v3719
        %3721 = vmatmul.f32.gmra.mxu0 %v3425
        %v3722 = vpop.f32.mrf.mxu0
        %v3723 = vadd.f32 %v3658, %v3722
        %3724 = vmatmul.f32.gmra.mxu0 %v3426
        %v3725 = vpop.f32.mrf.mxu0
        %v3726 = vadd.f32 %v3661, %v3725
        %3727 = vmatmul.f32.gmra.mxu0 %v3427
        %v3728 = vpop.f32.mrf.mxu0
        %v3729 = vadd.f32 %v3664, %v3728
        %3730 = vmatmul.f32.gmra.mxu0 %v3428
        %v3731 = vpop.f32.mrf.mxu0
        %v3732 = vadd.f32 %v3667, %v3731
        %3733 = vmatmul.f32.gmra.mxu0 %v3429
        %v3734 = vpop.f32.mrf.mxu0
        %v3735 = vadd.f32 %v3670, %v3734
        %3736 = vdwg.mxu0
        %s3737 = scalar_lea.vmem %s4, 512
        %v3738 = vld [vmem:[%s3737] sm:$0xff]
        %v3739 = vld [vmem:[%s3737 + $0x8] sm:$0xff]
        %v3740 = vld [vmem:[%s3737 + $0x10] sm:$0xff]
        %v3741 = vld [vmem:[%s3737 + $0x18] sm:$0xff]
        %v3742 = vld [vmem:[%s3737 + $0x20] sm:$0xff]
        %v3743 = vld [vmem:[%s3737 + $0x28] sm:$0xff]
        %v3744 = vld [vmem:[%s3737 + $0x30] sm:$0xff]
        %v3745 = vld [vmem:[%s3737 + $0x38] sm:$0xff]
        %v3746 = vld [vmem:[%s3737 + $0x40] sm:$0xff]
        %v3747 = vld [vmem:[%s3737 + $0x48] sm:$0xff]
        %v3748 = vld [vmem:[%s3737 + $0x50] sm:$0xff]
        %v3749 = vld [vmem:[%s3737 + $0x58] sm:$0xff]
        %v3750 = vld [vmem:[%s3737 + $0x60] sm:$0xff]
        %v3751 = vld [vmem:[%s3737 + $0x68] sm:$0xff]
        %v3752 = vld [vmem:[%s3737 + $0x70] sm:$0xff]
        %v3753 = vld [vmem:[%s3737 + $0x78] sm:$0xff]
        %3754 = vrot.lane.b32.xlu0 %v3430, 126
        %v3755 = vpop.permute.xlu0 %3754
        %3756 = vrot.lane.b32.xlu0 %v3463, 126
        %v3757 = vpop.permute.xlu0 %3756
        %3758 = vrot.lane.b32.xlu0 %v3431, 126
        %v3759 = vpop.permute.xlu0 %3758
        %3760 = vrot.lane.b32.xlu0 %v3464, 126
        %v3761 = vpop.permute.xlu0 %3760
        %3762 = vrot.lane.b32.xlu0 %v3432, 126
        %v3763 = vpop.permute.xlu0 %3762
        %3764 = vrot.lane.b32.xlu0 %v3465, 126
        %v3765 = vpop.permute.xlu0 %3764
        %3766 = vrot.lane.b32.xlu0 %v3433, 126
        %v3767 = vpop.permute.xlu0 %3766
        %3768 = vrot.lane.b32.xlu0 %v3466, 126
        %v3769 = vpop.permute.xlu0 %3768
        %3770 = vrot.lane.b32.xlu0 %v3434, 126
        %v3771 = vpop.permute.xlu0 %3770
        %3772 = vrot.lane.b32.xlu0 %v3467, 126
        %v3773 = vpop.permute.xlu0 %3772
        %3774 = vrot.lane.b32.xlu0 %v3435, 126
        %v3775 = vpop.permute.xlu0 %3774
        %3776 = vrot.lane.b32.xlu0 %v3468, 126
        %v3777 = vpop.permute.xlu0 %3776
        %3778 = vrot.lane.b32.xlu0 %v3436, 126
        %v3779 = vpop.permute.xlu0 %3778
        %3780 = vrot.lane.b32.xlu0 %v3469, 126
        %v3781 = vpop.permute.xlu0 %3780
        %3782 = vrot.lane.b32.xlu0 %v3437, 126
        %v3783 = vpop.permute.xlu0 %3782
        %3784 = vrot.lane.b32.xlu0 %v3470, 126
        %v3785 = vpop.permute.xlu0 %3784
        %3786 = vrot.lane.b32.xlu0 %v3438, 126
        %v3787 = vpop.permute.xlu0 %3786
        %3788 = vrot.lane.b32.xlu0 %v3471, 126
        %v3789 = vpop.permute.xlu0 %3788
        %3790 = vrot.lane.b32.xlu0 %v3439, 126
        %v3791 = vpop.permute.xlu0 %3790
        %3792 = vrot.lane.b32.xlu0 %v3472, 126
        %v3793 = vpop.permute.xlu0 %3792
        %3794 = vrot.lane.b32.xlu0 %v3440, 126
        %v3795 = vpop.permute.xlu0 %3794
        %3796 = vrot.lane.b32.xlu0 %v3473, 126
        %v3797 = vpop.permute.xlu0 %3796
        %3798 = vrot.lane.b32.xlu0 %v3441, 126
        %v3799 = vpop.permute.xlu0 %3798
        %3800 = vrot.lane.b32.xlu0 %v3474, 126
        %v3801 = vpop.permute.xlu0 %3800
        %3802 = vrot.lane.b32.xlu0 %v3442, 126
        %v3803 = vpop.permute.xlu0 %3802
        %3804 = vrot.lane.b32.xlu0 %v3475, 126
        %v3805 = vpop.permute.xlu0 %3804
        %3806 = vrot.lane.b32.xlu0 %v3443, 126
        %v3807 = vpop.permute.xlu0 %3806
        %3808 = vrot.lane.b32.xlu0 %v3476, 126
        %v3809 = vpop.permute.xlu0 %3808
        %3810 = vrot.lane.b32.xlu0 %v3444, 126
        %v3811 = vpop.permute.xlu0 %3810
        %3812 = vrot.lane.b32.xlu0 %v3477, 126
        %v3813 = vpop.permute.xlu0 %3812
        %3814 = vrot.lane.b32.xlu0 %v3445, 126
        %v3815 = vpop.permute.xlu0 %3814
        %3816 = vrot.lane.b32.xlu0 %v3478, 126
        %v3817 = vpop.permute.xlu0 %3816
        %v3818 = vsel %vm809, %v3755, %v3757
        %v3819 = vsel %vm809, %v3759, %v3761
        %v3820 = vsel %vm809, %v3763, %v3765
        %v3821 = vsel %vm809, %v3767, %v3769
        %v3822 = vsel %vm809, %v3771, %v3773
        %v3823 = vsel %vm809, %v3775, %v3777
        %v3824 = vsel %vm809, %v3779, %v3781
        %v3825 = vsel %vm809, %v3783, %v3785
        %v3826 = vsel %vm809, %v3787, %v3789
        %v3827 = vsel %vm809, %v3791, %v3793
        %v3828 = vsel %vm809, %v3795, %v3797
        %v3829 = vsel %vm809, %v3799, %v3801
        %v3830 = vsel %vm809, %v3803, %v3805
        %v3831 = vsel %vm809, %v3807, %v3809
        %v3832 = vsel %vm809, %v3811, %v3813
        %v3833 = vsel %vm809, %v3815, %v3817
        %3850 = vmatpush.msra.mxu0 %v3833
        %3851 = vmatpush.msra.mxu0 %v3832
        %3852 = vmatpush.msra.mxu0 %v3831
        %3853 = vmatpush.msra.mxu0 %v3830
        %3854 = vmatpush.msra.mxu0 %v3829
        %3855 = vmatpush.msra.mxu0 %v3828
        %3856 = vmatpush.msra.mxu0 %v3827
        %3857 = vmatpush.msra.mxu0 %v3826
        %3858 = vmatpush.msra.mxu0 %v3825
        %3859 = vmatpush.msra.mxu0 %v3824
        %3860 = vmatpush.msra.mxu0 %v3823
        %3861 = vmatpush.msra.mxu0 %v3822
        %3862 = vmatpush.msra.mxu0 %v3821
        %3863 = vmatpush.msra.mxu0 %v3820
        %3864 = vmatpush.msra.mxu0 %v3819
        %3865 = vmatpush.msra.mxu0 %v3818
        %3866 = vmatmul.f32.gmra.mxu0 %v3738
        %v3867 = vpop.f32.mrf.mxu0
        %v3868 = vadd.f32 0.0, %v3867
        %3869 = vmatmul.f32.gmra.mxu0 %v3739
        %v3870 = vpop.f32.mrf.mxu0
        %v3871 = vadd.f32 0.0, %v3870
        %3872 = vmatmul.f32.gmra.mxu0 %v3740
        %v3873 = vpop.f32.mrf.mxu0
        %v3874 = vadd.f32 0.0, %v3873
        %3875 = vmatmul.f32.gmra.mxu0 %v3741
        %v3876 = vpop.f32.mrf.mxu0
        %v3877 = vadd.f32 0.0, %v3876
        %3878 = vmatmul.f32.gmra.mxu0 %v3742
        %v3879 = vpop.f32.mrf.mxu0
        %v3880 = vadd.f32 0.0, %v3879
        %3881 = vmatmul.f32.gmra.mxu0 %v3743
        %v3882 = vpop.f32.mrf.mxu0
        %v3883 = vadd.f32 0.0, %v3882
        %3884 = vmatmul.f32.gmra.mxu0 %v3744
        %v3885 = vpop.f32.mrf.mxu0
        %v3886 = vadd.f32 0.0, %v3885
        %3887 = vmatmul.f32.gmra.mxu0 %v3745
        %v3888 = vpop.f32.mrf.mxu0
        %v3889 = vadd.f32 0.0, %v3888
        %3890 = vmatmul.f32.gmra.mxu0 %v3746
        %v3891 = vpop.f32.mrf.mxu0
        %v3892 = vadd.f32 0.0, %v3891
        %3893 = vmatmul.f32.gmra.mxu0 %v3747
        %v3894 = vpop.f32.mrf.mxu0
        %v3895 = vadd.f32 0.0, %v3894
        %3896 = vmatmul.f32.gmra.mxu0 %v3748
        %v3897 = vpop.f32.mrf.mxu0
        %v3898 = vadd.f32 0.0, %v3897
        %3899 = vmatmul.f32.gmra.mxu0 %v3749
        %v3900 = vpop.f32.mrf.mxu0
        %v3901 = vadd.f32 0.0, %v3900
        %3902 = vmatmul.f32.gmra.mxu0 %v3750
        %v3903 = vpop.f32.mrf.mxu0
        %v3904 = vadd.f32 0.0, %v3903
        %3905 = vmatmul.f32.gmra.mxu0 %v3751
        %v3906 = vpop.f32.mrf.mxu0
        %v3907 = vadd.f32 0.0, %v3906
        %3908 = vmatmul.f32.gmra.mxu0 %v3752
        %v3909 = vpop.f32.mrf.mxu0
        %v3910 = vadd.f32 0.0, %v3909
        %3911 = vmatmul.f32.gmra.mxu0 %v3753
        %v3912 = vpop.f32.mrf.mxu0
        %v3913 = vadd.f32 0.0, %v3912
        %3914 = vdwg.mxu0
        %v3915 = vadd.f32 %v3690, %v3868
        %v3916 = vadd.f32 %v3693, %v3871
        %v3917 = vadd.f32 %v3696, %v3874
        %v3918 = vadd.f32 %v3699, %v3877
        %v3919 = vadd.f32 %v3702, %v3880
        %v3920 = vadd.f32 %v3705, %v3883
        %v3921 = vadd.f32 %v3708, %v3886
        %v3922 = vadd.f32 %v3711, %v3889
        %v3923 = vadd.f32 %v3714, %v3892
        %v3924 = vadd.f32 %v3717, %v3895
        %v3925 = vadd.f32 %v3720, %v3898
        %v3926 = vadd.f32 %v3723, %v3901
        %v3927 = vadd.f32 %v3726, %v3904
        %v3928 = vadd.f32 %v3729, %v3907
        %v3929 = vadd.f32 %v3732, %v3910
        %v3930 = vadd.f32 %v3735, %v3913
        %s3931 = scalar_lea.vmem %s4, 768
        %v3932 = vld [vmem:[%s3931] sm:$0xff]
        %v3933 = vld [vmem:[%s3931 + $0x8] sm:$0xff]
        %v3934 = vld [vmem:[%s3931 + $0x10] sm:$0xff]
        %v3935 = vld [vmem:[%s3931 + $0x18] sm:$0xff]
        %v3936 = vld [vmem:[%s3931 + $0x20] sm:$0xff]
        %v3937 = vld [vmem:[%s3931 + $0x28] sm:$0xff]
        %v3938 = vld [vmem:[%s3931 + $0x30] sm:$0xff]
        %v3939 = vld [vmem:[%s3931 + $0x38] sm:$0xff]
        %v3940 = vld [vmem:[%s3931 + $0x40] sm:$0xff]
        %v3941 = vld [vmem:[%s3931 + $0x48] sm:$0xff]
        %v3942 = vld [vmem:[%s3931 + $0x50] sm:$0xff]
        %v3943 = vld [vmem:[%s3931 + $0x58] sm:$0xff]
        %v3944 = vld [vmem:[%s3931 + $0x60] sm:$0xff]
        %v3945 = vld [vmem:[%s3931 + $0x68] sm:$0xff]
        %v3946 = vld [vmem:[%s3931 + $0x70] sm:$0xff]
        %v3947 = vld [vmem:[%s3931 + $0x78] sm:$0xff]
        %3948 = vrot.lane.b32.xlu0 %v3430, 125
        %v3949 = vpop.permute.xlu0 %3948
        %3950 = vrot.lane.b32.xlu0 %v3463, 125
        %v3951 = vpop.permute.xlu0 %3950
        %3952 = vrot.lane.b32.xlu0 %v3431, 125
        %v3953 = vpop.permute.xlu0 %3952
        %3954 = vrot.lane.b32.xlu0 %v3464, 125
        %v3955 = vpop.permute.xlu0 %3954
        %3956 = vrot.lane.b32.xlu0 %v3432, 125
        %v3957 = vpop.permute.xlu0 %3956
        %3958 = vrot.lane.b32.xlu0 %v3465, 125
        %v3959 = vpop.permute.xlu0 %3958
        %3960 = vrot.lane.b32.xlu0 %v3433, 125
        %v3961 = vpop.permute.xlu0 %3960
        %3962 = vrot.lane.b32.xlu0 %v3466, 125
        %v3963 = vpop.permute.xlu0 %3962
        %3964 = vrot.lane.b32.xlu0 %v3434, 125
        %v3965 = vpop.permute.xlu0 %3964
        %3966 = vrot.lane.b32.xlu0 %v3467, 125
        %v3967 = vpop.permute.xlu0 %3966
        %3968 = vrot.lane.b32.xlu0 %v3435, 125
        %v3969 = vpop.permute.xlu0 %3968
        %3970 = vrot.lane.b32.xlu0 %v3468, 125
        %v3971 = vpop.permute.xlu0 %3970
        %3972 = vrot.lane.b32.xlu0 %v3436, 125
        %v3973 = vpop.permute.xlu0 %3972
        %3974 = vrot.lane.b32.xlu0 %v3469, 125
        %v3975 = vpop.permute.xlu0 %3974
        %3976 = vrot.lane.b32.xlu0 %v3437, 125
        %v3977 = vpop.permute.xlu0 %3976
        %3978 = vrot.lane.b32.xlu0 %v3470, 125
        %v3979 = vpop.permute.xlu0 %3978
        %3980 = vrot.lane.b32.xlu0 %v3438, 125
        %v3981 = vpop.permute.xlu0 %3980
        %3982 = vrot.lane.b32.xlu0 %v3471, 125
        %v3983 = vpop.permute.xlu0 %3982
        %3984 = vrot.lane.b32.xlu0 %v3439, 125
        %v3985 = vpop.permute.xlu0 %3984
        %3986 = vrot.lane.b32.xlu0 %v3472, 125
        %v3987 = vpop.permute.xlu0 %3986
        %3988 = vrot.lane.b32.xlu0 %v3440, 125
        %v3989 = vpop.permute.xlu0 %3988
        %3990 = vrot.lane.b32.xlu0 %v3473, 125
        %v3991 = vpop.permute.xlu0 %3990
        %3992 = vrot.lane.b32.xlu0 %v3441, 125
        %v3993 = vpop.permute.xlu0 %3992
        %3994 = vrot.lane.b32.xlu0 %v3474, 125
        %v3995 = vpop.permute.xlu0 %3994
        %3996 = vrot.lane.b32.xlu0 %v3442, 125
        %v3997 = vpop.permute.xlu0 %3996
        %3998 = vrot.lane.b32.xlu0 %v3475, 125
        %v3999 = vpop.permute.xlu0 %3998
        %4000 = vrot.lane.b32.xlu0 %v3443, 125
        %v4001 = vpop.permute.xlu0 %4000
        %4002 = vrot.lane.b32.xlu0 %v3476, 125
        %v4003 = vpop.permute.xlu0 %4002
        %4004 = vrot.lane.b32.xlu0 %v3444, 125
        %v4005 = vpop.permute.xlu0 %4004
        %4006 = vrot.lane.b32.xlu0 %v3477, 125
        %v4007 = vpop.permute.xlu0 %4006
        %4008 = vrot.lane.b32.xlu0 %v3445, 125
        %v4009 = vpop.permute.xlu0 %4008
        %4010 = vrot.lane.b32.xlu0 %v3478, 125
        %v4011 = vpop.permute.xlu0 %4010
        %v4012 = vsel %vm966, %v3949, %v3951
        %v4013 = vsel %vm966, %v3953, %v3955
        %v4014 = vsel %vm966, %v3957, %v3959
        %v4015 = vsel %vm966, %v3961, %v3963
        %v4016 = vsel %vm966, %v3965, %v3967
        %v4017 = vsel %vm966, %v3969, %v3971
        %v4018 = vsel %vm966, %v3973, %v3975
        %v4019 = vsel %vm966, %v3977, %v3979
        %v4020 = vsel %vm966, %v3981, %v3983
        %v4021 = vsel %vm966, %v3985, %v3987
        %v4022 = vsel %vm966, %v3989, %v3991
        %v4023 = vsel %vm966, %v3993, %v3995
        %v4024 = vsel %vm966, %v3997, %v3999
        %v4025 = vsel %vm966, %v4001, %v4003
        %v4026 = vsel %vm966, %v4005, %v4007
        %v4027 = vsel %vm966, %v4009, %v4011
        %4044 = vmatpush.msra.mxu0 %v4027
        %4045 = vmatpush.msra.mxu0 %v4026
        %4046 = vmatpush.msra.mxu0 %v4025
        %4047 = vmatpush.msra.mxu0 %v4024
        %4048 = vmatpush.msra.mxu0 %v4023
        %4049 = vmatpush.msra.mxu0 %v4022
        %4050 = vmatpush.msra.mxu0 %v4021
        %4051 = vmatpush.msra.mxu0 %v4020
        %4052 = vmatpush.msra.mxu0 %v4019
        %4053 = vmatpush.msra.mxu0 %v4018
        %4054 = vmatpush.msra.mxu0 %v4017
        %4055 = vmatpush.msra.mxu0 %v4016
        %4056 = vmatpush.msra.mxu0 %v4015
        %4057 = vmatpush.msra.mxu0 %v4014
        %4058 = vmatpush.msra.mxu0 %v4013
        %4059 = vmatpush.msra.mxu0 %v4012
        %4060 = vmatmul.f32.gmra.mxu0 %v3932
        %v4061 = vpop.f32.mrf.mxu0
        %v4062 = vadd.f32 0.0, %v4061
        %4063 = vmatmul.f32.gmra.mxu0 %v3933
        %v4064 = vpop.f32.mrf.mxu0
        %v4065 = vadd.f32 0.0, %v4064
        %4066 = vmatmul.f32.gmra.mxu0 %v3934
        %v4067 = vpop.f32.mrf.mxu0
        %v4068 = vadd.f32 0.0, %v4067
        %4069 = vmatmul.f32.gmra.mxu0 %v3935
        %v4070 = vpop.f32.mrf.mxu0
        %v4071 = vadd.f32 0.0, %v4070
        %4072 = vmatmul.f32.gmra.mxu0 %v3936
        %v4073 = vpop.f32.mrf.mxu0
        %v4074 = vadd.f32 0.0, %v4073
        %4075 = vmatmul.f32.gmra.mxu0 %v3937
        %v4076 = vpop.f32.mrf.mxu0
        %v4077 = vadd.f32 0.0, %v4076
        %4078 = vmatmul.f32.gmra.mxu0 %v3938
        %v4079 = vpop.f32.mrf.mxu0
        %v4080 = vadd.f32 0.0, %v4079
        %4081 = vmatmul.f32.gmra.mxu0 %v3939
        %v4082 = vpop.f32.mrf.mxu0
        %v4083 = vadd.f32 0.0, %v4082
        %4084 = vmatmul.f32.gmra.mxu0 %v3940
        %v4085 = vpop.f32.mrf.mxu0
        %v4086 = vadd.f32 0.0, %v4085
        %4087 = vmatmul.f32.gmra.mxu0 %v3941
        %v4088 = vpop.f32.mrf.mxu0
        %v4089 = vadd.f32 0.0, %v4088
        %4090 = vmatmul.f32.gmra.mxu0 %v3942
        %v4091 = vpop.f32.mrf.mxu0
        %v4092 = vadd.f32 0.0, %v4091
        %4093 = vmatmul.f32.gmra.mxu0 %v3943
        %v4094 = vpop.f32.mrf.mxu0
        %v4095 = vadd.f32 0.0, %v4094
        %4096 = vmatmul.f32.gmra.mxu0 %v3944
        %v4097 = vpop.f32.mrf.mxu0
        %v4098 = vadd.f32 0.0, %v4097
        %4099 = vmatmul.f32.gmra.mxu0 %v3945
        %v4100 = vpop.f32.mrf.mxu0
        %v4101 = vadd.f32 0.0, %v4100
        %4102 = vmatmul.f32.gmra.mxu0 %v3946
        %v4103 = vpop.f32.mrf.mxu0
        %v4104 = vadd.f32 0.0, %v4103
        %4105 = vmatmul.f32.gmra.mxu0 %v3947
        %v4106 = vpop.f32.mrf.mxu0
        %v4107 = vadd.f32 0.0, %v4106
        %4108 = vdwg.mxu0
        %v4109 = vadd.f32 %v3915, %v4062
        %v4110 = vadd.f32 %v3916, %v4065
        %v4111 = vadd.f32 %v3917, %v4068
        %v4112 = vadd.f32 %v3918, %v4071
        %v4113 = vadd.f32 %v3919, %v4074
        %v4114 = vadd.f32 %v3920, %v4077
        %v4115 = vadd.f32 %v3921, %v4080
        %v4116 = vadd.f32 %v3922, %v4083
        %v4117 = vadd.f32 %v3923, %v4086
        %v4118 = vadd.f32 %v3924, %v4089
        %v4119 = vadd.f32 %v3925, %v4092
        %v4120 = vadd.f32 %v3926, %v4095
        %v4121 = vadd.f32 %v3927, %v4098
        %v4122 = vadd.f32 %v3928, %v4101
        %v4123 = vadd.f32 %v3929, %v4104
        %v4124 = vadd.f32 %v3930, %v4107
        %s4125 = scalar_lea.vmem %s4, 1024
        %v4126 = vld [vmem:[%s4125] sm:$0xff]
        %v4127 = vld [vmem:[%s4125 + $0x8] sm:$0xff]
        %v4128 = vld [vmem:[%s4125 + $0x10] sm:$0xff]
        %v4129 = vld [vmem:[%s4125 + $0x18] sm:$0xff]
        %v4130 = vld [vmem:[%s4125 + $0x20] sm:$0xff]
        %v4131 = vld [vmem:[%s4125 + $0x28] sm:$0xff]
        %v4132 = vld [vmem:[%s4125 + $0x30] sm:$0xff]
        %v4133 = vld [vmem:[%s4125 + $0x38] sm:$0xff]
        %v4134 = vld [vmem:[%s4125 + $0x40] sm:$0xff]
        %v4135 = vld [vmem:[%s4125 + $0x48] sm:$0xff]
        %v4136 = vld [vmem:[%s4125 + $0x50] sm:$0xff]
        %v4137 = vld [vmem:[%s4125 + $0x58] sm:$0xff]
        %v4138 = vld [vmem:[%s4125 + $0x60] sm:$0xff]
        %v4139 = vld [vmem:[%s4125 + $0x68] sm:$0xff]
        %v4140 = vld [vmem:[%s4125 + $0x70] sm:$0xff]
        %v4141 = vld [vmem:[%s4125 + $0x78] sm:$0xff]
        %4142 = vrot.lane.b32.xlu0 %v3430, 124
        %v4143 = vpop.permute.xlu0 %4142
        %4144 = vrot.lane.b32.xlu0 %v3463, 124
        %v4145 = vpop.permute.xlu0 %4144
        %4146 = vrot.lane.b32.xlu0 %v3431, 124
        %v4147 = vpop.permute.xlu0 %4146
        %4148 = vrot.lane.b32.xlu0 %v3464, 124
        %v4149 = vpop.permute.xlu0 %4148
        %4150 = vrot.lane.b32.xlu0 %v3432, 124
        %v4151 = vpop.permute.xlu0 %4150
        %4152 = vrot.lane.b32.xlu0 %v3465, 124
        %v4153 = vpop.permute.xlu0 %4152
        %4154 = vrot.lane.b32.xlu0 %v3433, 124
        %v4155 = vpop.permute.xlu0 %4154
        %4156 = vrot.lane.b32.xlu0 %v3466, 124
        %v4157 = vpop.permute.xlu0 %4156
        %4158 = vrot.lane.b32.xlu0 %v3434, 124
        %v4159 = vpop.permute.xlu0 %4158
        %4160 = vrot.lane.b32.xlu0 %v3467, 124
        %v4161 = vpop.permute.xlu0 %4160
        %4162 = vrot.lane.b32.xlu0 %v3435, 124
        %v4163 = vpop.permute.xlu0 %4162
        %4164 = vrot.lane.b32.xlu0 %v3468, 124
        %v4165 = vpop.permute.xlu0 %4164
        %4166 = vrot.lane.b32.xlu0 %v3436, 124
        %v4167 = vpop.permute.xlu0 %4166
        %4168 = vrot.lane.b32.xlu0 %v3469, 124
        %v4169 = vpop.permute.xlu0 %4168
        %4170 = vrot.lane.b32.xlu0 %v3437, 124
        %v4171 = vpop.permute.xlu0 %4170
        %4172 = vrot.lane.b32.xlu0 %v3470, 124
        %v4173 = vpop.permute.xlu0 %4172
        %4174 = vrot.lane.b32.xlu0 %v3438, 124
        %v4175 = vpop.permute.xlu0 %4174
        %4176 = vrot.lane.b32.xlu0 %v3471, 124
        %v4177 = vpop.permute.xlu0 %4176
        %4178 = vrot.lane.b32.xlu0 %v3439, 124
        %v4179 = vpop.permute.xlu0 %4178
        %4180 = vrot.lane.b32.xlu0 %v3472, 124
        %v4181 = vpop.permute.xlu0 %4180
        %4182 = vrot.lane.b32.xlu0 %v3440, 124
        %v4183 = vpop.permute.xlu0 %4182
        %4184 = vrot.lane.b32.xlu0 %v3473, 124
        %v4185 = vpop.permute.xlu0 %4184
        %4186 = vrot.lane.b32.xlu0 %v3441, 124
        %v4187 = vpop.permute.xlu0 %4186
        %4188 = vrot.lane.b32.xlu0 %v3474, 124
        %v4189 = vpop.permute.xlu0 %4188
        %4190 = vrot.lane.b32.xlu0 %v3442, 124
        %v4191 = vpop.permute.xlu0 %4190
        %4192 = vrot.lane.b32.xlu0 %v3475, 124
        %v4193 = vpop.permute.xlu0 %4192
        %4194 = vrot.lane.b32.xlu0 %v3443, 124
        %v4195 = vpop.permute.xlu0 %4194
        %4196 = vrot.lane.b32.xlu0 %v3476, 124
        %v4197 = vpop.permute.xlu0 %4196
        %4198 = vrot.lane.b32.xlu0 %v3444, 124
        %v4199 = vpop.permute.xlu0 %4198
        %4200 = vrot.lane.b32.xlu0 %v3477, 124
        %v4201 = vpop.permute.xlu0 %4200
        %4202 = vrot.lane.b32.xlu0 %v3445, 124
        %v4203 = vpop.permute.xlu0 %4202
        %4204 = vrot.lane.b32.xlu0 %v3478, 124
        %v4205 = vpop.permute.xlu0 %4204
        %v4206 = vsel %vm1123, %v4143, %v4145
        %v4207 = vsel %vm1123, %v4147, %v4149
        %v4208 = vsel %vm1123, %v4151, %v4153
        %v4209 = vsel %vm1123, %v4155, %v4157
        %v4210 = vsel %vm1123, %v4159, %v4161
        %v4211 = vsel %vm1123, %v4163, %v4165
        %v4212 = vsel %vm1123, %v4167, %v4169
        %v4213 = vsel %vm1123, %v4171, %v4173
        %v4214 = vsel %vm1123, %v4175, %v4177
        %v4215 = vsel %vm1123, %v4179, %v4181
        %v4216 = vsel %vm1123, %v4183, %v4185
        %v4217 = vsel %vm1123, %v4187, %v4189
        %v4218 = vsel %vm1123, %v4191, %v4193
        %v4219 = vsel %vm1123, %v4195, %v4197
        %v4220 = vsel %vm1123, %v4199, %v4201
        %v4221 = vsel %vm1123, %v4203, %v4205
        %4238 = vmatpush.msra.mxu0 %v4221
        %4239 = vmatpush.msra.mxu0 %v4220
        %4240 = vmatpush.msra.mxu0 %v4219
        %4241 = vmatpush.msra.mxu0 %v4218
        %4242 = vmatpush.msra.mxu0 %v4217
        %4243 = vmatpush.msra.mxu0 %v4216
        %4244 = vmatpush.msra.mxu0 %v4215
        %4245 = vmatpush.msra.mxu0 %v4214
        %4246 = vmatpush.msra.mxu0 %v4213
        %4247 = vmatpush.msra.mxu0 %v4212
        %4248 = vmatpush.msra.mxu0 %v4211
        %4249 = vmatpush.msra.mxu0 %v4210
        %4250 = vmatpush.msra.mxu0 %v4209
        %4251 = vmatpush.msra.mxu0 %v4208
        %4252 = vmatpush.msra.mxu0 %v4207
        %4253 = vmatpush.msra.mxu0 %v4206
        %4254 = vmatmul.f32.gmra.mxu0 %v4126
        %v4255 = vpop.f32.mrf.mxu0
        %v4256 = vadd.f32 0.0, %v4255
        %4257 = vmatmul.f32.gmra.mxu0 %v4127
        %v4258 = vpop.f32.mrf.mxu0
        %v4259 = vadd.f32 0.0, %v4258
        %4260 = vmatmul.f32.gmra.mxu0 %v4128
        %v4261 = vpop.f32.mrf.mxu0
        %v4262 = vadd.f32 0.0, %v4261
        %4263 = vmatmul.f32.gmra.mxu0 %v4129
        %v4264 = vpop.f32.mrf.mxu0
        %v4265 = vadd.f32 0.0, %v4264
        %4266 = vmatmul.f32.gmra.mxu0 %v4130
        %v4267 = vpop.f32.mrf.mxu0
        %v4268 = vadd.f32 0.0, %v4267
        %4269 = vmatmul.f32.gmra.mxu0 %v4131
        %v4270 = vpop.f32.mrf.mxu0
        %v4271 = vadd.f32 0.0, %v4270
        %4272 = vmatmul.f32.gmra.mxu0 %v4132
        %v4273 = vpop.f32.mrf.mxu0
        %v4274 = vadd.f32 0.0, %v4273
        %4275 = vmatmul.f32.gmra.mxu0 %v4133
        %v4276 = vpop.f32.mrf.mxu0
        %v4277 = vadd.f32 0.0, %v4276
        %4278 = vmatmul.f32.gmra.mxu0 %v4134
        %v4279 = vpop.f32.mrf.mxu0
        %v4280 = vadd.f32 0.0, %v4279
        %4281 = vmatmul.f32.gmra.mxu0 %v4135
        %v4282 = vpop.f32.mrf.mxu0
        %v4283 = vadd.f32 0.0, %v4282
        %4284 = vmatmul.f32.gmra.mxu0 %v4136
        %v4285 = vpop.f32.mrf.mxu0
        %v4286 = vadd.f32 0.0, %v4285
        %4287 = vmatmul.f32.gmra.mxu0 %v4137
        %v4288 = vpop.f32.mrf.mxu0
        %v4289 = vadd.f32 0.0, %v4288
        %4290 = vmatmul.f32.gmra.mxu0 %v4138
        %v4291 = vpop.f32.mrf.mxu0
        %v4292 = vadd.f32 0.0, %v4291
        %4293 = vmatmul.f32.gmra.mxu0 %v4139
        %v4294 = vpop.f32.mrf.mxu0
        %v4295 = vadd.f32 0.0, %v4294
        %4296 = vmatmul.f32.gmra.mxu0 %v4140
        %v4297 = vpop.f32.mrf.mxu0
        %v4298 = vadd.f32 0.0, %v4297
        %4299 = vmatmul.f32.gmra.mxu0 %v4141
        %v4300 = vpop.f32.mrf.mxu0
        %v4301 = vadd.f32 0.0, %v4300
        %4302 = vdwg.mxu0
        %v4303 = vadd.f32 %v4109, %v4256
        %v4304 = vadd.f32 %v4110, %v4259
        %v4305 = vadd.f32 %v4111, %v4262
        %v4306 = vadd.f32 %v4112, %v4265
        %v4307 = vadd.f32 %v4113, %v4268
        %v4308 = vadd.f32 %v4114, %v4271
        %v4309 = vadd.f32 %v4115, %v4274
        %v4310 = vadd.f32 %v4116, %v4277
        %v4311 = vadd.f32 %v4117, %v4280
        %v4312 = vadd.f32 %v4118, %v4283
        %v4313 = vadd.f32 %v4119, %v4286
        %v4314 = vadd.f32 %v4120, %v4289
        %v4315 = vadd.f32 %v4121, %v4292
        %v4316 = vadd.f32 %v4122, %v4295
        %v4317 = vadd.f32 %v4123, %v4298
        %v4318 = vadd.f32 %v4124, %v4301
        %v4319 = vld [vmem:[%s5] sm:$0xff]
        %v4320 = vld [vmem:[%s5 + $0x8] sm:$0xff]
        %v4321 = vld [vmem:[%s5 + $0x10] sm:$0xff]
        %v4322 = vld [vmem:[%s5 + $0x18] sm:$0xff]
        %v4323 = vld [vmem:[%s5 + $0x20] sm:$0xff]
        %v4324 = vld [vmem:[%s5 + $0x28] sm:$0xff]
        %v4325 = vld [vmem:[%s5 + $0x30] sm:$0xff]
        %v4326 = vld [vmem:[%s5 + $0x38] sm:$0xff]
        %v4327 = vld [vmem:[%s5 + $0x40] sm:$0xff]
        %v4328 = vld [vmem:[%s5 + $0x48] sm:$0xff]
        %v4329 = vld [vmem:[%s5 + $0x50] sm:$0xff]
        %v4330 = vld [vmem:[%s5 + $0x58] sm:$0xff]
        %v4331 = vld [vmem:[%s5 + $0x60] sm:$0xff]
        %v4332 = vld [vmem:[%s5 + $0x68] sm:$0xff]
        %v4333 = vld [vmem:[%s5 + $0x70] sm:$0xff]
        %v4334 = vld [vmem:[%s5 + $0x78] sm:$0xff]
        %4336 = vset.pattern.permute.xlu0 0
        %4337 = vperm.xlu0 %4336, %v4319
        %v4338 = vpop.permute.xlu0 %4337
        %4341 = vset.pattern.permute.xlu0 0
        %4342 = vperm.xlu0 %4341, %v4320
        %v4343 = vpop.permute.xlu0 %4342
        %4346 = vset.pattern.permute.xlu0 0
        %4347 = vperm.xlu0 %4346, %v4321
        %v4348 = vpop.permute.xlu0 %4347
        %4351 = vset.pattern.permute.xlu0 0
        %4352 = vperm.xlu0 %4351, %v4322
        %v4353 = vpop.permute.xlu0 %4352
        %4356 = vset.pattern.permute.xlu0 0
        %4357 = vperm.xlu0 %4356, %v4323
        %v4358 = vpop.permute.xlu0 %4357
        %4361 = vset.pattern.permute.xlu0 0
        %4362 = vperm.xlu0 %4361, %v4324
        %v4363 = vpop.permute.xlu0 %4362
        %4366 = vset.pattern.permute.xlu0 0
        %4367 = vperm.xlu0 %4366, %v4325
        %v4368 = vpop.permute.xlu0 %4367
        %4371 = vset.pattern.permute.xlu0 0
        %4372 = vperm.xlu0 %4371, %v4326
        %v4373 = vpop.permute.xlu0 %4372
        %4376 = vset.pattern.permute.xlu0 0
        %4377 = vperm.xlu0 %4376, %v4327
        %v4378 = vpop.permute.xlu0 %4377
        %4381 = vset.pattern.permute.xlu0 0
        %4382 = vperm.xlu0 %4381, %v4328
        %v4383 = vpop.permute.xlu0 %4382
        %4386 = vset.pattern.permute.xlu0 0
        %4387 = vperm.xlu0 %4386, %v4329
        %v4388 = vpop.permute.xlu0 %4387
        %4391 = vset.pattern.permute.xlu0 0
        %4392 = vperm.xlu0 %4391, %v4330
        %v4393 = vpop.permute.xlu0 %4392
        %4396 = vset.pattern.permute.xlu0 0
        %4397 = vperm.xlu0 %4396, %v4331
        %v4398 = vpop.permute.xlu0 %4397
        %4401 = vset.pattern.permute.xlu0 0
        %4402 = vperm.xlu0 %4401, %v4332
        %v4403 = vpop.permute.xlu0 %4402
        %4406 = vset.pattern.permute.xlu0 0
        %4407 = vperm.xlu0 %4406, %v4333
        %v4408 = vpop.permute.xlu0 %4407
        %4411 = vset.pattern.permute.xlu0 0
        %4412 = vperm.xlu0 %4411, %v4334
        %v4413 = vpop.permute.xlu0 %4412
        %v4415 = vmul.f32 %v4303, %v4338
        %v4416 = vmul.f32 %v4304, %v4343
        %v4417 = vmul.f32 %v4305, %v4348
        %v4418 = vmul.f32 %v4306, %v4353
        %v4419 = vmul.f32 %v4307, %v4358
        %v4420 = vmul.f32 %v4308, %v4363
        %v4421 = vmul.f32 %v4309, %v4368
        %v4422 = vmul.f32 %v4310, %v4373
        %v4423 = vmul.f32 %v4311, %v4378
        %v4424 = vmul.f32 %v4312, %v4383
        %v4425 = vmul.f32 %v4313, %v4388
        %v4426 = vmul.f32 %v4314, %v4393
        %v4427 = vmul.f32 %v4315, %v4398
        %v4428 = vmul.f32 %v4316, %v4403
        %v4429 = vmul.f32 %v4317, %v4408
        %v4430 = vmul.f32 %v4318, %v4413
        %v4431 = vld [vmem:[%s6] sm:$0xff]
        %v4432 = vld [vmem:[%s6 + $0x8] sm:$0xff]
        %v4433 = vld [vmem:[%s6 + $0x10] sm:$0xff]
        %v4434 = vld [vmem:[%s6 + $0x18] sm:$0xff]
        %v4435 = vld [vmem:[%s6 + $0x20] sm:$0xff]
        %v4436 = vld [vmem:[%s6 + $0x28] sm:$0xff]
        %v4437 = vld [vmem:[%s6 + $0x30] sm:$0xff]
        %v4438 = vld [vmem:[%s6 + $0x38] sm:$0xff]
        %v4439 = vld [vmem:[%s6 + $0x40] sm:$0xff]
        %v4440 = vld [vmem:[%s6 + $0x48] sm:$0xff]
        %v4441 = vld [vmem:[%s6 + $0x50] sm:$0xff]
        %v4442 = vld [vmem:[%s6 + $0x58] sm:$0xff]
        %v4443 = vld [vmem:[%s6 + $0x60] sm:$0xff]
        %v4444 = vld [vmem:[%s6 + $0x68] sm:$0xff]
        %v4445 = vld [vmem:[%s6 + $0x70] sm:$0xff]
        %v4446 = vld [vmem:[%s6 + $0x78] sm:$0xff]
        %4448 = vset.pattern.permute.xlu0 0
        %4449 = vperm.xlu0 %4448, %v4431
        %v4450 = vpop.permute.xlu0 %4449
        %4453 = vset.pattern.permute.xlu0 0
        %4454 = vperm.xlu0 %4453, %v4432
        %v4455 = vpop.permute.xlu0 %4454
        %4458 = vset.pattern.permute.xlu0 0
        %4459 = vperm.xlu0 %4458, %v4433
        %v4460 = vpop.permute.xlu0 %4459
        %4463 = vset.pattern.permute.xlu0 0
        %4464 = vperm.xlu0 %4463, %v4434
        %v4465 = vpop.permute.xlu0 %4464
        %4468 = vset.pattern.permute.xlu0 0
        %4469 = vperm.xlu0 %4468, %v4435
        %v4470 = vpop.permute.xlu0 %4469
        %4473 = vset.pattern.permute.xlu0 0
        %4474 = vperm.xlu0 %4473, %v4436
        %v4475 = vpop.permute.xlu0 %4474
        %4478 = vset.pattern.permute.xlu0 0
        %4479 = vperm.xlu0 %4478, %v4437
        %v4480 = vpop.permute.xlu0 %4479
        %4483 = vset.pattern.permute.xlu0 0
        %4484 = vperm.xlu0 %4483, %v4438
        %v4485 = vpop.permute.xlu0 %4484
        %4488 = vset.pattern.permute.xlu0 0
        %4489 = vperm.xlu0 %4488, %v4439
        %v4490 = vpop.permute.xlu0 %4489
        %4493 = vset.pattern.permute.xlu0 0
        %4494 = vperm.xlu0 %4493, %v4440
        %v4495 = vpop.permute.xlu0 %4494
        %4498 = vset.pattern.permute.xlu0 0
        %4499 = vperm.xlu0 %4498, %v4441
        %v4500 = vpop.permute.xlu0 %4499
        %4503 = vset.pattern.permute.xlu0 0
        %4504 = vperm.xlu0 %4503, %v4442
        %v4505 = vpop.permute.xlu0 %4504
        %4508 = vset.pattern.permute.xlu0 0
        %4509 = vperm.xlu0 %4508, %v4443
        %v4510 = vpop.permute.xlu0 %4509
        %4513 = vset.pattern.permute.xlu0 0
        %4514 = vperm.xlu0 %4513, %v4444
        %v4515 = vpop.permute.xlu0 %4514
        %4518 = vset.pattern.permute.xlu0 0
        %4519 = vperm.xlu0 %4518, %v4445
        %v4520 = vpop.permute.xlu0 %4519
        %4523 = vset.pattern.permute.xlu0 0
        %4524 = vperm.xlu0 %4523, %v4446
        %v4525 = vpop.permute.xlu0 %4524
        %v4527 = vadd.f32 %v4415, %v4450
        %v4528 = vadd.f32 %v4416, %v4455
        %v4529 = vadd.f32 %v4417, %v4460
        %v4530 = vadd.f32 %v4418, %v4465
        %v4531 = vadd.f32 %v4419, %v4470
        %v4532 = vadd.f32 %v4420, %v4475
        %v4533 = vadd.f32 %v4421, %v4480
        %v4534 = vadd.f32 %v4422, %v4485
        %v4535 = vadd.f32 %v4423, %v4490
        %v4536 = vadd.f32 %v4424, %v4495
        %v4537 = vadd.f32 %v4425, %v4500
        %v4538 = vadd.f32 %v4426, %v4505
        %v4539 = vadd.f32 %v4427, %v4510
        %v4540 = vadd.f32 %v4428, %v4515
        %v4541 = vadd.f32 %v4429, %v4520
        %v4542 = vadd.f32 %v4430, %v4525
        %v4543 = vmax.f32 %v4527, 0.0
        %v4544 = vmax.f32 %v4528, 0.0
        %v4545 = vmax.f32 %v4529, 0.0
        %v4546 = vmax.f32 %v4530, 0.0
        %v4547 = vmax.f32 %v4531, 0.0
        %v4548 = vmax.f32 %v4532, 0.0
        %v4549 = vmax.f32 %v4533, 0.0
        %v4550 = vmax.f32 %v4534, 0.0
        %v4551 = vmax.f32 %v4535, 0.0
        %v4552 = vmax.f32 %v4536, 0.0
        %v4553 = vmax.f32 %v4537, 0.0
        %v4554 = vmax.f32 %v4538, 0.0
        %v4555 = vmax.f32 %v4539, 0.0
        %v4556 = vmax.f32 %v4540, 0.0
        %v4557 = vmax.f32 %v4541, 0.0
        %v4558 = vmax.f32 %v4542, 0.0
        %4559 = vst [vmem:[#allocation3] sm:$0xff] %v4543
        %4560 = vst [vmem:[#allocation3 + $0x10] sm:$0xff] %v4544
        %4561 = vst [vmem:[#allocation3 + $0x20] sm:$0xff] %v4545
        %4562 = vst [vmem:[#allocation3 + $0x30] sm:$0xff] %v4546
        %4563 = vst [vmem:[#allocation3 + $0x40] sm:$0xff] %v4547
        %4564 = vst [vmem:[#allocation3 + $0x50] sm:$0xff] %v4548
        %4565 = vst [vmem:[#allocation3 + $0x60] sm:$0xff] %v4549
        %4566 = vst [vmem:[#allocation3 + $0x70] sm:$0xff] %v4550
        %4567 = vst [vmem:[#allocation3 + $0x80] sm:$0xff] %v4551
        %4568 = vst [vmem:[#allocation3 + $0x90] sm:$0xff] %v4552
        %4569 = vst [vmem:[#allocation3 + $0xa0] sm:$0xff] %v4553
        %4570 = vst [vmem:[#allocation3 + $0xb0] sm:$0xff] %v4554
        %4571 = vst [vmem:[#allocation3 + $0xc0] sm:$0xff] %v4555
        %4572 = vst [vmem:[#allocation3 + $0xd0] sm:$0xff] %v4556
        %4573 = vst [vmem:[#allocation3 + $0xe0] sm:$0xff] %v4557
        %4574 = vst [vmem:[#allocation3 + $0xf0] sm:$0xff] %v4558
        %v4575 = vld [vmem:[%s4] sm:$0xff]
        %v4576 = vld [vmem:[%s4 + $0x8] sm:$0xff]
        %v4577 = vld [vmem:[%s4 + $0x10] sm:$0xff]
        %v4578 = vld [vmem:[%s4 + $0x18] sm:$0xff]
        %v4579 = vld [vmem:[%s4 + $0x20] sm:$0xff]
        %v4580 = vld [vmem:[%s4 + $0x28] sm:$0xff]
        %v4581 = vld [vmem:[%s4 + $0x30] sm:$0xff]
        %v4582 = vld [vmem:[%s4 + $0x38] sm:$0xff]
        %v4583 = vld [vmem:[%s4 + $0x40] sm:$0xff]
        %v4584 = vld [vmem:[%s4 + $0x48] sm:$0xff]
        %v4585 = vld [vmem:[%s4 + $0x50] sm:$0xff]
        %v4586 = vld [vmem:[%s4 + $0x58] sm:$0xff]
        %v4587 = vld [vmem:[%s4 + $0x60] sm:$0xff]
        %v4588 = vld [vmem:[%s4 + $0x68] sm:$0xff]
        %v4589 = vld [vmem:[%s4 + $0x70] sm:$0xff]
        %v4590 = vld [vmem:[%s4 + $0x78] sm:$0xff]
        %v4591 = vld [vmem:[#allocation2 + $0x8] sm:$0xff]
        %v4592 = vld [vmem:[#allocation2 + $0x18] sm:$0xff]
        %v4593 = vld [vmem:[#allocation2 + $0x28] sm:$0xff]
        %v4594 = vld [vmem:[#allocation2 + $0x38] sm:$0xff]
        %v4595 = vld [vmem:[#allocation2 + $0x48] sm:$0xff]
        %v4596 = vld [vmem:[#allocation2 + $0x58] sm:$0xff]
        %v4597 = vld [vmem:[#allocation2 + $0x68] sm:$0xff]
        %v4598 = vld [vmem:[#allocation2 + $0x78] sm:$0xff]
        %v4599 = vld [vmem:[#allocation2 + $0x88] sm:$0xff]
        %v4600 = vld [vmem:[#allocation2 + $0x98] sm:$0xff]
        %v4601 = vld [vmem:[#allocation2 + $0xa8] sm:$0xff]
        %v4602 = vld [vmem:[#allocation2 + $0xb8] sm:$0xff]
        %v4603 = vld [vmem:[#allocation2 + $0xc8] sm:$0xff]
        %v4604 = vld [vmem:[#allocation2 + $0xd8] sm:$0xff]
        %v4605 = vld [vmem:[#allocation2 + $0xe8] sm:$0xff]
        %v4606 = vld [vmem:[#allocation2 + $0xf8] sm:$0xff]
        %v4607 = vld [vmem:[%s3446] sm:$0xff]
        %v4608 = vld [vmem:[%s3446 + $0x8] sm:$0xff]
        %v4609 = vld [vmem:[%s3446 + $0x10] sm:$0xff]
        %v4610 = vld [vmem:[%s3446 + $0x18] sm:$0xff]
        %v4611 = vld [vmem:[%s3446 + $0x20] sm:$0xff]
        %v4612 = vld [vmem:[%s3446 + $0x28] sm:$0xff]
        %v4613 = vld [vmem:[%s3446 + $0x30] sm:$0xff]
        %v4614 = vld [vmem:[%s3446 + $0x38] sm:$0xff]
        %v4615 = vld [vmem:[%s3446 + $0x40] sm:$0xff]
        %v4616 = vld [vmem:[%s3446 + $0x48] sm:$0xff]
        %v4617 = vld [vmem:[%s3446 + $0x50] sm:$0xff]
        %v4618 = vld [vmem:[%s3446 + $0x58] sm:$0xff]
        %v4619 = vld [vmem:[%s3446 + $0x60] sm:$0xff]
        %v4620 = vld [vmem:[%s3446 + $0x68] sm:$0xff]
        %v4621 = vld [vmem:[%s3446 + $0x70] sm:$0xff]
        %v4622 = vld [vmem:[%s3446 + $0x78] sm:$0xff]
        %4639 = vrot.lane.b32.xlu0 %v4591, 127
        %v4640 = vpop.permute.xlu0 %4639
        %4641 = vrot.lane.b32.xlu0 %v4592, 127
        %v4642 = vpop.permute.xlu0 %4641
        %4643 = vrot.lane.b32.xlu0 %v4593, 127
        %v4644 = vpop.permute.xlu0 %4643
        %4645 = vrot.lane.b32.xlu0 %v4594, 127
        %v4646 = vpop.permute.xlu0 %4645
        %4647 = vrot.lane.b32.xlu0 %v4595, 127
        %v4648 = vpop.permute.xlu0 %4647
        %4649 = vrot.lane.b32.xlu0 %v4596, 127
        %v4650 = vpop.permute.xlu0 %4649
        %4651 = vrot.lane.b32.xlu0 %v4597, 127
        %v4652 = vpop.permute.xlu0 %4651
        %4653 = vrot.lane.b32.xlu0 %v4598, 127
        %v4654 = vpop.permute.xlu0 %4653
        %4655 = vrot.lane.b32.xlu0 %v4599, 127
        %v4656 = vpop.permute.xlu0 %4655
        %4657 = vrot.lane.b32.xlu0 %v4600, 127
        %v4658 = vpop.permute.xlu0 %4657
        %4659 = vrot.lane.b32.xlu0 %v4601, 127
        %v4660 = vpop.permute.xlu0 %4659
        %4661 = vrot.lane.b32.xlu0 %v4602, 127
        %v4662 = vpop.permute.xlu0 %4661
        %4663 = vrot.lane.b32.xlu0 %v4603, 127
        %v4664 = vpop.permute.xlu0 %4663
        %4665 = vrot.lane.b32.xlu0 %v4604, 127
        %v4666 = vpop.permute.xlu0 %4665
        %4667 = vrot.lane.b32.xlu0 %v4605, 127
        %v4668 = vpop.permute.xlu0 %4667
        %4669 = vrot.lane.b32.xlu0 %v4606, 127
        %v4670 = vpop.permute.xlu0 %4669
        %4687 = vmatpush.msra.mxu0 %v4670
        %4688 = vmatpush.msra.mxu0 %v4668
        %4689 = vmatpush.msra.mxu0 %v4666
        %4690 = vmatpush.msra.mxu0 %v4664
        %4691 = vmatpush.msra.mxu0 %v4662
        %4692 = vmatpush.msra.mxu0 %v4660
        %4693 = vmatpush.msra.mxu0 %v4658
        %4694 = vmatpush.msra.mxu0 %v4656
        %4695 = vmatpush.msra.mxu0 %v4654
        %4696 = vmatpush.msra.mxu0 %v4652
        %4697 = vmatpush.msra.mxu0 %v4650
        %4698 = vmatpush.msra.mxu0 %v4648
        %4699 = vmatpush.msra.mxu0 %v4646
        %4700 = vmatpush.msra.mxu0 %v4644
        %4701 = vmatpush.msra.mxu0 %v4642
        %4702 = vmatpush.msra.mxu0 %v4640
        %4703 = vmatmul.f32.gmra.mxu0 %v4607
        %v4704 = vpop.f32.mrf.mxu0
        %v4705 = vadd.f32 0.0, %v4704
        %4706 = vmatmul.f32.gmra.mxu0 %v4608
        %v4707 = vpop.f32.mrf.mxu0
        %v4708 = vadd.f32 0.0, %v4707
        %4709 = vmatmul.f32.gmra.mxu0 %v4609
        %v4710 = vpop.f32.mrf.mxu0
        %v4711 = vadd.f32 0.0, %v4710
        %4712 = vmatmul.f32.gmra.mxu0 %v4610
        %v4713 = vpop.f32.mrf.mxu0
        %v4714 = vadd.f32 0.0, %v4713
        %4715 = vmatmul.f32.gmra.mxu0 %v4611
        %v4716 = vpop.f32.mrf.mxu0
        %v4717 = vadd.f32 0.0, %v4716
        %4718 = vmatmul.f32.gmra.mxu0 %v4612
        %v4719 = vpop.f32.mrf.mxu0
        %v4720 = vadd.f32 0.0, %v4719
        %4721 = vmatmul.f32.gmra.mxu0 %v4613
        %v4722 = vpop.f32.mrf.mxu0
        %v4723 = vadd.f32 0.0, %v4722
        %4724 = vmatmul.f32.gmra.mxu0 %v4614
        %v4725 = vpop.f32.mrf.mxu0
        %v4726 = vadd.f32 0.0, %v4725
        %4727 = vmatmul.f32.gmra.mxu0 %v4615
        %v4728 = vpop.f32.mrf.mxu0
        %v4729 = vadd.f32 0.0, %v4728
        %4730 = vmatmul.f32.gmra.mxu0 %v4616
        %v4731 = vpop.f32.mrf.mxu0
        %v4732 = vadd.f32 0.0, %v4731
        %4733 = vmatmul.f32.gmra.mxu0 %v4617
        %v4734 = vpop.f32.mrf.mxu0
        %v4735 = vadd.f32 0.0, %v4734
        %4736 = vmatmul.f32.gmra.mxu0 %v4618
        %v4737 = vpop.f32.mrf.mxu0
        %v4738 = vadd.f32 0.0, %v4737
        %4739 = vmatmul.f32.gmra.mxu0 %v4619
        %v4740 = vpop.f32.mrf.mxu0
        %v4741 = vadd.f32 0.0, %v4740
        %4742 = vmatmul.f32.gmra.mxu0 %v4620
        %v4743 = vpop.f32.mrf.mxu0
        %v4744 = vadd.f32 0.0, %v4743
        %4745 = vmatmul.f32.gmra.mxu0 %v4621
        %v4746 = vpop.f32.mrf.mxu0
        %v4747 = vadd.f32 0.0, %v4746
        %4748 = vmatmul.f32.gmra.mxu0 %v4622
        %v4749 = vpop.f32.mrf.mxu0
        %v4750 = vadd.f32 0.0, %v4749
        %4751 = vdwg.mxu0
        %4752 = vmatpush.msra.mxu0 %v4606
        %4753 = vmatpush.msra.mxu0 %v4605
        %4754 = vmatpush.msra.mxu0 %v4604
        %4755 = vmatpush.msra.mxu0 %v4603
        %4756 = vmatpush.msra.mxu0 %v4602
        %4757 = vmatpush.msra.mxu0 %v4601
        %4758 = vmatpush.msra.mxu0 %v4600
        %4759 = vmatpush.msra.mxu0 %v4599
        %4760 = vmatpush.msra.mxu0 %v4598
        %4761 = vmatpush.msra.mxu0 %v4597
        %4762 = vmatpush.msra.mxu0 %v4596
        %4763 = vmatpush.msra.mxu0 %v4595
        %4764 = vmatpush.msra.mxu0 %v4594
        %4765 = vmatpush.msra.mxu0 %v4593
        %4766 = vmatpush.msra.mxu0 %v4592
        %4767 = vmatpush.msra.mxu0 %v4591
        %4768 = vmatmul.f32.gmra.mxu0 %v4575
        %v4769 = vpop.f32.mrf.mxu0
        %v4770 = vadd.f32 %v4705, %v4769
        %4771 = vmatmul.f32.gmra.mxu0 %v4576
        %v4772 = vpop.f32.mrf.mxu0
        %v4773 = vadd.f32 %v4708, %v4772
        %4774 = vmatmul.f32.gmra.mxu0 %v4577
        %v4775 = vpop.f32.mrf.mxu0
        %v4776 = vadd.f32 %v4711, %v4775
        %4777 = vmatmul.f32.gmra.mxu0 %v4578
        %v4778 = vpop.f32.mrf.mxu0
        %v4779 = vadd.f32 %v4714, %v4778
        %4780 = vmatmul.f32.gmra.mxu0 %v4579
        %v4781 = vpop.f32.mrf.mxu0
        %v4782 = vadd.f32 %v4717, %v4781
        %4783 = vmatmul.f32.gmra.mxu0 %v4580
        %v4784 = vpop.f32.mrf.mxu0
        %v4785 = vadd.f32 %v4720, %v4784
        %4786 = vmatmul.f32.gmra.mxu0 %v4581
        %v4787 = vpop.f32.mrf.mxu0
        %v4788 = vadd.f32 %v4723, %v4787
        %4789 = vmatmul.f32.gmra.mxu0 %v4582
        %v4790 = vpop.f32.mrf.mxu0
        %v4791 = vadd.f32 %v4726, %v4790
        %4792 = vmatmul.f32.gmra.mxu0 %v4583
        %v4793 = vpop.f32.mrf.mxu0
        %v4794 = vadd.f32 %v4729, %v4793
        %4795 = vmatmul.f32.gmra.mxu0 %v4584
        %v4796 = vpop.f32.mrf.mxu0
        %v4797 = vadd.f32 %v4732, %v4796
        %4798 = vmatmul.f32.gmra.mxu0 %v4585
        %v4799 = vpop.f32.mrf.mxu0
        %v4800 = vadd.f32 %v4735, %v4799
        %4801 = vmatmul.f32.gmra.mxu0 %v4586
        %v4802 = vpop.f32.mrf.mxu0
        %v4803 = vadd.f32 %v4738, %v4802
        %4804 = vmatmul.f32.gmra.mxu0 %v4587
        %v4805 = vpop.f32.mrf.mxu0
        %v4806 = vadd.f32 %v4741, %v4805
        %4807 = vmatmul.f32.gmra.mxu0 %v4588
        %v4808 = vpop.f32.mrf.mxu0
        %v4809 = vadd.f32 %v4744, %v4808
        %4810 = vmatmul.f32.gmra.mxu0 %v4589
        %v4811 = vpop.f32.mrf.mxu0
        %v4812 = vadd.f32 %v4747, %v4811
        %4813 = vmatmul.f32.gmra.mxu0 %v4590
        %v4814 = vpop.f32.mrf.mxu0
        %v4815 = vadd.f32 %v4750, %v4814
        %4816 = vdwg.mxu0
        %v4817 = vld [vmem:[%s3737] sm:$0xff]
        %v4818 = vld [vmem:[%s3737 + $0x8] sm:$0xff]
        %v4819 = vld [vmem:[%s3737 + $0x10] sm:$0xff]
        %v4820 = vld [vmem:[%s3737 + $0x18] sm:$0xff]
        %v4821 = vld [vmem:[%s3737 + $0x20] sm:$0xff]
        %v4822 = vld [vmem:[%s3737 + $0x28] sm:$0xff]
        %v4823 = vld [vmem:[%s3737 + $0x30] sm:$0xff]
        %v4824 = vld [vmem:[%s3737 + $0x38] sm:$0xff]
        %v4825 = vld [vmem:[%s3737 + $0x40] sm:$0xff]
        %v4826 = vld [vmem:[%s3737 + $0x48] sm:$0xff]
        %v4827 = vld [vmem:[%s3737 + $0x50] sm:$0xff]
        %v4828 = vld [vmem:[%s3737 + $0x58] sm:$0xff]
        %v4829 = vld [vmem:[%s3737 + $0x60] sm:$0xff]
        %v4830 = vld [vmem:[%s3737 + $0x68] sm:$0xff]
        %v4831 = vld [vmem:[%s3737 + $0x70] sm:$0xff]
        %v4832 = vld [vmem:[%s3737 + $0x78] sm:$0xff]
        %4833 = vrot.lane.b32.xlu0 %v4591, 126
        %v4834 = vpop.permute.xlu0 %4833
        %4835 = vrot.lane.b32.xlu0 %v4592, 126
        %v4836 = vpop.permute.xlu0 %4835
        %4837 = vrot.lane.b32.xlu0 %v4593, 126
        %v4838 = vpop.permute.xlu0 %4837
        %4839 = vrot.lane.b32.xlu0 %v4594, 126
        %v4840 = vpop.permute.xlu0 %4839
        %4841 = vrot.lane.b32.xlu0 %v4595, 126
        %v4842 = vpop.permute.xlu0 %4841
        %4843 = vrot.lane.b32.xlu0 %v4596, 126
        %v4844 = vpop.permute.xlu0 %4843
        %4845 = vrot.lane.b32.xlu0 %v4597, 126
        %v4846 = vpop.permute.xlu0 %4845
        %4847 = vrot.lane.b32.xlu0 %v4598, 126
        %v4848 = vpop.permute.xlu0 %4847
        %4849 = vrot.lane.b32.xlu0 %v4599, 126
        %v4850 = vpop.permute.xlu0 %4849
        %4851 = vrot.lane.b32.xlu0 %v4600, 126
        %v4852 = vpop.permute.xlu0 %4851
        %4853 = vrot.lane.b32.xlu0 %v4601, 126
        %v4854 = vpop.permute.xlu0 %4853
        %4855 = vrot.lane.b32.xlu0 %v4602, 126
        %v4856 = vpop.permute.xlu0 %4855
        %4857 = vrot.lane.b32.xlu0 %v4603, 126
        %v4858 = vpop.permute.xlu0 %4857
        %4859 = vrot.lane.b32.xlu0 %v4604, 126
        %v4860 = vpop.permute.xlu0 %4859
        %4861 = vrot.lane.b32.xlu0 %v4605, 126
        %v4862 = vpop.permute.xlu0 %4861
        %4863 = vrot.lane.b32.xlu0 %v4606, 126
        %v4864 = vpop.permute.xlu0 %4863
        %4881 = vmatpush.msra.mxu0 %v4864
        %4882 = vmatpush.msra.mxu0 %v4862
        %4883 = vmatpush.msra.mxu0 %v4860
        %4884 = vmatpush.msra.mxu0 %v4858
        %4885 = vmatpush.msra.mxu0 %v4856
        %4886 = vmatpush.msra.mxu0 %v4854
        %4887 = vmatpush.msra.mxu0 %v4852
        %4888 = vmatpush.msra.mxu0 %v4850
        %4889 = vmatpush.msra.mxu0 %v4848
        %4890 = vmatpush.msra.mxu0 %v4846
        %4891 = vmatpush.msra.mxu0 %v4844
        %4892 = vmatpush.msra.mxu0 %v4842
        %4893 = vmatpush.msra.mxu0 %v4840
        %4894 = vmatpush.msra.mxu0 %v4838
        %4895 = vmatpush.msra.mxu0 %v4836
        %4896 = vmatpush.msra.mxu0 %v4834
        %4897 = vmatmul.f32.gmra.mxu0 %v4817
        %v4898 = vpop.f32.mrf.mxu0
        %v4899 = vadd.f32 0.0, %v4898
        %4900 = vmatmul.f32.gmra.mxu0 %v4818
        %v4901 = vpop.f32.mrf.mxu0
        %v4902 = vadd.f32 0.0, %v4901
        %4903 = vmatmul.f32.gmra.mxu0 %v4819
        %v4904 = vpop.f32.mrf.mxu0
        %v4905 = vadd.f32 0.0, %v4904
        %4906 = vmatmul.f32.gmra.mxu0 %v4820
        %v4907 = vpop.f32.mrf.mxu0
        %v4908 = vadd.f32 0.0, %v4907
        %4909 = vmatmul.f32.gmra.mxu0 %v4821
        %v4910 = vpop.f32.mrf.mxu0
        %v4911 = vadd.f32 0.0, %v4910
        %4912 = vmatmul.f32.gmra.mxu0 %v4822
        %v4913 = vpop.f32.mrf.mxu0
        %v4914 = vadd.f32 0.0, %v4913
        %4915 = vmatmul.f32.gmra.mxu0 %v4823
        %v4916 = vpop.f32.mrf.mxu0
        %v4917 = vadd.f32 0.0, %v4916
        %4918 = vmatmul.f32.gmra.mxu0 %v4824
        %v4919 = vpop.f32.mrf.mxu0
        %v4920 = vadd.f32 0.0, %v4919
        %4921 = vmatmul.f32.gmra.mxu0 %v4825
        %v4922 = vpop.f32.mrf.mxu0
        %v4923 = vadd.f32 0.0, %v4922
        %4924 = vmatmul.f32.gmra.mxu0 %v4826
        %v4925 = vpop.f32.mrf.mxu0
        %v4926 = vadd.f32 0.0, %v4925
        %4927 = vmatmul.f32.gmra.mxu0 %v4827
        %v4928 = vpop.f32.mrf.mxu0
        %v4929 = vadd.f32 0.0, %v4928
        %4930 = vmatmul.f32.gmra.mxu0 %v4828
        %v4931 = vpop.f32.mrf.mxu0
        %v4932 = vadd.f32 0.0, %v4931
        %4933 = vmatmul.f32.gmra.mxu0 %v4829
        %v4934 = vpop.f32.mrf.mxu0
        %v4935 = vadd.f32 0.0, %v4934
        %4936 = vmatmul.f32.gmra.mxu0 %v4830
        %v4937 = vpop.f32.mrf.mxu0
        %v4938 = vadd.f32 0.0, %v4937
        %4939 = vmatmul.f32.gmra.mxu0 %v4831
        %v4940 = vpop.f32.mrf.mxu0
        %v4941 = vadd.f32 0.0, %v4940
        %4942 = vmatmul.f32.gmra.mxu0 %v4832
        %v4943 = vpop.f32.mrf.mxu0
        %v4944 = vadd.f32 0.0, %v4943
        %4945 = vdwg.mxu0
        %v4946 = vadd.f32 %v4770, %v4899
        %v4947 = vadd.f32 %v4773, %v4902
        %v4948 = vadd.f32 %v4776, %v4905
        %v4949 = vadd.f32 %v4779, %v4908
        %v4950 = vadd.f32 %v4782, %v4911
        %v4951 = vadd.f32 %v4785, %v4914
        %v4952 = vadd.f32 %v4788, %v4917
        %v4953 = vadd.f32 %v4791, %v4920
        %v4954 = vadd.f32 %v4794, %v4923
        %v4955 = vadd.f32 %v4797, %v4926
        %v4956 = vadd.f32 %v4800, %v4929
        %v4957 = vadd.f32 %v4803, %v4932
        %v4958 = vadd.f32 %v4806, %v4935
        %v4959 = vadd.f32 %v4809, %v4938
        %v4960 = vadd.f32 %v4812, %v4941
        %v4961 = vadd.f32 %v4815, %v4944
        %v4962 = vld [vmem:[%s3931] sm:$0xff]
        %v4963 = vld [vmem:[%s3931 + $0x8] sm:$0xff]
        %v4964 = vld [vmem:[%s3931 + $0x10] sm:$0xff]
        %v4965 = vld [vmem:[%s3931 + $0x18] sm:$0xff]
        %v4966 = vld [vmem:[%s3931 + $0x20] sm:$0xff]
        %v4967 = vld [vmem:[%s3931 + $0x28] sm:$0xff]
        %v4968 = vld [vmem:[%s3931 + $0x30] sm:$0xff]
        %v4969 = vld [vmem:[%s3931 + $0x38] sm:$0xff]
        %v4970 = vld [vmem:[%s3931 + $0x40] sm:$0xff]
        %v4971 = vld [vmem:[%s3931 + $0x48] sm:$0xff]
        %v4972 = vld [vmem:[%s3931 + $0x50] sm:$0xff]
        %v4973 = vld [vmem:[%s3931 + $0x58] sm:$0xff]
        %v4974 = vld [vmem:[%s3931 + $0x60] sm:$0xff]
        %v4975 = vld [vmem:[%s3931 + $0x68] sm:$0xff]
        %v4976 = vld [vmem:[%s3931 + $0x70] sm:$0xff]
        %v4977 = vld [vmem:[%s3931 + $0x78] sm:$0xff]
        %4978 = vrot.lane.b32.xlu0 %v4591, 125
        %v4979 = vpop.permute.xlu0 %4978
        %4980 = vrot.lane.b32.xlu0 %v4592, 125
        %v4981 = vpop.permute.xlu0 %4980
        %4982 = vrot.lane.b32.xlu0 %v4593, 125
        %v4983 = vpop.permute.xlu0 %4982
        %4984 = vrot.lane.b32.xlu0 %v4594, 125
        %v4985 = vpop.permute.xlu0 %4984
        %4986 = vrot.lane.b32.xlu0 %v4595, 125
        %v4987 = vpop.permute.xlu0 %4986
        %4988 = vrot.lane.b32.xlu0 %v4596, 125
        %v4989 = vpop.permute.xlu0 %4988
        %4990 = vrot.lane.b32.xlu0 %v4597, 125
        %v4991 = vpop.permute.xlu0 %4990
        %4992 = vrot.lane.b32.xlu0 %v4598, 125
        %v4993 = vpop.permute.xlu0 %4992
        %4994 = vrot.lane.b32.xlu0 %v4599, 125
        %v4995 = vpop.permute.xlu0 %4994
        %4996 = vrot.lane.b32.xlu0 %v4600, 125
        %v4997 = vpop.permute.xlu0 %4996
        %4998 = vrot.lane.b32.xlu0 %v4601, 125
        %v4999 = vpop.permute.xlu0 %4998
        %5000 = vrot.lane.b32.xlu0 %v4602, 125
        %v5001 = vpop.permute.xlu0 %5000
        %5002 = vrot.lane.b32.xlu0 %v4603, 125
        %v5003 = vpop.permute.xlu0 %5002
        %5004 = vrot.lane.b32.xlu0 %v4604, 125
        %v5005 = vpop.permute.xlu0 %5004
        %5006 = vrot.lane.b32.xlu0 %v4605, 125
        %v5007 = vpop.permute.xlu0 %5006
        %5008 = vrot.lane.b32.xlu0 %v4606, 125
        %v5009 = vpop.permute.xlu0 %5008
        %5026 = vmatpush.msra.mxu0 %v5009
        %5027 = vmatpush.msra.mxu0 %v5007
        %5028 = vmatpush.msra.mxu0 %v5005
        %5029 = vmatpush.msra.mxu0 %v5003
        %5030 = vmatpush.msra.mxu0 %v5001
        %5031 = vmatpush.msra.mxu0 %v4999
        %5032 = vmatpush.msra.mxu0 %v4997
        %5033 = vmatpush.msra.mxu0 %v4995
        %5034 = vmatpush.msra.mxu0 %v4993
        %5035 = vmatpush.msra.mxu0 %v4991
        %5036 = vmatpush.msra.mxu0 %v4989
        %5037 = vmatpush.msra.mxu0 %v4987
        %5038 = vmatpush.msra.mxu0 %v4985
        %5039 = vmatpush.msra.mxu0 %v4983
        %5040 = vmatpush.msra.mxu0 %v4981
        %5041 = vmatpush.msra.mxu0 %v4979
        %5042 = vmatmul.f32.gmra.mxu0 %v4962
        %v5043 = vpop.f32.mrf.mxu0
        %v5044 = vadd.f32 0.0, %v5043
        %5045 = vmatmul.f32.gmra.mxu0 %v4963
        %v5046 = vpop.f32.mrf.mxu0
        %v5047 = vadd.f32 0.0, %v5046
        %5048 = vmatmul.f32.gmra.mxu0 %v4964
        %v5049 = vpop.f32.mrf.mxu0
        %v5050 = vadd.f32 0.0, %v5049
        %5051 = vmatmul.f32.gmra.mxu0 %v4965
        %v5052 = vpop.f32.mrf.mxu0
        %v5053 = vadd.f32 0.0, %v5052
        %5054 = vmatmul.f32.gmra.mxu0 %v4966
        %v5055 = vpop.f32.mrf.mxu0
        %v5056 = vadd.f32 0.0, %v5055
        %5057 = vmatmul.f32.gmra.mxu0 %v4967
        %v5058 = vpop.f32.mrf.mxu0
        %v5059 = vadd.f32 0.0, %v5058
        %5060 = vmatmul.f32.gmra.mxu0 %v4968
        %v5061 = vpop.f32.mrf.mxu0
        %v5062 = vadd.f32 0.0, %v5061
        %5063 = vmatmul.f32.gmra.mxu0 %v4969
        %v5064 = vpop.f32.mrf.mxu0
        %v5065 = vadd.f32 0.0, %v5064
        %5066 = vmatmul.f32.gmra.mxu0 %v4970
        %v5067 = vpop.f32.mrf.mxu0
        %v5068 = vadd.f32 0.0, %v5067
        %5069 = vmatmul.f32.gmra.mxu0 %v4971
        %v5070 = vpop.f32.mrf.mxu0
        %v5071 = vadd.f32 0.0, %v5070
        %5072 = vmatmul.f32.gmra.mxu0 %v4972
        %v5073 = vpop.f32.mrf.mxu0
        %v5074 = vadd.f32 0.0, %v5073
        %5075 = vmatmul.f32.gmra.mxu0 %v4973
        %v5076 = vpop.f32.mrf.mxu0
        %v5077 = vadd.f32 0.0, %v5076
        %5078 = vmatmul.f32.gmra.mxu0 %v4974
        %v5079 = vpop.f32.mrf.mxu0
        %v5080 = vadd.f32 0.0, %v5079
        %5081 = vmatmul.f32.gmra.mxu0 %v4975
        %v5082 = vpop.f32.mrf.mxu0
        %v5083 = vadd.f32 0.0, %v5082
        %5084 = vmatmul.f32.gmra.mxu0 %v4976
        %v5085 = vpop.f32.mrf.mxu0
        %v5086 = vadd.f32 0.0, %v5085
        %5087 = vmatmul.f32.gmra.mxu0 %v4977
        %v5088 = vpop.f32.mrf.mxu0
        %v5089 = vadd.f32 0.0, %v5088
        %5090 = vdwg.mxu0
        %v5091 = vadd.f32 %v4946, %v5044
        %v5092 = vadd.f32 %v4947, %v5047
        %v5093 = vadd.f32 %v4948, %v5050
        %v5094 = vadd.f32 %v4949, %v5053
        %v5095 = vadd.f32 %v4950, %v5056
        %v5096 = vadd.f32 %v4951, %v5059
        %v5097 = vadd.f32 %v4952, %v5062
        %v5098 = vadd.f32 %v4953, %v5065
        %v5099 = vadd.f32 %v4954, %v5068
        %v5100 = vadd.f32 %v4955, %v5071
        %v5101 = vadd.f32 %v4956, %v5074
        %v5102 = vadd.f32 %v4957, %v5077
        %v5103 = vadd.f32 %v4958, %v5080
        %v5104 = vadd.f32 %v4959, %v5083
        %v5105 = vadd.f32 %v4960, %v5086
        %v5106 = vadd.f32 %v4961, %v5089
        %v5107 = vld [vmem:[%s4125] sm:$0xff]
        %v5108 = vld [vmem:[%s4125 + $0x8] sm:$0xff]
        %v5109 = vld [vmem:[%s4125 + $0x10] sm:$0xff]
        %v5110 = vld [vmem:[%s4125 + $0x18] sm:$0xff]
        %v5111 = vld [vmem:[%s4125 + $0x20] sm:$0xff]
        %v5112 = vld [vmem:[%s4125 + $0x28] sm:$0xff]
        %v5113 = vld [vmem:[%s4125 + $0x30] sm:$0xff]
        %v5114 = vld [vmem:[%s4125 + $0x38] sm:$0xff]
        %v5115 = vld [vmem:[%s4125 + $0x40] sm:$0xff]
        %v5116 = vld [vmem:[%s4125 + $0x48] sm:$0xff]
        %v5117 = vld [vmem:[%s4125 + $0x50] sm:$0xff]
        %v5118 = vld [vmem:[%s4125 + $0x58] sm:$0xff]
        %v5119 = vld [vmem:[%s4125 + $0x60] sm:$0xff]
        %v5120 = vld [vmem:[%s4125 + $0x68] sm:$0xff]
        %v5121 = vld [vmem:[%s4125 + $0x70] sm:$0xff]
        %v5122 = vld [vmem:[%s4125 + $0x78] sm:$0xff]
        %5123 = vrot.lane.b32.xlu0 %v4591, 124
        %v5124 = vpop.permute.xlu0 %5123
        %5125 = vrot.lane.b32.xlu0 %v4592, 124
        %v5126 = vpop.permute.xlu0 %5125
        %5127 = vrot.lane.b32.xlu0 %v4593, 124
        %v5128 = vpop.permute.xlu0 %5127
        %5129 = vrot.lane.b32.xlu0 %v4594, 124
        %v5130 = vpop.permute.xlu0 %5129
        %5131 = vrot.lane.b32.xlu0 %v4595, 124
        %v5132 = vpop.permute.xlu0 %5131
        %5133 = vrot.lane.b32.xlu0 %v4596, 124
        %v5134 = vpop.permute.xlu0 %5133
        %5135 = vrot.lane.b32.xlu0 %v4597, 124
        %v5136 = vpop.permute.xlu0 %5135
        %5137 = vrot.lane.b32.xlu0 %v4598, 124
        %v5138 = vpop.permute.xlu0 %5137
        %5139 = vrot.lane.b32.xlu0 %v4599, 124
        %v5140 = vpop.permute.xlu0 %5139
        %5141 = vrot.lane.b32.xlu0 %v4600, 124
        %v5142 = vpop.permute.xlu0 %5141
        %5143 = vrot.lane.b32.xlu0 %v4601, 124
        %v5144 = vpop.permute.xlu0 %5143
        %5145 = vrot.lane.b32.xlu0 %v4602, 124
        %v5146 = vpop.permute.xlu0 %5145
        %5147 = vrot.lane.b32.xlu0 %v4603, 124
        %v5148 = vpop.permute.xlu0 %5147
        %5149 = vrot.lane.b32.xlu0 %v4604, 124
        %v5150 = vpop.permute.xlu0 %5149
        %5151 = vrot.lane.b32.xlu0 %v4605, 124
        %v5152 = vpop.permute.xlu0 %5151
        %5153 = vrot.lane.b32.xlu0 %v4606, 124
        %v5154 = vpop.permute.xlu0 %5153
        %5171 = vmatpush.msra.mxu0 %v5154
        %5172 = vmatpush.msra.mxu0 %v5152
        %5173 = vmatpush.msra.mxu0 %v5150
        %5174 = vmatpush.msra.mxu0 %v5148
        %5175 = vmatpush.msra.mxu0 %v5146
        %5176 = vmatpush.msra.mxu0 %v5144
        %5177 = vmatpush.msra.mxu0 %v5142
        %5178 = vmatpush.msra.mxu0 %v5140
        %5179 = vmatpush.msra.mxu0 %v5138
        %5180 = vmatpush.msra.mxu0 %v5136
        %5181 = vmatpush.msra.mxu0 %v5134
        %5182 = vmatpush.msra.mxu0 %v5132
        %5183 = vmatpush.msra.mxu0 %v5130
        %5184 = vmatpush.msra.mxu0 %v5128
        %5185 = vmatpush.msra.mxu0 %v5126
        %5186 = vmatpush.msra.mxu0 %v5124
        %5187 = vmatmul.f32.gmra.mxu0 %v5107
        %v5188 = vpop.f32.mrf.mxu0
        %v5189 = vadd.f32 0.0, %v5188
        %5190 = vmatmul.f32.gmra.mxu0 %v5108
        %v5191 = vpop.f32.mrf.mxu0
        %v5192 = vadd.f32 0.0, %v5191
        %5193 = vmatmul.f32.gmra.mxu0 %v5109
        %v5194 = vpop.f32.mrf.mxu0
        %v5195 = vadd.f32 0.0, %v5194
        %5196 = vmatmul.f32.gmra.mxu0 %v5110
        %v5197 = vpop.f32.mrf.mxu0
        %v5198 = vadd.f32 0.0, %v5197
        %5199 = vmatmul.f32.gmra.mxu0 %v5111
        %v5200 = vpop.f32.mrf.mxu0
        %v5201 = vadd.f32 0.0, %v5200
        %5202 = vmatmul.f32.gmra.mxu0 %v5112
        %v5203 = vpop.f32.mrf.mxu0
        %v5204 = vadd.f32 0.0, %v5203
        %5205 = vmatmul.f32.gmra.mxu0 %v5113
        %v5206 = vpop.f32.mrf.mxu0
        %v5207 = vadd.f32 0.0, %v5206
        %5208 = vmatmul.f32.gmra.mxu0 %v5114
        %v5209 = vpop.f32.mrf.mxu0
        %v5210 = vadd.f32 0.0, %v5209
        %5211 = vmatmul.f32.gmra.mxu0 %v5115
        %v5212 = vpop.f32.mrf.mxu0
        %v5213 = vadd.f32 0.0, %v5212
        %5214 = vmatmul.f32.gmra.mxu0 %v5116
        %v5215 = vpop.f32.mrf.mxu0
        %v5216 = vadd.f32 0.0, %v5215
        %5217 = vmatmul.f32.gmra.mxu0 %v5117
        %v5218 = vpop.f32.mrf.mxu0
        %v5219 = vadd.f32 0.0, %v5218
        %5220 = vmatmul.f32.gmra.mxu0 %v5118
        %v5221 = vpop.f32.mrf.mxu0
        %v5222 = vadd.f32 0.0, %v5221
        %5223 = vmatmul.f32.gmra.mxu0 %v5119
        %v5224 = vpop.f32.mrf.mxu0
        %v5225 = vadd.f32 0.0, %v5224
        %5226 = vmatmul.f32.gmra.mxu0 %v5120
        %v5227 = vpop.f32.mrf.mxu0
        %v5228 = vadd.f32 0.0, %v5227
        %5229 = vmatmul.f32.gmra.mxu0 %v5121
        %v5230 = vpop.f32.mrf.mxu0
        %v5231 = vadd.f32 0.0, %v5230
        %5232 = vmatmul.f32.gmra.mxu0 %v5122
        %v5233 = vpop.f32.mrf.mxu0
        %v5234 = vadd.f32 0.0, %v5233
        %5235 = vdwg.mxu0
        %v5236 = vadd.f32 %v5091, %v5189
        %v5237 = vadd.f32 %v5092, %v5192
        %v5238 = vadd.f32 %v5093, %v5195
        %v5239 = vadd.f32 %v5094, %v5198
        %v5240 = vadd.f32 %v5095, %v5201
        %v5241 = vadd.f32 %v5096, %v5204
        %v5242 = vadd.f32 %v5097, %v5207
        %v5243 = vadd.f32 %v5098, %v5210
        %v5244 = vadd.f32 %v5099, %v5213
        %v5245 = vadd.f32 %v5100, %v5216
        %v5246 = vadd.f32 %v5101, %v5219
        %v5247 = vadd.f32 %v5102, %v5222
        %v5248 = vadd.f32 %v5103, %v5225
        %v5249 = vadd.f32 %v5104, %v5228
        %v5250 = vadd.f32 %v5105, %v5231
        %v5251 = vadd.f32 %v5106, %v5234
        %v5252 = vld [vmem:[%s5] sm:$0xff]
        %v5253 = vld [vmem:[%s5 + $0x8] sm:$0xff]
        %v5254 = vld [vmem:[%s5 + $0x10] sm:$0xff]
        %v5255 = vld [vmem:[%s5 + $0x18] sm:$0xff]
        %v5256 = vld [vmem:[%s5 + $0x20] sm:$0xff]
        %v5257 = vld [vmem:[%s5 + $0x28] sm:$0xff]
        %v5258 = vld [vmem:[%s5 + $0x30] sm:$0xff]
        %v5259 = vld [vmem:[%s5 + $0x38] sm:$0xff]
        %v5260 = vld [vmem:[%s5 + $0x40] sm:$0xff]
        %v5261 = vld [vmem:[%s5 + $0x48] sm:$0xff]
        %v5262 = vld [vmem:[%s5 + $0x50] sm:$0xff]
        %v5263 = vld [vmem:[%s5 + $0x58] sm:$0xff]
        %v5264 = vld [vmem:[%s5 + $0x60] sm:$0xff]
        %v5265 = vld [vmem:[%s5 + $0x68] sm:$0xff]
        %v5266 = vld [vmem:[%s5 + $0x70] sm:$0xff]
        %v5267 = vld [vmem:[%s5 + $0x78] sm:$0xff]
        %5269 = vset.pattern.permute.xlu0 0
        %5270 = vperm.xlu0 %5269, %v5252
        %v5271 = vpop.permute.xlu0 %5270
        %5274 = vset.pattern.permute.xlu0 0
        %5275 = vperm.xlu0 %5274, %v5253
        %v5276 = vpop.permute.xlu0 %5275
        %5279 = vset.pattern.permute.xlu0 0
        %5280 = vperm.xlu0 %5279, %v5254
        %v5281 = vpop.permute.xlu0 %5280
        %5284 = vset.pattern.permute.xlu0 0
        %5285 = vperm.xlu0 %5284, %v5255
        %v5286 = vpop.permute.xlu0 %5285
        %5289 = vset.pattern.permute.xlu0 0
        %5290 = vperm.xlu0 %5289, %v5256
        %v5291 = vpop.permute.xlu0 %5290
        %5294 = vset.pattern.permute.xlu0 0
        %5295 = vperm.xlu0 %5294, %v5257
        %v5296 = vpop.permute.xlu0 %5295
        %5299 = vset.pattern.permute.xlu0 0
        %5300 = vperm.xlu0 %5299, %v5258
        %v5301 = vpop.permute.xlu0 %5300
        %5304 = vset.pattern.permute.xlu0 0
        %5305 = vperm.xlu0 %5304, %v5259
        %v5306 = vpop.permute.xlu0 %5305
        %5309 = vset.pattern.permute.xlu0 0
        %5310 = vperm.xlu0 %5309, %v5260
        %v5311 = vpop.permute.xlu0 %5310
        %5314 = vset.pattern.permute.xlu0 0
        %5315 = vperm.xlu0 %5314, %v5261
        %v5316 = vpop.permute.xlu0 %5315
        %5319 = vset.pattern.permute.xlu0 0
        %5320 = vperm.xlu0 %5319, %v5262
        %v5321 = vpop.permute.xlu0 %5320
        %5324 = vset.pattern.permute.xlu0 0
        %5325 = vperm.xlu0 %5324, %v5263
        %v5326 = vpop.permute.xlu0 %5325
        %5329 = vset.pattern.permute.xlu0 0
        %5330 = vperm.xlu0 %5329, %v5264
        %v5331 = vpop.permute.xlu0 %5330
        %5334 = vset.pattern.permute.xlu0 0
        %5335 = vperm.xlu0 %5334, %v5265
        %v5336 = vpop.permute.xlu0 %5335
        %5339 = vset.pattern.permute.xlu0 0
        %5340 = vperm.xlu0 %5339, %v5266
        %v5341 = vpop.permute.xlu0 %5340
        %5344 = vset.pattern.permute.xlu0 0
        %5345 = vperm.xlu0 %5344, %v5267
        %v5346 = vpop.permute.xlu0 %5345
        %v5348 = vmul.f32 %v5236, %v5271
        %v5349 = vmul.f32 %v5237, %v5276
        %v5350 = vmul.f32 %v5238, %v5281
        %v5351 = vmul.f32 %v5239, %v5286
        %v5352 = vmul.f32 %v5240, %v5291
        %v5353 = vmul.f32 %v5241, %v5296
        %v5354 = vmul.f32 %v5242, %v5301
        %v5355 = vmul.f32 %v5243, %v5306
        %v5356 = vmul.f32 %v5244, %v5311
        %v5357 = vmul.f32 %v5245, %v5316
        %v5358 = vmul.f32 %v5246, %v5321
        %v5359 = vmul.f32 %v5247, %v5326
        %v5360 = vmul.f32 %v5248, %v5331
        %v5361 = vmul.f32 %v5249, %v5336
        %v5362 = vmul.f32 %v5250, %v5341
        %v5363 = vmul.f32 %v5251, %v5346
        %v5364 = vld [vmem:[%s6] sm:$0xff]
        %v5365 = vld [vmem:[%s6 + $0x8] sm:$0xff]
        %v5366 = vld [vmem:[%s6 + $0x10] sm:$0xff]
        %v5367 = vld [vmem:[%s6 + $0x18] sm:$0xff]
        %v5368 = vld [vmem:[%s6 + $0x20] sm:$0xff]
        %v5369 = vld [vmem:[%s6 + $0x28] sm:$0xff]
        %v5370 = vld [vmem:[%s6 + $0x30] sm:$0xff]
        %v5371 = vld [vmem:[%s6 + $0x38] sm:$0xff]
        %v5372 = vld [vmem:[%s6 + $0x40] sm:$0xff]
        %v5373 = vld [vmem:[%s6 + $0x48] sm:$0xff]
        %v5374 = vld [vmem:[%s6 + $0x50] sm:$0xff]
        %v5375 = vld [vmem:[%s6 + $0x58] sm:$0xff]
        %v5376 = vld [vmem:[%s6 + $0x60] sm:$0xff]
        %v5377 = vld [vmem:[%s6 + $0x68] sm:$0xff]
        %v5378 = vld [vmem:[%s6 + $0x70] sm:$0xff]
        %v5379 = vld [vmem:[%s6 + $0x78] sm:$0xff]
        %5381 = vset.pattern.permute.xlu0 0
        %5382 = vperm.xlu0 %5381, %v5364
        %v5383 = vpop.permute.xlu0 %5382
        %5386 = vset.pattern.permute.xlu0 0
        %5387 = vperm.xlu0 %5386, %v5365
        %v5388 = vpop.permute.xlu0 %5387
        %5391 = vset.pattern.permute.xlu0 0
        %5392 = vperm.xlu0 %5391, %v5366
        %v5393 = vpop.permute.xlu0 %5392
        %5396 = vset.pattern.permute.xlu0 0
        %5397 = vperm.xlu0 %5396, %v5367
        %v5398 = vpop.permute.xlu0 %5397
        %5401 = vset.pattern.permute.xlu0 0
        %5402 = vperm.xlu0 %5401, %v5368
        %v5403 = vpop.permute.xlu0 %5402
        %5406 = vset.pattern.permute.xlu0 0
        %5407 = vperm.xlu0 %5406, %v5369
        %v5408 = vpop.permute.xlu0 %5407
        %5411 = vset.pattern.permute.xlu0 0
        %5412 = vperm.xlu0 %5411, %v5370
        %v5413 = vpop.permute.xlu0 %5412
        %5416 = vset.pattern.permute.xlu0 0
        %5417 = vperm.xlu0 %5416, %v5371
        %v5418 = vpop.permute.xlu0 %5417
        %5421 = vset.pattern.permute.xlu0 0
        %5422 = vperm.xlu0 %5421, %v5372
        %v5423 = vpop.permute.xlu0 %5422
        %5426 = vset.pattern.permute.xlu0 0
        %5427 = vperm.xlu0 %5426, %v5373
        %v5428 = vpop.permute.xlu0 %5427
        %5431 = vset.pattern.permute.xlu0 0
        %5432 = vperm.xlu0 %5431, %v5374
        %v5433 = vpop.permute.xlu0 %5432
        %5436 = vset.pattern.permute.xlu0 0
        %5437 = vperm.xlu0 %5436, %v5375
        %v5438 = vpop.permute.xlu0 %5437
        %5441 = vset.pattern.permute.xlu0 0
        %5442 = vperm.xlu0 %5441, %v5376
        %v5443 = vpop.permute.xlu0 %5442
        %5446 = vset.pattern.permute.xlu0 0
        %5447 = vperm.xlu0 %5446, %v5377
        %v5448 = vpop.permute.xlu0 %5447
        %5451 = vset.pattern.permute.xlu0 0
        %5452 = vperm.xlu0 %5451, %v5378
        %v5453 = vpop.permute.xlu0 %5452
        %5456 = vset.pattern.permute.xlu0 0
        %5457 = vperm.xlu0 %5456, %v5379
        %v5458 = vpop.permute.xlu0 %5457
        %v5460 = vadd.f32 %v5348, %v5383
        %v5461 = vadd.f32 %v5349, %v5388
        %v5462 = vadd.f32 %v5350, %v5393
        %v5463 = vadd.f32 %v5351, %v5398
        %v5464 = vadd.f32 %v5352, %v5403
        %v5465 = vadd.f32 %v5353, %v5408
        %v5466 = vadd.f32 %v5354, %v5413
        %v5467 = vadd.f32 %v5355, %v5418
        %v5468 = vadd.f32 %v5356, %v5423
        %v5469 = vadd.f32 %v5357, %v5428
        %v5470 = vadd.f32 %v5358, %v5433
        %v5471 = vadd.f32 %v5359, %v5438
        %v5472 = vadd.f32 %v5360, %v5443
        %v5473 = vadd.f32 %v5361, %v5448
        %v5474 = vadd.f32 %v5362, %v5453
        %v5475 = vadd.f32 %v5363, %v5458
        %v5476 = vmax.f32 %v5460, 0.0
        %v5477 = vmax.f32 %v5461, 0.0
        %v5478 = vmax.f32 %v5462, 0.0
        %v5479 = vmax.f32 %v5463, 0.0
        %v5480 = vmax.f32 %v5464, 0.0
        %v5481 = vmax.f32 %v5465, 0.0
        %v5482 = vmax.f32 %v5466, 0.0
        %v5483 = vmax.f32 %v5467, 0.0
        %v5484 = vmax.f32 %v5468, 0.0
        %v5485 = vmax.f32 %v5469, 0.0
        %v5486 = vmax.f32 %v5470, 0.0
        %v5487 = vmax.f32 %v5471, 0.0
        %v5488 = vmax.f32 %v5472, 0.0
        %v5489 = vmax.f32 %v5473, 0.0
        %v5490 = vmax.f32 %v5474, 0.0
        %v5491 = vmax.f32 %v5475, 0.0
        %vm5492 = vcmask 826368
        %5493 = vst.msk [vmem:[#allocation3 + $0x8] sm:$0xff] %vm5492, %v5476
        %5494 = vst.msk [vmem:[#allocation3 + $0x18] sm:$0xff] %vm5492, %v5477
        %5495 = vst.msk [vmem:[#allocation3 + $0x28] sm:$0xff] %vm5492, %v5478
        %5496 = vst.msk [vmem:[#allocation3 + $0x38] sm:$0xff] %vm5492, %v5479
        %5497 = vst.msk [vmem:[#allocation3 + $0x48] sm:$0xff] %vm5492, %v5480
        %5498 = vst.msk [vmem:[#allocation3 + $0x58] sm:$0xff] %vm5492, %v5481
        %5499 = vst.msk [vmem:[#allocation3 + $0x68] sm:$0xff] %vm5492, %v5482
        %5500 = vst.msk [vmem:[#allocation3 + $0x78] sm:$0xff] %vm5492, %v5483
        %5501 = vst.msk [vmem:[#allocation3 + $0x88] sm:$0xff] %vm5492, %v5484
        %5502 = vst.msk [vmem:[#allocation3 + $0x98] sm:$0xff] %vm5492, %v5485
        %5503 = vst.msk [vmem:[#allocation3 + $0xa8] sm:$0xff] %vm5492, %v5486
        %5504 = vst.msk [vmem:[#allocation3 + $0xb8] sm:$0xff] %vm5492, %v5487
        %5505 = vst.msk [vmem:[#allocation3 + $0xc8] sm:$0xff] %vm5492, %v5488
        %5506 = vst.msk [vmem:[#allocation3 + $0xd8] sm:$0xff] %vm5492, %v5489
        %5507 = vst.msk [vmem:[#allocation3 + $0xe8] sm:$0xff] %vm5492, %v5490
        %5508 = vst.msk [vmem:[#allocation3 + $0xf8] sm:$0xff] %vm5492, %v5491
        %v5509 = vld [vmem:[%s4 + $0x80] sm:$0xff]
        %v5510 = vld [vmem:[%s4 + $0x88] sm:$0xff]
        %v5511 = vld [vmem:[%s4 + $0x90] sm:$0xff]
        %v5512 = vld [vmem:[%s4 + $0x98] sm:$0xff]
        %v5513 = vld [vmem:[%s4 + $0xa0] sm:$0xff]
        %v5514 = vld [vmem:[%s4 + $0xa8] sm:$0xff]
        %v5515 = vld [vmem:[%s4 + $0xb0] sm:$0xff]
        %v5516 = vld [vmem:[%s4 + $0xb8] sm:$0xff]
        %v5517 = vld [vmem:[%s4 + $0xc0] sm:$0xff]
        %v5518 = vld [vmem:[%s4 + $0xc8] sm:$0xff]
        %v5519 = vld [vmem:[%s4 + $0xd0] sm:$0xff]
        %v5520 = vld [vmem:[%s4 + $0xd8] sm:$0xff]
        %v5521 = vld [vmem:[%s4 + $0xe0] sm:$0xff]
        %v5522 = vld [vmem:[%s4 + $0xe8] sm:$0xff]
        %v5523 = vld [vmem:[%s4 + $0xf0] sm:$0xff]
        %v5524 = vld [vmem:[%s4 + $0xf8] sm:$0xff]
        %v5525 = vld [vmem:[#allocation2] sm:$0xff]
        %v5526 = vld [vmem:[#allocation2 + $0x10] sm:$0xff]
        %v5527 = vld [vmem:[#allocation2 + $0x20] sm:$0xff]
        %v5528 = vld [vmem:[#allocation2 + $0x30] sm:$0xff]
        %v5529 = vld [vmem:[#allocation2 + $0x40] sm:$0xff]
        %v5530 = vld [vmem:[#allocation2 + $0x50] sm:$0xff]
        %v5531 = vld [vmem:[#allocation2 + $0x60] sm:$0xff]
        %v5532 = vld [vmem:[#allocation2 + $0x70] sm:$0xff]
        %v5533 = vld [vmem:[#allocation2 + $0x80] sm:$0xff]
        %v5534 = vld [vmem:[#allocation2 + $0x90] sm:$0xff]
        %v5535 = vld [vmem:[#allocation2 + $0xa0] sm:$0xff]
        %v5536 = vld [vmem:[#allocation2 + $0xb0] sm:$0xff]
        %v5537 = vld [vmem:[#allocation2 + $0xc0] sm:$0xff]
        %v5538 = vld [vmem:[#allocation2 + $0xd0] sm:$0xff]
        %v5539 = vld [vmem:[#allocation2 + $0xe0] sm:$0xff]
        %v5540 = vld [vmem:[#allocation2 + $0xf0] sm:$0xff]
        %v5541 = vld [vmem:[%s3446 + $0x80] sm:$0xff]
        %v5542 = vld [vmem:[%s3446 + $0x88] sm:$0xff]
        %v5543 = vld [vmem:[%s3446 + $0x90] sm:$0xff]
        %v5544 = vld [vmem:[%s3446 + $0x98] sm:$0xff]
        %v5545 = vld [vmem:[%s3446 + $0xa0] sm:$0xff]
        %v5546 = vld [vmem:[%s3446 + $0xa8] sm:$0xff]
        %v5547 = vld [vmem:[%s3446 + $0xb0] sm:$0xff]
        %v5548 = vld [vmem:[%s3446 + $0xb8] sm:$0xff]
        %v5549 = vld [vmem:[%s3446 + $0xc0] sm:$0xff]
        %v5550 = vld [vmem:[%s3446 + $0xc8] sm:$0xff]
        %v5551 = vld [vmem:[%s3446 + $0xd0] sm:$0xff]
        %v5552 = vld [vmem:[%s3446 + $0xd8] sm:$0xff]
        %v5553 = vld [vmem:[%s3446 + $0xe0] sm:$0xff]
        %v5554 = vld [vmem:[%s3446 + $0xe8] sm:$0xff]
        %v5555 = vld [vmem:[%s3446 + $0xf0] sm:$0xff]
        %v5556 = vld [vmem:[%s3446 + $0xf8] sm:$0xff]
        %v5557 = vld [vmem:[#allocation2 + $0x8] sm:$0xff]
        %v5558 = vld [vmem:[#allocation2 + $0x18] sm:$0xff]
        %v5559 = vld [vmem:[#allocation2 + $0x28] sm:$0xff]
        %v5560 = vld [vmem:[#allocation2 + $0x38] sm:$0xff]
        %v5561 = vld [vmem:[#allocation2 + $0x48] sm:$0xff]
        %v5562 = vld [vmem:[#allocation2 + $0x58] sm:$0xff]
        %v5563 = vld [vmem:[#allocation2 + $0x68] sm:$0xff]
        %v5564 = vld [vmem:[#allocation2 + $0x78] sm:$0xff]
        %v5565 = vld [vmem:[#allocation2 + $0x88] sm:$0xff]
        %v5566 = vld [vmem:[#allocation2 + $0x98] sm:$0xff]
        %v5567 = vld [vmem:[#allocation2 + $0xa8] sm:$0xff]
        %v5568 = vld [vmem:[#allocation2 + $0xb8] sm:$0xff]
        %v5569 = vld [vmem:[#allocation2 + $0xc8] sm:$0xff]
        %v5570 = vld [vmem:[#allocation2 + $0xd8] sm:$0xff]
        %v5571 = vld [vmem:[#allocation2 + $0xe8] sm:$0xff]
        %v5572 = vld [vmem:[#allocation2 + $0xf8] sm:$0xff]
        %5605 = vrot.lane.b32.xlu0 %v5525, 127
        %v5606 = vpop.permute.xlu0 %5605
        %5607 = vrot.lane.b32.xlu0 %v5557, 127
        %v5608 = vpop.permute.xlu0 %5607
        %5609 = vrot.lane.b32.xlu0 %v5526, 127
        %v5610 = vpop.permute.xlu0 %5609
        %5611 = vrot.lane.b32.xlu0 %v5558, 127
        %v5612 = vpop.permute.xlu0 %5611
        %5613 = vrot.lane.b32.xlu0 %v5527, 127
        %v5614 = vpop.permute.xlu0 %5613
        %5615 = vrot.lane.b32.xlu0 %v5559, 127
        %v5616 = vpop.permute.xlu0 %5615
        %5617 = vrot.lane.b32.xlu0 %v5528, 127
        %v5618 = vpop.permute.xlu0 %5617
        %5619 = vrot.lane.b32.xlu0 %v5560, 127
        %v5620 = vpop.permute.xlu0 %5619
        %5621 = vrot.lane.b32.xlu0 %v5529, 127
        %v5622 = vpop.permute.xlu0 %5621
        %5623 = vrot.lane.b32.xlu0 %v5561, 127
        %v5624 = vpop.permute.xlu0 %5623
        %5625 = vrot.lane.b32.xlu0 %v5530, 127
        %v5626 = vpop.permute.xlu0 %5625
        %5627 = vrot.lane.b32.xlu0 %v5562, 127
        %v5628 = vpop.permute.xlu0 %5627
        %5629 = vrot.lane.b32.xlu0 %v5531, 127
        %v5630 = vpop.permute.xlu0 %5629
        %5631 = vrot.lane.b32.xlu0 %v5563, 127
        %v5632 = vpop.permute.xlu0 %5631
        %5633 = vrot.lane.b32.xlu0 %v5532, 127
        %v5634 = vpop.permute.xlu0 %5633
        %5635 = vrot.lane.b32.xlu0 %v5564, 127
        %v5636 = vpop.permute.xlu0 %5635
        %5637 = vrot.lane.b32.xlu0 %v5533, 127
        %v5638 = vpop.permute.xlu0 %5637
        %5639 = vrot.lane.b32.xlu0 %v5565, 127
        %v5640 = vpop.permute.xlu0 %5639
        %5641 = vrot.lane.b32.xlu0 %v5534, 127
        %v5642 = vpop.permute.xlu0 %5641
        %5643 = vrot.lane.b32.xlu0 %v5566, 127
        %v5644 = vpop.permute.xlu0 %5643
        %5645 = vrot.lane.b32.xlu0 %v5535, 127
        %v5646 = vpop.permute.xlu0 %5645
        %5647 = vrot.lane.b32.xlu0 %v5567, 127
        %v5648 = vpop.permute.xlu0 %5647
        %5649 = vrot.lane.b32.xlu0 %v5536, 127
        %v5650 = vpop.permute.xlu0 %5649
        %5651 = vrot.lane.b32.xlu0 %v5568, 127
        %v5652 = vpop.permute.xlu0 %5651
        %5653 = vrot.lane.b32.xlu0 %v5537, 127
        %v5654 = vpop.permute.xlu0 %5653
        %5655 = vrot.lane.b32.xlu0 %v5569, 127
        %v5656 = vpop.permute.xlu0 %5655
        %5657 = vrot.lane.b32.xlu0 %v5538, 127
        %v5658 = vpop.permute.xlu0 %5657
        %5659 = vrot.lane.b32.xlu0 %v5570, 127
        %v5660 = vpop.permute.xlu0 %5659
        %5661 = vrot.lane.b32.xlu0 %v5539, 127
        %v5662 = vpop.permute.xlu0 %5661
        %5663 = vrot.lane.b32.xlu0 %v5571, 127
        %v5664 = vpop.permute.xlu0 %5663
        %5665 = vrot.lane.b32.xlu0 %v5540, 127
        %v5666 = vpop.permute.xlu0 %5665
        %5667 = vrot.lane.b32.xlu0 %v5572, 127
        %v5668 = vpop.permute.xlu0 %5667
        %v5669 = vsel %vm551, %v5606, %v5608
        %v5670 = vsel %vm551, %v5610, %v5612
        %v5671 = vsel %vm551, %v5614, %v5616
        %v5672 = vsel %vm551, %v5618, %v5620
        %v5673 = vsel %vm551, %v5622, %v5624
        %v5674 = vsel %vm551, %v5626, %v5628
        %v5675 = vsel %vm551, %v5630, %v5632
        %v5676 = vsel %vm551, %v5634, %v5636
        %v5677 = vsel %vm551, %v5638, %v5640
        %v5678 = vsel %vm551, %v5642, %v5644
        %v5679 = vsel %vm551, %v5646, %v5648
        %v5680 = vsel %vm551, %v5650, %v5652
        %v5681 = vsel %vm551, %v5654, %v5656
        %v5682 = vsel %vm551, %v5658, %v5660
        %v5683 = vsel %vm551, %v5662, %v5664
        %v5684 = vsel %vm551, %v5666, %v5668
        %5701 = vmatpush.msra.mxu0 %v5684
        %5702 = vmatpush.msra.mxu0 %v5683
        %5703 = vmatpush.msra.mxu0 %v5682
        %5704 = vmatpush.msra.mxu0 %v5681
        %5705 = vmatpush.msra.mxu0 %v5680
        %5706 = vmatpush.msra.mxu0 %v5679
        %5707 = vmatpush.msra.mxu0 %v5678
        %5708 = vmatpush.msra.mxu0 %v5677
        %5709 = vmatpush.msra.mxu0 %v5676
        %5710 = vmatpush.msra.mxu0 %v5675
        %5711 = vmatpush.msra.mxu0 %v5674
        %5712 = vmatpush.msra.mxu0 %v5673
        %5713 = vmatpush.msra.mxu0 %v5672
        %5714 = vmatpush.msra.mxu0 %v5671
        %5715 = vmatpush.msra.mxu0 %v5670
        %5716 = vmatpush.msra.mxu0 %v5669
        %5717 = vmatmul.f32.gmra.mxu0 %v5541
        %v5718 = vpop.f32.mrf.mxu0
        %v5719 = vadd.f32 0.0, %v5718
        %5720 = vmatmul.f32.gmra.mxu0 %v5542
        %v5721 = vpop.f32.mrf.mxu0
        %v5722 = vadd.f32 0.0, %v5721
        %5723 = vmatmul.f32.gmra.mxu0 %v5543
        %v5724 = vpop.f32.mrf.mxu0
        %v5725 = vadd.f32 0.0, %v5724
        %5726 = vmatmul.f32.gmra.mxu0 %v5544
        %v5727 = vpop.f32.mrf.mxu0
        %v5728 = vadd.f32 0.0, %v5727
        %5729 = vmatmul.f32.gmra.mxu0 %v5545
        %v5730 = vpop.f32.mrf.mxu0
        %v5731 = vadd.f32 0.0, %v5730
        %5732 = vmatmul.f32.gmra.mxu0 %v5546
        %v5733 = vpop.f32.mrf.mxu0
        %v5734 = vadd.f32 0.0, %v5733
        %5735 = vmatmul.f32.gmra.mxu0 %v5547
        %v5736 = vpop.f32.mrf.mxu0
        %v5737 = vadd.f32 0.0, %v5736
        %5738 = vmatmul.f32.gmra.mxu0 %v5548
        %v5739 = vpop.f32.mrf.mxu0
        %v5740 = vadd.f32 0.0, %v5739
        %5741 = vmatmul.f32.gmra.mxu0 %v5549
        %v5742 = vpop.f32.mrf.mxu0
        %v5743 = vadd.f32 0.0, %v5742
        %5744 = vmatmul.f32.gmra.mxu0 %v5550
        %v5745 = vpop.f32.mrf.mxu0
        %v5746 = vadd.f32 0.0, %v5745
        %5747 = vmatmul.f32.gmra.mxu0 %v5551
        %v5748 = vpop.f32.mrf.mxu0
        %v5749 = vadd.f32 0.0, %v5748
        %5750 = vmatmul.f32.gmra.mxu0 %v5552
        %v5751 = vpop.f32.mrf.mxu0
        %v5752 = vadd.f32 0.0, %v5751
        %5753 = vmatmul.f32.gmra.mxu0 %v5553
        %v5754 = vpop.f32.mrf.mxu0
        %v5755 = vadd.f32 0.0, %v5754
        %5756 = vmatmul.f32.gmra.mxu0 %v5554
        %v5757 = vpop.f32.mrf.mxu0
        %v5758 = vadd.f32 0.0, %v5757
        %5759 = vmatmul.f32.gmra.mxu0 %v5555
        %v5760 = vpop.f32.mrf.mxu0
        %v5761 = vadd.f32 0.0, %v5760
        %5762 = vmatmul.f32.gmra.mxu0 %v5556
        %v5763 = vpop.f32.mrf.mxu0
        %v5764 = vadd.f32 0.0, %v5763
        %5765 = vdwg.mxu0
        %5766 = vmatpush.msra.mxu0 %v5540
        %5767 = vmatpush.msra.mxu0 %v5539
        %5768 = vmatpush.msra.mxu0 %v5538
        %5769 = vmatpush.msra.mxu0 %v5537
        %5770 = vmatpush.msra.mxu0 %v5536
        %5771 = vmatpush.msra.mxu0 %v5535
        %5772 = vmatpush.msra.mxu0 %v5534
        %5773 = vmatpush.msra.mxu0 %v5533
        %5774 = vmatpush.msra.mxu0 %v5532
        %5775 = vmatpush.msra.mxu0 %v5531
        %5776 = vmatpush.msra.mxu0 %v5530
        %5777 = vmatpush.msra.mxu0 %v5529
        %5778 = vmatpush.msra.mxu0 %v5528
        %5779 = vmatpush.msra.mxu0 %v5527
        %5780 = vmatpush.msra.mxu0 %v5526
        %5781 = vmatpush.msra.mxu0 %v5525
        %5782 = vmatmul.f32.gmra.mxu0 %v5509
        %v5783 = vpop.f32.mrf.mxu0
        %v5784 = vadd.f32 %v5719, %v5783
        %5785 = vmatmul.f32.gmra.mxu0 %v5510
        %v5786 = vpop.f32.mrf.mxu0
        %v5787 = vadd.f32 %v5722, %v5786
        %5788 = vmatmul.f32.gmra.mxu0 %v5511
        %v5789 = vpop.f32.mrf.mxu0
        %v5790 = vadd.f32 %v5725, %v5789
        %5791 = vmatmul.f32.gmra.mxu0 %v5512
        %v5792 = vpop.f32.mrf.mxu0
        %v5793 = vadd.f32 %v5728, %v5792
        %5794 = vmatmul.f32.gmra.mxu0 %v5513
        %v5795 = vpop.f32.mrf.mxu0
        %v5796 = vadd.f32 %v5731, %v5795
        %5797 = vmatmul.f32.gmra.mxu0 %v5514
        %v5798 = vpop.f32.mrf.mxu0
        %v5799 = vadd.f32 %v5734, %v5798
        %5800 = vmatmul.f32.gmra.mxu0 %v5515
        %v5801 = vpop.f32.mrf.mxu0
        %v5802 = vadd.f32 %v5737, %v5801
        %5803 = vmatmul.f32.gmra.mxu0 %v5516
        %v5804 = vpop.f32.mrf.mxu0
        %v5805 = vadd.f32 %v5740, %v5804
        %5806 = vmatmul.f32.gmra.mxu0 %v5517
        %v5807 = vpop.f32.mrf.mxu0
        %v5808 = vadd.f32 %v5743, %v5807
        %5809 = vmatmul.f32.gmra.mxu0 %v5518
        %v5810 = vpop.f32.mrf.mxu0
        %v5811 = vadd.f32 %v5746, %v5810
        %5812 = vmatmul.f32.gmra.mxu0 %v5519
        %v5813 = vpop.f32.mrf.mxu0
        %v5814 = vadd.f32 %v5749, %v5813
        %5815 = vmatmul.f32.gmra.mxu0 %v5520
        %v5816 = vpop.f32.mrf.mxu0
        %v5817 = vadd.f32 %v5752, %v5816
        %5818 = vmatmul.f32.gmra.mxu0 %v5521
        %v5819 = vpop.f32.mrf.mxu0
        %v5820 = vadd.f32 %v5755, %v5819
        %5821 = vmatmul.f32.gmra.mxu0 %v5522
        %v5822 = vpop.f32.mrf.mxu0
        %v5823 = vadd.f32 %v5758, %v5822
        %5824 = vmatmul.f32.gmra.mxu0 %v5523
        %v5825 = vpop.f32.mrf.mxu0
        %v5826 = vadd.f32 %v5761, %v5825
        %5827 = vmatmul.f32.gmra.mxu0 %v5524
        %v5828 = vpop.f32.mrf.mxu0
        %v5829 = vadd.f32 %v5764, %v5828
        %5830 = vdwg.mxu0
        %v5831 = vld [vmem:[%s3737 + $0x80] sm:$0xff]
        %v5832 = vld [vmem:[%s3737 + $0x88] sm:$0xff]
        %v5833 = vld [vmem:[%s3737 + $0x90] sm:$0xff]
        %v5834 = vld [vmem:[%s3737 + $0x98] sm:$0xff]
        %v5835 = vld [vmem:[%s3737 + $0xa0] sm:$0xff]
        %v5836 = vld [vmem:[%s3737 + $0xa8] sm:$0xff]
        %v5837 = vld [vmem:[%s3737 + $0xb0] sm:$0xff]
        %v5838 = vld [vmem:[%s3737 + $0xb8] sm:$0xff]
        %v5839 = vld [vmem:[%s3737 + $0xc0] sm:$0xff]
        %v5840 = vld [vmem:[%s3737 + $0xc8] sm:$0xff]
        %v5841 = vld [vmem:[%s3737 + $0xd0] sm:$0xff]
        %v5842 = vld [vmem:[%s3737 + $0xd8] sm:$0xff]
        %v5843 = vld [vmem:[%s3737 + $0xe0] sm:$0xff]
        %v5844 = vld [vmem:[%s3737 + $0xe8] sm:$0xff]
        %v5845 = vld [vmem:[%s3737 + $0xf0] sm:$0xff]
        %v5846 = vld [vmem:[%s3737 + $0xf8] sm:$0xff]
        %5847 = vrot.lane.b32.xlu0 %v5525, 126
        %v5848 = vpop.permute.xlu0 %5847
        %5849 = vrot.lane.b32.xlu0 %v5557, 126
        %v5850 = vpop.permute.xlu0 %5849
        %5851 = vrot.lane.b32.xlu0 %v5526, 126
        %v5852 = vpop.permute.xlu0 %5851
        %5853 = vrot.lane.b32.xlu0 %v5558, 126
        %v5854 = vpop.permute.xlu0 %5853
        %5855 = vrot.lane.b32.xlu0 %v5527, 126
        %v5856 = vpop.permute.xlu0 %5855
        %5857 = vrot.lane.b32.xlu0 %v5559, 126
        %v5858 = vpop.permute.xlu0 %5857
        %5859 = vrot.lane.b32.xlu0 %v5528, 126
        %v5860 = vpop.permute.xlu0 %5859
        %5861 = vrot.lane.b32.xlu0 %v5560, 126
        %v5862 = vpop.permute.xlu0 %5861
        %5863 = vrot.lane.b32.xlu0 %v5529, 126
        %v5864 = vpop.permute.xlu0 %5863
        %5865 = vrot.lane.b32.xlu0 %v5561, 126
        %v5866 = vpop.permute.xlu0 %5865
        %5867 = vrot.lane.b32.xlu0 %v5530, 126
        %v5868 = vpop.permute.xlu0 %5867
        %5869 = vrot.lane.b32.xlu0 %v5562, 126
        %v5870 = vpop.permute.xlu0 %5869
        %5871 = vrot.lane.b32.xlu0 %v5531, 126
        %v5872 = vpop.permute.xlu0 %5871
        %5873 = vrot.lane.b32.xlu0 %v5563, 126
        %v5874 = vpop.permute.xlu0 %5873
        %5875 = vrot.lane.b32.xlu0 %v5532, 126
        %v5876 = vpop.permute.xlu0 %5875
        %5877 = vrot.lane.b32.xlu0 %v5564, 126
        %v5878 = vpop.permute.xlu0 %5877
        %5879 = vrot.lane.b32.xlu0 %v5533, 126
        %v5880 = vpop.permute.xlu0 %5879
        %5881 = vrot.lane.b32.xlu0 %v5565, 126
        %v5882 = vpop.permute.xlu0 %5881
        %5883 = vrot.lane.b32.xlu0 %v5534, 126
        %v5884 = vpop.permute.xlu0 %5883
        %5885 = vrot.lane.b32.xlu0 %v5566, 126
        %v5886 = vpop.permute.xlu0 %5885
        %5887 = vrot.lane.b32.xlu0 %v5535, 126
        %v5888 = vpop.permute.xlu0 %5887
        %5889 = vrot.lane.b32.xlu0 %v5567, 126
        %v5890 = vpop.permute.xlu0 %5889
        %5891 = vrot.lane.b32.xlu0 %v5536, 126
        %v5892 = vpop.permute.xlu0 %5891
        %5893 = vrot.lane.b32.xlu0 %v5568, 126
        %v5894 = vpop.permute.xlu0 %5893
        %5895 = vrot.lane.b32.xlu0 %v5537, 126
        %v5896 = vpop.permute.xlu0 %5895
        %5897 = vrot.lane.b32.xlu0 %v5569, 126
        %v5898 = vpop.permute.xlu0 %5897
        %5899 = vrot.lane.b32.xlu0 %v5538, 126
        %v5900 = vpop.permute.xlu0 %5899
        %5901 = vrot.lane.b32.xlu0 %v5570, 126
        %v5902 = vpop.permute.xlu0 %5901
        %5903 = vrot.lane.b32.xlu0 %v5539, 126
        %v5904 = vpop.permute.xlu0 %5903
        %5905 = vrot.lane.b32.xlu0 %v5571, 126
        %v5906 = vpop.permute.xlu0 %5905
        %5907 = vrot.lane.b32.xlu0 %v5540, 126
        %v5908 = vpop.permute.xlu0 %5907
        %5909 = vrot.lane.b32.xlu0 %v5572, 126
        %v5910 = vpop.permute.xlu0 %5909
        %v5911 = vsel %vm809, %v5848, %v5850
        %v5912 = vsel %vm809, %v5852, %v5854
        %v5913 = vsel %vm809, %v5856, %v5858
        %v5914 = vsel %vm809, %v5860, %v5862
        %v5915 = vsel %vm809, %v5864, %v5866
        %v5916 = vsel %vm809, %v5868, %v5870
        %v5917 = vsel %vm809, %v5872, %v5874
        %v5918 = vsel %vm809, %v5876, %v5878
        %v5919 = vsel %vm809, %v5880, %v5882
        %v5920 = vsel %vm809, %v5884, %v5886
        %v5921 = vsel %vm809, %v5888, %v5890
        %v5922 = vsel %vm809, %v5892, %v5894
        %v5923 = vsel %vm809, %v5896, %v5898
        %v5924 = vsel %vm809, %v5900, %v5902
        %v5925 = vsel %vm809, %v5904, %v5906
        %v5926 = vsel %vm809, %v5908, %v5910
        %5943 = vmatpush.msra.mxu0 %v5926
        %5944 = vmatpush.msra.mxu0 %v5925
        %5945 = vmatpush.msra.mxu0 %v5924
        %5946 = vmatpush.msra.mxu0 %v5923
        %5947 = vmatpush.msra.mxu0 %v5922
        %5948 = vmatpush.msra.mxu0 %v5921
        %5949 = vmatpush.msra.mxu0 %v5920
        %5950 = vmatpush.msra.mxu0 %v5919
        %5951 = vmatpush.msra.mxu0 %v5918
        %5952 = vmatpush.msra.mxu0 %v5917
        %5953 = vmatpush.msra.mxu0 %v5916
        %5954 = vmatpush.msra.mxu0 %v5915
        %5955 = vmatpush.msra.mxu0 %v5914
        %5956 = vmatpush.msra.mxu0 %v5913
        %5957 = vmatpush.msra.mxu0 %v5912
        %5958 = vmatpush.msra.mxu0 %v5911
        %5959 = vmatmul.f32.gmra.mxu0 %v5831
        %v5960 = vpop.f32.mrf.mxu0
        %v5961 = vadd.f32 0.0, %v5960
        %5962 = vmatmul.f32.gmra.mxu0 %v5832
        %v5963 = vpop.f32.mrf.mxu0
        %v5964 = vadd.f32 0.0, %v5963
        %5965 = vmatmul.f32.gmra.mxu0 %v5833
        %v5966 = vpop.f32.mrf.mxu0
        %v5967 = vadd.f32 0.0, %v5966
        %5968 = vmatmul.f32.gmra.mxu0 %v5834
        %v5969 = vpop.f32.mrf.mxu0
        %v5970 = vadd.f32 0.0, %v5969
        %5971 = vmatmul.f32.gmra.mxu0 %v5835
        %v5972 = vpop.f32.mrf.mxu0
        %v5973 = vadd.f32 0.0, %v5972
        %5974 = vmatmul.f32.gmra.mxu0 %v5836
        %v5975 = vpop.f32.mrf.mxu0
        %v5976 = vadd.f32 0.0, %v5975
        %5977 = vmatmul.f32.gmra.mxu0 %v5837
        %v5978 = vpop.f32.mrf.mxu0
        %v5979 = vadd.f32 0.0, %v5978
        %5980 = vmatmul.f32.gmra.mxu0 %v5838
        %v5981 = vpop.f32.mrf.mxu0
        %v5982 = vadd.f32 0.0, %v5981
        %5983 = vmatmul.f32.gmra.mxu0 %v5839
        %v5984 = vpop.f32.mrf.mxu0
        %v5985 = vadd.f32 0.0, %v5984
        %5986 = vmatmul.f32.gmra.mxu0 %v5840
        %v5987 = vpop.f32.mrf.mxu0
        %v5988 = vadd.f32 0.0, %v5987
        %5989 = vmatmul.f32.gmra.mxu0 %v5841
        %v5990 = vpop.f32.mrf.mxu0
        %v5991 = vadd.f32 0.0, %v5990
        %5992 = vmatmul.f32.gmra.mxu0 %v5842
        %v5993 = vpop.f32.mrf.mxu0
        %v5994 = vadd.f32 0.0, %v5993
        %5995 = vmatmul.f32.gmra.mxu0 %v5843
        %v5996 = vpop.f32.mrf.mxu0
        %v5997 = vadd.f32 0.0, %v5996
        %5998 = vmatmul.f32.gmra.mxu0 %v5844
        %v5999 = vpop.f32.mrf.mxu0
        %v6000 = vadd.f32 0.0, %v5999
        %6001 = vmatmul.f32.gmra.mxu0 %v5845
        %v6002 = vpop.f32.mrf.mxu0
        %v6003 = vadd.f32 0.0, %v6002
        %6004 = vmatmul.f32.gmra.mxu0 %v5846
        %v6005 = vpop.f32.mrf.mxu0
        %v6006 = vadd.f32 0.0, %v6005
        %6007 = vdwg.mxu0
        %v6008 = vadd.f32 %v5784, %v5961
        %v6009 = vadd.f32 %v5787, %v5964
        %v6010 = vadd.f32 %v5790, %v5967
        %v6011 = vadd.f32 %v5793, %v5970
        %v6012 = vadd.f32 %v5796, %v5973
        %v6013 = vadd.f32 %v5799, %v5976
        %v6014 = vadd.f32 %v5802, %v5979
        %v6015 = vadd.f32 %v5805, %v5982
        %v6016 = vadd.f32 %v5808, %v5985
        %v6017 = vadd.f32 %v5811, %v5988
        %v6018 = vadd.f32 %v5814, %v5991
        %v6019 = vadd.f32 %v5817, %v5994
        %v6020 = vadd.f32 %v5820, %v5997
        %v6021 = vadd.f32 %v5823, %v6000
        %v6022 = vadd.f32 %v5826, %v6003
        %v6023 = vadd.f32 %v5829, %v6006
        %v6024 = vld [vmem:[%s3931 + $0x80] sm:$0xff]
        %v6025 = vld [vmem:[%s3931 + $0x88] sm:$0xff]
        %v6026 = vld [vmem:[%s3931 + $0x90] sm:$0xff]
        %v6027 = vld [vmem:[%s3931 + $0x98] sm:$0xff]
        %v6028 = vld [vmem:[%s3931 + $0xa0] sm:$0xff]
        %v6029 = vld [vmem:[%s3931 + $0xa8] sm:$0xff]
        %v6030 = vld [vmem:[%s3931 + $0xb0] sm:$0xff]
        %v6031 = vld [vmem:[%s3931 + $0xb8] sm:$0xff]
        %v6032 = vld [vmem:[%s3931 + $0xc0] sm:$0xff]
        %v6033 = vld [vmem:[%s3931 + $0xc8] sm:$0xff]
        %v6034 = vld [vmem:[%s3931 + $0xd0] sm:$0xff]
        %v6035 = vld [vmem:[%s3931 + $0xd8] sm:$0xff]
        %v6036 = vld [vmem:[%s3931 + $0xe0] sm:$0xff]
        %v6037 = vld [vmem:[%s3931 + $0xe8] sm:$0xff]
        %v6038 = vld [vmem:[%s3931 + $0xf0] sm:$0xff]
        %v6039 = vld [vmem:[%s3931 + $0xf8] sm:$0xff]
        %6040 = vrot.lane.b32.xlu0 %v5525, 125
        %v6041 = vpop.permute.xlu0 %6040
        %6042 = vrot.lane.b32.xlu0 %v5557, 125
        %v6043 = vpop.permute.xlu0 %6042
        %6044 = vrot.lane.b32.xlu0 %v5526, 125
        %v6045 = vpop.permute.xlu0 %6044
        %6046 = vrot.lane.b32.xlu0 %v5558, 125
        %v6047 = vpop.permute.xlu0 %6046
        %6048 = vrot.lane.b32.xlu0 %v5527, 125
        %v6049 = vpop.permute.xlu0 %6048
        %6050 = vrot.lane.b32.xlu0 %v5559, 125
        %v6051 = vpop.permute.xlu0 %6050
        %6052 = vrot.lane.b32.xlu0 %v5528, 125
        %v6053 = vpop.permute.xlu0 %6052
        %6054 = vrot.lane.b32.xlu0 %v5560, 125
        %v6055 = vpop.permute.xlu0 %6054
        %6056 = vrot.lane.b32.xlu0 %v5529, 125
        %v6057 = vpop.permute.xlu0 %6056
        %6058 = vrot.lane.b32.xlu0 %v5561, 125
        %v6059 = vpop.permute.xlu0 %6058
        %6060 = vrot.lane.b32.xlu0 %v5530, 125
        %v6061 = vpop.permute.xlu0 %6060
        %6062 = vrot.lane.b32.xlu0 %v5562, 125
        %v6063 = vpop.permute.xlu0 %6062
        %6064 = vrot.lane.b32.xlu0 %v5531, 125
        %v6065 = vpop.permute.xlu0 %6064
        %6066 = vrot.lane.b32.xlu0 %v5563, 125
        %v6067 = vpop.permute.xlu0 %6066
        %6068 = vrot.lane.b32.xlu0 %v5532, 125
        %v6069 = vpop.permute.xlu0 %6068
        %6070 = vrot.lane.b32.xlu0 %v5564, 125
        %v6071 = vpop.permute.xlu0 %6070
        %6072 = vrot.lane.b32.xlu0 %v5533, 125
        %v6073 = vpop.permute.xlu0 %6072
        %6074 = vrot.lane.b32.xlu0 %v5565, 125
        %v6075 = vpop.permute.xlu0 %6074
        %6076 = vrot.lane.b32.xlu0 %v5534, 125
        %v6077 = vpop.permute.xlu0 %6076
        %6078 = vrot.lane.b32.xlu0 %v5566, 125
        %v6079 = vpop.permute.xlu0 %6078
        %6080 = vrot.lane.b32.xlu0 %v5535, 125
        %v6081 = vpop.permute.xlu0 %6080
        %6082 = vrot.lane.b32.xlu0 %v5567, 125
        %v6083 = vpop.permute.xlu0 %6082
        %6084 = vrot.lane.b32.xlu0 %v5536, 125
        %v6085 = vpop.permute.xlu0 %6084
        %6086 = vrot.lane.b32.xlu0 %v5568, 125
        %v6087 = vpop.permute.xlu0 %6086
        %6088 = vrot.lane.b32.xlu0 %v5537, 125
        %v6089 = vpop.permute.xlu0 %6088
        %6090 = vrot.lane.b32.xlu0 %v5569, 125
        %v6091 = vpop.permute.xlu0 %6090
        %6092 = vrot.lane.b32.xlu0 %v5538, 125
        %v6093 = vpop.permute.xlu0 %6092
        %6094 = vrot.lane.b32.xlu0 %v5570, 125
        %v6095 = vpop.permute.xlu0 %6094
        %6096 = vrot.lane.b32.xlu0 %v5539, 125
        %v6097 = vpop.permute.xlu0 %6096
        %6098 = vrot.lane.b32.xlu0 %v5571, 125
        %v6099 = vpop.permute.xlu0 %6098
        %6100 = vrot.lane.b32.xlu0 %v5540, 125
        %v6101 = vpop.permute.xlu0 %6100
        %6102 = vrot.lane.b32.xlu0 %v5572, 125
        %v6103 = vpop.permute.xlu0 %6102
        %v6104 = vsel %vm966, %v6041, %v6043
        %v6105 = vsel %vm966, %v6045, %v6047
        %v6106 = vsel %vm966, %v6049, %v6051
        %v6107 = vsel %vm966, %v6053, %v6055
        %v6108 = vsel %vm966, %v6057, %v6059
        %v6109 = vsel %vm966, %v6061, %v6063
        %v6110 = vsel %vm966, %v6065, %v6067
        %v6111 = vsel %vm966, %v6069, %v6071
        %v6112 = vsel %vm966, %v6073, %v6075
        %v6113 = vsel %vm966, %v6077, %v6079
        %v6114 = vsel %vm966, %v6081, %v6083
        %v6115 = vsel %vm966, %v6085, %v6087
        %v6116 = vsel %vm966, %v6089, %v6091
        %v6117 = vsel %vm966, %v6093, %v6095
        %v6118 = vsel %vm966, %v6097, %v6099
        %v6119 = vsel %vm966, %v6101, %v6103
        %6136 = vmatpush.msra.mxu0 %v6119
        %6137 = vmatpush.msra.mxu0 %v6118
        %6138 = vmatpush.msra.mxu0 %v6117
        %6139 = vmatpush.msra.mxu0 %v6116
        %6140 = vmatpush.msra.mxu0 %v6115
        %6141 = vmatpush.msra.mxu0 %v6114
        %6142 = vmatpush.msra.mxu0 %v6113
        %6143 = vmatpush.msra.mxu0 %v6112
        %6144 = vmatpush.msra.mxu0 %v6111
        %6145 = vmatpush.msra.mxu0 %v6110
        %6146 = vmatpush.msra.mxu0 %v6109
        %6147 = vmatpush.msra.mxu0 %v6108
        %6148 = vmatpush.msra.mxu0 %v6107
        %6149 = vmatpush.msra.mxu0 %v6106
        %6150 = vmatpush.msra.mxu0 %v6105
        %6151 = vmatpush.msra.mxu0 %v6104
        %6152 = vmatmul.f32.gmra.mxu0 %v6024
        %v6153 = vpop.f32.mrf.mxu0
        %v6154 = vadd.f32 0.0, %v6153
        %6155 = vmatmul.f32.gmra.mxu0 %v6025
        %v6156 = vpop.f32.mrf.mxu0
        %v6157 = vadd.f32 0.0, %v6156
        %6158 = vmatmul.f32.gmra.mxu0 %v6026
        %v6159 = vpop.f32.mrf.mxu0
        %v6160 = vadd.f32 0.0, %v6159
        %6161 = vmatmul.f32.gmra.mxu0 %v6027
        %v6162 = vpop.f32.mrf.mxu0
        %v6163 = vadd.f32 0.0, %v6162
        %6164 = vmatmul.f32.gmra.mxu0 %v6028
        %v6165 = vpop.f32.mrf.mxu0
        %v6166 = vadd.f32 0.0, %v6165
        %6167 = vmatmul.f32.gmra.mxu0 %v6029
        %v6168 = vpop.f32.mrf.mxu0
        %v6169 = vadd.f32 0.0, %v6168
        %6170 = vmatmul.f32.gmra.mxu0 %v6030
        %v6171 = vpop.f32.mrf.mxu0
        %v6172 = vadd.f32 0.0, %v6171
        %6173 = vmatmul.f32.gmra.mxu0 %v6031
        %v6174 = vpop.f32.mrf.mxu0
        %v6175 = vadd.f32 0.0, %v6174
        %6176 = vmatmul.f32.gmra.mxu0 %v6032
        %v6177 = vpop.f32.mrf.mxu0
        %v6178 = vadd.f32 0.0, %v6177
        %6179 = vmatmul.f32.gmra.mxu0 %v6033
        %v6180 = vpop.f32.mrf.mxu0
        %v6181 = vadd.f32 0.0, %v6180
        %6182 = vmatmul.f32.gmra.mxu0 %v6034
        %v6183 = vpop.f32.mrf.mxu0
        %v6184 = vadd.f32 0.0, %v6183
        %6185 = vmatmul.f32.gmra.mxu0 %v6035
        %v6186 = vpop.f32.mrf.mxu0
        %v6187 = vadd.f32 0.0, %v6186
        %6188 = vmatmul.f32.gmra.mxu0 %v6036
        %v6189 = vpop.f32.mrf.mxu0
        %v6190 = vadd.f32 0.0, %v6189
        %6191 = vmatmul.f32.gmra.mxu0 %v6037
        %v6192 = vpop.f32.mrf.mxu0
        %v6193 = vadd.f32 0.0, %v6192
        %6194 = vmatmul.f32.gmra.mxu0 %v6038
        %v6195 = vpop.f32.mrf.mxu0
        %v6196 = vadd.f32 0.0, %v6195
        %6197 = vmatmul.f32.gmra.mxu0 %v6039
        %v6198 = vpop.f32.mrf.mxu0
        %v6199 = vadd.f32 0.0, %v6198
        %6200 = vdwg.mxu0
        %v6201 = vadd.f32 %v6008, %v6154
        %v6202 = vadd.f32 %v6009, %v6157
        %v6203 = vadd.f32 %v6010, %v6160
        %v6204 = vadd.f32 %v6011, %v6163
        %v6205 = vadd.f32 %v6012, %v6166
        %v6206 = vadd.f32 %v6013, %v6169
        %v6207 = vadd.f32 %v6014, %v6172
        %v6208 = vadd.f32 %v6015, %v6175
        %v6209 = vadd.f32 %v6016, %v6178
        %v6210 = vadd.f32 %v6017, %v6181
        %v6211 = vadd.f32 %v6018, %v6184
        %v6212 = vadd.f32 %v6019, %v6187
        %v6213 = vadd.f32 %v6020, %v6190
        %v6214 = vadd.f32 %v6021, %v6193
        %v6215 = vadd.f32 %v6022, %v6196
        %v6216 = vadd.f32 %v6023, %v6199
        %v6217 = vld [vmem:[%s4125 + $0x80] sm:$0xff]
        %v6218 = vld [vmem:[%s4125 + $0x88] sm:$0xff]
        %v6219 = vld [vmem:[%s4125 + $0x90] sm:$0xff]
        %v6220 = vld [vmem:[%s4125 + $0x98] sm:$0xff]
        %v6221 = vld [vmem:[%s4125 + $0xa0] sm:$0xff]
        %v6222 = vld [vmem:[%s4125 + $0xa8] sm:$0xff]
        %v6223 = vld [vmem:[%s4125 + $0xb0] sm:$0xff]
        %v6224 = vld [vmem:[%s4125 + $0xb8] sm:$0xff]
        %v6225 = vld [vmem:[%s4125 + $0xc0] sm:$0xff]
        %v6226 = vld [vmem:[%s4125 + $0xc8] sm:$0xff]
        %v6227 = vld [vmem:[%s4125 + $0xd0] sm:$0xff]
        %v6228 = vld [vmem:[%s4125 + $0xd8] sm:$0xff]
        %v6229 = vld [vmem:[%s4125 + $0xe0] sm:$0xff]
        %v6230 = vld [vmem:[%s4125 + $0xe8] sm:$0xff]
        %v6231 = vld [vmem:[%s4125 + $0xf0] sm:$0xff]
        %v6232 = vld [vmem:[%s4125 + $0xf8] sm:$0xff]
        %6233 = vrot.lane.b32.xlu0 %v5525, 124
        %v6234 = vpop.permute.xlu0 %6233
        %6235 = vrot.lane.b32.xlu0 %v5557, 124
        %v6236 = vpop.permute.xlu0 %6235
        %6237 = vrot.lane.b32.xlu0 %v5526, 124
        %v6238 = vpop.permute.xlu0 %6237
        %6239 = vrot.lane.b32.xlu0 %v5558, 124
        %v6240 = vpop.permute.xlu0 %6239
        %6241 = vrot.lane.b32.xlu0 %v5527, 124
        %v6242 = vpop.permute.xlu0 %6241
        %6243 = vrot.lane.b32.xlu0 %v5559, 124
        %v6244 = vpop.permute.xlu0 %6243
        %6245 = vrot.lane.b32.xlu0 %v5528, 124
        %v6246 = vpop.permute.xlu0 %6245
        %6247 = vrot.lane.b32.xlu0 %v5560, 124
        %v6248 = vpop.permute.xlu0 %6247
        %6249 = vrot.lane.b32.xlu0 %v5529, 124
        %v6250 = vpop.permute.xlu0 %6249
        %6251 = vrot.lane.b32.xlu0 %v5561, 124
        %v6252 = vpop.permute.xlu0 %6251
        %6253 = vrot.lane.b32.xlu0 %v5530, 124
        %v6254 = vpop.permute.xlu0 %6253
        %6255 = vrot.lane.b32.xlu0 %v5562, 124
        %v6256 = vpop.permute.xlu0 %6255
        %6257 = vrot.lane.b32.xlu0 %v5531, 124
        %v6258 = vpop.permute.xlu0 %6257
        %6259 = vrot.lane.b32.xlu0 %v5563, 124
        %v6260 = vpop.permute.xlu0 %6259
        %6261 = vrot.lane.b32.xlu0 %v5532, 124
        %v6262 = vpop.permute.xlu0 %6261
        %6263 = vrot.lane.b32.xlu0 %v5564, 124
        %v6264 = vpop.permute.xlu0 %6263
        %6265 = vrot.lane.b32.xlu0 %v5533, 124
        %v6266 = vpop.permute.xlu0 %6265
        %6267 = vrot.lane.b32.xlu0 %v5565, 124
        %v6268 = vpop.permute.xlu0 %6267
        %6269 = vrot.lane.b32.xlu0 %v5534, 124
        %v6270 = vpop.permute.xlu0 %6269
        %6271 = vrot.lane.b32.xlu0 %v5566, 124
        %v6272 = vpop.permute.xlu0 %6271
        %6273 = vrot.lane.b32.xlu0 %v5535, 124
        %v6274 = vpop.permute.xlu0 %6273
        %6275 = vrot.lane.b32.xlu0 %v5567, 124
        %v6276 = vpop.permute.xlu0 %6275
        %6277 = vrot.lane.b32.xlu0 %v5536, 124
        %v6278 = vpop.permute.xlu0 %6277
        %6279 = vrot.lane.b32.xlu0 %v5568, 124
        %v6280 = vpop.permute.xlu0 %6279
        %6281 = vrot.lane.b32.xlu0 %v5537, 124
        %v6282 = vpop.permute.xlu0 %6281
        %6283 = vrot.lane.b32.xlu0 %v5569, 124
        %v6284 = vpop.permute.xlu0 %6283
        %6285 = vrot.lane.b32.xlu0 %v5538, 124
        %v6286 = vpop.permute.xlu0 %6285
        %6287 = vrot.lane.b32.xlu0 %v5570, 124
        %v6288 = vpop.permute.xlu0 %6287
        %6289 = vrot.lane.b32.xlu0 %v5539, 124
        %v6290 = vpop.permute.xlu0 %6289
        %6291 = vrot.lane.b32.xlu0 %v5571, 124
        %v6292 = vpop.permute.xlu0 %6291
        %6293 = vrot.lane.b32.xlu0 %v5540, 124
        %v6294 = vpop.permute.xlu0 %6293
        %6295 = vrot.lane.b32.xlu0 %v5572, 124
        %v6296 = vpop.permute.xlu0 %6295
        %v6297 = vsel %vm1123, %v6234, %v6236
        %v6298 = vsel %vm1123, %v6238, %v6240
        %v6299 = vsel %vm1123, %v6242, %v6244
        %v6300 = vsel %vm1123, %v6246, %v6248
        %v6301 = vsel %vm1123, %v6250, %v6252
        %v6302 = vsel %vm1123, %v6254, %v6256
        %v6303 = vsel %vm1123, %v6258, %v6260
        %v6304 = vsel %vm1123, %v6262, %v6264
        %v6305 = vsel %vm1123, %v6266, %v6268
        %v6306 = vsel %vm1123, %v6270, %v6272
        %v6307 = vsel %vm1123, %v6274, %v6276
        %v6308 = vsel %vm1123, %v6278, %v6280
        %v6309 = vsel %vm1123, %v6282, %v6284
        %v6310 = vsel %vm1123, %v6286, %v6288
        %v6311 = vsel %vm1123, %v6290, %v6292
        %v6312 = vsel %vm1123, %v6294, %v6296
        %6329 = vmatpush.msra.mxu0 %v6312
        %6330 = vmatpush.msra.mxu0 %v6311
        %6331 = vmatpush.msra.mxu0 %v6310
        %6332 = vmatpush.msra.mxu0 %v6309
        %6333 = vmatpush.msra.mxu0 %v6308
        %6334 = vmatpush.msra.mxu0 %v6307
        %6335 = vmatpush.msra.mxu0 %v6306
        %6336 = vmatpush.msra.mxu0 %v6305
        %6337 = vmatpush.msra.mxu0 %v6304
        %6338 = vmatpush.msra.mxu0 %v6303
        %6339 = vmatpush.msra.mxu0 %v6302
        %6340 = vmatpush.msra.mxu0 %v6301
        %6341 = vmatpush.msra.mxu0 %v6300
        %6342 = vmatpush.msra.mxu0 %v6299
        %6343 = vmatpush.msra.mxu0 %v6298
        %6344 = vmatpush.msra.mxu0 %v6297
        %6345 = vmatmul.f32.gmra.mxu0 %v6217
        %v6346 = vpop.f32.mrf.mxu0
        %v6347 = vadd.f32 0.0, %v6346
        %6348 = vmatmul.f32.gmra.mxu0 %v6218
        %v6349 = vpop.f32.mrf.mxu0
        %v6350 = vadd.f32 0.0, %v6349
        %6351 = vmatmul.f32.gmra.mxu0 %v6219
        %v6352 = vpop.f32.mrf.mxu0
        %v6353 = vadd.f32 0.0, %v6352
        %6354 = vmatmul.f32.gmra.mxu0 %v6220
        %v6355 = vpop.f32.mrf.mxu0
        %v6356 = vadd.f32 0.0, %v6355
        %6357 = vmatmul.f32.gmra.mxu0 %v6221
        %v6358 = vpop.f32.mrf.mxu0
        %v6359 = vadd.f32 0.0, %v6358
        %6360 = vmatmul.f32.gmra.mxu0 %v6222
        %v6361 = vpop.f32.mrf.mxu0
        %v6362 = vadd.f32 0.0, %v6361
        %6363 = vmatmul.f32.gmra.mxu0 %v6223
        %v6364 = vpop.f32.mrf.mxu0
        %v6365 = vadd.f32 0.0, %v6364
        %6366 = vmatmul.f32.gmra.mxu0 %v6224
        %v6367 = vpop.f32.mrf.mxu0
        %v6368 = vadd.f32 0.0, %v6367
        %6369 = vmatmul.f32.gmra.mxu0 %v6225
        %v6370 = vpop.f32.mrf.mxu0
        %v6371 = vadd.f32 0.0, %v6370
        %6372 = vmatmul.f32.gmra.mxu0 %v6226
        %v6373 = vpop.f32.mrf.mxu0
        %v6374 = vadd.f32 0.0, %v6373
        %6375 = vmatmul.f32.gmra.mxu0 %v6227
        %v6376 = vpop.f32.mrf.mxu0
        %v6377 = vadd.f32 0.0, %v6376
        %6378 = vmatmul.f32.gmra.mxu0 %v6228
        %v6379 = vpop.f32.mrf.mxu0
        %v6380 = vadd.f32 0.0, %v6379
        %6381 = vmatmul.f32.gmra.mxu0 %v6229
        %v6382 = vpop.f32.mrf.mxu0
        %v6383 = vadd.f32 0.0, %v6382
        %6384 = vmatmul.f32.gmra.mxu0 %v6230
        %v6385 = vpop.f32.mrf.mxu0
        %v6386 = vadd.f32 0.0, %v6385
        %6387 = vmatmul.f32.gmra.mxu0 %v6231
        %v6388 = vpop.f32.mrf.mxu0
        %v6389 = vadd.f32 0.0, %v6388
        %6390 = vmatmul.f32.gmra.mxu0 %v6232
        %v6391 = vpop.f32.mrf.mxu0
        %v6392 = vadd.f32 0.0, %v6391
        %6393 = vdwg.mxu0
        %v6394 = vadd.f32 %v6201, %v6347
        %v6395 = vadd.f32 %v6202, %v6350
        %v6396 = vadd.f32 %v6203, %v6353
        %v6397 = vadd.f32 %v6204, %v6356
        %v6398 = vadd.f32 %v6205, %v6359
        %v6399 = vadd.f32 %v6206, %v6362
        %v6400 = vadd.f32 %v6207, %v6365
        %v6401 = vadd.f32 %v6208, %v6368
        %v6402 = vadd.f32 %v6209, %v6371
        %v6403 = vadd.f32 %v6210, %v6374
        %v6404 = vadd.f32 %v6211, %v6377
        %v6405 = vadd.f32 %v6212, %v6380
        %v6406 = vadd.f32 %v6213, %v6383
        %v6407 = vadd.f32 %v6214, %v6386
        %v6408 = vadd.f32 %v6215, %v6389
        %v6409 = vadd.f32 %v6216, %v6392
        %v6410 = vld [vmem:[%s5 + $0x80] sm:$0xff]
        %v6411 = vld [vmem:[%s5 + $0x88] sm:$0xff]
        %v6412 = vld [vmem:[%s5 + $0x90] sm:$0xff]
        %v6413 = vld [vmem:[%s5 + $0x98] sm:$0xff]
        %v6414 = vld [vmem:[%s5 + $0xa0] sm:$0xff]
        %v6415 = vld [vmem:[%s5 + $0xa8] sm:$0xff]
        %v6416 = vld [vmem:[%s5 + $0xb0] sm:$0xff]
        %v6417 = vld [vmem:[%s5 + $0xb8] sm:$0xff]
        %v6418 = vld [vmem:[%s5 + $0xc0] sm:$0xff]
        %v6419 = vld [vmem:[%s5 + $0xc8] sm:$0xff]
        %v6420 = vld [vmem:[%s5 + $0xd0] sm:$0xff]
        %v6421 = vld [vmem:[%s5 + $0xd8] sm:$0xff]
        %v6422 = vld [vmem:[%s5 + $0xe0] sm:$0xff]
        %v6423 = vld [vmem:[%s5 + $0xe8] sm:$0xff]
        %v6424 = vld [vmem:[%s5 + $0xf0] sm:$0xff]
        %v6425 = vld [vmem:[%s5 + $0xf8] sm:$0xff]
        %6427 = vset.pattern.permute.xlu0 0
        %6428 = vperm.xlu0 %6427, %v6410
        %v6429 = vpop.permute.xlu0 %6428
        %6432 = vset.pattern.permute.xlu0 0
        %6433 = vperm.xlu0 %6432, %v6411
        %v6434 = vpop.permute.xlu0 %6433
        %6437 = vset.pattern.permute.xlu0 0
        %6438 = vperm.xlu0 %6437, %v6412
        %v6439 = vpop.permute.xlu0 %6438
        %6442 = vset.pattern.permute.xlu0 0
        %6443 = vperm.xlu0 %6442, %v6413
        %v6444 = vpop.permute.xlu0 %6443
        %6447 = vset.pattern.permute.xlu0 0
        %6448 = vperm.xlu0 %6447, %v6414
        %v6449 = vpop.permute.xlu0 %6448
        %6452 = vset.pattern.permute.xlu0 0
        %6453 = vperm.xlu0 %6452, %v6415
        %v6454 = vpop.permute.xlu0 %6453
        %6457 = vset.pattern.permute.xlu0 0
        %6458 = vperm.xlu0 %6457, %v6416
        %v6459 = vpop.permute.xlu0 %6458
        %6462 = vset.pattern.permute.xlu0 0
        %6463 = vperm.xlu0 %6462, %v6417
        %v6464 = vpop.permute.xlu0 %6463
        %6467 = vset.pattern.permute.xlu0 0
        %6468 = vperm.xlu0 %6467, %v6418
        %v6469 = vpop.permute.xlu0 %6468
        %6472 = vset.pattern.permute.xlu0 0
        %6473 = vperm.xlu0 %6472, %v6419
        %v6474 = vpop.permute.xlu0 %6473
        %6477 = vset.pattern.permute.xlu0 0
        %6478 = vperm.xlu0 %6477, %v6420
        %v6479 = vpop.permute.xlu0 %6478
        %6482 = vset.pattern.permute.xlu0 0
        %6483 = vperm.xlu0 %6482, %v6421
        %v6484 = vpop.permute.xlu0 %6483
        %6487 = vset.pattern.permute.xlu0 0
        %6488 = vperm.xlu0 %6487, %v6422
        %v6489 = vpop.permute.xlu0 %6488
        %6492 = vset.pattern.permute.xlu0 0
        %6493 = vperm.xlu0 %6492, %v6423
        %v6494 = vpop.permute.xlu0 %6493
        %6497 = vset.pattern.permute.xlu0 0
        %6498 = vperm.xlu0 %6497, %v6424
        %v6499 = vpop.permute.xlu0 %6498
        %6502 = vset.pattern.permute.xlu0 0
        %6503 = vperm.xlu0 %6502, %v6425
        %v6504 = vpop.permute.xlu0 %6503
        %v6506 = vmul.f32 %v6394, %v6429
        %v6507 = vmul.f32 %v6395, %v6434
        %v6508 = vmul.f32 %v6396, %v6439
        %v6509 = vmul.f32 %v6397, %v6444
        %v6510 = vmul.f32 %v6398, %v6449
        %v6511 = vmul.f32 %v6399, %v6454
        %v6512 = vmul.f32 %v6400, %v6459
        %v6513 = vmul.f32 %v6401, %v6464
        %v6514 = vmul.f32 %v6402, %v6469
        %v6515 = vmul.f32 %v6403, %v6474
        %v6516 = vmul.f32 %v6404, %v6479
        %v6517 = vmul.f32 %v6405, %v6484
        %v6518 = vmul.f32 %v6406, %v6489
        %v6519 = vmul.f32 %v6407, %v6494
        %v6520 = vmul.f32 %v6408, %v6499
        %v6521 = vmul.f32 %v6409, %v6504
        %v6522 = vld [vmem:[%s6 + $0x80] sm:$0xff]
        %v6523 = vld [vmem:[%s6 + $0x88] sm:$0xff]
        %v6524 = vld [vmem:[%s6 + $0x90] sm:$0xff]
        %v6525 = vld [vmem:[%s6 + $0x98] sm:$0xff]
        %v6526 = vld [vmem:[%s6 + $0xa0] sm:$0xff]
        %v6527 = vld [vmem:[%s6 + $0xa8] sm:$0xff]
        %v6528 = vld [vmem:[%s6 + $0xb0] sm:$0xff]
        %v6529 = vld [vmem:[%s6 + $0xb8] sm:$0xff]
        %v6530 = vld [vmem:[%s6 + $0xc0] sm:$0xff]
        %v6531 = vld [vmem:[%s6 + $0xc8] sm:$0xff]
        %v6532 = vld [vmem:[%s6 + $0xd0] sm:$0xff]
        %v6533 = vld [vmem:[%s6 + $0xd8] sm:$0xff]
        %v6534 = vld [vmem:[%s6 + $0xe0] sm:$0xff]
        %v6535 = vld [vmem:[%s6 + $0xe8] sm:$0xff]
        %v6536 = vld [vmem:[%s6 + $0xf0] sm:$0xff]
        %v6537 = vld [vmem:[%s6 + $0xf8] sm:$0xff]
        %6539 = vset.pattern.permute.xlu0 0
        %6540 = vperm.xlu0 %6539, %v6522
        %v6541 = vpop.permute.xlu0 %6540
        %6544 = vset.pattern.permute.xlu0 0
        %6545 = vperm.xlu0 %6544, %v6523
        %v6546 = vpop.permute.xlu0 %6545
        %6549 = vset.pattern.permute.xlu0 0
        %6550 = vperm.xlu0 %6549, %v6524
        %v6551 = vpop.permute.xlu0 %6550
        %6554 = vset.pattern.permute.xlu0 0
        %6555 = vperm.xlu0 %6554, %v6525
        %v6556 = vpop.permute.xlu0 %6555
        %6559 = vset.pattern.permute.xlu0 0
        %6560 = vperm.xlu0 %6559, %v6526
        %v6561 = vpop.permute.xlu0 %6560
        %6564 = vset.pattern.permute.xlu0 0
        %6565 = vperm.xlu0 %6564, %v6527
        %v6566 = vpop.permute.xlu0 %6565
        %6569 = vset.pattern.permute.xlu0 0
        %6570 = vperm.xlu0 %6569, %v6528
        %v6571 = vpop.permute.xlu0 %6570
        %6574 = vset.pattern.permute.xlu0 0
        %6575 = vperm.xlu0 %6574, %v6529
        %v6576 = vpop.permute.xlu0 %6575
        %6579 = vset.pattern.permute.xlu0 0
        %6580 = vperm.xlu0 %6579, %v6530
        %v6581 = vpop.permute.xlu0 %6580
        %6584 = vset.pattern.permute.xlu0 0
        %6585 = vperm.xlu0 %6584, %v6531
        %v6586 = vpop.permute.xlu0 %6585
        %6589 = vset.pattern.permute.xlu0 0
        %6590 = vperm.xlu0 %6589, %v6532
        %v6591 = vpop.permute.xlu0 %6590
        %6594 = vset.pattern.permute.xlu0 0
        %6595 = vperm.xlu0 %6594, %v6533
        %v6596 = vpop.permute.xlu0 %6595
        %6599 = vset.pattern.permute.xlu0 0
        %6600 = vperm.xlu0 %6599, %v6534
        %v6601 = vpop.permute.xlu0 %6600
        %6604 = vset.pattern.permute.xlu0 0
        %6605 = vperm.xlu0 %6604, %v6535
        %v6606 = vpop.permute.xlu0 %6605
        %6609 = vset.pattern.permute.xlu0 0
        %6610 = vperm.xlu0 %6609, %v6536
        %v6611 = vpop.permute.xlu0 %6610
        %6614 = vset.pattern.permute.xlu0 0
        %6615 = vperm.xlu0 %6614, %v6537
        %v6616 = vpop.permute.xlu0 %6615
        %v6618 = vadd.f32 %v6506, %v6541
        %v6619 = vadd.f32 %v6507, %v6546
        %v6620 = vadd.f32 %v6508, %v6551
        %v6621 = vadd.f32 %v6509, %v6556
        %v6622 = vadd.f32 %v6510, %v6561
        %v6623 = vadd.f32 %v6511, %v6566
        %v6624 = vadd.f32 %v6512, %v6571
        %v6625 = vadd.f32 %v6513, %v6576
        %v6626 = vadd.f32 %v6514, %v6581
        %v6627 = vadd.f32 %v6515, %v6586
        %v6628 = vadd.f32 %v6516, %v6591
        %v6629 = vadd.f32 %v6517, %v6596
        %v6630 = vadd.f32 %v6518, %v6601
        %v6631 = vadd.f32 %v6519, %v6606
        %v6632 = vadd.f32 %v6520, %v6611
        %v6633 = vadd.f32 %v6521, %v6616
        %v6634 = vmax.f32 %v6618, 0.0
        %v6635 = vmax.f32 %v6619, 0.0
        %v6636 = vmax.f32 %v6620, 0.0
        %v6637 = vmax.f32 %v6621, 0.0
        %v6638 = vmax.f32 %v6622, 0.0
        %v6639 = vmax.f32 %v6623, 0.0
        %v6640 = vmax.f32 %v6624, 0.0
        %v6641 = vmax.f32 %v6625, 0.0
        %v6642 = vmax.f32 %v6626, 0.0
        %v6643 = vmax.f32 %v6627, 0.0
        %v6644 = vmax.f32 %v6628, 0.0
        %v6645 = vmax.f32 %v6629, 0.0
        %v6646 = vmax.f32 %v6630, 0.0
        %v6647 = vmax.f32 %v6631, 0.0
        %v6648 = vmax.f32 %v6632, 0.0
        %v6649 = vmax.f32 %v6633, 0.0
        %6650 = vst [vmem:[#allocation3 + $0x100] sm:$0xff] %v6634
        %6651 = vst [vmem:[#allocation3 + $0x110] sm:$0xff] %v6635
        %6652 = vst [vmem:[#allocation3 + $0x120] sm:$0xff] %v6636
        %6653 = vst [vmem:[#allocation3 + $0x130] sm:$0xff] %v6637
        %6654 = vst [vmem:[#allocation3 + $0x140] sm:$0xff] %v6638
        %6655 = vst [vmem:[#allocation3 + $0x150] sm:$0xff] %v6639
        %6656 = vst [vmem:[#allocation3 + $0x160] sm:$0xff] %v6640
        %6657 = vst [vmem:[#allocation3 + $0x170] sm:$0xff] %v6641
        %6658 = vst [vmem:[#allocation3 + $0x180] sm:$0xff] %v6642
        %6659 = vst [vmem:[#allocation3 + $0x190] sm:$0xff] %v6643
        %6660 = vst [vmem:[#allocation3 + $0x1a0] sm:$0xff] %v6644
        %6661 = vst [vmem:[#allocation3 + $0x1b0] sm:$0xff] %v6645
        %6662 = vst [vmem:[#allocation3 + $0x1c0] sm:$0xff] %v6646
        %6663 = vst [vmem:[#allocation3 + $0x1d0] sm:$0xff] %v6647
        %6664 = vst [vmem:[#allocation3 + $0x1e0] sm:$0xff] %v6648
        %6665 = vst [vmem:[#allocation3 + $0x1f0] sm:$0xff] %v6649
        %v6666 = vld [vmem:[%s4 + $0x80] sm:$0xff]
        %v6667 = vld [vmem:[%s4 + $0x88] sm:$0xff]
        %v6668 = vld [vmem:[%s4 + $0x90] sm:$0xff]
        %v6669 = vld [vmem:[%s4 + $0x98] sm:$0xff]
        %v6670 = vld [vmem:[%s4 + $0xa0] sm:$0xff]
        %v6671 = vld [vmem:[%s4 + $0xa8] sm:$0xff]
        %v6672 = vld [vmem:[%s4 + $0xb0] sm:$0xff]
        %v6673 = vld [vmem:[%s4 + $0xb8] sm:$0xff]
        %v6674 = vld [vmem:[%s4 + $0xc0] sm:$0xff]
        %v6675 = vld [vmem:[%s4 + $0xc8] sm:$0xff]
        %v6676 = vld [vmem:[%s4 + $0xd0] sm:$0xff]
        %v6677 = vld [vmem:[%s4 + $0xd8] sm:$0xff]
        %v6678 = vld [vmem:[%s4 + $0xe0] sm:$0xff]
        %v6679 = vld [vmem:[%s4 + $0xe8] sm:$0xff]
        %v6680 = vld [vmem:[%s4 + $0xf0] sm:$0xff]
        %v6681 = vld [vmem:[%s4 + $0xf8] sm:$0xff]
        %v6682 = vld [vmem:[#allocation2 + $0x8] sm:$0xff]
        %v6683 = vld [vmem:[#allocation2 + $0x18] sm:$0xff]
        %v6684 = vld [vmem:[#allocation2 + $0x28] sm:$0xff]
        %v6685 = vld [vmem:[#allocation2 + $0x38] sm:$0xff]
        %v6686 = vld [vmem:[#allocation2 + $0x48] sm:$0xff]
        %v6687 = vld [vmem:[#allocation2 + $0x58] sm:$0xff]
        %v6688 = vld [vmem:[#allocation2 + $0x68] sm:$0xff]
        %v6689 = vld [vmem:[#allocation2 + $0x78] sm:$0xff]
        %v6690 = vld [vmem:[#allocation2 + $0x88] sm:$0xff]
        %v6691 = vld [vmem:[#allocation2 + $0x98] sm:$0xff]
        %v6692 = vld [vmem:[#allocation2 + $0xa8] sm:$0xff]
        %v6693 = vld [vmem:[#allocation2 + $0xb8] sm:$0xff]
        %v6694 = vld [vmem:[#allocation2 + $0xc8] sm:$0xff]
        %v6695 = vld [vmem:[#allocation2 + $0xd8] sm:$0xff]
        %v6696 = vld [vmem:[#allocation2 + $0xe8] sm:$0xff]
        %v6697 = vld [vmem:[#allocation2 + $0xf8] sm:$0xff]
        %v6698 = vld [vmem:[%s3446 + $0x80] sm:$0xff]
        %v6699 = vld [vmem:[%s3446 + $0x88] sm:$0xff]
        %v6700 = vld [vmem:[%s3446 + $0x90] sm:$0xff]
        %v6701 = vld [vmem:[%s3446 + $0x98] sm:$0xff]
        %v6702 = vld [vmem:[%s3446 + $0xa0] sm:$0xff]
        %v6703 = vld [vmem:[%s3446 + $0xa8] sm:$0xff]
        %v6704 = vld [vmem:[%s3446 + $0xb0] sm:$0xff]
        %v6705 = vld [vmem:[%s3446 + $0xb8] sm:$0xff]
        %v6706 = vld [vmem:[%s3446 + $0xc0] sm:$0xff]
        %v6707 = vld [vmem:[%s3446 + $0xc8] sm:$0xff]
        %v6708 = vld [vmem:[%s3446 + $0xd0] sm:$0xff]
        %v6709 = vld [vmem:[%s3446 + $0xd8] sm:$0xff]
        %v6710 = vld [vmem:[%s3446 + $0xe0] sm:$0xff]
        %v6711 = vld [vmem:[%s3446 + $0xe8] sm:$0xff]
        %v6712 = vld [vmem:[%s3446 + $0xf0] sm:$0xff]
        %v6713 = vld [vmem:[%s3446 + $0xf8] sm:$0xff]
        %6730 = vrot.lane.b32.xlu0 %v6682, 127
        %v6731 = vpop.permute.xlu0 %6730
        %6732 = vrot.lane.b32.xlu0 %v6683, 127
        %v6733 = vpop.permute.xlu0 %6732
        %6734 = vrot.lane.b32.xlu0 %v6684, 127
        %v6735 = vpop.permute.xlu0 %6734
        %6736 = vrot.lane.b32.xlu0 %v6685, 127
        %v6737 = vpop.permute.xlu0 %6736
        %6738 = vrot.lane.b32.xlu0 %v6686, 127
        %v6739 = vpop.permute.xlu0 %6738
        %6740 = vrot.lane.b32.xlu0 %v6687, 127
        %v6741 = vpop.permute.xlu0 %6740
        %6742 = vrot.lane.b32.xlu0 %v6688, 127
        %v6743 = vpop.permute.xlu0 %6742
        %6744 = vrot.lane.b32.xlu0 %v6689, 127
        %v6745 = vpop.permute.xlu0 %6744
        %6746 = vrot.lane.b32.xlu0 %v6690, 127
        %v6747 = vpop.permute.xlu0 %6746
        %6748 = vrot.lane.b32.xlu0 %v6691, 127
        %v6749 = vpop.permute.xlu0 %6748
        %6750 = vrot.lane.b32.xlu0 %v6692, 127
        %v6751 = vpop.permute.xlu0 %6750
        %6752 = vrot.lane.b32.xlu0 %v6693, 127
        %v6753 = vpop.permute.xlu0 %6752
        %6754 = vrot.lane.b32.xlu0 %v6694, 127
        %v6755 = vpop.permute.xlu0 %6754
        %6756 = vrot.lane.b32.xlu0 %v6695, 127
        %v6757 = vpop.permute.xlu0 %6756
        %6758 = vrot.lane.b32.xlu0 %v6696, 127
        %v6759 = vpop.permute.xlu0 %6758
        %6760 = vrot.lane.b32.xlu0 %v6697, 127
        %v6761 = vpop.permute.xlu0 %6760
        %6778 = vmatpush.msra.mxu0 %v6761
        %6779 = vmatpush.msra.mxu0 %v6759
        %6780 = vmatpush.msra.mxu0 %v6757
        %6781 = vmatpush.msra.mxu0 %v6755
        %6782 = vmatpush.msra.mxu0 %v6753
        %6783 = vmatpush.msra.mxu0 %v6751
        %6784 = vmatpush.msra.mxu0 %v6749
        %6785 = vmatpush.msra.mxu0 %v6747
        %6786 = vmatpush.msra.mxu0 %v6745
        %6787 = vmatpush.msra.mxu0 %v6743
        %6788 = vmatpush.msra.mxu0 %v6741
        %6789 = vmatpush.msra.mxu0 %v6739
        %6790 = vmatpush.msra.mxu0 %v6737
        %6791 = vmatpush.msra.mxu0 %v6735
        %6792 = vmatpush.msra.mxu0 %v6733
        %6793 = vmatpush.msra.mxu0 %v6731
        %6794 = vmatmul.f32.gmra.mxu0 %v6698
        %v6795 = vpop.f32.mrf.mxu0
        %v6796 = vadd.f32 0.0, %v6795
        %6797 = vmatmul.f32.gmra.mxu0 %v6699
        %v6798 = vpop.f32.mrf.mxu0
        %v6799 = vadd.f32 0.0, %v6798
        %6800 = vmatmul.f32.gmra.mxu0 %v6700
        %v6801 = vpop.f32.mrf.mxu0
        %v6802 = vadd.f32 0.0, %v6801
        %6803 = vmatmul.f32.gmra.mxu0 %v6701
        %v6804 = vpop.f32.mrf.mxu0
        %v6805 = vadd.f32 0.0, %v6804
        %6806 = vmatmul.f32.gmra.mxu0 %v6702
        %v6807 = vpop.f32.mrf.mxu0
        %v6808 = vadd.f32 0.0, %v6807
        %6809 = vmatmul.f32.gmra.mxu0 %v6703
        %v6810 = vpop.f32.mrf.mxu0
        %v6811 = vadd.f32 0.0, %v6810
        %6812 = vmatmul.f32.gmra.mxu0 %v6704
        %v6813 = vpop.f32.mrf.mxu0
        %v6814 = vadd.f32 0.0, %v6813
        %6815 = vmatmul.f32.gmra.mxu0 %v6705
        %v6816 = vpop.f32.mrf.mxu0
        %v6817 = vadd.f32 0.0, %v6816
        %6818 = vmatmul.f32.gmra.mxu0 %v6706
        %v6819 = vpop.f32.mrf.mxu0
        %v6820 = vadd.f32 0.0, %v6819
        %6821 = vmatmul.f32.gmra.mxu0 %v6707
        %v6822 = vpop.f32.mrf.mxu0
        %v6823 = vadd.f32 0.0, %v6822
        %6824 = vmatmul.f32.gmra.mxu0 %v6708
        %v6825 = vpop.f32.mrf.mxu0
        %v6826 = vadd.f32 0.0, %v6825
        %6827 = vmatmul.f32.gmra.mxu0 %v6709
        %v6828 = vpop.f32.mrf.mxu0
        %v6829 = vadd.f32 0.0, %v6828
        %6830 = vmatmul.f32.gmra.mxu0 %v6710
        %v6831 = vpop.f32.mrf.mxu0
        %v6832 = vadd.f32 0.0, %v6831
        %6833 = vmatmul.f32.gmra.mxu0 %v6711
        %v6834 = vpop.f32.mrf.mxu0
        %v6835 = vadd.f32 0.0, %v6834
        %6836 = vmatmul.f32.gmra.mxu0 %v6712
        %v6837 = vpop.f32.mrf.mxu0
        %v6838 = vadd.f32 0.0, %v6837
        %6839 = vmatmul.f32.gmra.mxu0 %v6713
        %v6840 = vpop.f32.mrf.mxu0
        %v6841 = vadd.f32 0.0, %v6840
        %6842 = vdwg.mxu0
        %6843 = vmatpush.msra.mxu0 %v6697
        %6844 = vmatpush.msra.mxu0 %v6696
        %6845 = vmatpush.msra.mxu0 %v6695
        %6846 = vmatpush.msra.mxu0 %v6694
        %6847 = vmatpush.msra.mxu0 %v6693
        %6848 = vmatpush.msra.mxu0 %v6692
        %6849 = vmatpush.msra.mxu0 %v6691
        %6850 = vmatpush.msra.mxu0 %v6690
        %6851 = vmatpush.msra.mxu0 %v6689
        %6852 = vmatpush.msra.mxu0 %v6688
        %6853 = vmatpush.msra.mxu0 %v6687
        %6854 = vmatpush.msra.mxu0 %v6686
        %6855 = vmatpush.msra.mxu0 %v6685
        %6856 = vmatpush.msra.mxu0 %v6684
        %6857 = vmatpush.msra.mxu0 %v6683
        %6858 = vmatpush.msra.mxu0 %v6682
        %6859 = vmatmul.f32.gmra.mxu0 %v6666
        %v6860 = vpop.f32.mrf.mxu0
        %v6861 = vadd.f32 %v6796, %v6860
        %6862 = vmatmul.f32.gmra.mxu0 %v6667
        %v6863 = vpop.f32.mrf.mxu0
        %v6864 = vadd.f32 %v6799, %v6863
        %6865 = vmatmul.f32.gmra.mxu0 %v6668
        %v6866 = vpop.f32.mrf.mxu0
        %v6867 = vadd.f32 %v6802, %v6866
        %6868 = vmatmul.f32.gmra.mxu0 %v6669
        %v6869 = vpop.f32.mrf.mxu0
        %v6870 = vadd.f32 %v6805, %v6869
        %6871 = vmatmul.f32.gmra.mxu0 %v6670
        %v6872 = vpop.f32.mrf.mxu0
        %v6873 = vadd.f32 %v6808, %v6872
        %6874 = vmatmul.f32.gmra.mxu0 %v6671
        %v6875 = vpop.f32.mrf.mxu0
        %v6876 = vadd.f32 %v6811, %v6875
        %6877 = vmatmul.f32.gmra.mxu0 %v6672
        %v6878 = vpop.f32.mrf.mxu0
        %v6879 = vadd.f32 %v6814, %v6878
        %6880 = vmatmul.f32.gmra.mxu0 %v6673
        %v6881 = vpop.f32.mrf.mxu0
        %v6882 = vadd.f32 %v6817, %v6881
        %6883 = vmatmul.f32.gmra.mxu0 %v6674
        %v6884 = vpop.f32.mrf.mxu0
        %v6885 = vadd.f32 %v6820, %v6884
        %6886 = vmatmul.f32.gmra.mxu0 %v6675
        %v6887 = vpop.f32.mrf.mxu0
        %v6888 = vadd.f32 %v6823, %v6887
        %6889 = vmatmul.f32.gmra.mxu0 %v6676
        %v6890 = vpop.f32.mrf.mxu0
        %v6891 = vadd.f32 %v6826, %v6890
        %6892 = vmatmul.f32.gmra.mxu0 %v6677
        %v6893 = vpop.f32.mrf.mxu0
        %v6894 = vadd.f32 %v6829, %v6893
        %6895 = vmatmul.f32.gmra.mxu0 %v6678
        %v6896 = vpop.f32.mrf.mxu0
        %v6897 = vadd.f32 %v6832, %v6896
        %6898 = vmatmul.f32.gmra.mxu0 %v6679
        %v6899 = vpop.f32.mrf.mxu0
        %v6900 = vadd.f32 %v6835, %v6899
        %6901 = vmatmul.f32.gmra.mxu0 %v6680
        %v6902 = vpop.f32.mrf.mxu0
        %v6903 = vadd.f32 %v6838, %v6902
        %6904 = vmatmul.f32.gmra.mxu0 %v6681
        %v6905 = vpop.f32.mrf.mxu0
        %v6906 = vadd.f32 %v6841, %v6905
        %6907 = vdwg.mxu0
        %v6908 = vld [vmem:[%s3737 + $0x80] sm:$0xff]
        %v6909 = vld [vmem:[%s3737 + $0x88] sm:$0xff]
        %v6910 = vld [vmem:[%s3737 + $0x90] sm:$0xff]
        %v6911 = vld [vmem:[%s3737 + $0x98] sm:$0xff]
        %v6912 = vld [vmem:[%s3737 + $0xa0] sm:$0xff]
        %v6913 = vld [vmem:[%s3737 + $0xa8] sm:$0xff]
        %v6914 = vld [vmem:[%s3737 + $0xb0] sm:$0xff]
        %v6915 = vld [vmem:[%s3737 + $0xb8] sm:$0xff]
        %v6916 = vld [vmem:[%s3737 + $0xc0] sm:$0xff]
        %v6917 = vld [vmem:[%s3737 + $0xc8] sm:$0xff]
        %v6918 = vld [vmem:[%s3737 + $0xd0] sm:$0xff]
        %v6919 = vld [vmem:[%s3737 + $0xd8] sm:$0xff]
        %v6920 = vld [vmem:[%s3737 + $0xe0] sm:$0xff]
        %v6921 = vld [vmem:[%s3737 + $0xe8] sm:$0xff]
        %v6922 = vld [vmem:[%s3737 + $0xf0] sm:$0xff]
        %v6923 = vld [vmem:[%s3737 + $0xf8] sm:$0xff]
        %6924 = vrot.lane.b32.xlu0 %v6682, 126
        %v6925 = vpop.permute.xlu0 %6924
        %6926 = vrot.lane.b32.xlu0 %v6683, 126
        %v6927 = vpop.permute.xlu0 %6926
        %6928 = vrot.lane.b32.xlu0 %v6684, 126
        %v6929 = vpop.permute.xlu0 %6928
        %6930 = vrot.lane.b32.xlu0 %v6685, 126
        %v6931 = vpop.permute.xlu0 %6930
        %6932 = vrot.lane.b32.xlu0 %v6686, 126
        %v6933 = vpop.permute.xlu0 %6932
        %6934 = vrot.lane.b32.xlu0 %v6687, 126
        %v6935 = vpop.permute.xlu0 %6934
        %6936 = vrot.lane.b32.xlu0 %v6688, 126
        %v6937 = vpop.permute.xlu0 %6936
        %6938 = vrot.lane.b32.xlu0 %v6689, 126
        %v6939 = vpop.permute.xlu0 %6938
        %6940 = vrot.lane.b32.xlu0 %v6690, 126
        %v6941 = vpop.permute.xlu0 %6940
        %6942 = vrot.lane.b32.xlu0 %v6691, 126
        %v6943 = vpop.permute.xlu0 %6942
        %6944 = vrot.lane.b32.xlu0 %v6692, 126
        %v6945 = vpop.permute.xlu0 %6944
        %6946 = vrot.lane.b32.xlu0 %v6693, 126
        %v6947 = vpop.permute.xlu0 %6946
        %6948 = vrot.lane.b32.xlu0 %v6694, 126
        %v6949 = vpop.permute.xlu0 %6948
        %6950 = vrot.lane.b32.xlu0 %v6695, 126
        %v6951 = vpop.permute.xlu0 %6950
        %6952 = vrot.lane.b32.xlu0 %v6696, 126
        %v6953 = vpop.permute.xlu0 %6952
        %6954 = vrot.lane.b32.xlu0 %v6697, 126
        %v6955 = vpop.permute.xlu0 %6954
        %6972 = vmatpush.msra.mxu0 %v6955
        %6973 = vmatpush.msra.mxu0 %v6953
        %6974 = vmatpush.msra.mxu0 %v6951
        %6975 = vmatpush.msra.mxu0 %v6949
        %6976 = vmatpush.msra.mxu0 %v6947
        %6977 = vmatpush.msra.mxu0 %v6945
        %6978 = vmatpush.msra.mxu0 %v6943
        %6979 = vmatpush.msra.mxu0 %v6941
        %6980 = vmatpush.msra.mxu0 %v6939
        %6981 = vmatpush.msra.mxu0 %v6937
        %6982 = vmatpush.msra.mxu0 %v6935
        %6983 = vmatpush.msra.mxu0 %v6933
        %6984 = vmatpush.msra.mxu0 %v6931
        %6985 = vmatpush.msra.mxu0 %v6929
        %6986 = vmatpush.msra.mxu0 %v6927
        %6987 = vmatpush.msra.mxu0 %v6925
        %6988 = vmatmul.f32.gmra.mxu0 %v6908
        %v6989 = vpop.f32.mrf.mxu0
        %v6990 = vadd.f32 0.0, %v6989
        %6991 = vmatmul.f32.gmra.mxu0 %v6909
        %v6992 = vpop.f32.mrf.mxu0
        %v6993 = vadd.f32 0.0, %v6992
        %6994 = vmatmul.f32.gmra.mxu0 %v6910
        %v6995 = vpop.f32.mrf.mxu0
        %v6996 = vadd.f32 0.0, %v6995
        %6997 = vmatmul.f32.gmra.mxu0 %v6911
        %v6998 = vpop.f32.mrf.mxu0
        %v6999 = vadd.f32 0.0, %v6998
        %7000 = vmatmul.f32.gmra.mxu0 %v6912
        %v7001 = vpop.f32.mrf.mxu0
        %v7002 = vadd.f32 0.0, %v7001
        %7003 = vmatmul.f32.gmra.mxu0 %v6913
        %v7004 = vpop.f32.mrf.mxu0
        %v7005 = vadd.f32 0.0, %v7004
        %7006 = vmatmul.f32.gmra.mxu0 %v6914
        %v7007 = vpop.f32.mrf.mxu0
        %v7008 = vadd.f32 0.0, %v7007
        %7009 = vmatmul.f32.gmra.mxu0 %v6915
        %v7010 = vpop.f32.mrf.mxu0
        %v7011 = vadd.f32 0.0, %v7010
        %7012 = vmatmul.f32.gmra.mxu0 %v6916
        %v7013 = vpop.f32.mrf.mxu0
        %v7014 = vadd.f32 0.0, %v7013
        %7015 = vmatmul.f32.gmra.mxu0 %v6917
        %v7016 = vpop.f32.mrf.mxu0
        %v7017 = vadd.f32 0.0, %v7016
        %7018 = vmatmul.f32.gmra.mxu0 %v6918
        %v7019 = vpop.f32.mrf.mxu0
        %v7020 = vadd.f32 0.0, %v7019
        %7021 = vmatmul.f32.gmra.mxu0 %v6919
        %v7022 = vpop.f32.mrf.mxu0
        %v7023 = vadd.f32 0.0, %v7022
        %7024 = vmatmul.f32.gmra.mxu0 %v6920
        %v7025 = vpop.f32.mrf.mxu0
        %v7026 = vadd.f32 0.0, %v7025
        %7027 = vmatmul.f32.gmra.mxu0 %v6921
        %v7028 = vpop.f32.mrf.mxu0
        %v7029 = vadd.f32 0.0, %v7028
        %7030 = vmatmul.f32.gmra.mxu0 %v6922
        %v7031 = vpop.f32.mrf.mxu0
        %v7032 = vadd.f32 0.0, %v7031
        %7033 = vmatmul.f32.gmra.mxu0 %v6923
        %v7034 = vpop.f32.mrf.mxu0
        %v7035 = vadd.f32 0.0, %v7034
        %7036 = vdwg.mxu0
        %v7037 = vadd.f32 %v6861, %v6990
        %v7038 = vadd.f32 %v6864, %v6993
        %v7039 = vadd.f32 %v6867, %v6996
        %v7040 = vadd.f32 %v6870, %v6999
        %v7041 = vadd.f32 %v6873, %v7002
        %v7042 = vadd.f32 %v6876, %v7005
        %v7043 = vadd.f32 %v6879, %v7008
        %v7044 = vadd.f32 %v6882, %v7011
        %v7045 = vadd.f32 %v6885, %v7014
        %v7046 = vadd.f32 %v6888, %v7017
        %v7047 = vadd.f32 %v6891, %v7020
        %v7048 = vadd.f32 %v6894, %v7023
        %v7049 = vadd.f32 %v6897, %v7026
        %v7050 = vadd.f32 %v6900, %v7029
        %v7051 = vadd.f32 %v6903, %v7032
        %v7052 = vadd.f32 %v6906, %v7035
        %v7053 = vld [vmem:[%s3931 + $0x80] sm:$0xff]
        %v7054 = vld [vmem:[%s3931 + $0x88] sm:$0xff]
        %v7055 = vld [vmem:[%s3931 + $0x90] sm:$0xff]
        %v7056 = vld [vmem:[%s3931 + $0x98] sm:$0xff]
        %v7057 = vld [vmem:[%s3931 + $0xa0] sm:$0xff]
        %v7058 = vld [vmem:[%s3931 + $0xa8] sm:$0xff]
        %v7059 = vld [vmem:[%s3931 + $0xb0] sm:$0xff]
        %v7060 = vld [vmem:[%s3931 + $0xb8] sm:$0xff]
        %v7061 = vld [vmem:[%s3931 + $0xc0] sm:$0xff]
        %v7062 = vld [vmem:[%s3931 + $0xc8] sm:$0xff]
        %v7063 = vld [vmem:[%s3931 + $0xd0] sm:$0xff]
        %v7064 = vld [vmem:[%s3931 + $0xd8] sm:$0xff]
        %v7065 = vld [vmem:[%s3931 + $0xe0] sm:$0xff]
        %v7066 = vld [vmem:[%s3931 + $0xe8] sm:$0xff]
        %v7067 = vld [vmem:[%s3931 + $0xf0] sm:$0xff]
        %v7068 = vld [vmem:[%s3931 + $0xf8] sm:$0xff]
        %7069 = vrot.lane.b32.xlu0 %v6682, 125
        %v7070 = vpop.permute.xlu0 %7069
        %7071 = vrot.lane.b32.xlu0 %v6683, 125
        %v7072 = vpop.permute.xlu0 %7071
        %7073 = vrot.lane.b32.xlu0 %v6684, 125
        %v7074 = vpop.permute.xlu0 %7073
        %7075 = vrot.lane.b32.xlu0 %v6685, 125
        %v7076 = vpop.permute.xlu0 %7075
        %7077 = vrot.lane.b32.xlu0 %v6686, 125
        %v7078 = vpop.permute.xlu0 %7077
        %7079 = vrot.lane.b32.xlu0 %v6687, 125
        %v7080 = vpop.permute.xlu0 %7079
        %7081 = vrot.lane.b32.xlu0 %v6688, 125
        %v7082 = vpop.permute.xlu0 %7081
        %7083 = vrot.lane.b32.xlu0 %v6689, 125
        %v7084 = vpop.permute.xlu0 %7083
        %7085 = vrot.lane.b32.xlu0 %v6690, 125
        %v7086 = vpop.permute.xlu0 %7085
        %7087 = vrot.lane.b32.xlu0 %v6691, 125
        %v7088 = vpop.permute.xlu0 %7087
        %7089 = vrot.lane.b32.xlu0 %v6692, 125
        %v7090 = vpop.permute.xlu0 %7089
        %7091 = vrot.lane.b32.xlu0 %v6693, 125
        %v7092 = vpop.permute.xlu0 %7091
        %7093 = vrot.lane.b32.xlu0 %v6694, 125
        %v7094 = vpop.permute.xlu0 %7093
        %7095 = vrot.lane.b32.xlu0 %v6695, 125
        %v7096 = vpop.permute.xlu0 %7095
        %7097 = vrot.lane.b32.xlu0 %v6696, 125
        %v7098 = vpop.permute.xlu0 %7097
        %7099 = vrot.lane.b32.xlu0 %v6697, 125
        %v7100 = vpop.permute.xlu0 %7099
        %7117 = vmatpush.msra.mxu0 %v7100
        %7118 = vmatpush.msra.mxu0 %v7098
        %7119 = vmatpush.msra.mxu0 %v7096
        %7120 = vmatpush.msra.mxu0 %v7094
        %7121 = vmatpush.msra.mxu0 %v7092
        %7122 = vmatpush.msra.mxu0 %v7090
        %7123 = vmatpush.msra.mxu0 %v7088
        %7124 = vmatpush.msra.mxu0 %v7086
        %7125 = vmatpush.msra.mxu0 %v7084
        %7126 = vmatpush.msra.mxu0 %v7082
        %7127 = vmatpush.msra.mxu0 %v7080
        %7128 = vmatpush.msra.mxu0 %v7078
        %7129 = vmatpush.msra.mxu0 %v7076
        %7130 = vmatpush.msra.mxu0 %v7074
        %7131 = vmatpush.msra.mxu0 %v7072
        %7132 = vmatpush.msra.mxu0 %v7070
        %7133 = vmatmul.f32.gmra.mxu0 %v7053
        %v7134 = vpop.f32.mrf.mxu0
        %v7135 = vadd.f32 0.0, %v7134
        %7136 = vmatmul.f32.gmra.mxu0 %v7054
        %v7137 = vpop.f32.mrf.mxu0
        %v7138 = vadd.f32 0.0, %v7137
        %7139 = vmatmul.f32.gmra.mxu0 %v7055
        %v7140 = vpop.f32.mrf.mxu0
        %v7141 = vadd.f32 0.0, %v7140
        %7142 = vmatmul.f32.gmra.mxu0 %v7056
        %v7143 = vpop.f32.mrf.mxu0
        %v7144 = vadd.f32 0.0, %v7143
        %7145 = vmatmul.f32.gmra.mxu0 %v7057
        %v7146 = vpop.f32.mrf.mxu0
        %v7147 = vadd.f32 0.0, %v7146
        %7148 = vmatmul.f32.gmra.mxu0 %v7058
        %v7149 = vpop.f32.mrf.mxu0
        %v7150 = vadd.f32 0.0, %v7149
        %7151 = vmatmul.f32.gmra.mxu0 %v7059
        %v7152 = vpop.f32.mrf.mxu0
        %v7153 = vadd.f32 0.0, %v7152
        %7154 = vmatmul.f32.gmra.mxu0 %v7060
        %v7155 = vpop.f32.mrf.mxu0
        %v7156 = vadd.f32 0.0, %v7155
        %7157 = vmatmul.f32.gmra.mxu0 %v7061
        %v7158 = vpop.f32.mrf.mxu0
        %v7159 = vadd.f32 0.0, %v7158
        %7160 = vmatmul.f32.gmra.mxu0 %v7062
        %v7161 = vpop.f32.mrf.mxu0
        %v7162 = vadd.f32 0.0, %v7161
        %7163 = vmatmul.f32.gmra.mxu0 %v7063
        %v7164 = vpop.f32.mrf.mxu0
        %v7165 = vadd.f32 0.0, %v7164
        %7166 = vmatmul.f32.gmra.mxu0 %v7064
        %v7167 = vpop.f32.mrf.mxu0
        %v7168 = vadd.f32 0.0, %v7167
        %7169 = vmatmul.f32.gmra.mxu0 %v7065
        %v7170 = vpop.f32.mrf.mxu0
        %v7171 = vadd.f32 0.0, %v7170
        %7172 = vmatmul.f32.gmra.mxu0 %v7066
        %v7173 = vpop.f32.mrf.mxu0
        %v7174 = vadd.f32 0.0, %v7173
        %7175 = vmatmul.f32.gmra.mxu0 %v7067
        %v7176 = vpop.f32.mrf.mxu0
        %v7177 = vadd.f32 0.0, %v7176
        %7178 = vmatmul.f32.gmra.mxu0 %v7068
        %v7179 = vpop.f32.mrf.mxu0
        %v7180 = vadd.f32 0.0, %v7179
        %7181 = vdwg.mxu0
        %v7182 = vadd.f32 %v7037, %v7135
        %v7183 = vadd.f32 %v7038, %v7138
        %v7184 = vadd.f32 %v7039, %v7141
        %v7185 = vadd.f32 %v7040, %v7144
        %v7186 = vadd.f32 %v7041, %v7147
        %v7187 = vadd.f32 %v7042, %v7150
        %v7188 = vadd.f32 %v7043, %v7153
        %v7189 = vadd.f32 %v7044, %v7156
        %v7190 = vadd.f32 %v7045, %v7159
        %v7191 = vadd.f32 %v7046, %v7162
        %v7192 = vadd.f32 %v7047, %v7165
        %v7193 = vadd.f32 %v7048, %v7168
        %v7194 = vadd.f32 %v7049, %v7171
        %v7195 = vadd.f32 %v7050, %v7174
        %v7196 = vadd.f32 %v7051, %v7177
        %v7197 = vadd.f32 %v7052, %v7180
        %v7198 = vld [vmem:[%s4125 + $0x80] sm:$0xff]
        %v7199 = vld [vmem:[%s4125 + $0x88] sm:$0xff]
        %v7200 = vld [vmem:[%s4125 + $0x90] sm:$0xff]
        %v7201 = vld [vmem:[%s4125 + $0x98] sm:$0xff]
        %v7202 = vld [vmem:[%s4125 + $0xa0] sm:$0xff]
        %v7203 = vld [vmem:[%s4125 + $0xa8] sm:$0xff]
        %v7204 = vld [vmem:[%s4125 + $0xb0] sm:$0xff]
        %v7205 = vld [vmem:[%s4125 + $0xb8] sm:$0xff]
        %v7206 = vld [vmem:[%s4125 + $0xc0] sm:$0xff]
        %v7207 = vld [vmem:[%s4125 + $0xc8] sm:$0xff]
        %v7208 = vld [vmem:[%s4125 + $0xd0] sm:$0xff]
        %v7209 = vld [vmem:[%s4125 + $0xd8] sm:$0xff]
        %v7210 = vld [vmem:[%s4125 + $0xe0] sm:$0xff]
        %v7211 = vld [vmem:[%s4125 + $0xe8] sm:$0xff]
        %v7212 = vld [vmem:[%s4125 + $0xf0] sm:$0xff]
        %v7213 = vld [vmem:[%s4125 + $0xf8] sm:$0xff]
        %7214 = vrot.lane.b32.xlu0 %v6682, 124
        %v7215 = vpop.permute.xlu0 %7214
        %7216 = vrot.lane.b32.xlu0 %v6683, 124
        %v7217 = vpop.permute.xlu0 %7216
        %7218 = vrot.lane.b32.xlu0 %v6684, 124
        %v7219 = vpop.permute.xlu0 %7218
        %7220 = vrot.lane.b32.xlu0 %v6685, 124
        %v7221 = vpop.permute.xlu0 %7220
        %7222 = vrot.lane.b32.xlu0 %v6686, 124
        %v7223 = vpop.permute.xlu0 %7222
        %7224 = vrot.lane.b32.xlu0 %v6687, 124
        %v7225 = vpop.permute.xlu0 %7224
        %7226 = vrot.lane.b32.xlu0 %v6688, 124
        %v7227 = vpop.permute.xlu0 %7226
        %7228 = vrot.lane.b32.xlu0 %v6689, 124
        %v7229 = vpop.permute.xlu0 %7228
        %7230 = vrot.lane.b32.xlu0 %v6690, 124
        %v7231 = vpop.permute.xlu0 %7230
        %7232 = vrot.lane.b32.xlu0 %v6691, 124
        %v7233 = vpop.permute.xlu0 %7232
        %7234 = vrot.lane.b32.xlu0 %v6692, 124
        %v7235 = vpop.permute.xlu0 %7234
        %7236 = vrot.lane.b32.xlu0 %v6693, 124
        %v7237 = vpop.permute.xlu0 %7236
        %7238 = vrot.lane.b32.xlu0 %v6694, 124
        %v7239 = vpop.permute.xlu0 %7238
        %7240 = vrot.lane.b32.xlu0 %v6695, 124
        %v7241 = vpop.permute.xlu0 %7240
        %7242 = vrot.lane.b32.xlu0 %v6696, 124
        %v7243 = vpop.permute.xlu0 %7242
        %7244 = vrot.lane.b32.xlu0 %v6697, 124
        %v7245 = vpop.permute.xlu0 %7244
        %7262 = vmatpush.msra.mxu0 %v7245
        %7263 = vmatpush.msra.mxu0 %v7243
        %7264 = vmatpush.msra.mxu0 %v7241
        %7265 = vmatpush.msra.mxu0 %v7239
        %7266 = vmatpush.msra.mxu0 %v7237
        %7267 = vmatpush.msra.mxu0 %v7235
        %7268 = vmatpush.msra.mxu0 %v7233
        %7269 = vmatpush.msra.mxu0 %v7231
        %7270 = vmatpush.msra.mxu0 %v7229
        %7271 = vmatpush.msra.mxu0 %v7227
        %7272 = vmatpush.msra.mxu0 %v7225
        %7273 = vmatpush.msra.mxu0 %v7223
        %7274 = vmatpush.msra.mxu0 %v7221
        %7275 = vmatpush.msra.mxu0 %v7219
        %7276 = vmatpush.msra.mxu0 %v7217
        %7277 = vmatpush.msra.mxu0 %v7215
        %7278 = vmatmul.f32.gmra.mxu0 %v7198
        %v7279 = vpop.f32.mrf.mxu0
        %v7280 = vadd.f32 0.0, %v7279
        %7281 = vmatmul.f32.gmra.mxu0 %v7199
        %v7282 = vpop.f32.mrf.mxu0
        %v7283 = vadd.f32 0.0, %v7282
        %7284 = vmatmul.f32.gmra.mxu0 %v7200
        %v7285 = vpop.f32.mrf.mxu0
        %v7286 = vadd.f32 0.0, %v7285
        %7287 = vmatmul.f32.gmra.mxu0 %v7201
        %v7288 = vpop.f32.mrf.mxu0
        %v7289 = vadd.f32 0.0, %v7288
        %7290 = vmatmul.f32.gmra.mxu0 %v7202
        %v7291 = vpop.f32.mrf.mxu0
        %v7292 = vadd.f32 0.0, %v7291
        %7293 = vmatmul.f32.gmra.mxu0 %v7203
        %v7294 = vpop.f32.mrf.mxu0
        %v7295 = vadd.f32 0.0, %v7294
        %7296 = vmatmul.f32.gmra.mxu0 %v7204
        %v7297 = vpop.f32.mrf.mxu0
        %v7298 = vadd.f32 0.0, %v7297
        %7299 = vmatmul.f32.gmra.mxu0 %v7205
        %v7300 = vpop.f32.mrf.mxu0
        %v7301 = vadd.f32 0.0, %v7300
        %7302 = vmatmul.f32.gmra.mxu0 %v7206
        %v7303 = vpop.f32.mrf.mxu0
        %v7304 = vadd.f32 0.0, %v7303
        %7305 = vmatmul.f32.gmra.mxu0 %v7207
        %v7306 = vpop.f32.mrf.mxu0
        %v7307 = vadd.f32 0.0, %v7306
        %7308 = vmatmul.f32.gmra.mxu0 %v7208
        %v7309 = vpop.f32.mrf.mxu0
        %v7310 = vadd.f32 0.0, %v7309
        %7311 = vmatmul.f32.gmra.mxu0 %v7209
        %v7312 = vpop.f32.mrf.mxu0
        %v7313 = vadd.f32 0.0, %v7312
        %7314 = vmatmul.f32.gmra.mxu0 %v7210
        %v7315 = vpop.f32.mrf.mxu0
        %v7316 = vadd.f32 0.0, %v7315
        %7317 = vmatmul.f32.gmra.mxu0 %v7211
        %v7318 = vpop.f32.mrf.mxu0
        %v7319 = vadd.f32 0.0, %v7318
        %7320 = vmatmul.f32.gmra.mxu0 %v7212
        %v7321 = vpop.f32.mrf.mxu0
        %v7322 = vadd.f32 0.0, %v7321
        %7323 = vmatmul.f32.gmra.mxu0 %v7213
        %v7324 = vpop.f32.mrf.mxu0
        %v7325 = vadd.f32 0.0, %v7324
        %7326 = vdwg.mxu0
        %v7327 = vadd.f32 %v7182, %v7280
        %v7328 = vadd.f32 %v7183, %v7283
        %v7329 = vadd.f32 %v7184, %v7286
        %v7330 = vadd.f32 %v7185, %v7289
        %v7331 = vadd.f32 %v7186, %v7292
        %v7332 = vadd.f32 %v7187, %v7295
        %v7333 = vadd.f32 %v7188, %v7298
        %v7334 = vadd.f32 %v7189, %v7301
        %v7335 = vadd.f32 %v7190, %v7304
        %v7336 = vadd.f32 %v7191, %v7307
        %v7337 = vadd.f32 %v7192, %v7310
        %v7338 = vadd.f32 %v7193, %v7313
        %v7339 = vadd.f32 %v7194, %v7316
        %v7340 = vadd.f32 %v7195, %v7319
        %v7341 = vadd.f32 %v7196, %v7322
        %v7342 = vadd.f32 %v7197, %v7325
        %v7343 = vld [vmem:[%s5 + $0x80] sm:$0xff]
        %v7344 = vld [vmem:[%s5 + $0x88] sm:$0xff]
        %v7345 = vld [vmem:[%s5 + $0x90] sm:$0xff]
        %v7346 = vld [vmem:[%s5 + $0x98] sm:$0xff]
        %v7347 = vld [vmem:[%s5 + $0xa0] sm:$0xff]
        %v7348 = vld [vmem:[%s5 + $0xa8] sm:$0xff]
        %v7349 = vld [vmem:[%s5 + $0xb0] sm:$0xff]
        %v7350 = vld [vmem:[%s5 + $0xb8] sm:$0xff]
        %v7351 = vld [vmem:[%s5 + $0xc0] sm:$0xff]
        %v7352 = vld [vmem:[%s5 + $0xc8] sm:$0xff]
        %v7353 = vld [vmem:[%s5 + $0xd0] sm:$0xff]
        %v7354 = vld [vmem:[%s5 + $0xd8] sm:$0xff]
        %v7355 = vld [vmem:[%s5 + $0xe0] sm:$0xff]
        %v7356 = vld [vmem:[%s5 + $0xe8] sm:$0xff]
        %v7357 = vld [vmem:[%s5 + $0xf0] sm:$0xff]
        %v7358 = vld [vmem:[%s5 + $0xf8] sm:$0xff]
        %7360 = vset.pattern.permute.xlu0 0
        %7361 = vperm.xlu0 %7360, %v7343
        %v7362 = vpop.permute.xlu0 %7361
        %7365 = vset.pattern.permute.xlu0 0
        %7366 = vperm.xlu0 %7365, %v7344
        %v7367 = vpop.permute.xlu0 %7366
        %7370 = vset.pattern.permute.xlu0 0
        %7371 = vperm.xlu0 %7370, %v7345
        %v7372 = vpop.permute.xlu0 %7371
        %7375 = vset.pattern.permute.xlu0 0
        %7376 = vperm.xlu0 %7375, %v7346
        %v7377 = vpop.permute.xlu0 %7376
        %7380 = vset.pattern.permute.xlu0 0
        %7381 = vperm.xlu0 %7380, %v7347
        %v7382 = vpop.permute.xlu0 %7381
        %7385 = vset.pattern.permute.xlu0 0
        %7386 = vperm.xlu0 %7385, %v7348
        %v7387 = vpop.permute.xlu0 %7386
        %7390 = vset.pattern.permute.xlu0 0
        %7391 = vperm.xlu0 %7390, %v7349
        %v7392 = vpop.permute.xlu0 %7391
        %7395 = vset.pattern.permute.xlu0 0
        %7396 = vperm.xlu0 %7395, %v7350
        %v7397 = vpop.permute.xlu0 %7396
        %7400 = vset.pattern.permute.xlu0 0
        %7401 = vperm.xlu0 %7400, %v7351
        %v7402 = vpop.permute.xlu0 %7401
        %7405 = vset.pattern.permute.xlu0 0
        %7406 = vperm.xlu0 %7405, %v7352
        %v7407 = vpop.permute.xlu0 %7406
        %7410 = vset.pattern.permute.xlu0 0
        %7411 = vperm.xlu0 %7410, %v7353
        %v7412 = vpop.permute.xlu0 %7411
        %7415 = vset.pattern.permute.xlu0 0
        %7416 = vperm.xlu0 %7415, %v7354
        %v7417 = vpop.permute.xlu0 %7416
        %7420 = vset.pattern.permute.xlu0 0
        %7421 = vperm.xlu0 %7420, %v7355
        %v7422 = vpop.permute.xlu0 %7421
        %7425 = vset.pattern.permute.xlu0 0
        %7426 = vperm.xlu0 %7425, %v7356
        %v7427 = vpop.permute.xlu0 %7426
        %7430 = vset.pattern.permute.xlu0 0
        %7431 = vperm.xlu0 %7430, %v7357
        %v7432 = vpop.permute.xlu0 %7431
        %7435 = vset.pattern.permute.xlu0 0
        %7436 = vperm.xlu0 %7435, %v7358
        %v7437 = vpop.permute.xlu0 %7436
        %v7439 = vmul.f32 %v7327, %v7362
        %v7440 = vmul.f32 %v7328, %v7367
        %v7441 = vmul.f32 %v7329, %v7372
        %v7442 = vmul.f32 %v7330, %v7377
        %v7443 = vmul.f32 %v7331, %v7382
        %v7444 = vmul.f32 %v7332, %v7387
        %v7445 = vmul.f32 %v7333, %v7392
        %v7446 = vmul.f32 %v7334, %v7397
        %v7447 = vmul.f32 %v7335, %v7402
        %v7448 = vmul.f32 %v7336, %v7407
        %v7449 = vmul.f32 %v7337, %v7412
        %v7450 = vmul.f32 %v7338, %v7417
        %v7451 = vmul.f32 %v7339, %v7422
        %v7452 = vmul.f32 %v7340, %v7427
        %v7453 = vmul.f32 %v7341, %v7432
        %v7454 = vmul.f32 %v7342, %v7437
        %v7455 = vld [vmem:[%s6 + $0x80] sm:$0xff]
        %v7456 = vld [vmem:[%s6 + $0x88] sm:$0xff]
        %v7457 = vld [vmem:[%s6 + $0x90] sm:$0xff]
        %v7458 = vld [vmem:[%s6 + $0x98] sm:$0xff]
        %v7459 = vld [vmem:[%s6 + $0xa0] sm:$0xff]
        %v7460 = vld [vmem:[%s6 + $0xa8] sm:$0xff]
        %v7461 = vld [vmem:[%s6 + $0xb0] sm:$0xff]
        %v7462 = vld [vmem:[%s6 + $0xb8] sm:$0xff]
        %v7463 = vld [vmem:[%s6 + $0xc0] sm:$0xff]
        %v7464 = vld [vmem:[%s6 + $0xc8] sm:$0xff]
        %v7465 = vld [vmem:[%s6 + $0xd0] sm:$0xff]
        %v7466 = vld [vmem:[%s6 + $0xd8] sm:$0xff]
        %v7467 = vld [vmem:[%s6 + $0xe0] sm:$0xff]
        %v7468 = vld [vmem:[%s6 + $0xe8] sm:$0xff]
        %v7469 = vld [vmem:[%s6 + $0xf0] sm:$0xff]
        %v7470 = vld [vmem:[%s6 + $0xf8] sm:$0xff]
        %7472 = vset.pattern.permute.xlu0 0
        %7473 = vperm.xlu0 %7472, %v7455
        %v7474 = vpop.permute.xlu0 %7473
        %7477 = vset.pattern.permute.xlu0 0
        %7478 = vperm.xlu0 %7477, %v7456
        %v7479 = vpop.permute.xlu0 %7478
        %7482 = vset.pattern.permute.xlu0 0
        %7483 = vperm.xlu0 %7482, %v7457
        %v7484 = vpop.permute.xlu0 %7483
        %7487 = vset.pattern.permute.xlu0 0
        %7488 = vperm.xlu0 %7487, %v7458
        %v7489 = vpop.permute.xlu0 %7488
        %7492 = vset.pattern.permute.xlu0 0
        %7493 = vperm.xlu0 %7492, %v7459
        %v7494 = vpop.permute.xlu0 %7493
        %7497 = vset.pattern.permute.xlu0 0
        %7498 = vperm.xlu0 %7497, %v7460
        %v7499 = vpop.permute.xlu0 %7498
        %7502 = vset.pattern.permute.xlu0 0
        %7503 = vperm.xlu0 %7502, %v7461
        %v7504 = vpop.permute.xlu0 %7503
        %7507 = vset.pattern.permute.xlu0 0
        %7508 = vperm.xlu0 %7507, %v7462
        %v7509 = vpop.permute.xlu0 %7508
        %7512 = vset.pattern.permute.xlu0 0
        %7513 = vperm.xlu0 %7512, %v7463
        %v7514 = vpop.permute.xlu0 %7513
        %7517 = vset.pattern.permute.xlu0 0
        %7518 = vperm.xlu0 %7517, %v7464
        %v7519 = vpop.permute.xlu0 %7518
        %7522 = vset.pattern.permute.xlu0 0
        %7523 = vperm.xlu0 %7522, %v7465
        %v7524 = vpop.permute.xlu0 %7523
        %7527 = vset.pattern.permute.xlu0 0
        %7528 = vperm.xlu0 %7527, %v7466
        %v7529 = vpop.permute.xlu0 %7528
        %7532 = vset.pattern.permute.xlu0 0
        %7533 = vperm.xlu0 %7532, %v7467
        %v7534 = vpop.permute.xlu0 %7533
        %7537 = vset.pattern.permute.xlu0 0
        %7538 = vperm.xlu0 %7537, %v7468
        %v7539 = vpop.permute.xlu0 %7538
        %7542 = vset.pattern.permute.xlu0 0
        %7543 = vperm.xlu0 %7542, %v7469
        %v7544 = vpop.permute.xlu0 %7543
        %7547 = vset.pattern.permute.xlu0 0
        %7548 = vperm.xlu0 %7547, %v7470
        %v7549 = vpop.permute.xlu0 %7548
        %v7551 = vadd.f32 %v7439, %v7474
        %v7552 = vadd.f32 %v7440, %v7479
        %v7553 = vadd.f32 %v7441, %v7484
        %v7554 = vadd.f32 %v7442, %v7489
        %v7555 = vadd.f32 %v7443, %v7494
        %v7556 = vadd.f32 %v7444, %v7499
        %v7557 = vadd.f32 %v7445, %v7504
        %v7558 = vadd.f32 %v7446, %v7509
        %v7559 = vadd.f32 %v7447, %v7514
        %v7560 = vadd.f32 %v7448, %v7519
        %v7561 = vadd.f32 %v7449, %v7524
        %v7562 = vadd.f32 %v7450, %v7529
        %v7563 = vadd.f32 %v7451, %v7534
        %v7564 = vadd.f32 %v7452, %v7539
        %v7565 = vadd.f32 %v7453, %v7544
        %v7566 = vadd.f32 %v7454, %v7549
        %v7567 = vmax.f32 %v7551, 0.0
        %v7568 = vmax.f32 %v7552, 0.0
        %v7569 = vmax.f32 %v7553, 0.0
        %v7570 = vmax.f32 %v7554, 0.0
        %v7571 = vmax.f32 %v7555, 0.0
        %v7572 = vmax.f32 %v7556, 0.0
        %v7573 = vmax.f32 %v7557, 0.0
        %v7574 = vmax.f32 %v7558, 0.0
        %v7575 = vmax.f32 %v7559, 0.0
        %v7576 = vmax.f32 %v7560, 0.0
        %v7577 = vmax.f32 %v7561, 0.0
        %v7578 = vmax.f32 %v7562, 0.0
        %v7579 = vmax.f32 %v7563, 0.0
        %v7580 = vmax.f32 %v7564, 0.0
        %v7581 = vmax.f32 %v7565, 0.0
        %v7582 = vmax.f32 %v7566, 0.0
        %7583 = vst.msk [vmem:[#allocation3 + $0x108] sm:$0xff] %vm5492, %v7567
        %7584 = vst.msk [vmem:[#allocation3 + $0x118] sm:$0xff] %vm5492, %v7568
        %7585 = vst.msk [vmem:[#allocation3 + $0x128] sm:$0xff] %vm5492, %v7569
        %7586 = vst.msk [vmem:[#allocation3 + $0x138] sm:$0xff] %vm5492, %v7570
        %7587 = vst.msk [vmem:[#allocation3 + $0x148] sm:$0xff] %vm5492, %v7571
        %7588 = vst.msk [vmem:[#allocation3 + $0x158] sm:$0xff] %vm5492, %v7572
        %7589 = vst.msk [vmem:[#allocation3 + $0x168] sm:$0xff] %vm5492, %v7573
        %7590 = vst.msk [vmem:[#allocation3 + $0x178] sm:$0xff] %vm5492, %v7574
        %7591 = vst.msk [vmem:[#allocation3 + $0x188] sm:$0xff] %vm5492, %v7575
        %7592 = vst.msk [vmem:[#allocation3 + $0x198] sm:$0xff] %vm5492, %v7576
        %7593 = vst.msk [vmem:[#allocation3 + $0x1a8] sm:$0xff] %vm5492, %v7577
        %7594 = vst.msk [vmem:[#allocation3 + $0x1b8] sm:$0xff] %vm5492, %v7578
        %7595 = vst.msk [vmem:[#allocation3 + $0x1c8] sm:$0xff] %vm5492, %v7579
        %7596 = vst.msk [vmem:[#allocation3 + $0x1d8] sm:$0xff] %vm5492, %v7580
        %7597 = vst.msk [vmem:[#allocation3 + $0x1e8] sm:$0xff] %vm5492, %v7581
        %7598 = vst.msk [vmem:[#allocation3 + $0x1f8] sm:$0xff] %vm5492, %v7582
        %v7599 = vld [vmem:[#allocation4] sm:$0xff]
        %v7600 = vld [vmem:[#allocation4 + $0x8] sm:$0xff]
        %v7601 = vld [vmem:[#allocation4 + $0x10] sm:$0xff]
        %v7602 = vld [vmem:[#allocation4 + $0x18] sm:$0xff]
        %v7603 = vld [vmem:[#allocation4 + $0x20] sm:$0xff]
        %v7604 = vld [vmem:[#allocation4 + $0x28] sm:$0xff]
        %v7605 = vld [vmem:[#allocation4 + $0x30] sm:$0xff]
        %v7606 = vld [vmem:[#allocation4 + $0x38] sm:$0xff]
        %v7607 = vld [vmem:[#allocation4 + $0x40] sm:$0xff]
        %v7608 = vld [vmem:[#allocation4 + $0x48] sm:$0xff]
        %v7609 = vld [vmem:[#allocation4 + $0x50] sm:$0xff]
        %v7610 = vld [vmem:[#allocation4 + $0x58] sm:$0xff]
        %v7611 = vld [vmem:[#allocation4 + $0x60] sm:$0xff]
        %v7612 = vld [vmem:[#allocation4 + $0x68] sm:$0xff]
        %v7613 = vld [vmem:[#allocation4 + $0x70] sm:$0xff]
        %v7614 = vld [vmem:[#allocation4 + $0x78] sm:$0xff]
        %v7615 = vld [vmem:[#allocation4 + $0x80] sm:$0xff]
        %v7616 = vld [vmem:[#allocation4 + $0x88] sm:$0xff]
        %v7617 = vld [vmem:[#allocation4 + $0x90] sm:$0xff]
        %v7618 = vld [vmem:[#allocation4 + $0x98] sm:$0xff]
        %v7619 = vld [vmem:[#allocation4 + $0xa0] sm:$0xff]
        %v7620 = vld [vmem:[#allocation4 + $0xa8] sm:$0xff]
        %v7621 = vld [vmem:[#allocation4 + $0xb0] sm:$0xff]
        %v7622 = vld [vmem:[#allocation4 + $0xb8] sm:$0xff]
        %v7623 = vld [vmem:[#allocation4 + $0xc0] sm:$0xff]
        %v7624 = vld [vmem:[#allocation4 + $0xc8] sm:$0xff]
        %v7625 = vld [vmem:[#allocation4 + $0xd0] sm:$0xff]
        %v7626 = vld [vmem:[#allocation4 + $0xd8] sm:$0xff]
        %v7627 = vld [vmem:[#allocation4 + $0xe0] sm:$0xff]
        %v7628 = vld [vmem:[#allocation4 + $0xe8] sm:$0xff]
        %v7629 = vld [vmem:[#allocation4 + $0xf0] sm:$0xff]
        %v7630 = vld [vmem:[#allocation4 + $0xf8] sm:$0xff]
        %v7631 = vld [vmem:[#allocation3] sm:$0xff]
        %v7632 = vld [vmem:[#allocation3 + $0x10] sm:$0xff]
        %v7633 = vld [vmem:[#allocation3 + $0x20] sm:$0xff]
        %v7634 = vld [vmem:[#allocation3 + $0x30] sm:$0xff]
        %v7635 = vld [vmem:[#allocation3 + $0x40] sm:$0xff]
        %v7636 = vld [vmem:[#allocation3 + $0x50] sm:$0xff]
        %v7637 = vld [vmem:[#allocation3 + $0x60] sm:$0xff]
        %v7638 = vld [vmem:[#allocation3 + $0x70] sm:$0xff]
        %v7639 = vld [vmem:[#allocation3 + $0x80] sm:$0xff]
        %v7640 = vld [vmem:[#allocation3 + $0x90] sm:$0xff]
        %v7641 = vld [vmem:[#allocation3 + $0xa0] sm:$0xff]
        %v7642 = vld [vmem:[#allocation3 + $0xb0] sm:$0xff]
        %v7643 = vld [vmem:[#allocation3 + $0xc0] sm:$0xff]
        %v7644 = vld [vmem:[#allocation3 + $0xd0] sm:$0xff]
        %v7645 = vld [vmem:[#allocation3 + $0xe0] sm:$0xff]
        %v7646 = vld [vmem:[#allocation3 + $0xf0] sm:$0xff]
        %v7647 = vld [vmem:[#allocation3 + $0x100] sm:$0xff]
        %v7648 = vld [vmem:[#allocation3 + $0x110] sm:$0xff]
        %v7649 = vld [vmem:[#allocation3 + $0x120] sm:$0xff]
        %v7650 = vld [vmem:[#allocation3 + $0x130] sm:$0xff]
        %v7651 = vld [vmem:[#allocation3 + $0x140] sm:$0xff]
        %v7652 = vld [vmem:[#allocation3 + $0x150] sm:$0xff]
        %v7653 = vld [vmem:[#allocation3 + $0x160] sm:$0xff]
        %v7654 = vld [vmem:[#allocation3 + $0x170] sm:$0xff]
        %v7655 = vld [vmem:[#allocation3 + $0x180] sm:$0xff]
        %v7656 = vld [vmem:[#allocation3 + $0x190] sm:$0xff]
        %v7657 = vld [vmem:[#allocation3 + $0x1a0] sm:$0xff]
        %v7658 = vld [vmem:[#allocation3 + $0x1b0] sm:$0xff]
        %v7659 = vld [vmem:[#allocation3 + $0x1c0] sm:$0xff]
        %v7660 = vld [vmem:[#allocation3 + $0x1d0] sm:$0xff]
        %v7661 = vld [vmem:[#allocation3 + $0x1e0] sm:$0xff]
        %v7662 = vld [vmem:[#allocation3 + $0x1f0] sm:$0xff]
        %s7663 = scalar_lea.vmem [#allocation4], 256
        %v7664 = vld [vmem:[%s7663] sm:$0xff]
        %v7665 = vld [vmem:[%s7663 + $0x8] sm:$0xff]
        %v7666 = vld [vmem:[%s7663 + $0x10] sm:$0xff]
        %v7667 = vld [vmem:[%s7663 + $0x18] sm:$0xff]
        %v7668 = vld [vmem:[%s7663 + $0x20] sm:$0xff]
        %v7669 = vld [vmem:[%s7663 + $0x28] sm:$0xff]
        %v7670 = vld [vmem:[%s7663 + $0x30] sm:$0xff]
        %v7671 = vld [vmem:[%s7663 + $0x38] sm:$0xff]
        %v7672 = vld [vmem:[%s7663 + $0x40] sm:$0xff]
        %v7673 = vld [vmem:[%s7663 + $0x48] sm:$0xff]
        %v7674 = vld [vmem:[%s7663 + $0x50] sm:$0xff]
        %v7675 = vld [vmem:[%s7663 + $0x58] sm:$0xff]
        %v7676 = vld [vmem:[%s7663 + $0x60] sm:$0xff]
        %v7677 = vld [vmem:[%s7663 + $0x68] sm:$0xff]
        %v7678 = vld [vmem:[%s7663 + $0x70] sm:$0xff]
        %v7679 = vld [vmem:[%s7663 + $0x78] sm:$0xff]
        %v7680 = vld [vmem:[%s7663 + $0x80] sm:$0xff]
        %v7681 = vld [vmem:[%s7663 + $0x88] sm:$0xff]
        %v7682 = vld [vmem:[%s7663 + $0x90] sm:$0xff]
        %v7683 = vld [vmem:[%s7663 + $0x98] sm:$0xff]
        %v7684 = vld [vmem:[%s7663 + $0xa0] sm:$0xff]
        %v7685 = vld [vmem:[%s7663 + $0xa8] sm:$0xff]
        %v7686 = vld [vmem:[%s7663 + $0xb0] sm:$0xff]
        %v7687 = vld [vmem:[%s7663 + $0xb8] sm:$0xff]
        %v7688 = vld [vmem:[%s7663 + $0xc0] sm:$0xff]
        %v7689 = vld [vmem:[%s7663 + $0xc8] sm:$0xff]
        %v7690 = vld [vmem:[%s7663 + $0xd0] sm:$0xff]
        %v7691 = vld [vmem:[%s7663 + $0xd8] sm:$0xff]
        %v7692 = vld [vmem:[%s7663 + $0xe0] sm:$0xff]
        %v7693 = vld [vmem:[%s7663 + $0xe8] sm:$0xff]
        %v7694 = vld [vmem:[%s7663 + $0xf0] sm:$0xff]
        %v7695 = vld [vmem:[%s7663 + $0xf8] sm:$0xff]
        %v7696 = vld [vmem:[#allocation3 + $0x8] sm:$0xff]
        %v7697 = vld [vmem:[#allocation3 + $0x18] sm:$0xff]
        %v7698 = vld [vmem:[#allocation3 + $0x28] sm:$0xff]
        %v7699 = vld [vmem:[#allocation3 + $0x38] sm:$0xff]
        %v7700 = vld [vmem:[#allocation3 + $0x48] sm:$0xff]
        %v7701 = vld [vmem:[#allocation3 + $0x58] sm:$0xff]
        %v7702 = vld [vmem:[#allocation3 + $0x68] sm:$0xff]
        %v7703 = vld [vmem:[#allocation3 + $0x78] sm:$0xff]
        %v7704 = vld [vmem:[#allocation3 + $0x88] sm:$0xff]
        %v7705 = vld [vmem:[#allocation3 + $0x98] sm:$0xff]
        %v7706 = vld [vmem:[#allocation3 + $0xa8] sm:$0xff]
        %v7707 = vld [vmem:[#allocation3 + $0xb8] sm:$0xff]
        %v7708 = vld [vmem:[#allocation3 + $0xc8] sm:$0xff]
        %v7709 = vld [vmem:[#allocation3 + $0xd8] sm:$0xff]
        %v7710 = vld [vmem:[#allocation3 + $0xe8] sm:$0xff]
        %v7711 = vld [vmem:[#allocation3 + $0xf8] sm:$0xff]
        %v7712 = vld [vmem:[#allocation3 + $0x108] sm:$0xff]
        %v7713 = vld [vmem:[#allocation3 + $0x118] sm:$0xff]
        %v7714 = vld [vmem:[#allocation3 + $0x128] sm:$0xff]
        %v7715 = vld [vmem:[#allocation3 + $0x138] sm:$0xff]
        %v7716 = vld [vmem:[#allocation3 + $0x148] sm:$0xff]
        %v7717 = vld [vmem:[#allocation3 + $0x158] sm:$0xff]
        %v7718 = vld [vmem:[#allocation3 + $0x168] sm:$0xff]
        %v7719 = vld [vmem:[#allocation3 + $0x178] sm:$0xff]
        %v7720 = vld [vmem:[#allocation3 + $0x188] sm:$0xff]
        %v7721 = vld [vmem:[#allocation3 + $0x198] sm:$0xff]
        %v7722 = vld [vmem:[#allocation3 + $0x1a8] sm:$0xff]
        %v7723 = vld [vmem:[#allocation3 + $0x1b8] sm:$0xff]
        %v7724 = vld [vmem:[#allocation3 + $0x1c8] sm:$0xff]
        %v7725 = vld [vmem:[#allocation3 + $0x1d8] sm:$0xff]
        %v7726 = vld [vmem:[#allocation3 + $0x1e8] sm:$0xff]
        %v7727 = vld [vmem:[#allocation3 + $0x1f8] sm:$0xff]
        %7792 = vrot.lane.b32.xlu0 %v7631, 127
        %v7793 = vpop.permute.xlu0 %7792
        %7794 = vrot.lane.b32.xlu0 %v7696, 127
        %v7795 = vpop.permute.xlu0 %7794
        %7796 = vrot.lane.b32.xlu0 %v7632, 127
        %v7797 = vpop.permute.xlu0 %7796
        %7798 = vrot.lane.b32.xlu0 %v7697, 127
        %v7799 = vpop.permute.xlu0 %7798
        %7800 = vrot.lane.b32.xlu0 %v7633, 127
        %v7801 = vpop.permute.xlu0 %7800
        %7802 = vrot.lane.b32.xlu0 %v7698, 127
        %v7803 = vpop.permute.xlu0 %7802
        %7804 = vrot.lane.b32.xlu0 %v7634, 127
        %v7805 = vpop.permute.xlu0 %7804
        %7806 = vrot.lane.b32.xlu0 %v7699, 127
        %v7807 = vpop.permute.xlu0 %7806
        %7808 = vrot.lane.b32.xlu0 %v7635, 127
        %v7809 = vpop.permute.xlu0 %7808
        %7810 = vrot.lane.b32.xlu0 %v7700, 127
        %v7811 = vpop.permute.xlu0 %7810
        %7812 = vrot.lane.b32.xlu0 %v7636, 127
        %v7813 = vpop.permute.xlu0 %7812
        %7814 = vrot.lane.b32.xlu0 %v7701, 127
        %v7815 = vpop.permute.xlu0 %7814
        %7816 = vrot.lane.b32.xlu0 %v7637, 127
        %v7817 = vpop.permute.xlu0 %7816
        %7818 = vrot.lane.b32.xlu0 %v7702, 127
        %v7819 = vpop.permute.xlu0 %7818
        %7820 = vrot.lane.b32.xlu0 %v7638, 127
        %v7821 = vpop.permute.xlu0 %7820
        %7822 = vrot.lane.b32.xlu0 %v7703, 127
        %v7823 = vpop.permute.xlu0 %7822
        %7824 = vrot.lane.b32.xlu0 %v7639, 127
        %v7825 = vpop.permute.xlu0 %7824
        %7826 = vrot.lane.b32.xlu0 %v7704, 127
        %v7827 = vpop.permute.xlu0 %7826
        %7828 = vrot.lane.b32.xlu0 %v7640, 127
        %v7829 = vpop.permute.xlu0 %7828
        %7830 = vrot.lane.b32.xlu0 %v7705, 127
        %v7831 = vpop.permute.xlu0 %7830
        %7832 = vrot.lane.b32.xlu0 %v7641, 127
        %v7833 = vpop.permute.xlu0 %7832
        %7834 = vrot.lane.b32.xlu0 %v7706, 127
        %v7835 = vpop.permute.xlu0 %7834
        %7836 = vrot.lane.b32.xlu0 %v7642, 127
        %v7837 = vpop.permute.xlu0 %7836
        %7838 = vrot.lane.b32.xlu0 %v7707, 127
        %v7839 = vpop.permute.xlu0 %7838
        %7840 = vrot.lane.b32.xlu0 %v7643, 127
        %v7841 = vpop.permute.xlu0 %7840
        %7842 = vrot.lane.b32.xlu0 %v7708, 127
        %v7843 = vpop.permute.xlu0 %7842
        %7844 = vrot.lane.b32.xlu0 %v7644, 127
        %v7845 = vpop.permute.xlu0 %7844
        %7846 = vrot.lane.b32.xlu0 %v7709, 127
        %v7847 = vpop.permute.xlu0 %7846
        %7848 = vrot.lane.b32.xlu0 %v7645, 127
        %v7849 = vpop.permute.xlu0 %7848
        %7850 = vrot.lane.b32.xlu0 %v7710, 127
        %v7851 = vpop.permute.xlu0 %7850
        %7852 = vrot.lane.b32.xlu0 %v7646, 127
        %v7853 = vpop.permute.xlu0 %7852
        %7854 = vrot.lane.b32.xlu0 %v7711, 127
        %v7855 = vpop.permute.xlu0 %7854
        %7856 = vrot.lane.b32.xlu0 %v7647, 127
        %v7857 = vpop.permute.xlu0 %7856
        %7858 = vrot.lane.b32.xlu0 %v7712, 127
        %v7859 = vpop.permute.xlu0 %7858
        %7860 = vrot.lane.b32.xlu0 %v7648, 127
        %v7861 = vpop.permute.xlu0 %7860
        %7862 = vrot.lane.b32.xlu0 %v7713, 127
        %v7863 = vpop.permute.xlu0 %7862
        %7864 = vrot.lane.b32.xlu0 %v7649, 127
        %v7865 = vpop.permute.xlu0 %7864
        %7866 = vrot.lane.b32.xlu0 %v7714, 127
        %v7867 = vpop.permute.xlu0 %7866
        %7868 = vrot.lane.b32.xlu0 %v7650, 127
        %v7869 = vpop.permute.xlu0 %7868
        %7870 = vrot.lane.b32.xlu0 %v7715, 127
        %v7871 = vpop.permute.xlu0 %7870
        %7872 = vrot.lane.b32.xlu0 %v7651, 127
        %v7873 = vpop.permute.xlu0 %7872
        %7874 = vrot.lane.b32.xlu0 %v7716, 127
        %v7875 = vpop.permute.xlu0 %7874
        %7876 = vrot.lane.b32.xlu0 %v7652, 127
        %v7877 = vpop.permute.xlu0 %7876
        %7878 = vrot.lane.b32.xlu0 %v7717, 127
        %v7879 = vpop.permute.xlu0 %7878
        %7880 = vrot.lane.b32.xlu0 %v7653, 127
        %v7881 = vpop.permute.xlu0 %7880
        %7882 = vrot.lane.b32.xlu0 %v7718, 127
        %v7883 = vpop.permute.xlu0 %7882
        %7884 = vrot.lane.b32.xlu0 %v7654, 127
        %v7885 = vpop.permute.xlu0 %7884
        %7886 = vrot.lane.b32.xlu0 %v7719, 127
        %v7887 = vpop.permute.xlu0 %7886
        %7888 = vrot.lane.b32.xlu0 %v7655, 127
        %v7889 = vpop.permute.xlu0 %7888
        %7890 = vrot.lane.b32.xlu0 %v7720, 127
        %v7891 = vpop.permute.xlu0 %7890
        %7892 = vrot.lane.b32.xlu0 %v7656, 127
        %v7893 = vpop.permute.xlu0 %7892
        %7894 = vrot.lane.b32.xlu0 %v7721, 127
        %v7895 = vpop.permute.xlu0 %7894
        %7896 = vrot.lane.b32.xlu0 %v7657, 127
        %v7897 = vpop.permute.xlu0 %7896
        %7898 = vrot.lane.b32.xlu0 %v7722, 127
        %v7899 = vpop.permute.xlu0 %7898
        %7900 = vrot.lane.b32.xlu0 %v7658, 127
        %v7901 = vpop.permute.xlu0 %7900
        %7902 = vrot.lane.b32.xlu0 %v7723, 127
        %v7903 = vpop.permute.xlu0 %7902
        %7904 = vrot.lane.b32.xlu0 %v7659, 127
        %v7905 = vpop.permute.xlu0 %7904
        %7906 = vrot.lane.b32.xlu0 %v7724, 127
        %v7907 = vpop.permute.xlu0 %7906
        %7908 = vrot.lane.b32.xlu0 %v7660, 127
        %v7909 = vpop.permute.xlu0 %7908
        %7910 = vrot.lane.b32.xlu0 %v7725, 127
        %v7911 = vpop.permute.xlu0 %7910
        %7912 = vrot.lane.b32.xlu0 %v7661, 127
        %v7913 = vpop.permute.xlu0 %7912
        %7914 = vrot.lane.b32.xlu0 %v7726, 127
        %v7915 = vpop.permute.xlu0 %7914
        %7916 = vrot.lane.b32.xlu0 %v7662, 127
        %v7917 = vpop.permute.xlu0 %7916
        %7918 = vrot.lane.b32.xlu0 %v7727, 127
        %v7919 = vpop.permute.xlu0 %7918
        %v7920 = vsel %vm551, %v7793, %v7795
        %v7921 = vsel %vm551, %v7797, %v7799
        %v7922 = vsel %vm551, %v7801, %v7803
        %v7923 = vsel %vm551, %v7805, %v7807
        %v7924 = vsel %vm551, %v7809, %v7811
        %v7925 = vsel %vm551, %v7813, %v7815
        %v7926 = vsel %vm551, %v7817, %v7819
        %v7927 = vsel %vm551, %v7821, %v7823
        %v7928 = vsel %vm551, %v7825, %v7827
        %v7929 = vsel %vm551, %v7829, %v7831
        %v7930 = vsel %vm551, %v7833, %v7835
        %v7931 = vsel %vm551, %v7837, %v7839
        %v7932 = vsel %vm551, %v7841, %v7843
        %v7933 = vsel %vm551, %v7845, %v7847
        %v7934 = vsel %vm551, %v7849, %v7851
        %v7935 = vsel %vm551, %v7853, %v7855
        %v7936 = vsel %vm551, %v7857, %v7859
        %v7937 = vsel %vm551, %v7861, %v7863
        %v7938 = vsel %vm551, %v7865, %v7867
        %v7939 = vsel %vm551, %v7869, %v7871
        %v7940 = vsel %vm551, %v7873, %v7875
        %v7941 = vsel %vm551, %v7877, %v7879
        %v7942 = vsel %vm551, %v7881, %v7883
        %v7943 = vsel %vm551, %v7885, %v7887
        %v7944 = vsel %vm551, %v7889, %v7891
        %v7945 = vsel %vm551, %v7893, %v7895
        %v7946 = vsel %vm551, %v7897, %v7899
        %v7947 = vsel %vm551, %v7901, %v7903
        %v7948 = vsel %vm551, %v7905, %v7907
        %v7949 = vsel %vm551, %v7909, %v7911
        %v7950 = vsel %vm551, %v7913, %v7915
        %v7951 = vsel %vm551, %v7917, %v7919
        %7984 = vmatpush.msra.mxu0 %v7935
        %7985 = vmatpush.msra.mxu0 %v7934
        %7986 = vmatpush.msra.mxu0 %v7933
        %7987 = vmatpush.msra.mxu0 %v7932
        %7988 = vmatpush.msra.mxu0 %v7931
        %7989 = vmatpush.msra.mxu0 %v7930
        %7990 = vmatpush.msra.mxu0 %v7929
        %7991 = vmatpush.msra.mxu0 %v7928
        %7992 = vmatpush.msra.mxu0 %v7927
        %7993 = vmatpush.msra.mxu0 %v7926
        %7994 = vmatpush.msra.mxu0 %v7925
        %7995 = vmatpush.msra.mxu0 %v7924
        %7996 = vmatpush.msra.mxu0 %v7923
        %7997 = vmatpush.msra.mxu0 %v7922
        %7998 = vmatpush.msra.mxu0 %v7921
        %7999 = vmatpush.msra.mxu0 %v7920
        %8000 = vmatmul.f32.gmra.mxu0 %v7664
        %v8001 = vpop.f32.mrf.mxu0
        %v8002 = vadd.f32 0.0, %v8001
        %8003 = vmatmul.f32.gmra.mxu0 %v7666
        %v8004 = vpop.f32.mrf.mxu0
        %v8005 = vadd.f32 0.0, %v8004
        %8006 = vmatmul.f32.gmra.mxu0 %v7668
        %v8007 = vpop.f32.mrf.mxu0
        %v8008 = vadd.f32 0.0, %v8007
        %8009 = vmatmul.f32.gmra.mxu0 %v7670
        %v8010 = vpop.f32.mrf.mxu0
        %v8011 = vadd.f32 0.0, %v8010
        %8012 = vmatmul.f32.gmra.mxu0 %v7672
        %v8013 = vpop.f32.mrf.mxu0
        %v8014 = vadd.f32 0.0, %v8013
        %8015 = vmatmul.f32.gmra.mxu0 %v7674
        %v8016 = vpop.f32.mrf.mxu0
        %v8017 = vadd.f32 0.0, %v8016
        %8018 = vmatmul.f32.gmra.mxu0 %v7676
        %v8019 = vpop.f32.mrf.mxu0
        %v8020 = vadd.f32 0.0, %v8019
        %8021 = vmatmul.f32.gmra.mxu0 %v7678
        %v8022 = vpop.f32.mrf.mxu0
        %v8023 = vadd.f32 0.0, %v8022
        %8024 = vmatmul.f32.gmra.mxu0 %v7680
        %v8025 = vpop.f32.mrf.mxu0
        %v8026 = vadd.f32 0.0, %v8025
        %8027 = vmatmul.f32.gmra.mxu0 %v7682
        %v8028 = vpop.f32.mrf.mxu0
        %v8029 = vadd.f32 0.0, %v8028
        %8030 = vmatmul.f32.gmra.mxu0 %v7684
        %v8031 = vpop.f32.mrf.mxu0
        %v8032 = vadd.f32 0.0, %v8031
        %8033 = vmatmul.f32.gmra.mxu0 %v7686
        %v8034 = vpop.f32.mrf.mxu0
        %v8035 = vadd.f32 0.0, %v8034
        %8036 = vmatmul.f32.gmra.mxu0 %v7688
        %v8037 = vpop.f32.mrf.mxu0
        %v8038 = vadd.f32 0.0, %v8037
        %8039 = vmatmul.f32.gmra.mxu0 %v7690
        %v8040 = vpop.f32.mrf.mxu0
        %v8041 = vadd.f32 0.0, %v8040
        %8042 = vmatmul.f32.gmra.mxu0 %v7692
        %v8043 = vpop.f32.mrf.mxu0
        %v8044 = vadd.f32 0.0, %v8043
        %8045 = vmatmul.f32.gmra.mxu0 %v7694
        %v8046 = vpop.f32.mrf.mxu0
        %v8047 = vadd.f32 0.0, %v8046
        %8048 = vdwg.mxu0
        %8049 = vmatpush.msra.mxu0 %v7951
        %8050 = vmatpush.msra.mxu0 %v7950
        %8051 = vmatpush.msra.mxu0 %v7949
        %8052 = vmatpush.msra.mxu0 %v7948
        %8053 = vmatpush.msra.mxu0 %v7947
        %8054 = vmatpush.msra.mxu0 %v7946
        %8055 = vmatpush.msra.mxu0 %v7945
        %8056 = vmatpush.msra.mxu0 %v7944
        %8057 = vmatpush.msra.mxu0 %v7943
        %8058 = vmatpush.msra.mxu0 %v7942
        %8059 = vmatpush.msra.mxu0 %v7941
        %8060 = vmatpush.msra.mxu0 %v7940
        %8061 = vmatpush.msra.mxu0 %v7939
        %8062 = vmatpush.msra.mxu0 %v7938
        %8063 = vmatpush.msra.mxu0 %v7937
        %8064 = vmatpush.msra.mxu0 %v7936
        %8065 = vmatmul.f32.gmra.mxu0 %v7665
        %v8066 = vpop.f32.mrf.mxu0
        %v8067 = vadd.f32 %v8002, %v8066
        %8068 = vmatmul.f32.gmra.mxu0 %v7667
        %v8069 = vpop.f32.mrf.mxu0
        %v8070 = vadd.f32 %v8005, %v8069
        %8071 = vmatmul.f32.gmra.mxu0 %v7669
        %v8072 = vpop.f32.mrf.mxu0
        %v8073 = vadd.f32 %v8008, %v8072
        %8074 = vmatmul.f32.gmra.mxu0 %v7671
        %v8075 = vpop.f32.mrf.mxu0
        %v8076 = vadd.f32 %v8011, %v8075
        %8077 = vmatmul.f32.gmra.mxu0 %v7673
        %v8078 = vpop.f32.mrf.mxu0
        %v8079 = vadd.f32 %v8014, %v8078
        %8080 = vmatmul.f32.gmra.mxu0 %v7675
        %v8081 = vpop.f32.mrf.mxu0
        %v8082 = vadd.f32 %v8017, %v8081
        %8083 = vmatmul.f32.gmra.mxu0 %v7677
        %v8084 = vpop.f32.mrf.mxu0
        %v8085 = vadd.f32 %v8020, %v8084
        %8086 = vmatmul.f32.gmra.mxu0 %v7679
        %v8087 = vpop.f32.mrf.mxu0
        %v8088 = vadd.f32 %v8023, %v8087
        %8089 = vmatmul.f32.gmra.mxu0 %v7681
        %v8090 = vpop.f32.mrf.mxu0
        %v8091 = vadd.f32 %v8026, %v8090
        %8092 = vmatmul.f32.gmra.mxu0 %v7683
        %v8093 = vpop.f32.mrf.mxu0
        %v8094 = vadd.f32 %v8029, %v8093
        %8095 = vmatmul.f32.gmra.mxu0 %v7685
        %v8096 = vpop.f32.mrf.mxu0
        %v8097 = vadd.f32 %v8032, %v8096
        %8098 = vmatmul.f32.gmra.mxu0 %v7687
        %v8099 = vpop.f32.mrf.mxu0
        %v8100 = vadd.f32 %v8035, %v8099
        %8101 = vmatmul.f32.gmra.mxu0 %v7689
        %v8102 = vpop.f32.mrf.mxu0
        %v8103 = vadd.f32 %v8038, %v8102
        %8104 = vmatmul.f32.gmra.mxu0 %v7691
        %v8105 = vpop.f32.mrf.mxu0
        %v8106 = vadd.f32 %v8041, %v8105
        %8107 = vmatmul.f32.gmra.mxu0 %v7693
        %v8108 = vpop.f32.mrf.mxu0
        %v8109 = vadd.f32 %v8044, %v8108
        %8110 = vmatmul.f32.gmra.mxu0 %v7695
        %v8111 = vpop.f32.mrf.mxu0
        %v8112 = vadd.f32 %v8047, %v8111
        %8113 = vdwg.mxu0
        %8114 = vmatpush.msra.mxu0 %v7646
        %8115 = vmatpush.msra.mxu0 %v7645
        %8116 = vmatpush.msra.mxu0 %v7644
        %8117 = vmatpush.msra.mxu0 %v7643
        %8118 = vmatpush.msra.mxu0 %v7642
        %8119 = vmatpush.msra.mxu0 %v7641
        %8120 = vmatpush.msra.mxu0 %v7640
        %8121 = vmatpush.msra.mxu0 %v7639
        %8122 = vmatpush.msra.mxu0 %v7638
        %8123 = vmatpush.msra.mxu0 %v7637
        %8124 = vmatpush.msra.mxu0 %v7636
        %8125 = vmatpush.msra.mxu0 %v7635
        %8126 = vmatpush.msra.mxu0 %v7634
        %8127 = vmatpush.msra.mxu0 %v7633
        %8128 = vmatpush.msra.mxu0 %v7632
        %8129 = vmatpush.msra.mxu0 %v7631
        %8130 = vmatmul.f32.gmra.mxu0 %v7599
        %v8131 = vpop.f32.mrf.mxu0
        %v8132 = vadd.f32 %v8067, %v8131
        %8133 = vmatmul.f32.gmra.mxu0 %v7601
        %v8134 = vpop.f32.mrf.mxu0
        %v8135 = vadd.f32 %v8070, %v8134
        %8136 = vmatmul.f32.gmra.mxu0 %v7603
        %v8137 = vpop.f32.mrf.mxu0
        %v8138 = vadd.f32 %v8073, %v8137
        %8139 = vmatmul.f32.gmra.mxu0 %v7605
        %v8140 = vpop.f32.mrf.mxu0
        %v8141 = vadd.f32 %v8076, %v8140
        %8142 = vmatmul.f32.gmra.mxu0 %v7607
        %v8143 = vpop.f32.mrf.mxu0
        %v8144 = vadd.f32 %v8079, %v8143
        %8145 = vmatmul.f32.gmra.mxu0 %v7609
        %v8146 = vpop.f32.mrf.mxu0
        %v8147 = vadd.f32 %v8082, %v8146
        %8148 = vmatmul.f32.gmra.mxu0 %v7611
        %v8149 = vpop.f32.mrf.mxu0
        %v8150 = vadd.f32 %v8085, %v8149
        %8151 = vmatmul.f32.gmra.mxu0 %v7613
        %v8152 = vpop.f32.mrf.mxu0
        %v8153 = vadd.f32 %v8088, %v8152
        %8154 = vmatmul.f32.gmra.mxu0 %v7615
        %v8155 = vpop.f32.mrf.mxu0
        %v8156 = vadd.f32 %v8091, %v8155
        %8157 = vmatmul.f32.gmra.mxu0 %v7617
        %v8158 = vpop.f32.mrf.mxu0
        %v8159 = vadd.f32 %v8094, %v8158
        %8160 = vmatmul.f32.gmra.mxu0 %v7619
        %v8161 = vpop.f32.mrf.mxu0
        %v8162 = vadd.f32 %v8097, %v8161
        %8163 = vmatmul.f32.gmra.mxu0 %v7621
        %v8164 = vpop.f32.mrf.mxu0
        %v8165 = vadd.f32 %v8100, %v8164
        %8166 = vmatmul.f32.gmra.mxu0 %v7623
        %v8167 = vpop.f32.mrf.mxu0
        %v8168 = vadd.f32 %v8103, %v8167
        %8169 = vmatmul.f32.gmra.mxu0 %v7625
        %v8170 = vpop.f32.mrf.mxu0
        %v8171 = vadd.f32 %v8106, %v8170
        %8172 = vmatmul.f32.gmra.mxu0 %v7627
        %v8173 = vpop.f32.mrf.mxu0
        %v8174 = vadd.f32 %v8109, %v8173
        %8175 = vmatmul.f32.gmra.mxu0 %v7629
        %v8176 = vpop.f32.mrf.mxu0
        %v8177 = vadd.f32 %v8112, %v8176
        %8178 = vdwg.mxu0
        %8179 = vmatpush.msra.mxu0 %v7662
        %8180 = vmatpush.msra.mxu0 %v7661
        %8181 = vmatpush.msra.mxu0 %v7660
        %8182 = vmatpush.msra.mxu0 %v7659
        %8183 = vmatpush.msra.mxu0 %v7658
        %8184 = vmatpush.msra.mxu0 %v7657
        %8185 = vmatpush.msra.mxu0 %v7656
        %8186 = vmatpush.msra.mxu0 %v7655
        %8187 = vmatpush.msra.mxu0 %v7654
        %8188 = vmatpush.msra.mxu0 %v7653
        %8189 = vmatpush.msra.mxu0 %v7652
        %8190 = vmatpush.msra.mxu0 %v7651
        %8191 = vmatpush.msra.mxu0 %v7650
        %8192 = vmatpush.msra.mxu0 %v7649
        %8193 = vmatpush.msra.mxu0 %v7648
        %8194 = vmatpush.msra.mxu0 %v7647
        %8195 = vmatmul.f32.gmra.mxu0 %v7600
        %v8196 = vpop.f32.mrf.mxu0
        %v8197 = vadd.f32 %v8132, %v8196
        %8198 = vmatmul.f32.gmra.mxu0 %v7602
        %v8199 = vpop.f32.mrf.mxu0
        %v8200 = vadd.f32 %v8135, %v8199
        %8201 = vmatmul.f32.gmra.mxu0 %v7604
        %v8202 = vpop.f32.mrf.mxu0
        %v8203 = vadd.f32 %v8138, %v8202
        %8204 = vmatmul.f32.gmra.mxu0 %v7606
        %v8205 = vpop.f32.mrf.mxu0
        %v8206 = vadd.f32 %v8141, %v8205
        %8207 = vmatmul.f32.gmra.mxu0 %v7608
        %v8208 = vpop.f32.mrf.mxu0
        %v8209 = vadd.f32 %v8144, %v8208
        %8210 = vmatmul.f32.gmra.mxu0 %v7610
        %v8211 = vpop.f32.mrf.mxu0
        %v8212 = vadd.f32 %v8147, %v8211
        %8213 = vmatmul.f32.gmra.mxu0 %v7612
        %v8214 = vpop.f32.mrf.mxu0
        %v8215 = vadd.f32 %v8150, %v8214
        %8216 = vmatmul.f32.gmra.mxu0 %v7614
        %v8217 = vpop.f32.mrf.mxu0
        %v8218 = vadd.f32 %v8153, %v8217
        %8219 = vmatmul.f32.gmra.mxu0 %v7616
        %v8220 = vpop.f32.mrf.mxu0
        %v8221 = vadd.f32 %v8156, %v8220
        %8222 = vmatmul.f32.gmra.mxu0 %v7618
        %v8223 = vpop.f32.mrf.mxu0
        %v8224 = vadd.f32 %v8159, %v8223
        %8225 = vmatmul.f32.gmra.mxu0 %v7620
        %v8226 = vpop.f32.mrf.mxu0
        %v8227 = vadd.f32 %v8162, %v8226
        %8228 = vmatmul.f32.gmra.mxu0 %v7622
        %v8229 = vpop.f32.mrf.mxu0
        %v8230 = vadd.f32 %v8165, %v8229
        %8231 = vmatmul.f32.gmra.mxu0 %v7624
        %v8232 = vpop.f32.mrf.mxu0
        %v8233 = vadd.f32 %v8168, %v8232
        %8234 = vmatmul.f32.gmra.mxu0 %v7626
        %v8235 = vpop.f32.mrf.mxu0
        %v8236 = vadd.f32 %v8171, %v8235
        %8237 = vmatmul.f32.gmra.mxu0 %v7628
        %v8238 = vpop.f32.mrf.mxu0
        %v8239 = vadd.f32 %v8174, %v8238
        %8240 = vmatmul.f32.gmra.mxu0 %v7630
        %v8241 = vpop.f32.mrf.mxu0
        %v8242 = vadd.f32 %v8177, %v8241
        %8243 = vdwg.mxu0
        %s8244 = scalar_lea.vmem [#allocation4], 512
        %v8245 = vld [vmem:[%s8244] sm:$0xff]
        %v8246 = vld [vmem:[%s8244 + $0x8] sm:$0xff]
        %v8247 = vld [vmem:[%s8244 + $0x10] sm:$0xff]
        %v8248 = vld [vmem:[%s8244 + $0x18] sm:$0xff]
        %v8249 = vld [vmem:[%s8244 + $0x20] sm:$0xff]
        %v8250 = vld [vmem:[%s8244 + $0x28] sm:$0xff]
        %v8251 = vld [vmem:[%s8244 + $0x30] sm:$0xff]
        %v8252 = vld [vmem:[%s8244 + $0x38] sm:$0xff]
        %v8253 = vld [vmem:[%s8244 + $0x40] sm:$0xff]
        %v8254 = vld [vmem:[%s8244 + $0x48] sm:$0xff]
        %v8255 = vld [vmem:[%s8244 + $0x50] sm:$0xff]
        %v8256 = vld [vmem:[%s8244 + $0x58] sm:$0xff]
        %v8257 = vld [vmem:[%s8244 + $0x60] sm:$0xff]
        %v8258 = vld [vmem:[%s8244 + $0x68] sm:$0xff]
        %v8259 = vld [vmem:[%s8244 + $0x70] sm:$0xff]
        %v8260 = vld [vmem:[%s8244 + $0x78] sm:$0xff]
        %v8261 = vld [vmem:[%s8244 + $0x80] sm:$0xff]
        %v8262 = vld [vmem:[%s8244 + $0x88] sm:$0xff]
        %v8263 = vld [vmem:[%s8244 + $0x90] sm:$0xff]
        %v8264 = vld [vmem:[%s8244 + $0x98] sm:$0xff]
        %v8265 = vld [vmem:[%s8244 + $0xa0] sm:$0xff]
        %v8266 = vld [vmem:[%s8244 + $0xa8] sm:$0xff]
        %v8267 = vld [vmem:[%s8244 + $0xb0] sm:$0xff]
        %v8268 = vld [vmem:[%s8244 + $0xb8] sm:$0xff]
        %v8269 = vld [vmem:[%s8244 + $0xc0] sm:$0xff]
        %v8270 = vld [vmem:[%s8244 + $0xc8] sm:$0xff]
        %v8271 = vld [vmem:[%s8244 + $0xd0] sm:$0xff]
        %v8272 = vld [vmem:[%s8244 + $0xd8] sm:$0xff]
        %v8273 = vld [vmem:[%s8244 + $0xe0] sm:$0xff]
        %v8274 = vld [vmem:[%s8244 + $0xe8] sm:$0xff]
        %v8275 = vld [vmem:[%s8244 + $0xf0] sm:$0xff]
        %v8276 = vld [vmem:[%s8244 + $0xf8] sm:$0xff]
        %8277 = vrot.lane.b32.xlu0 %v7631, 126
        %v8278 = vpop.permute.xlu0 %8277
        %8279 = vrot.lane.b32.xlu0 %v7696, 126
        %v8280 = vpop.permute.xlu0 %8279
        %8281 = vrot.lane.b32.xlu0 %v7632, 126
        %v8282 = vpop.permute.xlu0 %8281
        %8283 = vrot.lane.b32.xlu0 %v7697, 126
        %v8284 = vpop.permute.xlu0 %8283
        %8285 = vrot.lane.b32.xlu0 %v7633, 126
        %v8286 = vpop.permute.xlu0 %8285
        %8287 = vrot.lane.b32.xlu0 %v7698, 126
        %v8288 = vpop.permute.xlu0 %8287
        %8289 = vrot.lane.b32.xlu0 %v7634, 126
        %v8290 = vpop.permute.xlu0 %8289
        %8291 = vrot.lane.b32.xlu0 %v7699, 126
        %v8292 = vpop.permute.xlu0 %8291
        %8293 = vrot.lane.b32.xlu0 %v7635, 126
        %v8294 = vpop.permute.xlu0 %8293
        %8295 = vrot.lane.b32.xlu0 %v7700, 126
        %v8296 = vpop.permute.xlu0 %8295
        %8297 = vrot.lane.b32.xlu0 %v7636, 126
        %v8298 = vpop.permute.xlu0 %8297
        %8299 = vrot.lane.b32.xlu0 %v7701, 126
        %v8300 = vpop.permute.xlu0 %8299
        %8301 = vrot.lane.b32.xlu0 %v7637, 126
        %v8302 = vpop.permute.xlu0 %8301
        %8303 = vrot.lane.b32.xlu0 %v7702, 126
        %v8304 = vpop.permute.xlu0 %8303
        %8305 = vrot.lane.b32.xlu0 %v7638, 126
        %v8306 = vpop.permute.xlu0 %8305
        %8307 = vrot.lane.b32.xlu0 %v7703, 126
        %v8308 = vpop.permute.xlu0 %8307
        %8309 = vrot.lane.b32.xlu0 %v7639, 126
        %v8310 = vpop.permute.xlu0 %8309
        %8311 = vrot.lane.b32.xlu0 %v7704, 126
        %v8312 = vpop.permute.xlu0 %8311
        %8313 = vrot.lane.b32.xlu0 %v7640, 126
        %v8314 = vpop.permute.xlu0 %8313
        %8315 = vrot.lane.b32.xlu0 %v7705, 126
        %v8316 = vpop.permute.xlu0 %8315
        %8317 = vrot.lane.b32.xlu0 %v7641, 126
        %v8318 = vpop.permute.xlu0 %8317
        %8319 = vrot.lane.b32.xlu0 %v7706, 126
        %v8320 = vpop.permute.xlu0 %8319
        %8321 = vrot.lane.b32.xlu0 %v7642, 126
        %v8322 = vpop.permute.xlu0 %8321
        %8323 = vrot.lane.b32.xlu0 %v7707, 126
        %v8324 = vpop.permute.xlu0 %8323
        %8325 = vrot.lane.b32.xlu0 %v7643, 126
        %v8326 = vpop.permute.xlu0 %8325
        %8327 = vrot.lane.b32.xlu0 %v7708, 126
        %v8328 = vpop.permute.xlu0 %8327
        %8329 = vrot.lane.b32.xlu0 %v7644, 126
        %v8330 = vpop.permute.xlu0 %8329
        %8331 = vrot.lane.b32.xlu0 %v7709, 126
        %v8332 = vpop.permute.xlu0 %8331
        %8333 = vrot.lane.b32.xlu0 %v7645, 126
        %v8334 = vpop.permute.xlu0 %8333
        %8335 = vrot.lane.b32.xlu0 %v7710, 126
        %v8336 = vpop.permute.xlu0 %8335
        %8337 = vrot.lane.b32.xlu0 %v7646, 126
        %v8338 = vpop.permute.xlu0 %8337
        %8339 = vrot.lane.b32.xlu0 %v7711, 126
        %v8340 = vpop.permute.xlu0 %8339
        %8341 = vrot.lane.b32.xlu0 %v7647, 126
        %v8342 = vpop.permute.xlu0 %8341
        %8343 = vrot.lane.b32.xlu0 %v7712, 126
        %v8344 = vpop.permute.xlu0 %8343
        %8345 = vrot.lane.b32.xlu0 %v7648, 126
        %v8346 = vpop.permute.xlu0 %8345
        %8347 = vrot.lane.b32.xlu0 %v7713, 126
        %v8348 = vpop.permute.xlu0 %8347
        %8349 = vrot.lane.b32.xlu0 %v7649, 126
        %v8350 = vpop.permute.xlu0 %8349
        %8351 = vrot.lane.b32.xlu0 %v7714, 126
        %v8352 = vpop.permute.xlu0 %8351
        %8353 = vrot.lane.b32.xlu0 %v7650, 126
        %v8354 = vpop.permute.xlu0 %8353
        %8355 = vrot.lane.b32.xlu0 %v7715, 126
        %v8356 = vpop.permute.xlu0 %8355
        %8357 = vrot.lane.b32.xlu0 %v7651, 126
        %v8358 = vpop.permute.xlu0 %8357
        %8359 = vrot.lane.b32.xlu0 %v7716, 126
        %v8360 = vpop.permute.xlu0 %8359
        %8361 = vrot.lane.b32.xlu0 %v7652, 126
        %v8362 = vpop.permute.xlu0 %8361
        %8363 = vrot.lane.b32.xlu0 %v7717, 126
        %v8364 = vpop.permute.xlu0 %8363
        %8365 = vrot.lane.b32.xlu0 %v7653, 126
        %v8366 = vpop.permute.xlu0 %8365
        %8367 = vrot.lane.b32.xlu0 %v7718, 126
        %v8368 = vpop.permute.xlu0 %8367
        %8369 = vrot.lane.b32.xlu0 %v7654, 126
        %v8370 = vpop.permute.xlu0 %8369
        %8371 = vrot.lane.b32.xlu0 %v7719, 126
        %v8372 = vpop.permute.xlu0 %8371
        %8373 = vrot.lane.b32.xlu0 %v7655, 126
        %v8374 = vpop.permute.xlu0 %8373
        %8375 = vrot.lane.b32.xlu0 %v7720, 126
        %v8376 = vpop.permute.xlu0 %8375
        %8377 = vrot.lane.b32.xlu0 %v7656, 126
        %v8378 = vpop.permute.xlu0 %8377
        %8379 = vrot.lane.b32.xlu0 %v7721, 126
        %v8380 = vpop.permute.xlu0 %8379
        %8381 = vrot.lane.b32.xlu0 %v7657, 126
        %v8382 = vpop.permute.xlu0 %8381
        %8383 = vrot.lane.b32.xlu0 %v7722, 126
        %v8384 = vpop.permute.xlu0 %8383
        %8385 = vrot.lane.b32.xlu0 %v7658, 126
        %v8386 = vpop.permute.xlu0 %8385
        %8387 = vrot.lane.b32.xlu0 %v7723, 126
        %v8388 = vpop.permute.xlu0 %8387
        %8389 = vrot.lane.b32.xlu0 %v7659, 126
        %v8390 = vpop.permute.xlu0 %8389
        %8391 = vrot.lane.b32.xlu0 %v7724, 126
        %v8392 = vpop.permute.xlu0 %8391
        %8393 = vrot.lane.b32.xlu0 %v7660, 126
        %v8394 = vpop.permute.xlu0 %8393
        %8395 = vrot.lane.b32.xlu0 %v7725, 126
        %v8396 = vpop.permute.xlu0 %8395
        %8397 = vrot.lane.b32.xlu0 %v7661, 126
        %v8398 = vpop.permute.xlu0 %8397
        %8399 = vrot.lane.b32.xlu0 %v7726, 126
        %v8400 = vpop.permute.xlu0 %8399
        %8401 = vrot.lane.b32.xlu0 %v7662, 126
        %v8402 = vpop.permute.xlu0 %8401
        %8403 = vrot.lane.b32.xlu0 %v7727, 126
        %v8404 = vpop.permute.xlu0 %8403
        %v8405 = vsel %vm809, %v8278, %v8280
        %v8406 = vsel %vm809, %v8282, %v8284
        %v8407 = vsel %vm809, %v8286, %v8288
        %v8408 = vsel %vm809, %v8290, %v8292
        %v8409 = vsel %vm809, %v8294, %v8296
        %v8410 = vsel %vm809, %v8298, %v8300
        %v8411 = vsel %vm809, %v8302, %v8304
        %v8412 = vsel %vm809, %v8306, %v8308
        %v8413 = vsel %vm809, %v8310, %v8312
        %v8414 = vsel %vm809, %v8314, %v8316
        %v8415 = vsel %vm809, %v8318, %v8320
        %v8416 = vsel %vm809, %v8322, %v8324
        %v8417 = vsel %vm809, %v8326, %v8328
        %v8418 = vsel %vm809, %v8330, %v8332
        %v8419 = vsel %vm809, %v8334, %v8336
        %v8420 = vsel %vm809, %v8338, %v8340
        %v8421 = vsel %vm809, %v8342, %v8344
        %v8422 = vsel %vm809, %v8346, %v8348
        %v8423 = vsel %vm809, %v8350, %v8352
        %v8424 = vsel %vm809, %v8354, %v8356
        %v8425 = vsel %vm809, %v8358, %v8360
        %v8426 = vsel %vm809, %v8362, %v8364
        %v8427 = vsel %vm809, %v8366, %v8368
        %v8428 = vsel %vm809, %v8370, %v8372
        %v8429 = vsel %vm809, %v8374, %v8376
        %v8430 = vsel %vm809, %v8378, %v8380
        %v8431 = vsel %vm809, %v8382, %v8384
        %v8432 = vsel %vm809, %v8386, %v8388
        %v8433 = vsel %vm809, %v8390, %v8392
        %v8434 = vsel %vm809, %v8394, %v8396
        %v8435 = vsel %vm809, %v8398, %v8400
        %v8436 = vsel %vm809, %v8402, %v8404
        %8469 = vmatpush.msra.mxu0 %v8420
        %8470 = vmatpush.msra.mxu0 %v8419
        %8471 = vmatpush.msra.mxu0 %v8418
        %8472 = vmatpush.msra.mxu0 %v8417
        %8473 = vmatpush.msra.mxu0 %v8416
        %8474 = vmatpush.msra.mxu0 %v8415
        %8475 = vmatpush.msra.mxu0 %v8414
        %8476 = vmatpush.msra.mxu0 %v8413
        %8477 = vmatpush.msra.mxu0 %v8412
        %8478 = vmatpush.msra.mxu0 %v8411
        %8479 = vmatpush.msra.mxu0 %v8410
        %8480 = vmatpush.msra.mxu0 %v8409
        %8481 = vmatpush.msra.mxu0 %v8408
        %8482 = vmatpush.msra.mxu0 %v8407
        %8483 = vmatpush.msra.mxu0 %v8406
        %8484 = vmatpush.msra.mxu0 %v8405
        %8485 = vmatmul.f32.gmra.mxu0 %v8245
        %v8486 = vpop.f32.mrf.mxu0
        %v8487 = vadd.f32 0.0, %v8486
        %8488 = vmatmul.f32.gmra.mxu0 %v8247
        %v8489 = vpop.f32.mrf.mxu0
        %v8490 = vadd.f32 0.0, %v8489
        %8491 = vmatmul.f32.gmra.mxu0 %v8249
        %v8492 = vpop.f32.mrf.mxu0
        %v8493 = vadd.f32 0.0, %v8492
        %8494 = vmatmul.f32.gmra.mxu0 %v8251
        %v8495 = vpop.f32.mrf.mxu0
        %v8496 = vadd.f32 0.0, %v8495
        %8497 = vmatmul.f32.gmra.mxu0 %v8253
        %v8498 = vpop.f32.mrf.mxu0
        %v8499 = vadd.f32 0.0, %v8498
        %8500 = vmatmul.f32.gmra.mxu0 %v8255
        %v8501 = vpop.f32.mrf.mxu0
        %v8502 = vadd.f32 0.0, %v8501
        %8503 = vmatmul.f32.gmra.mxu0 %v8257
        %v8504 = vpop.f32.mrf.mxu0
        %v8505 = vadd.f32 0.0, %v8504
        %8506 = vmatmul.f32.gmra.mxu0 %v8259
        %v8507 = vpop.f32.mrf.mxu0
        %v8508 = vadd.f32 0.0, %v8507
        %8509 = vmatmul.f32.gmra.mxu0 %v8261
        %v8510 = vpop.f32.mrf.mxu0
        %v8511 = vadd.f32 0.0, %v8510
        %8512 = vmatmul.f32.gmra.mxu0 %v8263
        %v8513 = vpop.f32.mrf.mxu0
        %v8514 = vadd.f32 0.0, %v8513
        %8515 = vmatmul.f32.gmra.mxu0 %v8265
        %v8516 = vpop.f32.mrf.mxu0
        %v8517 = vadd.f32 0.0, %v8516
        %8518 = vmatmul.f32.gmra.mxu0 %v8267
        %v8519 = vpop.f32.mrf.mxu0
        %v8520 = vadd.f32 0.0, %v8519
        %8521 = vmatmul.f32.gmra.mxu0 %v8269
        %v8522 = vpop.f32.mrf.mxu0
        %v8523 = vadd.f32 0.0, %v8522
        %8524 = vmatmul.f32.gmra.mxu0 %v8271
        %v8525 = vpop.f32.mrf.mxu0
        %v8526 = vadd.f32 0.0, %v8525
        %8527 = vmatmul.f32.gmra.mxu0 %v8273
        %v8528 = vpop.f32.mrf.mxu0
        %v8529 = vadd.f32 0.0, %v8528
        %8530 = vmatmul.f32.gmra.mxu0 %v8275
        %v8531 = vpop.f32.mrf.mxu0
        %v8532 = vadd.f32 0.0, %v8531
        %8533 = vdwg.mxu0
        %8534 = vmatpush.msra.mxu0 %v8436
        %8535 = vmatpush.msra.mxu0 %v8435
        %8536 = vmatpush.msra.mxu0 %v8434
        %8537 = vmatpush.msra.mxu0 %v8433
        %8538 = vmatpush.msra.mxu0 %v8432
        %8539 = vmatpush.msra.mxu0 %v8431
        %8540 = vmatpush.msra.mxu0 %v8430
        %8541 = vmatpush.msra.mxu0 %v8429
        %8542 = vmatpush.msra.mxu0 %v8428
        %8543 = vmatpush.msra.mxu0 %v8427
        %8544 = vmatpush.msra.mxu0 %v8426
        %8545 = vmatpush.msra.mxu0 %v8425
        %8546 = vmatpush.msra.mxu0 %v8424
        %8547 = vmatpush.msra.mxu0 %v8423
        %8548 = vmatpush.msra.mxu0 %v8422
        %8549 = vmatpush.msra.mxu0 %v8421
        %8550 = vmatmul.f32.gmra.mxu0 %v8246
        %v8551 = vpop.f32.mrf.mxu0
        %v8552 = vadd.f32 %v8487, %v8551
        %8553 = vmatmul.f32.gmra.mxu0 %v8248
        %v8554 = vpop.f32.mrf.mxu0
        %v8555 = vadd.f32 %v8490, %v8554
        %8556 = vmatmul.f32.gmra.mxu0 %v8250
        %v8557 = vpop.f32.mrf.mxu0
        %v8558 = vadd.f32 %v8493, %v8557
        %8559 = vmatmul.f32.gmra.mxu0 %v8252
        %v8560 = vpop.f32.mrf.mxu0
        %v8561 = vadd.f32 %v8496, %v8560
        %8562 = vmatmul.f32.gmra.mxu0 %v8254
        %v8563 = vpop.f32.mrf.mxu0
        %v8564 = vadd.f32 %v8499, %v8563
        %8565 = vmatmul.f32.gmra.mxu0 %v8256
        %v8566 = vpop.f32.mrf.mxu0
        %v8567 = vadd.f32 %v8502, %v8566
        %8568 = vmatmul.f32.gmra.mxu0 %v8258
        %v8569 = vpop.f32.mrf.mxu0
        %v8570 = vadd.f32 %v8505, %v8569
        %8571 = vmatmul.f32.gmra.mxu0 %v8260
        %v8572 = vpop.f32.mrf.mxu0
        %v8573 = vadd.f32 %v8508, %v8572
        %8574 = vmatmul.f32.gmra.mxu0 %v8262
        %v8575 = vpop.f32.mrf.mxu0
        %v8576 = vadd.f32 %v8511, %v8575
        %8577 = vmatmul.f32.gmra.mxu0 %v8264
        %v8578 = vpop.f32.mrf.mxu0
        %v8579 = vadd.f32 %v8514, %v8578
        %8580 = vmatmul.f32.gmra.mxu0 %v8266
        %v8581 = vpop.f32.mrf.mxu0
        %v8582 = vadd.f32 %v8517, %v8581
        %8583 = vmatmul.f32.gmra.mxu0 %v8268
        %v8584 = vpop.f32.mrf.mxu0
        %v8585 = vadd.f32 %v8520, %v8584
        %8586 = vmatmul.f32.gmra.mxu0 %v8270
        %v8587 = vpop.f32.mrf.mxu0
        %v8588 = vadd.f32 %v8523, %v8587
        %8589 = vmatmul.f32.gmra.mxu0 %v8272
        %v8590 = vpop.f32.mrf.mxu0
        %v8591 = vadd.f32 %v8526, %v8590
        %8592 = vmatmul.f32.gmra.mxu0 %v8274
        %v8593 = vpop.f32.mrf.mxu0
        %v8594 = vadd.f32 %v8529, %v8593
        %8595 = vmatmul.f32.gmra.mxu0 %v8276
        %v8596 = vpop.f32.mrf.mxu0
        %v8597 = vadd.f32 %v8532, %v8596
        %8598 = vdwg.mxu0
        %v8599 = vadd.f32 %v8197, %v8552
        %v8600 = vadd.f32 %v8200, %v8555
        %v8601 = vadd.f32 %v8203, %v8558
        %v8602 = vadd.f32 %v8206, %v8561
        %v8603 = vadd.f32 %v8209, %v8564
        %v8604 = vadd.f32 %v8212, %v8567
        %v8605 = vadd.f32 %v8215, %v8570
        %v8606 = vadd.f32 %v8218, %v8573
        %v8607 = vadd.f32 %v8221, %v8576
        %v8608 = vadd.f32 %v8224, %v8579
        %v8609 = vadd.f32 %v8227, %v8582
        %v8610 = vadd.f32 %v8230, %v8585
        %v8611 = vadd.f32 %v8233, %v8588
        %v8612 = vadd.f32 %v8236, %v8591
        %v8613 = vadd.f32 %v8239, %v8594
        %v8614 = vadd.f32 %v8242, %v8597
        %v8615 = vld [vmem:[%s8] sm:$0xff]
        %v8616 = vld [vmem:[%s8 + $0x8] sm:$0xff]
        %v8617 = vld [vmem:[%s8 + $0x10] sm:$0xff]
        %v8618 = vld [vmem:[%s8 + $0x18] sm:$0xff]
        %v8619 = vld [vmem:[%s8 + $0x20] sm:$0xff]
        %v8620 = vld [vmem:[%s8 + $0x28] sm:$0xff]
        %v8621 = vld [vmem:[%s8 + $0x30] sm:$0xff]
        %v8622 = vld [vmem:[%s8 + $0x38] sm:$0xff]
        %v8623 = vld [vmem:[%s8 + $0x40] sm:$0xff]
        %v8624 = vld [vmem:[%s8 + $0x48] sm:$0xff]
        %v8625 = vld [vmem:[%s8 + $0x50] sm:$0xff]
        %v8626 = vld [vmem:[%s8 + $0x58] sm:$0xff]
        %v8627 = vld [vmem:[%s8 + $0x60] sm:$0xff]
        %v8628 = vld [vmem:[%s8 + $0x68] sm:$0xff]
        %v8629 = vld [vmem:[%s8 + $0x70] sm:$0xff]
        %v8630 = vld [vmem:[%s8 + $0x78] sm:$0xff]
        %8632 = vset.pattern.permute.xlu0 0
        %8633 = vperm.xlu0 %8632, %v8615
        %v8634 = vpop.permute.xlu0 %8633
        %8637 = vset.pattern.permute.xlu0 0
        %8638 = vperm.xlu0 %8637, %v8616
        %v8639 = vpop.permute.xlu0 %8638
        %8642 = vset.pattern.permute.xlu0 0
        %8643 = vperm.xlu0 %8642, %v8617
        %v8644 = vpop.permute.xlu0 %8643
        %8647 = vset.pattern.permute.xlu0 0
        %8648 = vperm.xlu0 %8647, %v8618
        %v8649 = vpop.permute.xlu0 %8648
        %8652 = vset.pattern.permute.xlu0 0
        %8653 = vperm.xlu0 %8652, %v8619
        %v8654 = vpop.permute.xlu0 %8653
        %8657 = vset.pattern.permute.xlu0 0
        %8658 = vperm.xlu0 %8657, %v8620
        %v8659 = vpop.permute.xlu0 %8658
        %8662 = vset.pattern.permute.xlu0 0
        %8663 = vperm.xlu0 %8662, %v8621
        %v8664 = vpop.permute.xlu0 %8663
        %8667 = vset.pattern.permute.xlu0 0
        %8668 = vperm.xlu0 %8667, %v8622
        %v8669 = vpop.permute.xlu0 %8668
        %8672 = vset.pattern.permute.xlu0 0
        %8673 = vperm.xlu0 %8672, %v8623
        %v8674 = vpop.permute.xlu0 %8673
        %8677 = vset.pattern.permute.xlu0 0
        %8678 = vperm.xlu0 %8677, %v8624
        %v8679 = vpop.permute.xlu0 %8678
        %8682 = vset.pattern.permute.xlu0 0
        %8683 = vperm.xlu0 %8682, %v8625
        %v8684 = vpop.permute.xlu0 %8683
        %8687 = vset.pattern.permute.xlu0 0
        %8688 = vperm.xlu0 %8687, %v8626
        %v8689 = vpop.permute.xlu0 %8688
        %8692 = vset.pattern.permute.xlu0 0
        %8693 = vperm.xlu0 %8692, %v8627
        %v8694 = vpop.permute.xlu0 %8693
        %8697 = vset.pattern.permute.xlu0 0
        %8698 = vperm.xlu0 %8697, %v8628
        %v8699 = vpop.permute.xlu0 %8698
        %8702 = vset.pattern.permute.xlu0 0
        %8703 = vperm.xlu0 %8702, %v8629
        %v8704 = vpop.permute.xlu0 %8703
        %8707 = vset.pattern.permute.xlu0 0
        %8708 = vperm.xlu0 %8707, %v8630
        %v8709 = vpop.permute.xlu0 %8708
        %v8711 = vmul.f32 %v8599, %v8634
        %v8712 = vmul.f32 %v8600, %v8639
        %v8713 = vmul.f32 %v8601, %v8644
        %v8714 = vmul.f32 %v8602, %v8649
        %v8715 = vmul.f32 %v8603, %v8654
        %v8716 = vmul.f32 %v8604, %v8659
        %v8717 = vmul.f32 %v8605, %v8664
        %v8718 = vmul.f32 %v8606, %v8669
        %v8719 = vmul.f32 %v8607, %v8674
        %v8720 = vmul.f32 %v8608, %v8679
        %v8721 = vmul.f32 %v8609, %v8684
        %v8722 = vmul.f32 %v8610, %v8689
        %v8723 = vmul.f32 %v8611, %v8694
        %v8724 = vmul.f32 %v8612, %v8699
        %v8725 = vmul.f32 %v8613, %v8704
        %v8726 = vmul.f32 %v8614, %v8709
        %v8727 = vld [vmem:[%s9] sm:$0xff]
        %v8728 = vld [vmem:[%s9 + $0x8] sm:$0xff]
        %v8729 = vld [vmem:[%s9 + $0x10] sm:$0xff]
        %v8730 = vld [vmem:[%s9 + $0x18] sm:$0xff]
        %v8731 = vld [vmem:[%s9 + $0x20] sm:$0xff]
        %v8732 = vld [vmem:[%s9 + $0x28] sm:$0xff]
        %v8733 = vld [vmem:[%s9 + $0x30] sm:$0xff]
        %v8734 = vld [vmem:[%s9 + $0x38] sm:$0xff]
        %v8735 = vld [vmem:[%s9 + $0x40] sm:$0xff]
        %v8736 = vld [vmem:[%s9 + $0x48] sm:$0xff]
        %v8737 = vld [vmem:[%s9 + $0x50] sm:$0xff]
        %v8738 = vld [vmem:[%s9 + $0x58] sm:$0xff]
        %v8739 = vld [vmem:[%s9 + $0x60] sm:$0xff]
        %v8740 = vld [vmem:[%s9 + $0x68] sm:$0xff]
        %v8741 = vld [vmem:[%s9 + $0x70] sm:$0xff]
        %v8742 = vld [vmem:[%s9 + $0x78] sm:$0xff]
        %8744 = vset.pattern.permute.xlu0 0
        %8745 = vperm.xlu0 %8744, %v8727
        %v8746 = vpop.permute.xlu0 %8745
        %8749 = vset.pattern.permute.xlu0 0
        %8750 = vperm.xlu0 %8749, %v8728
        %v8751 = vpop.permute.xlu0 %8750
        %8754 = vset.pattern.permute.xlu0 0
        %8755 = vperm.xlu0 %8754, %v8729
        %v8756 = vpop.permute.xlu0 %8755
        %8759 = vset.pattern.permute.xlu0 0
        %8760 = vperm.xlu0 %8759, %v8730
        %v8761 = vpop.permute.xlu0 %8760
        %8764 = vset.pattern.permute.xlu0 0
        %8765 = vperm.xlu0 %8764, %v8731
        %v8766 = vpop.permute.xlu0 %8765
        %8769 = vset.pattern.permute.xlu0 0
        %8770 = vperm.xlu0 %8769, %v8732
        %v8771 = vpop.permute.xlu0 %8770
        %8774 = vset.pattern.permute.xlu0 0
        %8775 = vperm.xlu0 %8774, %v8733
        %v8776 = vpop.permute.xlu0 %8775
        %8779 = vset.pattern.permute.xlu0 0
        %8780 = vperm.xlu0 %8779, %v8734
        %v8781 = vpop.permute.xlu0 %8780
        %8784 = vset.pattern.permute.xlu0 0
        %8785 = vperm.xlu0 %8784, %v8735
        %v8786 = vpop.permute.xlu0 %8785
        %8789 = vset.pattern.permute.xlu0 0
        %8790 = vperm.xlu0 %8789, %v8736
        %v8791 = vpop.permute.xlu0 %8790
        %8794 = vset.pattern.permute.xlu0 0
        %8795 = vperm.xlu0 %8794, %v8737
        %v8796 = vpop.permute.xlu0 %8795
        %8799 = vset.pattern.permute.xlu0 0
        %8800 = vperm.xlu0 %8799, %v8738
        %v8801 = vpop.permute.xlu0 %8800
        %8804 = vset.pattern.permute.xlu0 0
        %8805 = vperm.xlu0 %8804, %v8739
        %v8806 = vpop.permute.xlu0 %8805
        %8809 = vset.pattern.permute.xlu0 0
        %8810 = vperm.xlu0 %8809, %v8740
        %v8811 = vpop.permute.xlu0 %8810
        %8814 = vset.pattern.permute.xlu0 0
        %8815 = vperm.xlu0 %8814, %v8741
        %v8816 = vpop.permute.xlu0 %8815
        %8819 = vset.pattern.permute.xlu0 0
        %8820 = vperm.xlu0 %8819, %v8742
        %v8821 = vpop.permute.xlu0 %8820
        %v8823 = vadd.f32 %v8711, %v8746
        %v8824 = vadd.f32 %v8712, %v8751
        %v8825 = vadd.f32 %v8713, %v8756
        %v8826 = vadd.f32 %v8714, %v8761
        %v8827 = vadd.f32 %v8715, %v8766
        %v8828 = vadd.f32 %v8716, %v8771
        %v8829 = vadd.f32 %v8717, %v8776
        %v8830 = vadd.f32 %v8718, %v8781
        %v8831 = vadd.f32 %v8719, %v8786
        %v8832 = vadd.f32 %v8720, %v8791
        %v8833 = vadd.f32 %v8721, %v8796
        %v8834 = vadd.f32 %v8722, %v8801
        %v8835 = vadd.f32 %v8723, %v8806
        %v8836 = vadd.f32 %v8724, %v8811
        %v8837 = vadd.f32 %v8725, %v8816
        %v8838 = vadd.f32 %v8726, %v8821
        %v8839 = vmax.f32 %v8823, 0.0
        %v8840 = vmax.f32 %v8824, 0.0
        %v8841 = vmax.f32 %v8825, 0.0
        %v8842 = vmax.f32 %v8826, 0.0
        %v8843 = vmax.f32 %v8827, 0.0
        %v8844 = vmax.f32 %v8828, 0.0
        %v8845 = vmax.f32 %v8829, 0.0
        %v8846 = vmax.f32 %v8830, 0.0
        %v8847 = vmax.f32 %v8831, 0.0
        %v8848 = vmax.f32 %v8832, 0.0
        %v8849 = vmax.f32 %v8833, 0.0
        %v8850 = vmax.f32 %v8834, 0.0
        %v8851 = vmax.f32 %v8835, 0.0
        %v8852 = vmax.f32 %v8836, 0.0
        %v8853 = vmax.f32 %v8837, 0.0
        %v8854 = vmax.f32 %v8838, 0.0
        %8855 = vadd.xlane.f32.xlu0 %v8839
        %v8856 = vpop.xlane.xlu0 %8855
        %8857 = vadd.xlane.f32.xlu0 %v8840
        %v8858 = vpop.xlane.xlu0 %8857
        %8859 = vadd.xlane.f32.xlu0 %v8841
        %v8860 = vpop.xlane.xlu0 %8859
        %8861 = vadd.xlane.f32.xlu0 %v8842
        %v8862 = vpop.xlane.xlu0 %8861
        %8863 = vadd.xlane.f32.xlu0 %v8843
        %v8864 = vpop.xlane.xlu0 %8863
        %8865 = vadd.xlane.f32.xlu0 %v8844
        %v8866 = vpop.xlane.xlu0 %8865
        %8867 = vadd.xlane.f32.xlu0 %v8845
        %v8868 = vpop.xlane.xlu0 %8867
        %8869 = vadd.xlane.f32.xlu0 %v8846
        %v8870 = vpop.xlane.xlu0 %8869
        %8871 = vadd.xlane.f32.xlu0 %v8847
        %v8872 = vpop.xlane.xlu0 %8871
        %8873 = vadd.xlane.f32.xlu0 %v8848
        %v8874 = vpop.xlane.xlu0 %8873
        %8875 = vadd.xlane.f32.xlu0 %v8849
        %v8876 = vpop.xlane.xlu0 %8875
        %8877 = vadd.xlane.f32.xlu0 %v8850
        %v8878 = vpop.xlane.xlu0 %8877
        %8879 = vadd.xlane.f32.xlu0 %v8851
        %v8880 = vpop.xlane.xlu0 %8879
        %8881 = vadd.xlane.f32.xlu0 %v8852
        %v8882 = vpop.xlane.xlu0 %8881
        %8883 = vadd.xlane.f32.xlu0 %v8853
        %v8884 = vpop.xlane.xlu0 %8883
        %8885 = vadd.xlane.f32.xlu0 %v8854
        %v8886 = vpop.xlane.xlu0 %8885
        %v8887 = vadd.f32 %v8856, 0.0
        %v8888 = vadd.f32 %v8858, 0.0
        %v8889 = vadd.f32 %v8860, 0.0
        %v8890 = vadd.f32 %v8862, 0.0
        %v8891 = vadd.f32 %v8864, 0.0
        %v8892 = vadd.f32 %v8866, 0.0
        %v8893 = vadd.f32 %v8868, 0.0
        %v8894 = vadd.f32 %v8870, 0.0
        %v8895 = vadd.f32 %v8872, 0.0
        %v8896 = vadd.f32 %v8874, 0.0
        %v8897 = vadd.f32 %v8876, 0.0
        %v8898 = vadd.f32 %v8878, 0.0
        %v8899 = vadd.f32 %v8880, 0.0
        %v8900 = vadd.f32 %v8882, 0.0
        %v8901 = vadd.f32 %v8884, 0.0
        %v8902 = vadd.f32 %v8886, 0.0
        %8935 = vmatpush.msra.mxu0 %v7855
        %8936 = vmatpush.msra.mxu0 %v7851
        %8937 = vmatpush.msra.mxu0 %v7847
        %8938 = vmatpush.msra.mxu0 %v7843
        %8939 = vmatpush.msra.mxu0 %v7839
        %8940 = vmatpush.msra.mxu0 %v7835
        %8941 = vmatpush.msra.mxu0 %v7831
        %8942 = vmatpush.msra.mxu0 %v7827
        %8943 = vmatpush.msra.mxu0 %v7823
        %8944 = vmatpush.msra.mxu0 %v7819
        %8945 = vmatpush.msra.mxu0 %v7815
        %8946 = vmatpush.msra.mxu0 %v7811
        %8947 = vmatpush.msra.mxu0 %v7807
        %8948 = vmatpush.msra.mxu0 %v7803
        %8949 = vmatpush.msra.mxu0 %v7799
        %8950 = vmatpush.msra.mxu0 %v7795
        %8951 = vmatmul.f32.gmra.mxu0 %v7664
        %v8952 = vpop.f32.mrf.mxu0
        %v8953 = vadd.f32 0.0, %v8952
        %8954 = vmatmul.f32.gmra.mxu0 %v7666
        %v8955 = vpop.f32.mrf.mxu0
        %v8956 = vadd.f32 0.0, %v8955
        %8957 = vmatmul.f32.gmra.mxu0 %v7668
        %v8958 = vpop.f32.mrf.mxu0
        %v8959 = vadd.f32 0.0, %v8958
        %8960 = vmatmul.f32.gmra.mxu0 %v7670
        %v8961 = vpop.f32.mrf.mxu0
        %v8962 = vadd.f32 0.0, %v8961
        %8963 = vmatmul.f32.gmra.mxu0 %v7672
        %v8964 = vpop.f32.mrf.mxu0
        %v8965 = vadd.f32 0.0, %v8964
        %8966 = vmatmul.f32.gmra.mxu0 %v7674
        %v8967 = vpop.f32.mrf.mxu0
        %v8968 = vadd.f32 0.0, %v8967
        %8969 = vmatmul.f32.gmra.mxu0 %v7676
        %v8970 = vpop.f32.mrf.mxu0
        %v8971 = vadd.f32 0.0, %v8970
        %8972 = vmatmul.f32.gmra.mxu0 %v7678
        %v8973 = vpop.f32.mrf.mxu0
        %v8974 = vadd.f32 0.0, %v8973
        %8975 = vmatmul.f32.gmra.mxu0 %v7680
        %v8976 = vpop.f32.mrf.mxu0
        %v8977 = vadd.f32 0.0, %v8976
        %8978 = vmatmul.f32.gmra.mxu0 %v7682
        %v8979 = vpop.f32.mrf.mxu0
        %v8980 = vadd.f32 0.0, %v8979
        %8981 = vmatmul.f32.gmra.mxu0 %v7684
        %v8982 = vpop.f32.mrf.mxu0
        %v8983 = vadd.f32 0.0, %v8982
        %8984 = vmatmul.f32.gmra.mxu0 %v7686
        %v8985 = vpop.f32.mrf.mxu0
        %v8986 = vadd.f32 0.0, %v8985
        %8987 = vmatmul.f32.gmra.mxu0 %v7688
        %v8988 = vpop.f32.mrf.mxu0
        %v8989 = vadd.f32 0.0, %v8988
        %8990 = vmatmul.f32.gmra.mxu0 %v7690
        %v8991 = vpop.f32.mrf.mxu0
        %v8992 = vadd.f32 0.0, %v8991
        %8993 = vmatmul.f32.gmra.mxu0 %v7692
        %v8994 = vpop.f32.mrf.mxu0
        %v8995 = vadd.f32 0.0, %v8994
        %8996 = vmatmul.f32.gmra.mxu0 %v7694
        %v8997 = vpop.f32.mrf.mxu0
        %v8998 = vadd.f32 0.0, %v8997
        %8999 = vdwg.mxu0
        %9000 = vmatpush.msra.mxu0 %v7919
        %9001 = vmatpush.msra.mxu0 %v7915
        %9002 = vmatpush.msra.mxu0 %v7911
        %9003 = vmatpush.msra.mxu0 %v7907
        %9004 = vmatpush.msra.mxu0 %v7903
        %9005 = vmatpush.msra.mxu0 %v7899
        %9006 = vmatpush.msra.mxu0 %v7895
        %9007 = vmatpush.msra.mxu0 %v7891
        %9008 = vmatpush.msra.mxu0 %v7887
        %9009 = vmatpush.msra.mxu0 %v7883
        %9010 = vmatpush.msra.mxu0 %v7879
        %9011 = vmatpush.msra.mxu0 %v7875
        %9012 = vmatpush.msra.mxu0 %v7871
        %9013 = vmatpush.msra.mxu0 %v7867
        %9014 = vmatpush.msra.mxu0 %v7863
        %9015 = vmatpush.msra.mxu0 %v7859
        %9016 = vmatmul.f32.gmra.mxu0 %v7665
        %v9017 = vpop.f32.mrf.mxu0
        %v9018 = vadd.f32 %v8953, %v9017
        %9019 = vmatmul.f32.gmra.mxu0 %v7667
        %v9020 = vpop.f32.mrf.mxu0
        %v9021 = vadd.f32 %v8956, %v9020
        %9022 = vmatmul.f32.gmra.mxu0 %v7669
        %v9023 = vpop.f32.mrf.mxu0
        %v9024 = vadd.f32 %v8959, %v9023
        %9025 = vmatmul.f32.gmra.mxu0 %v7671
        %v9026 = vpop.f32.mrf.mxu0
        %v9027 = vadd.f32 %v8962, %v9026
        %9028 = vmatmul.f32.gmra.mxu0 %v7673
        %v9029 = vpop.f32.mrf.mxu0
        %v9030 = vadd.f32 %v8965, %v9029
        %9031 = vmatmul.f32.gmra.mxu0 %v7675
        %v9032 = vpop.f32.mrf.mxu0
        %v9033 = vadd.f32 %v8968, %v9032
        %9034 = vmatmul.f32.gmra.mxu0 %v7677
        %v9035 = vpop.f32.mrf.mxu0
        %v9036 = vadd.f32 %v8971, %v9035
        %9037 = vmatmul.f32.gmra.mxu0 %v7679
        %v9038 = vpop.f32.mrf.mxu0
        %v9039 = vadd.f32 %v8974, %v9038
        %9040 = vmatmul.f32.gmra.mxu0 %v7681
        %v9041 = vpop.f32.mrf.mxu0
        %v9042 = vadd.f32 %v8977, %v9041
        %9043 = vmatmul.f32.gmra.mxu0 %v7683
        %v9044 = vpop.f32.mrf.mxu0
        %v9045 = vadd.f32 %v8980, %v9044
        %9046 = vmatmul.f32.gmra.mxu0 %v7685
        %v9047 = vpop.f32.mrf.mxu0
        %v9048 = vadd.f32 %v8983, %v9047
        %9049 = vmatmul.f32.gmra.mxu0 %v7687
        %v9050 = vpop.f32.mrf.mxu0
        %v9051 = vadd.f32 %v8986, %v9050
        %9052 = vmatmul.f32.gmra.mxu0 %v7689
        %v9053 = vpop.f32.mrf.mxu0
        %v9054 = vadd.f32 %v8989, %v9053
        %9055 = vmatmul.f32.gmra.mxu0 %v7691
        %v9056 = vpop.f32.mrf.mxu0
        %v9057 = vadd.f32 %v8992, %v9056
        %9058 = vmatmul.f32.gmra.mxu0 %v7693
        %v9059 = vpop.f32.mrf.mxu0
        %v9060 = vadd.f32 %v8995, %v9059
        %9061 = vmatmul.f32.gmra.mxu0 %v7695
        %v9062 = vpop.f32.mrf.mxu0
        %v9063 = vadd.f32 %v8998, %v9062
        %9064 = vdwg.mxu0
        %9065 = vmatpush.msra.mxu0 %v7711
        %9066 = vmatpush.msra.mxu0 %v7710
        %9067 = vmatpush.msra.mxu0 %v7709
        %9068 = vmatpush.msra.mxu0 %v7708
        %9069 = vmatpush.msra.mxu0 %v7707
        %9070 = vmatpush.msra.mxu0 %v7706
        %9071 = vmatpush.msra.mxu0 %v7705
        %9072 = vmatpush.msra.mxu0 %v7704
        %9073 = vmatpush.msra.mxu0 %v7703
        %9074 = vmatpush.msra.mxu0 %v7702
        %9075 = vmatpush.msra.mxu0 %v7701
        %9076 = vmatpush.msra.mxu0 %v7700
        %9077 = vmatpush.msra.mxu0 %v7699
        %9078 = vmatpush.msra.mxu0 %v7698
        %9079 = vmatpush.msra.mxu0 %v7697
        %9080 = vmatpush.msra.mxu0 %v7696
        %9081 = vmatmul.f32.gmra.mxu0 %v7599
        %v9082 = vpop.f32.mrf.mxu0
        %v9083 = vadd.f32 %v9018, %v9082
        %9084 = vmatmul.f32.gmra.mxu0 %v7601
        %v9085 = vpop.f32.mrf.mxu0
        %v9086 = vadd.f32 %v9021, %v9085
        %9087 = vmatmul.f32.gmra.mxu0 %v7603
        %v9088 = vpop.f32.mrf.mxu0
        %v9089 = vadd.f32 %v9024, %v9088
        %9090 = vmatmul.f32.gmra.mxu0 %v7605
        %v9091 = vpop.f32.mrf.mxu0
        %v9092 = vadd.f32 %v9027, %v9091
        %9093 = vmatmul.f32.gmra.mxu0 %v7607
        %v9094 = vpop.f32.mrf.mxu0
        %v9095 = vadd.f32 %v9030, %v9094
        %9096 = vmatmul.f32.gmra.mxu0 %v7609
        %v9097 = vpop.f32.mrf.mxu0
        %v9098 = vadd.f32 %v9033, %v9097
        %9099 = vmatmul.f32.gmra.mxu0 %v7611
        %v9100 = vpop.f32.mrf.mxu0
        %v9101 = vadd.f32 %v9036, %v9100
        %9102 = vmatmul.f32.gmra.mxu0 %v7613
        %v9103 = vpop.f32.mrf.mxu0
        %v9104 = vadd.f32 %v9039, %v9103
        %9105 = vmatmul.f32.gmra.mxu0 %v7615
        %v9106 = vpop.f32.mrf.mxu0
        %v9107 = vadd.f32 %v9042, %v9106
        %9108 = vmatmul.f32.gmra.mxu0 %v7617
        %v9109 = vpop.f32.mrf.mxu0
        %v9110 = vadd.f32 %v9045, %v9109
        %9111 = vmatmul.f32.gmra.mxu0 %v7619
        %v9112 = vpop.f32.mrf.mxu0
        %v9113 = vadd.f32 %v9048, %v9112
        %9114 = vmatmul.f32.gmra.mxu0 %v7621
        %v9115 = vpop.f32.mrf.mxu0
        %v9116 = vadd.f32 %v9051, %v9115
        %9117 = vmatmul.f32.gmra.mxu0 %v7623
        %v9118 = vpop.f32.mrf.mxu0
        %v9119 = vadd.f32 %v9054, %v9118
        %9120 = vmatmul.f32.gmra.mxu0 %v7625
        %v9121 = vpop.f32.mrf.mxu0
        %v9122 = vadd.f32 %v9057, %v9121
        %9123 = vmatmul.f32.gmra.mxu0 %v7627
        %v9124 = vpop.f32.mrf.mxu0
        %v9125 = vadd.f32 %v9060, %v9124
        %9126 = vmatmul.f32.gmra.mxu0 %v7629
        %v9127 = vpop.f32.mrf.mxu0
        %v9128 = vadd.f32 %v9063, %v9127
        %9129 = vdwg.mxu0
        %9130 = vmatpush.msra.mxu0 %v7727
        %9131 = vmatpush.msra.mxu0 %v7726
        %9132 = vmatpush.msra.mxu0 %v7725
        %9133 = vmatpush.msra.mxu0 %v7724
        %9134 = vmatpush.msra.mxu0 %v7723
        %9135 = vmatpush.msra.mxu0 %v7722
        %9136 = vmatpush.msra.mxu0 %v7721
        %9137 = vmatpush.msra.mxu0 %v7720
        %9138 = vmatpush.msra.mxu0 %v7719
        %9139 = vmatpush.msra.mxu0 %v7718
        %9140 = vmatpush.msra.mxu0 %v7717
        %9141 = vmatpush.msra.mxu0 %v7716
        %9142 = vmatpush.msra.mxu0 %v7715
        %9143 = vmatpush.msra.mxu0 %v7714
        %9144 = vmatpush.msra.mxu0 %v7713
        %9145 = vmatpush.msra.mxu0 %v7712
        %9146 = vmatmul.f32.gmra.mxu0 %v7600
        %v9147 = vpop.f32.mrf.mxu0
        %v9148 = vadd.f32 %v9083, %v9147
        %9149 = vmatmul.f32.gmra.mxu0 %v7602
        %v9150 = vpop.f32.mrf.mxu0
        %v9151 = vadd.f32 %v9086, %v9150
        %9152 = vmatmul.f32.gmra.mxu0 %v7604
        %v9153 = vpop.f32.mrf.mxu0
        %v9154 = vadd.f32 %v9089, %v9153
        %9155 = vmatmul.f32.gmra.mxu0 %v7606
        %v9156 = vpop.f32.mrf.mxu0
        %v9157 = vadd.f32 %v9092, %v9156
        %9158 = vmatmul.f32.gmra.mxu0 %v7608
        %v9159 = vpop.f32.mrf.mxu0
        %v9160 = vadd.f32 %v9095, %v9159
        %9161 = vmatmul.f32.gmra.mxu0 %v7610
        %v9162 = vpop.f32.mrf.mxu0
        %v9163 = vadd.f32 %v9098, %v9162
        %9164 = vmatmul.f32.gmra.mxu0 %v7612
        %v9165 = vpop.f32.mrf.mxu0
        %v9166 = vadd.f32 %v9101, %v9165
        %9167 = vmatmul.f32.gmra.mxu0 %v7614
        %v9168 = vpop.f32.mrf.mxu0
        %v9169 = vadd.f32 %v9104, %v9168
        %9170 = vmatmul.f32.gmra.mxu0 %v7616
        %v9171 = vpop.f32.mrf.mxu0
        %v9172 = vadd.f32 %v9107, %v9171
        %9173 = vmatmul.f32.gmra.mxu0 %v7618
        %v9174 = vpop.f32.mrf.mxu0
        %v9175 = vadd.f32 %v9110, %v9174
        %9176 = vmatmul.f32.gmra.mxu0 %v7620
        %v9177 = vpop.f32.mrf.mxu0
        %v9178 = vadd.f32 %v9113, %v9177
        %9179 = vmatmul.f32.gmra.mxu0 %v7622
        %v9180 = vpop.f32.mrf.mxu0
        %v9181 = vadd.f32 %v9116, %v9180
        %9182 = vmatmul.f32.gmra.mxu0 %v7624
        %v9183 = vpop.f32.mrf.mxu0
        %v9184 = vadd.f32 %v9119, %v9183
        %9185 = vmatmul.f32.gmra.mxu0 %v7626
        %v9186 = vpop.f32.mrf.mxu0
        %v9187 = vadd.f32 %v9122, %v9186
        %9188 = vmatmul.f32.gmra.mxu0 %v7628
        %v9189 = vpop.f32.mrf.mxu0
        %v9190 = vadd.f32 %v9125, %v9189
        %9191 = vmatmul.f32.gmra.mxu0 %v7630
        %v9192 = vpop.f32.mrf.mxu0
        %v9193 = vadd.f32 %v9128, %v9192
        %9194 = vdwg.mxu0
        %9227 = vmatpush.msra.mxu0 %v8340
        %9228 = vmatpush.msra.mxu0 %v8336
        %9229 = vmatpush.msra.mxu0 %v8332
        %9230 = vmatpush.msra.mxu0 %v8328
        %9231 = vmatpush.msra.mxu0 %v8324
        %9232 = vmatpush.msra.mxu0 %v8320
        %9233 = vmatpush.msra.mxu0 %v8316
        %9234 = vmatpush.msra.mxu0 %v8312
        %9235 = vmatpush.msra.mxu0 %v8308
        %9236 = vmatpush.msra.mxu0 %v8304
        %9237 = vmatpush.msra.mxu0 %v8300
        %9238 = vmatpush.msra.mxu0 %v8296
        %9239 = vmatpush.msra.mxu0 %v8292
        %9240 = vmatpush.msra.mxu0 %v8288
        %9241 = vmatpush.msra.mxu0 %v8284
        %9242 = vmatpush.msra.mxu0 %v8280
        %9243 = vmatmul.f32.gmra.mxu0 %v8245
        %v9244 = vpop.f32.mrf.mxu0
        %v9245 = vadd.f32 0.0, %v9244
        %9246 = vmatmul.f32.gmra.mxu0 %v8247
        %v9247 = vpop.f32.mrf.mxu0
        %v9248 = vadd.f32 0.0, %v9247
        %9249 = vmatmul.f32.gmra.mxu0 %v8249
        %v9250 = vpop.f32.mrf.mxu0
        %v9251 = vadd.f32 0.0, %v9250
        %9252 = vmatmul.f32.gmra.mxu0 %v8251
        %v9253 = vpop.f32.mrf.mxu0
        %v9254 = vadd.f32 0.0, %v9253
        %9255 = vmatmul.f32.gmra.mxu0 %v8253
        %v9256 = vpop.f32.mrf.mxu0
        %v9257 = vadd.f32 0.0, %v9256
        %9258 = vmatmul.f32.gmra.mxu0 %v8255
        %v9259 = vpop.f32.mrf.mxu0
        %v9260 = vadd.f32 0.0, %v9259
        %9261 = vmatmul.f32.gmra.mxu0 %v8257
        %v9262 = vpop.f32.mrf.mxu0
        %v9263 = vadd.f32 0.0, %v9262
        %9264 = vmatmul.f32.gmra.mxu0 %v8259
        %v9265 = vpop.f32.mrf.mxu0
        %v9266 = vadd.f32 0.0, %v9265
        %9267 = vmatmul.f32.gmra.mxu0 %v8261
        %v9268 = vpop.f32.mrf.mxu0
        %v9269 = vadd.f32 0.0, %v9268
        %9270 = vmatmul.f32.gmra.mxu0 %v8263
        %v9271 = vpop.f32.mrf.mxu0
        %v9272 = vadd.f32 0.0, %v9271
        %9273 = vmatmul.f32.gmra.mxu0 %v8265
        %v9274 = vpop.f32.mrf.mxu0
        %v9275 = vadd.f32 0.0, %v9274
        %9276 = vmatmul.f32.gmra.mxu0 %v8267
        %v9277 = vpop.f32.mrf.mxu0
        %v9278 = vadd.f32 0.0, %v9277
        %9279 = vmatmul.f32.gmra.mxu0 %v8269
        %v9280 = vpop.f32.mrf.mxu0
        %v9281 = vadd.f32 0.0, %v9280
        %9282 = vmatmul.f32.gmra.mxu0 %v8271
        %v9283 = vpop.f32.mrf.mxu0
        %v9284 = vadd.f32 0.0, %v9283
        %9285 = vmatmul.f32.gmra.mxu0 %v8273
        %v9286 = vpop.f32.mrf.mxu0
        %v9287 = vadd.f32 0.0, %v9286
        %9288 = vmatmul.f32.gmra.mxu0 %v8275
        %v9289 = vpop.f32.mrf.mxu0
        %v9290 = vadd.f32 0.0, %v9289
        %9291 = vdwg.mxu0
        %9292 = vmatpush.msra.mxu0 %v8404
        %9293 = vmatpush.msra.mxu0 %v8400
        %9294 = vmatpush.msra.mxu0 %v8396
        %9295 = vmatpush.msra.mxu0 %v8392
        %9296 = vmatpush.msra.mxu0 %v8388
        %9297 = vmatpush.msra.mxu0 %v8384
        %9298 = vmatpush.msra.mxu0 %v8380
        %9299 = vmatpush.msra.mxu0 %v8376
        %9300 = vmatpush.msra.mxu0 %v8372
        %9301 = vmatpush.msra.mxu0 %v8368
        %9302 = vmatpush.msra.mxu0 %v8364
        %9303 = vmatpush.msra.mxu0 %v8360
        %9304 = vmatpush.msra.mxu0 %v8356
        %9305 = vmatpush.msra.mxu0 %v8352
        %9306 = vmatpush.msra.mxu0 %v8348
        %9307 = vmatpush.msra.mxu0 %v8344
        %9308 = vmatmul.f32.gmra.mxu0 %v8246
        %v9309 = vpop.f32.mrf.mxu0
        %v9310 = vadd.f32 %v9245, %v9309
        %9311 = vmatmul.f32.gmra.mxu0 %v8248
        %v9312 = vpop.f32.mrf.mxu0
        %v9313 = vadd.f32 %v9248, %v9312
        %9314 = vmatmul.f32.gmra.mxu0 %v8250
        %v9315 = vpop.f32.mrf.mxu0
        %v9316 = vadd.f32 %v9251, %v9315
        %9317 = vmatmul.f32.gmra.mxu0 %v8252
        %v9318 = vpop.f32.mrf.mxu0
        %v9319 = vadd.f32 %v9254, %v9318
        %9320 = vmatmul.f32.gmra.mxu0 %v8254
        %v9321 = vpop.f32.mrf.mxu0
        %v9322 = vadd.f32 %v9257, %v9321
        %9323 = vmatmul.f32.gmra.mxu0 %v8256
        %v9324 = vpop.f32.mrf.mxu0
        %v9325 = vadd.f32 %v9260, %v9324
        %9326 = vmatmul.f32.gmra.mxu0 %v8258
        %v9327 = vpop.f32.mrf.mxu0
        %v9328 = vadd.f32 %v9263, %v9327
        %9329 = vmatmul.f32.gmra.mxu0 %v8260
        %v9330 = vpop.f32.mrf.mxu0
        %v9331 = vadd.f32 %v9266, %v9330
        %9332 = vmatmul.f32.gmra.mxu0 %v8262
        %v9333 = vpop.f32.mrf.mxu0
        %v9334 = vadd.f32 %v9269, %v9333
        %9335 = vmatmul.f32.gmra.mxu0 %v8264
        %v9336 = vpop.f32.mrf.mxu0
        %v9337 = vadd.f32 %v9272, %v9336
        %9338 = vmatmul.f32.gmra.mxu0 %v8266
        %v9339 = vpop.f32.mrf.mxu0
        %v9340 = vadd.f32 %v9275, %v9339
        %9341 = vmatmul.f32.gmra.mxu0 %v8268
        %v9342 = vpop.f32.mrf.mxu0
        %v9343 = vadd.f32 %v9278, %v9342
        %9344 = vmatmul.f32.gmra.mxu0 %v8270
        %v9345 = vpop.f32.mrf.mxu0
        %v9346 = vadd.f32 %v9281, %v9345
        %9347 = vmatmul.f32.gmra.mxu0 %v8272
        %v9348 = vpop.f32.mrf.mxu0
        %v9349 = vadd.f32 %v9284, %v9348
        %9350 = vmatmul.f32.gmra.mxu0 %v8274
        %v9351 = vpop.f32.mrf.mxu0
        %v9352 = vadd.f32 %v9287, %v9351
        %9353 = vmatmul.f32.gmra.mxu0 %v8276
        %v9354 = vpop.f32.mrf.mxu0
        %v9355 = vadd.f32 %v9290, %v9354
        %9356 = vdwg.mxu0
        %v9357 = vadd.f32 %v9148, %v9310
        %v9358 = vadd.f32 %v9151, %v9313
        %v9359 = vadd.f32 %v9154, %v9316
        %v9360 = vadd.f32 %v9157, %v9319
        %v9361 = vadd.f32 %v9160, %v9322
        %v9362 = vadd.f32 %v9163, %v9325
        %v9363 = vadd.f32 %v9166, %v9328
        %v9364 = vadd.f32 %v9169, %v9331
        %v9365 = vadd.f32 %v9172, %v9334
        %v9366 = vadd.f32 %v9175, %v9337
        %v9367 = vadd.f32 %v9178, %v9340
        %v9368 = vadd.f32 %v9181, %v9343
        %v9369 = vadd.f32 %v9184, %v9346
        %v9370 = vadd.f32 %v9187, %v9349
        %v9371 = vadd.f32 %v9190, %v9352
        %v9372 = vadd.f32 %v9193, %v9355
        %v9373 = vmul.f32 %v9357, %v8634
        %v9374 = vmul.f32 %v9358, %v8639
        %v9375 = vmul.f32 %v9359, %v8644
        %v9376 = vmul.f32 %v9360, %v8649
        %v9377 = vmul.f32 %v9361, %v8654
        %v9378 = vmul.f32 %v9362, %v8659
        %v9379 = vmul.f32 %v9363, %v8664
        %v9380 = vmul.f32 %v9364, %v8669
        %v9381 = vmul.f32 %v9365, %v8674
        %v9382 = vmul.f32 %v9366, %v8679
        %v9383 = vmul.f32 %v9367, %v8684
        %v9384 = vmul.f32 %v9368, %v8689
        %v9385 = vmul.f32 %v9369, %v8694
        %v9386 = vmul.f32 %v9370, %v8699
        %v9387 = vmul.f32 %v9371, %v8704
        %v9388 = vmul.f32 %v9372, %v8709
        %v9389 = vadd.f32 %v9373, %v8746
        %v9390 = vadd.f32 %v9374, %v8751
        %v9391 = vadd.f32 %v9375, %v8756
        %v9392 = vadd.f32 %v9376, %v8761
        %v9393 = vadd.f32 %v9377, %v8766
        %v9394 = vadd.f32 %v9378, %v8771
        %v9395 = vadd.f32 %v9379, %v8776
        %v9396 = vadd.f32 %v9380, %v8781
        %v9397 = vadd.f32 %v9381, %v8786
        %v9398 = vadd.f32 %v9382, %v8791
        %v9399 = vadd.f32 %v9383, %v8796
        %v9400 = vadd.f32 %v9384, %v8801
        %v9401 = vadd.f32 %v9385, %v8806
        %v9402 = vadd.f32 %v9386, %v8811
        %v9403 = vadd.f32 %v9387, %v8816
        %v9404 = vadd.f32 %v9388, %v8821
        %v9405 = vmax.f32 %v9389, 0.0
        %v9406 = vmax.f32 %v9390, 0.0
        %v9407 = vmax.f32 %v9391, 0.0
        %v9408 = vmax.f32 %v9392, 0.0
        %v9409 = vmax.f32 %v9393, 0.0
        %v9410 = vmax.f32 %v9394, 0.0
        %v9411 = vmax.f32 %v9395, 0.0
        %v9412 = vmax.f32 %v9396, 0.0
        %v9413 = vmax.f32 %v9397, 0.0
        %v9414 = vmax.f32 %v9398, 0.0
        %v9415 = vmax.f32 %v9399, 0.0
        %v9416 = vmax.f32 %v9400, 0.0
        %v9417 = vmax.f32 %v9401, 0.0
        %v9418 = vmax.f32 %v9402, 0.0
        %v9419 = vmax.f32 %v9403, 0.0
        %v9420 = vmax.f32 %v9404, 0.0
        %vm9421 = vcmask 809984
        %v9422 = vsel %vm9421, %v9405, 0.0
        %9423 = vadd.xlane.f32.xlu0 %v9422
        %v9424 = vpop.xlane.xlu0 %9423
        %v9425 = vsel %vm9421, %v9406, 0.0
        %9426 = vadd.xlane.f32.xlu0 %v9425
        %v9427 = vpop.xlane.xlu0 %9426
        %v9428 = vsel %vm9421, %v9407, 0.0
        %9429 = vadd.xlane.f32.xlu0 %v9428
        %v9430 = vpop.xlane.xlu0 %9429
        %v9431 = vsel %vm9421, %v9408, 0.0
        %9432 = vadd.xlane.f32.xlu0 %v9431
        %v9433 = vpop.xlane.xlu0 %9432
        %v9434 = vsel %vm9421, %v9409, 0.0
        %9435 = vadd.xlane.f32.xlu0 %v9434
        %v9436 = vpop.xlane.xlu0 %9435
        %v9437 = vsel %vm9421, %v9410, 0.0
        %9438 = vadd.xlane.f32.xlu0 %v9437
        %v9439 = vpop.xlane.xlu0 %9438
        %v9440 = vsel %vm9421, %v9411, 0.0
        %9441 = vadd.xlane.f32.xlu0 %v9440
        %v9442 = vpop.xlane.xlu0 %9441
        %v9443 = vsel %vm9421, %v9412, 0.0
        %9444 = vadd.xlane.f32.xlu0 %v9443
        %v9445 = vpop.xlane.xlu0 %9444
        %v9446 = vsel %vm9421, %v9413, 0.0
        %9447 = vadd.xlane.f32.xlu0 %v9446
        %v9448 = vpop.xlane.xlu0 %9447
        %v9449 = vsel %vm9421, %v9414, 0.0
        %9450 = vadd.xlane.f32.xlu0 %v9449
        %v9451 = vpop.xlane.xlu0 %9450
        %v9452 = vsel %vm9421, %v9415, 0.0
        %9453 = vadd.xlane.f32.xlu0 %v9452
        %v9454 = vpop.xlane.xlu0 %9453
        %v9455 = vsel %vm9421, %v9416, 0.0
        %9456 = vadd.xlane.f32.xlu0 %v9455
        %v9457 = vpop.xlane.xlu0 %9456
        %v9458 = vsel %vm9421, %v9417, 0.0
        %9459 = vadd.xlane.f32.xlu0 %v9458
        %v9460 = vpop.xlane.xlu0 %9459
        %v9461 = vsel %vm9421, %v9418, 0.0
        %9462 = vadd.xlane.f32.xlu0 %v9461
        %v9463 = vpop.xlane.xlu0 %9462
        %v9464 = vsel %vm9421, %v9419, 0.0
        %9465 = vadd.xlane.f32.xlu0 %v9464
        %v9466 = vpop.xlane.xlu0 %9465
        %v9467 = vsel %vm9421, %v9420, 0.0
        %9468 = vadd.xlane.f32.xlu0 %v9467
        %v9469 = vpop.xlane.xlu0 %9468
        %v9470 = vadd.f32 %v8887, %v9424
        %v9471 = vadd.f32 %v8888, %v9427
        %v9472 = vadd.f32 %v8889, %v9430
        %v9473 = vadd.f32 %v8890, %v9433
        %v9474 = vadd.f32 %v8891, %v9436
        %v9475 = vadd.f32 %v8892, %v9439
        %v9476 = vadd.f32 %v8893, %v9442
        %v9477 = vadd.f32 %v8894, %v9445
        %v9478 = vadd.f32 %v8895, %v9448
        %v9479 = vadd.f32 %v8896, %v9451
        %v9480 = vadd.f32 %v8897, %v9454
        %v9481 = vadd.f32 %v8898, %v9457
        %v9482 = vadd.f32 %v8899, %v9460
        %v9483 = vadd.f32 %v8900, %v9463
        %v9484 = vadd.f32 %v8901, %v9466
        %v9485 = vadd.f32 %v8902, %v9469
        %v9486 = vmul.f32 %v9470, 0.004405286
        %v9487 = vmul.f32 %v9471, 0.004405286
        %v9488 = vmul.f32 %v9472, 0.004405286
        %v9489 = vmul.f32 %v9473, 0.004405286
        %v9490 = vmul.f32 %v9474, 0.004405286
        %v9491 = vmul.f32 %v9475, 0.004405286
        %v9492 = vmul.f32 %v9476, 0.004405286
        %v9493 = vmul.f32 %v9477, 0.004405286
        %v9494 = vmul.f32 %v9478, 0.004405286
        %v9495 = vmul.f32 %v9479, 0.004405286
        %v9496 = vmul.f32 %v9480, 0.004405286
        %v9497 = vmul.f32 %v9481, 0.004405286
        %v9498 = vmul.f32 %v9482, 0.004405286
        %v9499 = vmul.f32 %v9483, 0.004405286
        %v9500 = vmul.f32 %v9484, 0.004405286
        %v9501 = vmul.f32 %v9485, 0.004405286
        %v9502 = vld [vmem:[%s10] sm:$0xff]
        %v9503 = vld [vmem:[%s10 + $0x8] sm:$0xff]
        %v9504 = vld [vmem:[%s10 + $0x10] sm:$0xff]
        %v9505 = vld [vmem:[%s10 + $0x18] sm:$0xff]
        %v9506 = vld [vmem:[%s10 + $0x20] sm:$0xff]
        %v9507 = vld [vmem:[%s10 + $0x28] sm:$0xff]
        %v9508 = vld [vmem:[%s10 + $0x30] sm:$0xff]
        %v9509 = vld [vmem:[%s10 + $0x38] sm:$0xff]
        %v9510 = vld [vmem:[%s10 + $0x40] sm:$0xff]
        %v9511 = vld [vmem:[%s10 + $0x48] sm:$0xff]
        %v9512 = vld [vmem:[%s10 + $0x50] sm:$0xff]
        %v9513 = vld [vmem:[%s10 + $0x58] sm:$0xff]
        %v9514 = vld [vmem:[%s10 + $0x60] sm:$0xff]
        %v9515 = vld [vmem:[%s10 + $0x68] sm:$0xff]
        %v9516 = vld [vmem:[%s10 + $0x70] sm:$0xff]
        %v9517 = vld [vmem:[%s10 + $0x78] sm:$0xff]
        %v9518 = vld [vmem:[%s10 + $0x80] sm:$0xff]
        %v9519 = vld [vmem:[%s10 + $0x88] sm:$0xff]
        %v9520 = vld [vmem:[%s10 + $0x90] sm:$0xff]
        %v9521 = vld [vmem:[%s10 + $0x98] sm:$0xff]
        %v9522 = vld [vmem:[%s10 + $0xa0] sm:$0xff]
        %v9523 = vld [vmem:[%s10 + $0xa8] sm:$0xff]
        %v9524 = vld [vmem:[%s10 + $0xb0] sm:$0xff]
        %v9525 = vld [vmem:[%s10 + $0xb8] sm:$0xff]
        %v9526 = vld [vmem:[%s10 + $0xc0] sm:$0xff]
        %v9527 = vld [vmem:[%s10 + $0xc8] sm:$0xff]
        %v9528 = vld [vmem:[%s10 + $0xd0] sm:$0xff]
        %v9529 = vld [vmem:[%s10 + $0xd8] sm:$0xff]
        %v9530 = vld [vmem:[%s10 + $0xe0] sm:$0xff]
        %v9531 = vld [vmem:[%s10 + $0xe8] sm:$0xff]
        %v9532 = vld [vmem:[%s12] sm:$0x1]
        %v9534 = vperm.slane %v9532, 0
        %9536 = vst [vmem:[#allocation1] ss:$2 sm:$0xff] %v509
        %v9537 = vld.sshfl [vmem:[#allocation1] sm:$0xff pattern:$0x75316420]
        %v9538 = vld.sshfl [vmem:[#allocation1 + $0x8] sm:$0xff pattern:$0x75316420]
        %vm9540 = vcmask 916480
        %v9541 = vsel %vm9540, %v9538, 0
        %9543 = vmatpush.msra.mxu0 %v9517
        %9544 = vmatpush.msra.mxu0 %v9516
        %9545 = vmatpush.msra.mxu0 %v9515
        %9546 = vmatpush.msra.mxu0 %v9514
        %9547 = vmatpush.msra.mxu0 %v9513
        %9548 = vmatpush.msra.mxu0 %v9512
        %9549 = vmatpush.msra.mxu0 %v9511
        %9550 = vmatpush.msra.mxu0 %v9510
        %9551 = vmatpush.msra.mxu0 %v9509
        %9552 = vmatpush.msra.mxu0 %v9508
        %9553 = vmatpush.msra.mxu0 %v9507
        %9554 = vmatpush.msra.mxu0 %v9506
        %9555 = vmatpush.msra.mxu0 %v9505
        %9556 = vmatpush.msra.mxu0 %v9504
        %9557 = vmatpush.msra.mxu0 %v9503
        %9558 = vmatpush.msra.mxu0 %v9502
        %9559 = vmatmul.f32.gmra.mxu0 %v9537
        %v9560 = vpop.f32.mrf.mxu0
        %v9561 = vadd.f32 %v9534, %v9560
        %9562 = vdwg.mxu0
        %9563 = vmatpush.msra.mxu0 0.0
        %9564 = vmatpush.msra.mxu0 0.0
        %9565 = vmatpush.msra.mxu0 %v9531
        %9566 = vmatpush.msra.mxu0 %v9530
        %9567 = vmatpush.msra.mxu0 %v9529
        %9568 = vmatpush.msra.mxu0 %v9528
        %9569 = vmatpush.msra.mxu0 %v9527
        %9570 = vmatpush.msra.mxu0 %v9526
        %9571 = vmatpush.msra.mxu0 %v9525
        %9572 = vmatpush.msra.mxu0 %v9524
        %9573 = vmatpush.msra.mxu0 %v9523
        %9574 = vmatpush.msra.mxu0 %v9522
        %9575 = vmatpush.msra.mxu0 %v9521
        %9576 = vmatpush.msra.mxu0 %v9520
        %9577 = vmatpush.msra.mxu0 %v9519
        %9578 = vmatpush.msra.mxu0 %v9518
        %9579 = vmatmul.f32.gmra.mxu0 %v9541
        %v9580 = vpop.f32.mrf.mxu0
        %v9581 = vadd.f32 %v9561, %v9580
        %9582 = vdwg.mxu0
        %v9583 = vld [vmem:[%s11] sm:$0xff]
        %vm9584 = vcmask 64512
        %v9586 = vsel %vm9584, 0.0, 0
        %9588 = vmatpush.msra.mxu0 0.0
        %9589 = vmatpush.msra.mxu0 0.0
        %9590 = vmatpush.msra.mxu0 0.0
        %9591 = vmatpush.msra.mxu0 0.0
        %9592 = vmatpush.msra.mxu0 0.0
        %9593 = vmatpush.msra.mxu0 0.0
        %9594 = vmatpush.msra.mxu0 0.0
        %9595 = vmatpush.msra.mxu0 0.0
        %9596 = vmatpush.msra.mxu0 0.0
        %9597 = vmatpush.msra.mxu0 0.0
        %9598 = vmatpush.msra.mxu0 0.0
        %9599 = vmatpush.msra.mxu0 0.0
        %9600 = vmatpush.msra.mxu0 0.0
        %9601 = vmatpush.msra.mxu0 0.0
        %9602 = vmatpush.msra.mxu0 0.0
        %9603 = vmatpush.msra.mxu0 %v9583
        %9604 = vmatmul.f32.gmra.mxu0 %v9586
        %v9605 = vpop.f32.mrf.mxu0
        %v9606 = vadd.f32 0.0, %v9605
        %9607 = vdwg.mxu0
        %v9608 = vadd.f32 %v9581, %v9606
        %v9609 = vxor.u32 %v9608, 2147483648
        %v9610 = vmul.f32 %v9609, 1.442695
        %v9611 = vpow.pop %v9610
        %v9612 = vadd.f32 %v9611, 1.0
        %v9613 = vrcp.pop %v9612
        %v9614 = vmul.f32 %v9612, %v9613
        %v9615 = vsub.f32 1.0, %v9614
        %v9616 = vmul.f32 %v9613, %v9615
        %v9617 = vadd.f32 %v9613, %v9616
        %vm9618 = vweird.f32 %v9612
        %vm9619 = vweird.f32 %v9613
        %vm9620 = vmor %vm9618, %vm9619
        %v9621 = vsel %vm9620, %v9613, %v9617
        %v9622 = vand.u32 2147483647, %v9612
        %vm9623 = vcmp.eq.f32.partialorder %v9622, 8.507059e+37
        %v9624 = vand.u32 %v9612, 2147483648
        %v9625 = vor.u32 1.1754944e-38, %v9624
        %v9626 = vsel %vm9623, %v9625, %v9621
        %v9627 = vmul.f32 1.0, %v9626
        %v9628 = vtanh.pop %v9608
        %v9629 = vmul.f32 %v9627, 0.0
        %9631 = vrot.lane.b32.xlu0 %v9628, 112
        %v9632 = vpop.permute.xlu0 %9631
        %v9634 = vmul.f32 %v9627, %v9632
        %9636 = vrot.lane.b32.xlu0 %v9634, 8
        %v9637 = vpop.permute.xlu0 %9636
        %v9639 = vadd.f32 %v9629, %v9637
        %v9640 = vtanh.pop %v9639
        %9642 = vrot.lane.b32.xlu0 %v9640, 16
        %v9643 = vpop.permute.xlu0 %9642
        %v9645 = vmul.f32 %v9627, %v9643
        %9647 = vrot.lane.b32.xlu0 %v9645, 104
        %v9648 = vpop.permute.xlu0 %9647
        %v9649 = vsel %vm9584, %v9648, 0
        %9651 = vmatpush.msra.mxu0 0.0
        %9652 = vmatpush.msra.mxu0 0.0
        %9653 = vmatpush.msra.mxu0 0.0
        %9654 = vmatpush.msra.mxu0 0.0
        %9655 = vmatpush.msra.mxu0 0.0
        %9656 = vmatpush.msra.mxu0 0.0
        %9657 = vmatpush.msra.mxu0 0.0
        %9658 = vmatpush.msra.mxu0 0.0
        %9659 = vmatpush.msra.mxu0 0.0
        %9660 = vmatpush.msra.mxu0 0.0
        %9661 = vmatpush.msra.mxu0 0.0
        %9662 = vmatpush.msra.mxu0 0.0
        %9663 = vmatpush.msra.mxu0 0.0
        %9664 = vmatpush.msra.mxu0 0.0
        %9665 = vmatpush.msra.mxu0 0.0
        %9666 = vmatpush.msra.mxu0 %v9583
        %9667 = vmatmul.f32.gmra.mxu0 %v9649
        %v9668 = vpop.f32.mrf.mxu0
        %v9669 = vadd.f32 0.0, %v9668
        %9670 = vdwg.mxu0
        %v9672 = vrot.slane %v9669, 7
        %v9674 = vadd.f32 %v9581, %v9672
        %v9675 = vxor.u32 %v9674, 2147483648
        %v9676 = vmul.f32 %v9675, 1.442695
        %v9677 = vpow.pop %v9676
        %v9678 = vadd.f32 %v9677, 1.0
        %v9679 = vrcp.pop %v9678
        %v9680 = vmul.f32 %v9678, %v9679
        %v9681 = vsub.f32 1.0, %v9680
        %v9682 = vmul.f32 %v9679, %v9681
        %v9683 = vadd.f32 %v9679, %v9682
        %vm9684 = vweird.f32 %v9678
        %vm9685 = vweird.f32 %v9679
        %vm9686 = vmor %vm9684, %vm9685
        %v9687 = vsel %vm9686, %v9679, %v9683
        %v9688 = vand.u32 2147483647, %v9678
        %vm9689 = vcmp.eq.f32.partialorder %v9688, 8.507059e+37
        %v9690 = vand.u32 %v9678, 2147483648
        %v9691 = vor.u32 1.1754944e-38, %v9690
        %v9692 = vsel %vm9689, %v9691, %v9687
        %v9693 = vmul.f32 1.0, %v9692
        %v9694 = vtanh.pop %v9674
        %v9696 = vrot.slane %v9639, 7
        %v9698 = vmul.f32 %v9693, %v9696
        %9700 = vrot.lane.b32.xlu0 %v9694, 112
        %v9701 = vpop.permute.xlu0 %9700
        %v9703 = vmul.f32 %v9693, %v9701
        %9705 = vrot.lane.b32.xlu0 %v9703, 8
        %v9706 = vpop.permute.xlu0 %9705
        %v9708 = vadd.f32 %v9698, %v9706
        %v9709 = vtanh.pop %v9708
        %9711 = vrot.lane.b32.xlu0 %v9709, 16
        %v9712 = vpop.permute.xlu0 %9711
        %v9714 = vmul.f32 %v9693, %v9712
        %v9716 = vrot.slane %v9714, 1
        %9717 = vrot.lane.b32.xlu0 %v9716, 104
        %v9718 = vpop.permute.xlu0 %9717
        %v9719 = vsel %vm9584, %v9718, 0
        %9721 = vmatpush.msra.mxu0 0.0
        %9722 = vmatpush.msra.mxu0 0.0
        %9723 = vmatpush.msra.mxu0 0.0
        %9724 = vmatpush.msra.mxu0 0.0
        %9725 = vmatpush.msra.mxu0 0.0
        %9726 = vmatpush.msra.mxu0 0.0
        %9727 = vmatpush.msra.mxu0 0.0
        %9728 = vmatpush.msra.mxu0 0.0
        %9729 = vmatpush.msra.mxu0 0.0
        %9730 = vmatpush.msra.mxu0 0.0
        %9731 = vmatpush.msra.mxu0 0.0
        %9732 = vmatpush.msra.mxu0 0.0
        %9733 = vmatpush.msra.mxu0 0.0
        %9734 = vmatpush.msra.mxu0 0.0
        %9735 = vmatpush.msra.mxu0 0.0
        %9736 = vmatpush.msra.mxu0 %v9583
        %9737 = vmatmul.f32.gmra.mxu0 %v9719
        %v9738 = vpop.f32.mrf.mxu0
        %v9739 = vadd.f32 0.0, %v9738
        %9740 = vdwg.mxu0
        %v9742 = vrot.slane %v9739, 6
        %v9744 = vadd.f32 %v9581, %v9742
        %v9745 = vxor.u32 %v9744, 2147483648
        %v9746 = vmul.f32 %v9745, 1.442695
        %v9747 = vpow.pop %v9746
        %v9748 = vadd.f32 %v9747, 1.0
        %v9749 = vrcp.pop %v9748
        %v9750 = vmul.f32 %v9748, %v9749
        %v9751 = vsub.f32 1.0, %v9750
        %v9752 = vmul.f32 %v9749, %v9751
        %v9753 = vadd.f32 %v9749, %v9752
        %vm9754 = vweird.f32 %v9748
        %vm9755 = vweird.f32 %v9749
        %vm9756 = vmor %vm9754, %vm9755
        %v9757 = vsel %vm9756, %v9749, %v9753
        %v9758 = vand.u32 2147483647, %v9748
        %vm9759 = vcmp.eq.f32.partialorder %v9758, 8.507059e+37
        %v9760 = vand.u32 %v9748, 2147483648
        %v9761 = vor.u32 1.1754944e-38, %v9760
        %v9762 = vsel %vm9759, %v9761, %v9757
        %v9763 = vmul.f32 1.0, %v9762
        %v9764 = vtanh.pop %v9744
        %v9766 = vrot.slane %v9708, 7
        %v9768 = vmul.f32 %v9763, %v9766
        %9770 = vrot.lane.b32.xlu0 %v9764, 112
        %v9771 = vpop.permute.xlu0 %9770
        %v9773 = vmul.f32 %v9763, %v9771
        %9775 = vrot.lane.b32.xlu0 %v9773, 8
        %v9776 = vpop.permute.xlu0 %9775
        %v9778 = vadd.f32 %v9768, %v9776
        %v9779 = vtanh.pop %v9778
        %9781 = vrot.lane.b32.xlu0 %v9779, 16
        %v9782 = vpop.permute.xlu0 %9781
        %v9784 = vmul.f32 %v9763, %v9782
        %v9786 = vrot.slane %v9784, 2
        %9787 = vrot.lane.b32.xlu0 %v9786, 104
        %v9788 = vpop.permute.xlu0 %9787
        %v9789 = vsel %vm9584, %v9788, 0
        %9791 = vmatpush.msra.mxu0 0.0
        %9792 = vmatpush.msra.mxu0 0.0
        %9793 = vmatpush.msra.mxu0 0.0
        %9794 = vmatpush.msra.mxu0 0.0
        %9795 = vmatpush.msra.mxu0 0.0
        %9796 = vmatpush.msra.mxu0 0.0
        %9797 = vmatpush.msra.mxu0 0.0
        %9798 = vmatpush.msra.mxu0 0.0
        %9799 = vmatpush.msra.mxu0 0.0
        %9800 = vmatpush.msra.mxu0 0.0
        %9801 = vmatpush.msra.mxu0 0.0
        %9802 = vmatpush.msra.mxu0 0.0
        %9803 = vmatpush.msra.mxu0 0.0
        %9804 = vmatpush.msra.mxu0 0.0
        %9805 = vmatpush.msra.mxu0 0.0
        %9806 = vmatpush.msra.mxu0 %v9583
        %9807 = vmatmul.f32.gmra.mxu0 %v9789
        %v9808 = vpop.f32.mrf.mxu0
        %v9809 = vadd.f32 0.0, %v9808
        %9810 = vdwg.mxu0
        %v9812 = vrot.slane %v9809, 5
        %v9814 = vadd.f32 %v9581, %v9812
        %v9815 = vxor.u32 %v9814, 2147483648
        %v9816 = vmul.f32 %v9815, 1.442695
        %v9817 = vpow.pop %v9816
        %v9818 = vadd.f32 %v9817, 1.0
        %v9819 = vrcp.pop %v9818
        %v9820 = vmul.f32 %v9818, %v9819
        %v9821 = vsub.f32 1.0, %v9820
        %v9822 = vmul.f32 %v9819, %v9821
        %v9823 = vadd.f32 %v9819, %v9822
        %vm9824 = vweird.f32 %v9818
        %vm9825 = vweird.f32 %v9819
        %vm9826 = vmor %vm9824, %vm9825
        %v9827 = vsel %vm9826, %v9819, %v9823
        %v9828 = vand.u32 2147483647, %v9818
        %vm9829 = vcmp.eq.f32.partialorder %v9828, 8.507059e+37
        %v9830 = vand.u32 %v9818, 2147483648
        %v9831 = vor.u32 1.1754944e-38, %v9830
        %v9832 = vsel %vm9829, %v9831, %v9827
        %v9833 = vmul.f32 1.0, %v9832
        %v9834 = vtanh.pop %v9814
        %v9836 = vrot.slane %v9778, 7
        %v9838 = vmul.f32 %v9833, %v9836
        %9840 = vrot.lane.b32.xlu0 %v9834, 112
        %v9841 = vpop.permute.xlu0 %9840
        %v9843 = vmul.f32 %v9833, %v9841
        %9845 = vrot.lane.b32.xlu0 %v9843, 8
        %v9846 = vpop.permute.xlu0 %9845
        %v9848 = vadd.f32 %v9838, %v9846
        %v9849 = vtanh.pop %v9848
        %9851 = vrot.lane.b32.xlu0 %v9849, 16
        %v9852 = vpop.permute.xlu0 %9851
        %v9854 = vmul.f32 %v9833, %v9852
        %v9855 = vld [vmem:[%s13] sm:$0xff]
        %v9856 = vld [vmem:[%s13 + $0x8] sm:$0xff]
        %v9857 = vld [vmem:[%s13 + $0x10] sm:$0xff]
        %v9858 = vld [vmem:[%s13 + $0x18] sm:$0xff]
        %v9859 = vld [vmem:[%s13 + $0x20] sm:$0xff]
        %v9860 = vld [vmem:[%s13 + $0x28] sm:$0xff]
        %v9861 = vld [vmem:[%s13 + $0x30] sm:$0xff]
        %v9862 = vld [vmem:[%s13 + $0x38] sm:$0xff]
        %v9863 = vld [vmem:[%s13 + $0x40] sm:$0xff]
        %v9864 = vld [vmem:[%s13 + $0x48] sm:$0xff]
        %v9865 = vld [vmem:[%s13 + $0x50] sm:$0xff]
        %v9866 = vld [vmem:[%s13 + $0x58] sm:$0xff]
        %v9867 = vld [vmem:[%s13 + $0x60] sm:$0xff]
        %v9868 = vld [vmem:[%s13 + $0x68] sm:$0xff]
        %v9869 = vld [vmem:[%s13 + $0x70] sm:$0xff]
        %v9870 = vld [vmem:[%s13 + $0x78] sm:$0xff]
        %v9871 = vld [vmem:[%s13 + $0x80] sm:$0xff]
        %v9888 = vlaneseq
        %v9889 = vand.u32 %v9888, 127
        %v9890 = vperm.slane %v9486, %v9889
        %v9891 = vadd.s32 %v9889, 4294967288
        %v9892 = vperm.slane %v9487, %v9891
        %vm9893 = vcmask 130112
        %v9894 = vsel %vm9893, %v9892, %v9890
        %v9895 = vadd.s32 %v9889, 4294967280
        %v9896 = vperm.slane %v9488, %v9895
        %vm9897 = vcmask 195712
        %v9898 = vsel %vm9897, %v9896, %v9894
        %v9899 = vadd.s32 %v9889, 4294967272
        %v9900 = vperm.slane %v9489, %v9899
        %vm9901 = vcmask 261312
        %v9902 = vsel %vm9901, %v9900, %v9898
        %v9903 = vadd.s32 %v9889, 4294967264
        %v9904 = vperm.slane %v9490, %v9903
        %vm9905 = vcmask 326912
        %v9906 = vsel %vm9905, %v9904, %v9902
        %v9907 = vadd.s32 %v9889, 4294967256
        %v9908 = vperm.slane %v9491, %v9907
        %vm9909 = vcmask 392512
        %v9910 = vsel %vm9909, %v9908, %v9906
        %v9911 = vadd.s32 %v9889, 4294967248
        %v9912 = vperm.slane %v9492, %v9911
        %vm9913 = vcmask 458112
        %v9914 = vsel %vm9913, %v9912, %v9910
        %v9915 = vadd.s32 %v9889, 4294967240
        %v9916 = vperm.slane %v9493, %v9915
        %vm9917 = vcmask 523712
        %v9918 = vsel %vm9917, %v9916, %v9914
        %v9919 = vadd.s32 %v9889, 4294967232
        %v9920 = vperm.slane %v9494, %v9919
        %vm9921 = vcmask 589312
        %v9922 = vsel %vm9921, %v9920, %v9918
        %v9923 = vadd.s32 %v9889, 4294967224
        %v9924 = vperm.slane %v9495, %v9923
        %vm9925 = vcmask 654912
        %v9926 = vsel %vm9925, %v9924, %v9922
        %v9927 = vadd.s32 %v9889, 4294967216
        %v9928 = vperm.slane %v9496, %v9927
        %vm9929 = vcmask 720512
        %v9930 = vsel %vm9929, %v9928, %v9926
        %v9931 = vadd.s32 %v9889, 4294967208
        %v9932 = vperm.slane %v9497, %v9931
        %vm9933 = vcmask 786112
        %v9934 = vsel %vm9933, %v9932, %v9930
        %v9935 = vadd.s32 %v9889, 4294967200
        %v9936 = vperm.slane %v9498, %v9935
        %vm9937 = vcmask 851712
        %v9938 = vsel %vm9937, %v9936, %v9934
        %v9939 = vadd.s32 %v9889, 4294967192
        %v9940 = vperm.slane %v9499, %v9939
        %vm9941 = vcmask 917312
        %v9942 = vsel %vm9941, %v9940, %v9938
        %v9943 = vadd.s32 %v9889, 4294967184
        %v9944 = vperm.slane %v9500, %v9943
        %vm9945 = vcmask 982912
        %v9946 = vsel %vm9945, %v9944, %v9942
        %v9947 = vadd.s32 %v9889, 4294967176
        %v9948 = vperm.slane %v9501, %v9947
        %vm9949 = vcmask 1048512
        %v9950 = vsel %vm9949, %v9948, %v9946
        %9952 = vmatpush.msra.mxu0 %v9871
        %9953 = vmatpush.msra.mxu0 %v9870
        %9954 = vmatpush.msra.mxu0 %v9869
        %9955 = vmatpush.msra.mxu0 %v9868
        %9956 = vmatpush.msra.mxu0 %v9867
        %9957 = vmatpush.msra.mxu0 %v9866
        %9958 = vmatpush.msra.mxu0 %v9865
        %9959 = vmatpush.msra.mxu0 %v9864
        %9960 = vmatpush.msra.mxu0 %v9863
        %9961 = vmatpush.msra.mxu0 %v9862
        %9962 = vmatpush.msra.mxu0 %v9861
        %9963 = vmatpush.msra.mxu0 %v9860
        %9964 = vmatpush.msra.mxu0 %v9859
        %9965 = vmatpush.msra.mxu0 %v9858
        %9966 = vmatpush.msra.mxu0 %v9857
        %9967 = vmatpush.msra.mxu0 %v9856
        %9968 = vmatmul.f32.gmra.mxu0 %v9950
        %v9969 = vpop.f32.mrf.mxu0
        %v9970 = vadd.f32 0.0, %v9969
        %9971 = vdwg.mxu0
        %v9973 = vrot.slane %v9854, 3
        %9974 = vrot.lane.b32.xlu0 %v9973, 104
        %v9975 = vpop.permute.xlu0 %9974
        %v9976 = vsel %vm9584, %v9975, 0
        %9978 = vmatpush.msra.mxu0 0.0
        %9979 = vmatpush.msra.mxu0 0.0
        %9980 = vmatpush.msra.mxu0 0.0
        %9981 = vmatpush.msra.mxu0 0.0
        %9982 = vmatpush.msra.mxu0 0.0
        %9983 = vmatpush.msra.mxu0 0.0
        %9984 = vmatpush.msra.mxu0 0.0
        %9985 = vmatpush.msra.mxu0 0.0
        %9986 = vmatpush.msra.mxu0 0.0
        %9987 = vmatpush.msra.mxu0 0.0
        %9988 = vmatpush.msra.mxu0 0.0
        %9989 = vmatpush.msra.mxu0 0.0
        %9990 = vmatpush.msra.mxu0 0.0
        %9991 = vmatpush.msra.mxu0 0.0
        %9992 = vmatpush.msra.mxu0 0.0
        %9993 = vmatpush.msra.mxu0 %v9855
        %9994 = vmatmul.f32.gmra.mxu0 %v9976
        %v9995 = vpop.f32.mrf.mxu0
        %v9996 = vadd.f32 %v9970, %v9995
        %9997 = vdwg.mxu0
        %v9998 = vld [vmem:[%s14] sm:$0x1]
        %v9999 = vadd.f32 %v9996, %v9998
        %vm10000 = vcmask 73728
        %10001 = vst.msk [vmem:[%s503] sm:$0x1] %vm10000, %v9999
        %s10002 = sand.u32 %s358, 1
        %s10003 = scalar_lea.sflag [#allocation6], %s10002
        %s10004 = sand.u32 %s358, 1
        %s10005 = scalar_lea.vmem [#allocation7], %s10004
        // Predicated region
        $region85: #{lstm_fcn_forward.1} parent=79 // pred_check
          %p10006 = pneg %p368
        $region86: #{lstm_fcn_forward.1} parent=79 // pred_check_branch
          %10008 = sbr.rel (%p10006) target = $region88
        $region87: #{lstm_fcn_forward.1} parent=79 // pred_region
          %10010 = vsyncadd %s10003, 0
          %s10011 = scalar_lea.hbm %s15, %s30
          %s10013 = sshll.u32 %s10005, 4
          %s10014 = int_to_ptr.vmem [resolvable:$true] %s10013
          %s10015 = sshll.u32 %s10011, 4
          %s10016 = int_to_ptr.hbm [resolvable:$true] %s10015
          %10018 = dma.vmem_to_hbm [thread:$0]  %s10014, 16, %s10016, %s10003
        $region88: #{lstm_fcn_forward.1} parent=79 // pred_fallthru
          _
      $region80: #{lstm_fcn_forward.1} parent=5 // pred_fallthru
        _
      %p10019 = scmp.le.s32.totalorder 2, %s25
      // Predicated region
      $region89: #{lstm_fcn_forward.1} parent=5 // pred_check
        %p10020 = pneg %p10019
      $region90: #{lstm_fcn_forward.1} parent=5 // pred_check_branch
        %10022 = sbr.rel (%p10020) target = $region92
      $region91: #{lstm_fcn_forward.1} parent=5 // pred_region
        %s10023 = ssub.s32 %s25, 2
        // Predicated region
        $region93: #{lstm_fcn_forward.1} parent=91 // pred_check
          %p10024 = pneg %p374
        $region94: #{lstm_fcn_forward.1} parent=91 // pred_check_branch
          %10026 = sbr.rel (%p10024) target = $region96
        $region95: #{lstm_fcn_forward.1} parent=91 // pred_region
          %s10027 = sand.u32 %s359, 1
          %s10028 = scalar_lea.sflag [#allocation6], %s10027
          %s10029 = sand.u32 %s359, 1
          %s10030 = scalar_lea.vmem [#allocation7], %s10029
          %10032 = dma.done %s10028, 16
        $region96: #{lstm_fcn_forward.1} parent=91 // pred_fallthru
          _
      $region92: #{lstm_fcn_forward.1} parent=5 // pred_fallthru
        _
    $region6: #{lstm_fcn_forward.1} parent=1 // loop_footer
      %s29 = sadd.s32 1, %s25
    $region7: #{lstm_fcn_forward.1} parent=1 // loop_footer_branch
      %24 = sbr.rel target = $region3
    $region8: #{lstm_fcn_forward.1} parent=1 // loop_exit
      _
    %10033 = vsyncpa [#allocation5], 1
    %s10034 = scalar_lea.sflag [#allocation5], 1
    %10035 = vsyncpa %s10034, 1
    %10036 = vsyncpa [#allocation6], 1
    %s10037 = scalar_lea.sflag [#allocation6], 1
    %10038 = vsyncpa %s10037, 1

</llo_original>
